<compile_context>
chip_gen: v5e
topology: v5e:2x2
jax: 0.10.0
libtpu: 0.0.40
codegen_flags: <defaults>
</compile_context>

<pallas_src>
import functools

import jax
import jax.numpy as jnp
import numpy as np
from jax import lax
from jax.experimental import pallas as pl
from jax.experimental.pallas import tpu as pltpu


_VMEM_LIMIT = 32 * 1024 * 1024      # explicit scoped-VMEM budget (safe on v5e/v6e/v7x)
LANE = 128                          # TPU lane width; all kernel outputs are 128-lane dense
_BLEND_PALLAS_MIN = 8192            # below this element count the blend stays in fused XLA


def _round_up(x, m):
    return (x + m - 1) // m * m


# ----------------------------------------------------------------------------
# Pallas kernel 1: fused multi-dot matmul with lane-dense (tm, 128) store
#   acc = sum_i dot(x_i, w_i)                (bf16 operands, fp32 accumulate)
#   acc = acc + shift [+ residual] ; [relu] ; [acc = dot(acc, w_post) + b_post]
# ----------------------------------------------------------------------------
def _fused_mm_kernel(*refs, n_dots, relu, has_res, has_post):
    i = 0
    acc = None
    for _ in range(n_dots):
        x_ref, w_ref = refs[i], refs[i + 1]
        i += 2
        d = jnp.dot(x_ref[...], w_ref[...], preferred_element_type=jnp.float32)
        acc = d if acc is None else acc + d
    acc = acc + refs[i][...]                      # shift (1, 128) fp32
    i += 1
    if has_res:
        acc = acc + refs[i][...].astype(jnp.float32)
        i += 1
    if relu:
        acc = jnp.maximum(acc, 0.0)
    if has_post:                                  # fused 1x1 post conv (fp32 weights)
        wp_ref, bp_ref = refs[i], refs[i + 1]
        i += 2
        acc = jnp.dot(acc, wp_ref[...], preferred_element_type=jnp.float32) + bp_ref[...]
    o_ref = refs[i]
    o_ref[...] = acc.astype(o_ref.dtype)          # full-width (tm, 128) store


def fused_matmul(xw_pairs, shift, *, residual=None, relu=False, post=None,
                 n_valid, out_dtype=jnp.bfloat16, tm_cap=512):
    """xw_pairs: list of (x (M, K_i) bf16, w (K_i, 128) bf16). shift: (1, 128) fp32.
    Returns (M, n_valid)."""
    M = xw_pairs[0][0].shape[0]
    if M <= tm_cap:
        tm, Mp = M, M                              # single step, block == full dims
    else:
        tm = tm_cap                                # >= 2 grid steps for the big layers
        Mp = _round_up(M, tm)

    def pad_rows(t):
        return t if t.shape[0] == Mp else jnp.pad(t, ((0, Mp - t.shape[0]), (0, 0)))

    args, in_specs = [], []
    for x, w in xw_pairs:
        x = pad_rows(x)
        K = x.shape[1]
        args += [x, w]
        in_specs += [pl.BlockSpec((tm, K), lambda i: (i, 0)),
                     pl.BlockSpec((K, LANE), lambda i: (0, 0))]   # weights resident
    args.append(shift)
    in_specs.append(pl.BlockSpec((1, LANE), lambda i: (0, 0)))

    has_res = residual is not None
    if has_res:
        r = residual
        if r.shape[1] != LANE:                      # pad residual columns to lane width
            r = jnp.pad(r, ((0, 0), (0, LANE - r.shape[1])))
        args.append(pad_rows(r))
        in_specs.append(pl.BlockSpec((tm, LANE), lambda i: (i, 0)))

    has_post = post is not None
    if has_post:
        wp, bp = post                               # (128, 128) fp32, (1, 128) fp32
        args += [wp, bp]
        in_specs += [pl.BlockSpec((LANE, LANE), lambda i: (0, 0)),
                     pl.BlockSpec((1, LANE), lambda i: (0, 0))]

    out = pl.pallas_call(
        functools.partial(_fused_mm_kernel, n_dots=len(xw_pairs), relu=relu,
                          has_res=has_res, has_post=has_post),
        out_shape=jax.ShapeDtypeStruct((Mp, LANE), out_dtype),
        grid_spec=pltpu.PrefetchScalarGridSpec(
            num_scalar_prefetch=0,
            grid=(Mp // tm,),
            in_specs=in_specs,
            out_specs=pl.BlockSpec((tm, LANE), lambda i: (i, 0)),
        ),
        compiler_params=pltpu.CompilerParams(
            dimension_semantics=("parallel",),
            vmem_limit_bytes=_VMEM_LIMIT,
        ),
    )(*args)
    return out[:M, :n_valid]


# ----------------------------------------------------------------------------
# im2col (XLA glue): NHWC -> (M, Kp) patches, K zero-padded to a lane multiple
# ----------------------------------------------------------------------------
def _im2col(x, kh, kw, stride, padding):
    N, H, W, C = x.shape
    if padding:
        x = jnp.pad(x, ((0, 0), (padding, padding), (padding, padding), (0, 0)))
    Ho = (x.shape[1] - kh) // stride + 1
    Wo = (x.shape[2] - kw) // stride + 1
    M = N * Ho * Wo
    if kh == 1 and kw == 1:
        xs = x if stride == 1 else x[:, ::stride, ::stride, :]
        return xs.reshape(M, C), (N, Ho, Wo)
    cols = [x[:, i:i + (Ho - 1) * stride + 1:stride,
              j:j + (Wo - 1) * stride + 1:stride, :]
            for i in range(kh) for j in range(kw)]
    K = kh * kw * C
    Kp = _round_up(K, LANE)
    if Kp != K:                                     # zero tap block -> unmasked x loads
        cols.append(jnp.zeros((N, Ho, Wo, Kp - K), x.dtype))
    return jnp.concatenate(cols, axis=-1).reshape(M, Kp), (N, Ho, Wo)


# ----------------------------------------------------------------------------
# Maxpool 3x3 / stride 2 / pad 1: tiny (2*8*8*8 elems) -> plain fused XLA
# (a dedicated pallas_call's dispatch overhead would exceed the data cost)
# ----------------------------------------------------------------------------
def maxpool3x3s2p1(x):
    return lax.reduce_window(
        x, jnp.array(-jnp.inf, x.dtype), lax.max,
        window_dimensions=(1, 3, 3, 1), window_strides=(1, 2, 2, 1),
        padding=((0, 0), (1, 1), (1, 1), (0, 0)))


# ----------------------------------------------------------------------------
# Pallas kernel 2: bilinear 4-corner blend, weights computed in-kernel from two
# tiny fp32 vectors; layout (N*out_h, out_w*C) is an exact lane multiple here.
# ----------------------------------------------------------------------------
def _blend_kernel(a_ref, b_ref, c_ref, d_ref, fy_ref, fx_ref, o_ref):
    fy = fy_ref[...]                 # (rb, 1) fp32: y fraction per output row
    fx = fx_ref[...]                 # (1, L) fp32: x fraction per (ow, c) lane
    wy0 = 1.0 - fy
    wx0 = 1.0 - fx
    y = (a_ref[...].astype(jnp.float32) * (wy0 * wx0)
         + b_ref[...].astype(jnp.float32) * (wy0 * fx)
         + c_ref[...].astype(jnp.float32) * (fy * wx0)
         + d_ref[...].astype(jnp.float32) * (fy * fx))
    o_ref[...] = y.astype(o_ref.dtype)


def _blend_pallas(a, b, c, d, fy, fx, N, out_h, out_w, C):
    R = N * out_h
    L = out_w * C
    a2, b2, c2, d2 = (t.reshape(R, L) for t in (a, b, c, d))
    fy_col = jnp.tile(fy, N).reshape(R, 1).astype(jnp.float32)
    fx_row = jnp.repeat(fx, C).reshape(1, L).astype(jnp.float32)

    rb = R if R <= 1024 else 512
    out = pl.pallas_call(
        _blend_kernel,
        out_shape=jax.ShapeDtypeStruct((R, L), a.dtype),
        grid_spec=pltpu.PrefetchScalarGridSpec(
            num_scalar_prefetch=0,
            grid=(R // rb,),
            in_specs=[pl.BlockSpec((rb, L), lambda i: (i, 0))] * 4
                     + [pl.BlockSpec((rb, 1), lambda i: (i, 0)),
                        pl.BlockSpec((1, L), lambda i: (0, 0))],
            out_specs=pl.BlockSpec((rb, L), lambda i: (i, 0)),
        ),
        compiler_params=pltpu.CompilerParams(
            dimension_semantics=("parallel",), vmem_limit_bytes=_VMEM_LIMIT),
    )(a2, b2, c2, d2, fy_col, fx_row)
    return out.reshape(N, out_h, out_w, C)


def bilinear_resize(x, out_h, out_w):
    """Matches torch.nn.functional.interpolate(mode='bilinear', align_corners=False)."""
    N, H, W, C = x.shape

    def coords(out_size, in_size):
        o = jnp.arange(out_size, dtype=jnp.float32)
        src = jnp.clip((o + 0.5) * (in_size / out_size) - 0.5, 0.0, in_size - 1.0)
        i0 = jnp.floor(src).astype(jnp.int32)
        i1 = jnp.minimum(i0 + 1, in_size - 1)
        return i0, i1, src - i0.astype(jnp.float32)

    y0, y1, fy = coords(out_h, H)
    x0, x1, fx = coords(out_w, W)

    # corner gathers stay in XLA glue (data-dependent gather)
    top = jnp.take(x, y0, axis=1)
    bot = jnp.take(x, y1, axis=1)
    a = jnp.take(top, x0, axis=2)
    b = jnp.take(top, x1, axis=2)
    c = jnp.take(bot, x0, axis=2)
    d = jnp.take(bot, x1, axis=2)

    total = N * out_h * out_w * C
    R, L = N * out_h, out_w * C
    if total >= _BLEND_PALLAS_MIN and L % LANE == 0 and (R <= 1024 or R % 512 == 0):
        return _blend_pallas(a, b, c, d, fy, fx, N, out_h, out_w, C)

    # tiny resizes: fused XLA (kernel dispatch overhead would dominate)
    wy1 = fy[None, :, None, None]
    wx1 = fx[None, None, :, None]
    y = (a.astype(jnp.float32) * (1.0 - wy1) * (1.0 - wx1)
         + b.astype(jnp.float32) * (1.0 - wy1) * wx1
         + c.astype(jnp.float32) * wy1 * (1.0 - wx1)
         + d.astype(jnp.float32) * wy1 * wx1)
    return y.astype(x.dtype)


# ----------------------------------------------------------------------------
# Model pieces (ResNet encoder + DecoderBlocks) built from the kernels above
# ----------------------------------------------------------------------------
# Small "resnet" config (small_resnet=True): resnet.sizes = (8, 16, 32, 64), inputs = 3
#   -> enc_sizes = (64, 32, 16, 8, 3); decoder='xs' -> (32, 32, 16, 16, 8)
INPUTS = 3
CIN_PAD = 8          # stem / decoder6-skip input channels padded 3 -> 8 (wider XLA tap copies)
SIZES = (8, 16, 32, 64)
DEC = (32, 32, 16, 16, 8)
OUTPUTS = 10


def basic_block(bp, x, stride, cout, down):
    # conv1 3x3 + BN (folded) + relu
    p1, (n, h1, w1) = _im2col(x, 3, 3, stride, 1)
    h = fused_matmul([(p1, bp['w1'])], bp['b1'], relu=True, n_valid=cout)
    h = h.reshape(n, h1, w1, cout)
    # conv2 3x3 + BN, + identity (fused downsample 1x1 conv or raw residual), relu
    p2, (n2, h2, w2) = _im2col(h, 3, 3, 1, 1)
    if down:
        xs = x[:, ::stride, ::stride, :].reshape(n2 * h2 * w2, x.shape[-1])
        out = fused_matmul([(p2, bp['w2']), (xs, bp['wd'])], bp['b2'],
                           relu=True, n_valid=cout)
    else:
        res = x.reshape(n2 * h2 * w2, x.shape[-1])
        out = fused_matmul([(p2, bp['w2'])], bp['b2'], residual=res,
                           relu=True, n_valid=cout)
    return out.reshape(n2, h2, w2, cout)


def decoder_block(dp, x, skip, cout, post=None, post_outputs=None):
    x_up = bilinear_resize(x, skip.shape[1], skip.shape[2])
    # no channel concat: two patch operands + split weight, two dots accumulated in-kernel
    p_up, (n, ho, wo) = _im2col(x_up, 3, 3, 1, 1)
    p_sk, _ = _im2col(skip, 3, 3, 1, 1)
    if post is None:
        out = fused_matmul([(p_up, dp['w_up']), (p_sk, dp['w_skip'])], dp['b'],
                           relu=True, n_valid=cout)
        return out.reshape(n, ho, wo, cout)
    # decoder6: fuse the post 1x1 conv into the same kernel, fp32 output
    out = fused_matmul([(p_up, dp['w_up']), (p_sk, dp['w_skip'])], dp['b'],
                       relu=True, post=post, n_valid=post_outputs,
                       out_dtype=jnp.float32)
    return out.reshape(n, ho, wo, post_outputs)


def resnet_segmentation_forward(params, x_nchw):
    p = params
    # NCHW (PyTorch) -> NHWC (kernel layout), bf16 activations through the network
    x = jnp.transpose(x_nchw, (0, 2, 3, 1)).astype(jnp.bfloat16)
    x0p = jnp.pad(x, ((0, 0), (0, 0), (0, 0), (0, CIN_PAD - INPUTS)))   # 3 -> 8 channels

    # stem: conv1 7x7/2 (+ folded BN) + relu, then maxpool (plain XLA)
    patches, (n, ho, wo) = _im2col(x0p, 7, 7, 2, 3)
    h = fused_matmul([(patches, p['stem_w'])], p['stem_b'], relu=True, n_valid=SIZES[0])
    h = maxpool3x3s2p1(h.reshape(n, ho, wo, SIZES[0]))

    # encoder layers 1..4 -> activations
    acts = []
    h = basic_block(p['layer1'], h, 1, SIZES[0], down=False); acts.append(h)
    h = basic_block(p['layer2'], h, 2, SIZES[1], down=True);  acts.append(h)
    h = basic_block(p['layer3'], h, 2, SIZES[2], down=True);  acts.append(h)
    h = basic_block(p['layer4'], h, 2, SIZES[3], down=True);  acts.append(h)

    # decoder chain (same indexing as the PyTorch forward)
    h = decoder_block(p['dec2'], h, acts[-2], DEC[0])
    h = decoder_block(p['dec3'], h, acts[-3], DEC[1])
    h = decoder_block(p['dec4'], h, acts[-4], DEC[2])
    # decoder6 + post 1x1 conv fused into a single kernel (fp32 output)
    out = decoder_block(p['dec6'], h, x0p, DEC[4],
                        post=(p['post_w'], p['post_b']), post_outputs=OUTPUTS)

    # NHWC -> NCHW to match the PyTorch module output
    return jnp.transpose(out, (0, 3, 1, 2))


# ----------------------------------------------------------------------------
# Deterministic synthetic parameter init.  BN folded + weights packed (Kp, 128)
# bf16 / shifts (1, 128) fp32 at prep time so the jit graph stays lean.
# ----------------------------------------------------------------------------
def _conv_w(key, kh, kw, cin, cout):
    fan_in = kh * kw * cin
    return jax.random.normal(key, (kh, kw, cin, cout), jnp.float32) / np.sqrt(fan_in)


def _bn(key, c):
    k1, k2, k3, k4 = jax.random.split(key, 4)
    gamma = 1.0 + 0.1 * jax.random.normal(k1, (c,), jnp.float32)
    beta = 0.1 * jax.random.normal(k2, (c,), jnp.float32)
    mean = 0.1 * jax.random.normal(k3, (c,), jnp.float32)
    var = jax.random.uniform(k4, (c,), jnp.float32, 0.5, 1.5)
    scale = gamma / jnp.sqrt(var + 1e-5)
    shift = beta - mean * scale
    return scale, shift


def _pack_w(w4, pad_cin_to=None):
    """(kh,kw,cin,cout) fp32 -> (Kp, 128) bf16; K padded to a lane multiple for spatial convs."""
    kh, kw, cin, cout = w4.shape
    if pad_cin_to and pad_cin_to > cin:
        w4 = jnp.pad(w4, ((0, 0), (0, 0), (0, pad_cin_to - cin), (0, 0)))
        cin = pad_cin_to
    K = kh * kw * cin
    wm = w4.reshape(K, cout)
    if kh > 1 or kw > 1:
        wm = jnp.pad(wm, ((0, _round_up(K, LANE) - K), (0, 0)))
    return jnp.pad(wm, ((0, 0), (0, LANE - cout))).astype(jnp.bfloat16)


def _pack_b(b):
    return jnp.pad(b.reshape(1, -1), ((0, 0), (0, LANE - b.shape[0]))).astype(jnp.float32)


def init_params(key):
    keys = iter(jax.random.split(key, 64))
    p = {}

    # stem conv1 7x7/2 + BN (folded); input channels padded 3 -> 8 to match x0p
    w = _conv_w(next(keys), 7, 7, INPUTS, SIZES[0])
    s, b = _bn(next(keys), SIZES[0])
    p['stem_w'] = _pack_w(w * s[None, None, None, :], pad_cin_to=CIN_PAD)
    p['stem_b'] = _pack_b(b)

    def make_block(cin, cout, down):
        bp = {}
        w1 = _conv_w(next(keys), 3, 3, cin, cout)
        s1, b1 = _bn(next(keys), cout)
        bp['w1'], bp['b1'] = _pack_w(w1 * s1[None, None, None, :]), _pack_b(b1)
        w2 = _conv_w(next(keys), 3, 3, cout, cout)
        s2, b2 = _bn(next(keys), cout)
        if down:
            wd = _conv_w(next(keys), 1, 1, cin, cout)
            sd, bd = _bn(next(keys), cout)
            bp['wd'] = _pack_w(wd * sd[None, None, None, :])
            # combined shift for the fused conv2 + downsample epilogue
            bp['w2'], bp['b2'] = _pack_w(w2 * s2[None, None, None, :]), _pack_b(b2 + bd)
        else:
            bp['w2'], bp['b2'] = _pack_w(w2 * s2[None, None, None, :]), _pack_b(b2)
        return bp

    p['layer1'] = make_block(SIZES[0], SIZES[0], False)
    p['layer2'] = make_block(SIZES[0], SIZES[1], True)
    p['layer3'] = make_block(SIZES[1], SIZES[2], True)
    p['layer4'] = make_block(SIZES[2], SIZES[3], True)

    enc = (SIZES[3], SIZES[2], SIZES[1], SIZES[0], INPUTS)   # enc_sizes

    def make_dec(c_up, c_skip, cout, pad_skip_to=None):
        w = _conv_w(next(keys), 3, 3, c_up + c_skip, cout)
        b = 0.01 * jax.random.normal(next(keys), (cout,), jnp.float32)
        return {'w_up': _pack_w(w[:, :, :c_up, :]),
                'w_skip': _pack_w(w[:, :, c_up:, :], pad_cin_to=pad_skip_to),
                'b': _pack_b(b)}

    p['dec2'] = make_dec(enc[0], enc[1], DEC[0])
    p['dec3'] = make_dec(DEC[0], enc[2], DEC[1])
    p['dec4'] = make_dec(DEC[1], enc[3], DEC[2])
    p['dec6'] = make_dec(DEC[2], enc[4], DEC[4], pad_skip_to=CIN_PAD)

    # post 1x1 conv (8 -> 10) kept fp32, fused into the decoder6 kernel
    wp = _conv_w(next(keys), 1, 1, DEC[4], OUTPUTS).reshape(DEC[4], OUTPUTS)
    bpost = 0.01 * jax.random.normal(next(keys), (OUTPUTS,), jnp.float32)
    p['post_w'] = jnp.pad(wp, ((0, LANE - DEC[4]), (0, LANE - OUTPUTS))).astype(jnp.float32)
    p['post_b'] = _pack_b(bpost)
    return p


if __name__ == "__main__":
    key = jax.random.PRNGKey(0)
    pkey, xkey = jax.random.split(key)
    params = init_params(pkey)
    x = jax.random.normal(xkey, (2, INPUTS, 32, 32), jnp.float32)

    fwd = jax.jit(resnet_segmentation_forward)
    out = jax.block_until_ready(fwd(params, x))

    assert out.shape == (2, OUTPUTS, 32, 32), out.shape
    assert bool(jnp.all(jnp.isfinite(out)))
    print("KERNEL_OK")
</pallas_src>

<mosaic_0001>
module attributes {stable_mosaic.version = 11 : i64} {
  func.func @_fused_mm_kernel(%arg0: i32, %arg1: memref<512x512xbf16, #tpu.memory_space<vmem>>, %arg2: memref<512x128xbf16, #tpu.memory_space<vmem>>, %arg3: memref<1x128xf32, #tpu.memory_space<vmem>>, %arg4: memref<512x128xbf16, #tpu.memory_space<vmem>>) attributes {dimension_semantics = [#tpu.dimension_semantics<parallel>], iteration_bounds = array<i64: 1>, scalar_prefetch = 0 : i64, scratch_operands = 0 : i64, tpu.core_type = #tpu.core_type<tc>, window_params = [{transform_indices = @transform_0, window_bounds = array<i64: 512, 512>}, {pipeline_mode = #tpu.pipeline_mode<synchronous>, transform_indices = @transform_1, window_bounds = array<i64: 512, 128>}, {pipeline_mode = #tpu.pipeline_mode<synchronous>, transform_indices = @transform_2, window_bounds = array<i64: 1, 128>}, {transform_indices = @transform_3, window_bounds = array<i64: 512, 128>}]} {
    %c0 = arith.constant 0 : index
    %c0_0 = arith.constant 0 : index
    %0 = vector.load %arg1[%c0, %c0_0] : memref<512x512xbf16, #tpu.memory_space<vmem>>, vector<512x512xbf16>
    %c0_1 = arith.constant 0 : index
    %c0_2 = arith.constant 0 : index
    %1 = vector.load %arg2[%c0_1, %c0_2] : memref<512x128xbf16, #tpu.memory_space<vmem>>, vector<512x128xbf16>
    %cst = arith.constant dense<0.000000e+00> : vector<512x128xf32>
    %2 = tpu.matmul %0, %1, %cst {dimension_numbers = #tpu.dot_dimension_numbers<[1], [0], [0], [1], [0, 0, 1, 1], [], []>} : vector<512x512xbf16>, vector<512x128xbf16>, vector<512x128xf32> -> vector<512x128xf32>
    %c0_3 = arith.constant 0 : index
    %c0_4 = arith.constant 0 : index
    %3 = vector.load %arg3[%c0_3, %c0_4] : memref<1x128xf32, #tpu.memory_space<vmem>>, vector<1x128xf32>
    %4 = vector.broadcast %3 : vector<1x128xf32> to vector<512x128xf32>
    %5 = arith.addf %2, %4 : vector<512x128xf32>
    %cst_5 = arith.constant 0.000000e+00 : f32
    %6 = vector.broadcast %cst_5 : f32 to vector<512x128xf32>
    %7 = arith.maximumf %5, %6 : vector<512x128xf32>
    %8 = arith.truncf %7 : vector<512x128xf32> to vector<512x128xbf16>
    %c0_6 = arith.constant 0 : index
    %c0_7 = arith.constant 0 : index
    %9 = vector.load %arg4[%c0_6, %c0_7] : memref<512x128xbf16, #tpu.memory_space<vmem>>, vector<512x128xbf16>
    tpu.vector_store %arg4[%c0_6, %c0_7], %8 {strides = array<i32>} : memref<512x128xbf16, #tpu.memory_space<vmem>>, vector<512x128xbf16>,
    return
  }
  func.func @transform_0(%arg0: i32) -> (i32, i32) {
    %c0_i32 = arith.constant 0 : i32
    %c0_i32_0 = arith.constant 0 : i32
    return %arg0, %c0_i32 : i32, i32
  }
  func.func @transform_1(%arg0: i32) -> (i32, i32) {
    %c0_i32 = arith.constant 0 : i32
    %c0_i32_0 = arith.constant 0 : i32
    %c0_i32_1 = arith.constant 0 : i32
    return %c0_i32, %c0_i32_0 : i32, i32
  }
  func.func @transform_2(%arg0: i32) -> (i32, i32) {
    %c0_i32 = arith.constant 0 : i32
    %c0_i32_0 = arith.constant 0 : i32
    %c0_i32_1 = arith.constant 0 : i32
    return %c0_i32, %c0_i32_0 : i32, i32
  }
  func.func @transform_3(%arg0: i32) -> (i32, i32) {
    %c0_i32 = arith.constant 0 : i32
    %c0_i32_0 = arith.constant 0 : i32
    return %arg0, %c0_i32 : i32, i32
  }
}

module attributes {stable_mosaic.version = 11 : i64} {
  func.func @_fused_mm_kernel(%arg0: i32, %arg1: memref<128x128xbf16, #tpu.memory_space<vmem>>, %arg2: memref<128x128xbf16, #tpu.memory_space<vmem>>, %arg3: memref<1x128xf32, #tpu.memory_space<vmem>>, %arg4: memref<128x128xbf16, #tpu.memory_space<vmem>>) attributes {dimension_semantics = [#tpu.dimension_semantics<parallel>], iteration_bounds = array<i64: 1>, scalar_prefetch = 0 : i64, scratch_operands = 0 : i64, tpu.core_type = #tpu.core_type<tc>, window_params = [{transform_indices = @transform_0, window_bounds = array<i64: 128, 128>}, {pipeline_mode = #tpu.pipeline_mode<synchronous>, transform_indices = @transform_1, window_bounds = array<i64: 128, 128>}, {pipeline_mode = #tpu.pipeline_mode<synchronous>, transform_indices = @transform_2, window_bounds = array<i64: 1, 128>}, {transform_indices = @transform_3, window_bounds = array<i64: 128, 128>}]} {
    %c0 = arith.constant 0 : index
    %c0_0 = arith.constant 0 : index
    %0 = vector.load %arg1[%c0, %c0_0] : memref<128x128xbf16, #tpu.memory_space<vmem>>, vector<128x128xbf16>
    %c0_1 = arith.constant 0 : index
    %c0_2 = arith.constant 0 : index
    %1 = vector.load %arg2[%c0_1, %c0_2] : memref<128x128xbf16, #tpu.memory_space<vmem>>, vector<128x128xbf16>
    %cst = arith.constant dense<0.000000e+00> : vector<128x128xf32>
    %2 = tpu.matmul %0, %1, %cst {dimension_numbers = #tpu.dot_dimension_numbers<[1], [0], [0], [1], [0, 0, 1, 1], [], []>} : vector<128x128xbf16>, vector<128x128xbf16>, vector<128x128xf32> -> vector<128x128xf32>
    %c0_3 = arith.constant 0 : index
    %c0_4 = arith.constant 0 : index
    %3 = vector.load %arg3[%c0_3, %c0_4] : memref<1x128xf32, #tpu.memory_space<vmem>>, vector<1x128xf32>
    %4 = vector.broadcast %3 : vector<1x128xf32> to vector<128x128xf32>
    %5 = arith.addf %2, %4 : vector<128x128xf32>
    %cst_5 = arith.constant 0.000000e+00 : f32
    %6 = vector.broadcast %cst_5 : f32 to vector<128x128xf32>
    %7 = arith.maximumf %5, %6 : vector<128x128xf32>
    %8 = arith.truncf %7 : vector<128x128xf32> to vector<128x128xbf16>
    %c0_6 = arith.constant 0 : index
    %c0_7 = arith.constant 0 : index
    %9 = vector.load %arg4[%c0_6, %c0_7] : memref<128x128xbf16, #tpu.memory_space<vmem>>, vector<128x128xbf16>
    tpu.vector_store %arg4[%c0_6, %c0_7], %8 {strides = array<i32>} : memref<128x128xbf16, #tpu.memory_space<vmem>>, vector<128x128xbf16>,
    return
  }
  func.func @transform_0(%arg0: i32) -> (i32, i32) {
    %c0_i32 = arith.constant 0 : i32
    %c0_i32_0 = arith.constant 0 : i32
    return %arg0, %c0_i32 : i32, i32
  }
  func.func @transform_1(%arg0: i32) -> (i32, i32) {
    %c0_i32 = arith.constant 0 : i32
    %c0_i32_0 = arith.constant 0 : i32
    %c0_i32_1 = arith.constant 0 : i32
    return %c0_i32, %c0_i32_0 : i32, i32
  }
  func.func @transform_2(%arg0: i32) -> (i32, i32) {
    %c0_i32 = arith.constant 0 : i32
    %c0_i32_0 = arith.constant 0 : i32
    %c0_i32_1 = arith.constant 0 : i32
    return %c0_i32, %c0_i32_0 : i32, i32
  }
  func.func @transform_3(%arg0: i32) -> (i32, i32) {
    %c0_i32 = arith.constant 0 : i32
    %c0_i32_0 = arith.constant 0 : i32
    return %arg0, %c0_i32 : i32, i32
  }
}

module attributes {stable_mosaic.version = 11 : i64} {
  func.func @_fused_mm_kernel(%arg0: i32, %arg1: memref<128x128xbf16, #tpu.memory_space<vmem>>, %arg2: memref<128x128xbf16, #tpu.memory_space<vmem>>, %arg3: memref<1x128xf32, #tpu.memory_space<vmem>>, %arg4: memref<128x128xbf16, #tpu.memory_space<vmem>>, %arg5: memref<128x128xbf16, #tpu.memory_space<vmem>>) attributes {dimension_semantics = [#tpu.dimension_semantics<parallel>], iteration_bounds = array<i64: 1>, scalar_prefetch = 0 : i64, scratch_operands = 0 : i64, tpu.core_type = #tpu.core_type<tc>, window_params = [{transform_indices = @transform_0, window_bounds = array<i64: 128, 128>}, {pipeline_mode = #tpu.pipeline_mode<synchronous>, transform_indices = @transform_1, window_bounds = array<i64: 128, 128>}, {pipeline_mode = #tpu.pipeline_mode<synchronous>, transform_indices = @transform_2, window_bounds = array<i64: 1, 128>}, {transform_indices = @transform_3, window_bounds = array<i64: 128, 128>}, {transform_indices = @transform_4, window_bounds = array<i64: 128, 128>}]} {
    %c0 = arith.constant 0 : index
    %c0_0 = arith.constant 0 : index
    %0 = vector.load %arg1[%c0, %c0_0] : memref<128x128xbf16, #tpu.memory_space<vmem>>, vector<128x128xbf16>
    %c0_1 = arith.constant 0 : index
    %c0_2 = arith.constant 0 : index
    %1 = vector.load %arg2[%c0_1, %c0_2] : memref<128x128xbf16, #tpu.memory_space<vmem>>, vector<128x128xbf16>
    %cst = arith.constant dense<0.000000e+00> : vector<128x128xf32>
    %2 = tpu.matmul %0, %1, %cst {dimension_numbers = #tpu.dot_dimension_numbers<[1], [0], [0], [1], [0, 0, 1, 1], [], []>} : vector<128x128xbf16>, vector<128x128xbf16>, vector<128x128xf32> -> vector<128x128xf32>
    %c0_3 = arith.constant 0 : index
    %c0_4 = arith.constant 0 : index
    %3 = vector.load %arg3[%c0_3, %c0_4] : memref<1x128xf32, #tpu.memory_space<vmem>>, vector<1x128xf32>
    %4 = vector.broadcast %3 : vector<1x128xf32> to vector<128x128xf32>
    %5 = arith.addf %2, %4 : vector<128x128xf32>
    %c0_5 = arith.constant 0 : index
    %c0_6 = arith.constant 0 : index
    %6 = vector.load %arg4[%c0_5, %c0_6] : memref<128x128xbf16, #tpu.memory_space<vmem>>, vector<128x128xbf16>
    %7 = arith.extf %6 : vector<128x128xbf16> to vector<128x128xf32>
    %8 = arith.addf %5, %7 : vector<128x128xf32>
    %cst_7 = arith.constant 0.000000e+00 : f32
    %9 = vector.broadcast %cst_7 : f32 to vector<128x128xf32>
    %10 = arith.maximumf %8, %9 : vector<128x128xf32>
    %11 = arith.truncf %10 : vector<128x128xf32> to vector<128x128xbf16>
    %c0_8 = arith.constant 0 : index
    %c0_9 = arith.constant 0 : index
    %12 = vector.load %arg5[%c0_8, %c0_9] : memref<128x128xbf16, #tpu.memory_space<vmem>>, vector<128x128xbf16>
    tpu.vector_store %arg5[%c0_8, %c0_9], %11 {strides = array<i32>} : memref<128x128xbf16, #tpu.memory_space<vmem>>, vector<128x128xbf16>,
    return
  }
  func.func @transform_0(%arg0: i32) -> (i32, i32) {
    %c0_i32 = arith.constant 0 : i32
    %c0_i32_0 = arith.constant 0 : i32
    return %arg0, %c0_i32 : i32, i32
  }
  func.func @transform_1(%arg0: i32) -> (i32, i32) {
    %c0_i32 = arith.constant 0 : i32
    %c0_i32_0 = arith.constant 0 : i32
    %c0_i32_1 = arith.constant 0 : i32
    return %c0_i32, %c0_i32_0 : i32, i32
  }
  func.func @transform_2(%arg0: i32) -> (i32, i32) {
    %c0_i32 = arith.constant 0 : i32
    %c0_i32_0 = arith.constant 0 : i32
    %c0_i32_1 = arith.constant 0 : i32
    return %c0_i32, %c0_i32_0 : i32, i32
  }
  func.func @transform_3(%arg0: i32) -> (i32, i32) {
    %c0_i32 = arith.constant 0 : i32
    %c0_i32_0 = arith.constant 0 : i32
    return %arg0, %c0_i32 : i32, i32
  }
  func.func @transform_4(%arg0: i32) -> (i32, i32) {
    %c0_i32 = arith.constant 0 : i32
    %c0_i32_0 = arith.constant 0 : i32
    return %arg0, %c0_i32 : i32, i32
  }
}

module attributes {stable_mosaic.version = 11 : i64} {
  func.func @_fused_mm_kernel(%arg0: i32, %arg1: memref<32x128xbf16, #tpu.memory_space<vmem>>, %arg2: memref<128x128xbf16, #tpu.memory_space<vmem>>, %arg3: memref<1x128xf32, #tpu.memory_space<vmem>>, %arg4: memref<32x128xbf16, #tpu.memory_space<vmem>>) attributes {dimension_semantics = [#tpu.dimension_semantics<parallel>], iteration_bounds = array<i64: 1>, scalar_prefetch = 0 : i64, scratch_operands = 0 : i64, tpu.core_type = #tpu.core_type<tc>, window_params = [{transform_indices = @transform_0, window_bounds = array<i64: 32, 128>}, {pipeline_mode = #tpu.pipeline_mode<synchronous>, transform_indices = @transform_1, window_bounds = array<i64: 128, 128>}, {pipeline_mode = #tpu.pipeline_mode<synchronous>, transform_indices = @transform_2, window_bounds = array<i64: 1, 128>}, {transform_indices = @transform_3, window_bounds = array<i64: 32, 128>}]} {
    %c0 = arith.constant 0 : index
    %c0_0 = arith.constant 0 : index
    %0 = vector.load %arg1[%c0, %c0_0] : memref<32x128xbf16, #tpu.memory_space<vmem>>, vector<32x128xbf16>
    %c0_1 = arith.constant 0 : index
    %c0_2 = arith.constant 0 : index
    %1 = vector.load %arg2[%c0_1, %c0_2] : memref<128x128xbf16, #tpu.memory_space<vmem>>, vector<128x128xbf16>
    %cst = arith.constant dense<0.000000e+00> : vector<32x128xf32>
    %2 = tpu.matmul %0, %1, %cst {dimension_numbers = #tpu.dot_dimension_numbers<[1], [0], [0], [1], [0, 0, 1, 1], [], []>} : vector<32x128xbf16>, vector<128x128xbf16>, vector<32x128xf32> -> vector<32x128xf32>
    %c0_3 = arith.constant 0 : index
    %c0_4 = arith.constant 0 : index
    %3 = vector.load %arg3[%c0_3, %c0_4] : memref<1x128xf32, #tpu.memory_space<vmem>>, vector<1x128xf32>
    %4 = vector.broadcast %3 : vector<1x128xf32> to vector<32x128xf32>
    %5 = arith.addf %2, %4 : vector<32x128xf32>
    %cst_5 = arith.constant 0.000000e+00 : f32
    %6 = vector.broadcast %cst_5 : f32 to vector<32x128xf32>
    %7 = arith.maximumf %5, %6 : vector<32x128xf32>
    %8 = arith.truncf %7 : vector<32x128xf32> to vector<32x128xbf16>
    %c0_6 = arith.constant 0 : index
    %c0_7 = arith.constant 0 : index
    %9 = vector.load %arg4[%c0_6, %c0_7] : memref<32x128xbf16, #tpu.memory_space<vmem>>, vector<32x128xbf16>
    tpu.vector_store %arg4[%c0_6, %c0_7], %8 {strides = array<i32>} : memref<32x128xbf16, #tpu.memory_space<vmem>>, vector<32x128xbf16>,
    return
  }
  func.func @transform_0(%arg0: i32) -> (i32, i32) {
    %c0_i32 = arith.constant 0 : i32
    %c0_i32_0 = arith.constant 0 : i32
    return %arg0, %c0_i32 : i32, i32
  }
  func.func @transform_1(%arg0: i32) -> (i32, i32) {
    %c0_i32 = arith.constant 0 : i32
    %c0_i32_0 = arith.constant 0 : i32
    %c0_i32_1 = arith.constant 0 : i32
    return %c0_i32, %c0_i32_0 : i32, i32
  }
  func.func @transform_2(%arg0: i32) -> (i32, i32) {
    %c0_i32 = arith.constant 0 : i32
    %c0_i32_0 = arith.constant 0 : i32
    %c0_i32_1 = arith.constant 0 : i32
    return %c0_i32, %c0_i32_0 : i32, i32
  }
  func.func @transform_3(%arg0: i32) -> (i32, i32) {
    %c0_i32 = arith.constant 0 : i32
    %c0_i32_0 = arith.constant 0 : i32
    return %arg0, %c0_i32 : i32, i32
  }
}

module attributes {stable_mosaic.version = 11 : i64} {
  func.func @_fused_mm_kernel(%arg0: i32, %arg1: memref<32x256xbf16, #tpu.memory_space<vmem>>, %arg2: memref<256x128xbf16, #tpu.memory_space<vmem>>, %arg3: memref<32x8xbf16, #tpu.memory_space<vmem>>, %arg4: memref<8x128xbf16, #tpu.memory_space<vmem>>, %arg5: memref<1x128xf32, #tpu.memory_space<vmem>>, %arg6: memref<32x128xbf16, #tpu.memory_space<vmem>>) attributes {dimension_semantics = [#tpu.dimension_semantics<parallel>], iteration_bounds = array<i64: 1>, scalar_prefetch = 0 : i64, scratch_operands = 0 : i64, tpu.core_type = #tpu.core_type<tc>, window_params = [{transform_indices = @transform_0, window_bounds = array<i64: 32, 256>}, {pipeline_mode = #tpu.pipeline_mode<synchronous>, transform_indices = @transform_1, window_bounds = array<i64: 256, 128>}, {transform_indices = @transform_2, window_bounds = array<i64: 32, 8>}, {pipeline_mode = #tpu.pipeline_mode<synchronous>, transform_indices = @transform_3, window_bounds = array<i64: 8, 128>}, {pipeline_mode = #tpu.pipeline_mode<synchronous>, transform_indices = @transform_4, window_bounds = array<i64: 1, 128>}, {transform_indices = @transform_5, window_bounds = array<i64: 32, 128>}]} {
    %c0 = arith.constant 0 : index
    %c0_0 = arith.constant 0 : index
    %0 = vector.load %arg1[%c0, %c0_0] : memref<32x256xbf16, #tpu.memory_space<vmem>>, vector<32x256xbf16>
    %c0_1 = arith.constant 0 : index
    %c0_2 = arith.constant 0 : index
    %1 = vector.load %arg2[%c0_1, %c0_2] : memref<256x128xbf16, #tpu.memory_space<vmem>>, vector<256x128xbf16>
    %cst = arith.constant dense<0.000000e+00> : vector<32x128xf32>
    %2 = tpu.matmul %0, %1, %cst {dimension_numbers = #tpu.dot_dimension_numbers<[1], [0], [0], [1], [0, 0, 1, 1], [], []>} : vector<32x256xbf16>, vector<256x128xbf16>, vector<32x128xf32> -> vector<32x128xf32>
    %c0_3 = arith.constant 0 : index
    %c0_4 = arith.constant 0 : index
    %3 = vector.load %arg3[%c0_3, %c0_4] : memref<32x8xbf16, #tpu.memory_space<vmem>>, vector<32x8xbf16>
    %c0_5 = arith.constant 0 : index
    %c0_6 = arith.constant 0 : index
    %4 = vector.load %arg4[%c0_5, %c0_6] : memref<8x128xbf16, #tpu.memory_space<vmem>>, vector<8x128xbf16>
    %cst_7 = arith.constant dense<0.000000e+00> : vector<32x128xf32>
    %5 = tpu.matmul %3, %4, %cst_7 {dimension_numbers = #tpu.dot_dimension_numbers<[1], [0], [0], [1], [0, 0, 1, 1], [], []>} : vector<32x8xbf16>, vector<8x128xbf16>, vector<32x128xf32> -> vector<32x128xf32>
    %6 = arith.addf %2, %5 : vector<32x128xf32>
    %c0_8 = arith.constant 0 : index
    %c0_9 = arith.constant 0 : index
    %7 = vector.load %arg5[%c0_8, %c0_9] : memref<1x128xf32, #tpu.memory_space<vmem>>, vector<1x128xf32>
    %8 = vector.broadcast %7 : vector<1x128xf32> to vector<32x128xf32>
    %9 = arith.addf %6, %8 : vector<32x128xf32>
    %cst_10 = arith.constant 0.000000e+00 : f32
    %10 = vector.broadcast %cst_10 : f32 to vector<32x128xf32>
    %11 = arith.maximumf %9, %10 : vector<32x128xf32>
    %12 = arith.truncf %11 : vector<32x128xf32> to vector<32x128xbf16>
    %c0_11 = arith.constant 0 : index
    %c0_12 = arith.constant 0 : index
    %13 = vector.load %arg6[%c0_11, %c0_12] : memref<32x128xbf16, #tpu.memory_space<vmem>>, vector<32x128xbf16>
    tpu.vector_store %arg6[%c0_11, %c0_12], %12 {strides = array<i32>} : memref<32x128xbf16, #tpu.memory_space<vmem>>, vector<32x128xbf16>,
    return
  }
  func.func @transform_0(%arg0: i32) -> (i32, i32) {
    %c0_i32 = arith.constant 0 : i32
    %c0_i32_0 = arith.constant 0 : i32
    return %arg0, %c0_i32 : i32, i32
  }
  func.func @transform_1(%arg0: i32) -> (i32, i32) {
    %c0_i32 = arith.constant 0 : i32
    %c0_i32_0 = arith.constant 0 : i32
    %c0_i32_1 = arith.constant 0 : i32
    return %c0_i32, %c0_i32_0 : i32, i32
  }
  func.func @transform_2(%arg0: i32) -> (i32, i32) {
    %c0_i32 = arith.constant 0 : i32
    %c0_i32_0 = arith.constant 0 : i32
    return %arg0, %c0_i32 : i32, i32
  }
  func.func @transform_3(%arg0: i32) -> (i32, i32) {
    %c0_i32 = arith.constant 0 : i32
    %c0_i32_0 = arith.constant 0 : i32
    %c0_i32_1 = arith.constant 0 : i32
    return %c0_i32, %c0_i32_0 : i32, i32
  }
  func.func @transform_4(%arg0: i32) -> (i32, i32) {
    %c0_i32 = arith.constant 0 : i32
    %c0_i32_0 = arith.constant 0 : i32
    %c0_i32_1 = arith.constant 0 : i32
    return %c0_i32, %c0_i32_0 : i32, i32
  }
  func.func @transform_5(%arg0: i32) -> (i32, i32) {
    %c0_i32 = arith.constant 0 : i32
    %c0_i32_0 = arith.constant 0 : i32
    return %arg0, %c0_i32 : i32, i32
  }
}

module attributes {stable_mosaic.version = 11 : i64} {
  func.func @_fused_mm_kernel(%arg0: i32, %arg1: memref<8x256xbf16, #tpu.memory_space<vmem>>, %arg2: memref<256x128xbf16, #tpu.memory_space<vmem>>, %arg3: memref<1x128xf32, #tpu.memory_space<vmem>>, %arg4: memref<8x128xbf16, #tpu.memory_space<vmem>>) attributes {dimension_semantics = [#tpu.dimension_semantics<parallel>], iteration_bounds = array<i64: 1>, scalar_prefetch = 0 : i64, scratch_operands = 0 : i64, tpu.core_type = #tpu.core_type<tc>, window_params = [{transform_indices = @transform_0, window_bounds = array<i64: 8, 256>}, {pipeline_mode = #tpu.pipeline_mode<synchronous>, transform_indices = @transform_1, window_bounds = array<i64: 256, 128>}, {pipeline_mode = #tpu.pipeline_mode<synchronous>, transform_indices = @transform_2, window_bounds = array<i64: 1, 128>}, {transform_indices = @transform_3, window_bounds = array<i64: 8, 128>}]} {
    %c0 = arith.constant 0 : index
    %c0_0 = arith.constant 0 : index
    %0 = vector.load %arg1[%c0, %c0_0] : memref<8x256xbf16, #tpu.memory_space<vmem>>, vector<8x256xbf16>
    %c0_1 = arith.constant 0 : index
    %c0_2 = arith.constant 0 : index
    %1 = vector.load %arg2[%c0_1, %c0_2] : memref<256x128xbf16, #tpu.memory_space<vmem>>, vector<256x128xbf16>
    %cst = arith.constant dense<0.000000e+00> : vector<8x128xf32>
    %2 = tpu.matmul %0, %1, %cst {dimension_numbers = #tpu.dot_dimension_numbers<[1], [0], [0], [1], [0, 0, 1, 1], [], []>} : vector<8x256xbf16>, vector<256x128xbf16>, vector<8x128xf32> -> vector<8x128xf32>
    %c0_3 = arith.constant 0 : index
    %c0_4 = arith.constant 0 : index
    %3 = vector.load %arg3[%c0_3, %c0_4] : memref<1x128xf32, #tpu.memory_space<vmem>>, vector<1x128xf32>
    %4 = vector.broadcast %3 : vector<1x128xf32> to vector<8x128xf32>
    %5 = arith.addf %2, %4 : vector<8x128xf32>
    %cst_5 = arith.constant 0.000000e+00 : f32
    %6 = vector.broadcast %cst_5 : f32 to vector<8x128xf32>
    %7 = arith.maximumf %5, %6 : vector<8x128xf32>
    %8 = arith.truncf %7 : vector<8x128xf32> to vector<8x128xbf16>
    %c0_6 = arith.constant 0 : index
    %c0_7 = arith.constant 0 : index
    %9 = vector.load %arg4[%c0_6, %c0_7] : memref<8x128xbf16, #tpu.memory_space<vmem>>, vector<8x128xbf16>
    tpu.vector_store %arg4[%c0_6, %c0_7], %8 {strides = array<i32>} : memref<8x128xbf16, #tpu.memory_space<vmem>>, vector<8x128xbf16>,
    return
  }
  func.func @transform_0(%arg0: i32) -> (i32, i32) {
    %c0_i32 = arith.constant 0 : i32
    %c0_i32_0 = arith.constant 0 : i32
    return %arg0, %c0_i32 : i32, i32
  }
  func.func @transform_1(%arg0: i32) -> (i32, i32) {
    %c0_i32 = arith.constant 0 : i32
    %c0_i32_0 = arith.constant 0 : i32
    %c0_i32_1 = arith.constant 0 : i32
    return %c0_i32, %c0_i32_0 : i32, i32
  }
  func.func @transform_2(%arg0: i32) -> (i32, i32) {
    %c0_i32 = arith.constant 0 : i32
    %c0_i32_0 = arith.constant 0 : i32
    %c0_i32_1 = arith.constant 0 : i32
    return %c0_i32, %c0_i32_0 : i32, i32
  }
  func.func @transform_3(%arg0: i32) -> (i32, i32) {
    %c0_i32 = arith.constant 0 : i32
    %c0_i32_0 = arith.constant 0 : i32
    return %arg0, %c0_i32 : i32, i32
  }
}

module attributes {stable_mosaic.version = 11 : i64} {
  func.func @_fused_mm_kernel(%arg0: i32, %arg1: memref<8x384xbf16, #tpu.memory_space<vmem>>, %arg2: memref<384x128xbf16, #tpu.memory_space<vmem>>, %arg3: memref<8x16xbf16, #tpu.memory_space<vmem>>, %arg4: memref<16x128xbf16, #tpu.memory_space<vmem>>, %arg5: memref<1x128xf32, #tpu.memory_space<vmem>>, %arg6: memref<8x128xbf16, #tpu.memory_space<vmem>>) attributes {dimension_semantics = [#tpu.dimension_semantics<parallel>], iteration_bounds = array<i64: 1>, scalar_prefetch = 0 : i64, scratch_operands = 0 : i64, tpu.core_type = #tpu.core_type<tc>, window_params = [{transform_indices = @transform_0, window_bounds = array<i64: 8, 384>}, {pipeline_mode = #tpu.pipeline_mode<synchronous>, transform_indices = @transform_1, window_bounds = array<i64: 384, 128>}, {transform_indices = @transform_2, window_bounds = array<i64: 8, 16>}, {pipeline_mode = #tpu.pipeline_mode<synchronous>, transform_indices = @transform_3, window_bounds = array<i64: 16, 128>}, {pipeline_mode = #tpu.pipeline_mode<synchronous>, transform_indices = @transform_4, window_bounds = array<i64: 1, 128>}, {transform_indices = @transform_5, window_bounds = array<i64: 8, 128>}]} {
    %c0 = arith.constant 0 : index
    %c0_0 = arith.constant 0 : index
    %0 = vector.load %arg1[%c0, %c0_0] : memref<8x384xbf16, #tpu.memory_space<vmem>>, vector<8x384xbf16>
    %c0_1 = arith.constant 0 : index
    %c0_2 = arith.constant 0 : index
    %1 = vector.load %arg2[%c0_1, %c0_2] : memref<384x128xbf16, #tpu.memory_space<vmem>>, vector<384x128xbf16>
    %cst = arith.constant dense<0.000000e+00> : vector<8x128xf32>
    %2 = tpu.matmul %0, %1, %cst {dimension_numbers = #tpu.dot_dimension_numbers<[1], [0], [0], [1], [0, 0, 1, 1], [], []>} : vector<8x384xbf16>, vector<384x128xbf16>, vector<8x128xf32> -> vector<8x128xf32>
    %c0_3 = arith.constant 0 : index
    %c0_4 = arith.constant 0 : index
    %3 = vector.load %arg3[%c0_3, %c0_4] : memref<8x16xbf16, #tpu.memory_space<vmem>>, vector<8x16xbf16>
    %c0_5 = arith.constant 0 : index
    %c0_6 = arith.constant 0 : index
    %4 = vector.load %arg4[%c0_5, %c0_6] : memref<16x128xbf16, #tpu.memory_space<vmem>>, vector<16x128xbf16>
    %cst_7 = arith.constant dense<0.000000e+00> : vector<8x128xf32>
    %5 = tpu.matmul %3, %4, %cst_7 {dimension_numbers = #tpu.dot_dimension_numbers<[1], [0], [0], [1], [0, 0, 1, 1], [], []>} : vector<8x16xbf16>, vector<16x128xbf16>, vector<8x128xf32> -> vector<8x128xf32>
    %6 = arith.addf %2, %5 : vector<8x128xf32>
    %c0_8 = arith.constant 0 : index
    %c0_9 = arith.constant 0 : index
    %7 = vector.load %arg5[%c0_8, %c0_9] : memref<1x128xf32, #tpu.memory_space<vmem>>, vector<1x128xf32>
    %8 = vector.broadcast %7 : vector<1x128xf32> to vector<8x128xf32>
    %9 = arith.addf %6, %8 : vector<8x128xf32>
    %cst_10 = arith.constant 0.000000e+00 : f32
    %10 = vector.broadcast %cst_10 : f32 to vector<8x128xf32>
    %11 = arith.maximumf %9, %10 : vector<8x128xf32>
    %12 = arith.truncf %11 : vector<8x128xf32> to vector<8x128xbf16>
    %c0_11 = arith.constant 0 : index
    %c0_12 = arith.constant 0 : index
    %13 = vector.load %arg6[%c0_11, %c0_12] : memref<8x128xbf16, #tpu.memory_space<vmem>>, vector<8x128xbf16>
    tpu.vector_store %arg6[%c0_11, %c0_12], %12 {strides = array<i32>} : memref<8x128xbf16, #tpu.memory_space<vmem>>, vector<8x128xbf16>,
    return
  }
  func.func @transform_0(%arg0: i32) -> (i32, i32) {
    %c0_i32 = arith.constant 0 : i32
    %c0_i32_0 = arith.constant 0 : i32
    return %arg0, %c0_i32 : i32, i32
  }
  func.func @transform_1(%arg0: i32) -> (i32, i32) {
    %c0_i32 = arith.constant 0 : i32
    %c0_i32_0 = arith.constant 0 : i32
    %c0_i32_1 = arith.constant 0 : i32
    return %c0_i32, %c0_i32_0 : i32, i32
  }
  func.func @transform_2(%arg0: i32) -> (i32, i32) {
    %c0_i32 = arith.constant 0 : i32
    %c0_i32_0 = arith.constant 0 : i32
    return %arg0, %c0_i32 : i32, i32
  }
  func.func @transform_3(%arg0: i32) -> (i32, i32) {
    %c0_i32 = arith.constant 0 : i32
    %c0_i32_0 = arith.constant 0 : i32
    %c0_i32_1 = arith.constant 0 : i32
    return %c0_i32, %c0_i32_0 : i32, i32
  }
  func.func @transform_4(%arg0: i32) -> (i32, i32) {
    %c0_i32 = arith.constant 0 : i32
    %c0_i32_0 = arith.constant 0 : i32
    %c0_i32_1 = arith.constant 0 : i32
    return %c0_i32, %c0_i32_0 : i32, i32
  }
  func.func @transform_5(%arg0: i32) -> (i32, i32) {
    %c0_i32 = arith.constant 0 : i32
    %c0_i32_0 = arith.constant 0 : i32
    return %arg0, %c0_i32 : i32, i32
  }
}

module attributes {stable_mosaic.version = 11 : i64} {
  func.func @_fused_mm_kernel(%arg0: i32, %arg1: memref<2x384xbf16, #tpu.memory_space<vmem>>, %arg2: memref<384x128xbf16, #tpu.memory_space<vmem>>, %arg3: memref<1x128xf32, #tpu.memory_space<vmem>>, %arg4: memref<2x128xbf16, #tpu.memory_space<vmem>>) attributes {dimension_semantics = [#tpu.dimension_semantics<parallel>], iteration_bounds = array<i64: 1>, scalar_prefetch = 0 : i64, scratch_operands = 0 : i64, tpu.core_type = #tpu.core_type<tc>, window_params = [{transform_indices = @transform_0, window_bounds = array<i64: 2, 384>}, {pipeline_mode = #tpu.pipeline_mode<synchronous>, transform_indices = @transform_1, window_bounds = array<i64: 384, 128>}, {pipeline_mode = #tpu.pipeline_mode<synchronous>, transform_indices = @transform_2, window_bounds = array<i64: 1, 128>}, {transform_indices = @transform_3, window_bounds = array<i64: 2, 128>}]} {
    %c0 = arith.constant 0 : index
    %c0_0 = arith.constant 0 : index
    %0 = vector.load %arg1[%c0, %c0_0] : memref<2x384xbf16, #tpu.memory_space<vmem>>, vector<2x384xbf16>
    %c0_1 = arith.constant 0 : index
    %c0_2 = arith.constant 0 : index
    %1 = vector.load %arg2[%c0_1, %c0_2] : memref<384x128xbf16, #tpu.memory_space<vmem>>, vector<384x128xbf16>
    %cst = arith.constant dense<0.000000e+00> : vector<2x128xf32>
    %2 = tpu.matmul %0, %1, %cst {dimension_numbers = #tpu.dot_dimension_numbers<[1], [0], [0], [1], [0, 0, 1, 1], [], []>} : vector<2x384xbf16>, vector<384x128xbf16>, vector<2x128xf32> -> vector<2x128xf32>
    %c0_3 = arith.constant 0 : index
    %c0_4 = arith.constant 0 : index
    %3 = vector.load %arg3[%c0_3, %c0_4] : memref<1x128xf32, #tpu.memory_space<vmem>>, vector<1x128xf32>
    %4 = vector.broadcast %3 : vector<1x128xf32> to vector<2x128xf32>
    %5 = arith.addf %2, %4 : vector<2x128xf32>
    %cst_5 = arith.constant 0.000000e+00 : f32
    %6 = vector.broadcast %cst_5 : f32 to vector<2x128xf32>
    %7 = arith.maximumf %5, %6 : vector<2x128xf32>
    %8 = arith.truncf %7 : vector<2x128xf32> to vector<2x128xbf16>
    %c0_6 = arith.constant 0 : index
    %c0_7 = arith.constant 0 : index
    %9 = vector.load %arg4[%c0_6, %c0_7] : memref<2x128xbf16, #tpu.memory_space<vmem>>, vector<2x128xbf16>
    tpu.vector_store %arg4[%c0_6, %c0_7], %8 {strides = array<i32>} : memref<2x128xbf16, #tpu.memory_space<vmem>>, vector<2x128xbf16>,
    return
  }
  func.func @transform_0(%arg0: i32) -> (i32, i32) {
    %c0_i32 = arith.constant 0 : i32
    %c0_i32_0 = arith.constant 0 : i32
    return %arg0, %c0_i32 : i32, i32
  }
  func.func @transform_1(%arg0: i32) -> (i32, i32) {
    %c0_i32 = arith.constant 0 : i32
    %c0_i32_0 = arith.constant 0 : i32
    %c0_i32_1 = arith.constant 0 : i32
    return %c0_i32, %c0_i32_0 : i32, i32
  }
  func.func @transform_2(%arg0: i32) -> (i32, i32) {
    %c0_i32 = arith.constant 0 : i32
    %c0_i32_0 = arith.constant 0 : i32
    %c0_i32_1 = arith.constant 0 : i32
    return %c0_i32, %c0_i32_0 : i32, i32
  }
  func.func @transform_3(%arg0: i32) -> (i32, i32) {
    %c0_i32 = arith.constant 0 : i32
    %c0_i32_0 = arith.constant 0 : i32
    return %arg0, %c0_i32 : i32, i32
  }
}

module attributes {stable_mosaic.version = 11 : i64} {
  func.func @_fused_mm_kernel(%arg0: i32, %arg1: memref<2x640xbf16, #tpu.memory_space<vmem>>, %arg2: memref<640x128xbf16, #tpu.memory_space<vmem>>, %arg3: memref<2x32xbf16, #tpu.memory_space<vmem>>, %arg4: memref<32x128xbf16, #tpu.memory_space<vmem>>, %arg5: memref<1x128xf32, #tpu.memory_space<vmem>>, %arg6: memref<2x128xbf16, #tpu.memory_space<vmem>>) attributes {dimension_semantics = [#tpu.dimension_semantics<parallel>], iteration_bounds = array<i64: 1>, scalar_prefetch = 0 : i64, scratch_operands = 0 : i64, tpu.core_type = #tpu.core_type<tc>, window_params = [{transform_indices = @transform_0, window_bounds = array<i64: 2, 640>}, {pipeline_mode = #tpu.pipeline_mode<synchronous>, transform_indices = @transform_1, window_bounds = array<i64: 640, 128>}, {transform_indices = @transform_2, window_bounds = array<i64: 2, 32>}, {pipeline_mode = #tpu.pipeline_mode<synchronous>, transform_indices = @transform_3, window_bounds = array<i64: 32, 128>}, {pipeline_mode = #tpu.pipeline_mode<synchronous>, transform_indices = @transform_4, window_bounds = array<i64: 1, 128>}, {transform_indices = @transform_5, window_bounds = array<i64: 2, 128>}]} {
    %c0 = arith.constant 0 : index
    %c0_0 = arith.constant 0 : index
    %0 = vector.load %arg1[%c0, %c0_0] : memref<2x640xbf16, #tpu.memory_space<vmem>>, vector<2x640xbf16>
    %c0_1 = arith.constant 0 : index
    %c0_2 = arith.constant 0 : index
    %1 = vector.load %arg2[%c0_1, %c0_2] : memref<640x128xbf16, #tpu.memory_space<vmem>>, vector<640x128xbf16>
    %cst = arith.constant dense<0.000000e+00> : vector<2x128xf32>
    %2 = tpu.matmul %0, %1, %cst {dimension_numbers = #tpu.dot_dimension_numbers<[1], [0], [0], [1], [0, 0, 1, 1], [], []>} : vector<2x640xbf16>, vector<640x128xbf16>, vector<2x128xf32> -> vector<2x128xf32>
    %c0_3 = arith.constant 0 : index
    %c0_4 = arith.constant 0 : index
    %3 = vector.load %arg3[%c0_3, %c0_4] : memref<2x32xbf16, #tpu.memory_space<vmem>>, vector<2x32xbf16>
    %c0_5 = arith.constant 0 : index
    %c0_6 = arith.constant 0 : index
    %4 = vector.load %arg4[%c0_5, %c0_6] : memref<32x128xbf16, #tpu.memory_space<vmem>>, vector<32x128xbf16>
    %cst_7 = arith.constant dense<0.000000e+00> : vector<2x128xf32>
    %5 = tpu.matmul %3, %4, %cst_7 {dimension_numbers = #tpu.dot_dimension_numbers<[1], [0], [0], [1], [0, 0, 1, 1], [], []>} : vector<2x32xbf16>, vector<32x128xbf16>, vector<2x128xf32> -> vector<2x128xf32>
    %6 = arith.addf %2, %5 : vector<2x128xf32>
    %c0_8 = arith.constant 0 : index
    %c0_9 = arith.constant 0 : index
    %7 = vector.load %arg5[%c0_8, %c0_9] : memref<1x128xf32, #tpu.memory_space<vmem>>, vector<1x128xf32>
    %8 = vector.broadcast %7 : vector<1x128xf32> to vector<2x128xf32>
    %9 = arith.addf %6, %8 : vector<2x128xf32>
    %cst_10 = arith.constant 0.000000e+00 : f32
    %10 = vector.broadcast %cst_10 : f32 to vector<2x128xf32>
    %11 = arith.maximumf %9, %10 : vector<2x128xf32>
    %12 = arith.truncf %11 : vector<2x128xf32> to vector<2x128xbf16>
    %c0_11 = arith.constant 0 : index
    %c0_12 = arith.constant 0 : index
    %13 = vector.load %arg6[%c0_11, %c0_12] : memref<2x128xbf16, #tpu.memory_space<vmem>>, vector<2x128xbf16>
    tpu.vector_store %arg6[%c0_11, %c0_12], %12 {strides = array<i32>} : memref<2x128xbf16, #tpu.memory_space<vmem>>, vector<2x128xbf16>,
    return
  }
  func.func @transform_0(%arg0: i32) -> (i32, i32) {
    %c0_i32 = arith.constant 0 : i32
    %c0_i32_0 = arith.constant 0 : i32
    return %arg0, %c0_i32 : i32, i32
  }
  func.func @transform_1(%arg0: i32) -> (i32, i32) {
    %c0_i32 = arith.constant 0 : i32
    %c0_i32_0 = arith.constant 0 : i32
    %c0_i32_1 = arith.constant 0 : i32
    return %c0_i32, %c0_i32_0 : i32, i32
  }
  func.func @transform_2(%arg0: i32) -> (i32, i32) {
    %c0_i32 = arith.constant 0 : i32
    %c0_i32_0 = arith.constant 0 : i32
    return %arg0, %c0_i32 : i32, i32
  }
  func.func @transform_3(%arg0: i32) -> (i32, i32) {
    %c0_i32 = arith.constant 0 : i32
    %c0_i32_0 = arith.constant 0 : i32
    %c0_i32_1 = arith.constant 0 : i32
    return %c0_i32, %c0_i32_0 : i32, i32
  }
  func.func @transform_4(%arg0: i32) -> (i32, i32) {
    %c0_i32 = arith.constant 0 : i32
    %c0_i32_0 = arith.constant 0 : i32
    %c0_i32_1 = arith.constant 0 : i32
    return %c0_i32, %c0_i32_0 : i32, i32
  }
  func.func @transform_5(%arg0: i32) -> (i32, i32) {
    %c0_i32 = arith.constant 0 : i32
    %c0_i32_0 = arith.constant 0 : i32
    return %arg0, %c0_i32 : i32, i32
  }
}

module attributes {stable_mosaic.version = 11 : i64} {
  func.func @_fused_mm_kernel(%arg0: i32, %arg1: memref<8x640xbf16, #tpu.memory_space<vmem>>, %arg2: memref<640x128xbf16, #tpu.memory_space<vmem>>, %arg3: memref<8x384xbf16, #tpu.memory_space<vmem>>, %arg4: memref<384x128xbf16, #tpu.memory_space<vmem>>, %arg5: memref<1x128xf32, #tpu.memory_space<vmem>>, %arg6: memref<8x128xbf16, #tpu.memory_space<vmem>>) attributes {dimension_semantics = [#tpu.dimension_semantics<parallel>], iteration_bounds = array<i64: 1>, scalar_prefetch = 0 : i64, scratch_operands = 0 : i64, tpu.core_type = #tpu.core_type<tc>, window_params = [{transform_indices = @transform_0, window_bounds = array<i64: 8, 640>}, {pipeline_mode = #tpu.pipeline_mode<synchronous>, transform_indices = @transform_1, window_bounds = array<i64: 640, 128>}, {transform_indices = @transform_2, window_bounds = array<i64: 8, 384>}, {pipeline_mode = #tpu.pipeline_mode<synchronous>, transform_indices = @transform_3, window_bounds = array<i64: 384, 128>}, {pipeline_mode = #tpu.pipeline_mode<synchronous>, transform_indices = @transform_4, window_bounds = array<i64: 1, 128>}, {transform_indices = @transform_5, window_bounds = array<i64: 8, 128>}]} {
    %c0 = arith.constant 0 : index
    %c0_0 = arith.constant 0 : index
    %0 = vector.load %arg1[%c0, %c0_0] : memref<8x640xbf16, #tpu.memory_space<vmem>>, vector<8x640xbf16>
    %c0_1 = arith.constant 0 : index
    %c0_2 = arith.constant 0 : index
    %1 = vector.load %arg2[%c0_1, %c0_2] : memref<640x128xbf16, #tpu.memory_space<vmem>>, vector<640x128xbf16>
    %cst = arith.constant dense<0.000000e+00> : vector<8x128xf32>
    %2 = tpu.matmul %0, %1, %cst {dimension_numbers = #tpu.dot_dimension_numbers<[1], [0], [0], [1], [0, 0, 1, 1], [], []>} : vector<8x640xbf16>, vector<640x128xbf16>, vector<8x128xf32> -> vector<8x128xf32>
    %c0_3 = arith.constant 0 : index
    %c0_4 = arith.constant 0 : index
    %3 = vector.load %arg3[%c0_3, %c0_4] : memref<8x384xbf16, #tpu.memory_space<vmem>>, vector<8x384xbf16>
    %c0_5 = arith.constant 0 : index
    %c0_6 = arith.constant 0 : index
    %4 = vector.load %arg4[%c0_5, %c0_6] : memref<384x128xbf16, #tpu.memory_space<vmem>>, vector<384x128xbf16>
    %cst_7 = arith.constant dense<0.000000e+00> : vector<8x128xf32>
    %5 = tpu.matmul %3, %4, %cst_7 {dimension_numbers = #tpu.dot_dimension_numbers<[1], [0], [0], [1], [0, 0, 1, 1], [], []>} : vector<8x384xbf16>, vector<384x128xbf16>, vector<8x128xf32> -> vector<8x128xf32>
    %6 = arith.addf %2, %5 : vector<8x128xf32>
    %c0_8 = arith.constant 0 : index
    %c0_9 = arith.constant 0 : index
    %7 = vector.load %arg5[%c0_8, %c0_9] : memref<1x128xf32, #tpu.memory_space<vmem>>, vector<1x128xf32>
    %8 = vector.broadcast %7 : vector<1x128xf32> to vector<8x128xf32>
    %9 = arith.addf %6, %8 : vector<8x128xf32>
    %cst_10 = arith.constant 0.000000e+00 : f32
    %10 = vector.broadcast %cst_10 : f32 to vector<8x128xf32>
    %11 = arith.maximumf %9, %10 : vector<8x128xf32>
    %12 = arith.truncf %11 : vector<8x128xf32> to vector<8x128xbf16>
    %c0_11 = arith.constant 0 : index
    %c0_12 = arith.constant 0 : index
    %13 = vector.load %arg6[%c0_11, %c0_12] : memref<8x128xbf16, #tpu.memory_space<vmem>>, vector<8x128xbf16>
    tpu.vector_store %arg6[%c0_11, %c0_12], %12 {strides = array<i32>} : memref<8x128xbf16, #tpu.memory_space<vmem>>, vector<8x128xbf16>,
    return
  }
  func.func @transform_0(%arg0: i32) -> (i32, i32) {
    %c0_i32 = arith.constant 0 : i32
    %c0_i32_0 = arith.constant 0 : i32
    return %arg0, %c0_i32 : i32, i32
  }
  func.func @transform_1(%arg0: i32) -> (i32, i32) {
    %c0_i32 = arith.constant 0 : i32
    %c0_i32_0 = arith.constant 0 : i32
    %c0_i32_1 = arith.constant 0 : i32
    return %c0_i32, %c0_i32_0 : i32, i32
  }
  func.func @transform_2(%arg0: i32) -> (i32, i32) {
    %c0_i32 = arith.constant 0 : i32
    %c0_i32_0 = arith.constant 0 : i32
    return %arg0, %c0_i32 : i32, i32
  }
  func.func @transform_3(%arg0: i32) -> (i32, i32) {
    %c0_i32 = arith.constant 0 : i32
    %c0_i32_0 = arith.constant 0 : i32
    %c0_i32_1 = arith.constant 0 : i32
    return %c0_i32, %c0_i32_0 : i32, i32
  }
  func.func @transform_4(%arg0: i32) -> (i32, i32) {
    %c0_i32 = arith.constant 0 : i32
    %c0_i32_0 = arith.constant 0 : i32
    %c0_i32_1 = arith.constant 0 : i32
    return %c0_i32, %c0_i32_0 : i32, i32
  }
  func.func @transform_5(%arg0: i32) -> (i32, i32) {
    %c0_i32 = arith.constant 0 : i32
    %c0_i32_0 = arith.constant 0 : i32
    return %arg0, %c0_i32 : i32, i32
  }
}

module attributes {stable_mosaic.version = 11 : i64} {
  func.func @_fused_mm_kernel(%arg0: i32, %arg1: memref<32x384xbf16, #tpu.memory_space<vmem>>, %arg2: memref<384x128xbf16, #tpu.memory_space<vmem>>, %arg3: memref<32x256xbf16, #tpu.memory_space<vmem>>, %arg4: memref<256x128xbf16, #tpu.memory_space<vmem>>, %arg5: memref<1x128xf32, #tpu.memory_space<vmem>>, %arg6: memref<32x128xbf16, #tpu.memory_space<vmem>>) attributes {dimension_semantics = [#tpu.dimension_semantics<parallel>], iteration_bounds = array<i64: 1>, scalar_prefetch = 0 : i64, scratch_operands = 0 : i64, tpu.core_type = #tpu.core_type<tc>, window_params = [{transform_indices = @transform_0, window_bounds = array<i64: 32, 384>}, {pipeline_mode = #tpu.pipeline_mode<synchronous>, transform_indices = @transform_1, window_bounds = array<i64: 384, 128>}, {transform_indices = @transform_2, window_bounds = array<i64: 32, 256>}, {pipeline_mode = #tpu.pipeline_mode<synchronous>, transform_indices = @transform_3, window_bounds = array<i64: 256, 128>}, {pipeline_mode = #tpu.pipeline_mode<synchronous>, transform_indices = @transform_4, window_bounds = array<i64: 1, 128>}, {transform_indices = @transform_5, window_bounds = array<i64: 32, 128>}]} {
    %c0 = arith.constant 0 : index
    %c0_0 = arith.constant 0 : index
    %0 = vector.load %arg1[%c0, %c0_0] : memref<32x384xbf16, #tpu.memory_space<vmem>>, vector<32x384xbf16>
    %c0_1 = arith.constant 0 : index
    %c0_2 = arith.constant 0 : index
    %1 = vector.load %arg2[%c0_1, %c0_2] : memref<384x128xbf16, #tpu.memory_space<vmem>>, vector<384x128xbf16>
    %cst = arith.constant dense<0.000000e+00> : vector<32x128xf32>
    %2 = tpu.matmul %0, %1, %cst {dimension_numbers = #tpu.dot_dimension_numbers<[1], [0], [0], [1], [0, 0, 1, 1], [], []>} : vector<32x384xbf16>, vector<384x128xbf16>, vector<32x128xf32> -> vector<32x128xf32>
    %c0_3 = arith.constant 0 : index
    %c0_4 = arith.constant 0 : index
    %3 = vector.load %arg3[%c0_3, %c0_4] : memref<32x256xbf16, #tpu.memory_space<vmem>>, vector<32x256xbf16>
    %c0_5 = arith.constant 0 : index
    %c0_6 = arith.constant 0 : index
    %4 = vector.load %arg4[%c0_5, %c0_6] : memref<256x128xbf16, #tpu.memory_space<vmem>>, vector<256x128xbf16>
    %cst_7 = arith.constant dense<0.000000e+00> : vector<32x128xf32>
    %5 = tpu.matmul %3, %4, %cst_7 {dimension_numbers = #tpu.dot_dimension_numbers<[1], [0], [0], [1], [0, 0, 1, 1], [], []>} : vector<32x256xbf16>, vector<256x128xbf16>, vector<32x128xf32> -> vector<32x128xf32>
    %6 = arith.addf %2, %5 : vector<32x128xf32>
    %c0_8 = arith.constant 0 : index
    %c0_9 = arith.constant 0 : index
    %7 = vector.load %arg5[%c0_8, %c0_9] : memref<1x128xf32, #tpu.memory_space<vmem>>, vector<1x128xf32>
    %8 = vector.broadcast %7 : vector<1x128xf32> to vector<32x128xf32>
    %9 = arith.addf %6, %8 : vector<32x128xf32>
    %cst_10 = arith.constant 0.000000e+00 : f32
    %10 = vector.broadcast %cst_10 : f32 to vector<32x128xf32>
    %11 = arith.maximumf %9, %10 : vector<32x128xf32>
    %12 = arith.truncf %11 : vector<32x128xf32> to vector<32x128xbf16>
    %c0_11 = arith.constant 0 : index
    %c0_12 = arith.constant 0 : index
    %13 = vector.load %arg6[%c0_11, %c0_12] : memref<32x128xbf16, #tpu.memory_space<vmem>>, vector<32x128xbf16>
    tpu.vector_store %arg6[%c0_11, %c0_12], %12 {strides = array<i32>} : memref<32x128xbf16, #tpu.memory_space<vmem>>, vector<32x128xbf16>,
    return
  }
  func.func @transform_0(%arg0: i32) -> (i32, i32) {
    %c0_i32 = arith.constant 0 : i32
    %c0_i32_0 = arith.constant 0 : i32
    return %arg0, %c0_i32 : i32, i32
  }
  func.func @transform_1(%arg0: i32) -> (i32, i32) {
    %c0_i32 = arith.constant 0 : i32
    %c0_i32_0 = arith.constant 0 : i32
    %c0_i32_1 = arith.constant 0 : i32
    return %c0_i32, %c0_i32_0 : i32, i32
  }
  func.func @transform_2(%arg0: i32) -> (i32, i32) {
    %c0_i32 = arith.constant 0 : i32
    %c0_i32_0 = arith.constant 0 : i32
    return %arg0, %c0_i32 : i32, i32
  }
  func.func @transform_3(%arg0: i32) -> (i32, i32) {
    %c0_i32 = arith.constant 0 : i32
    %c0_i32_0 = arith.constant 0 : i32
    %c0_i32_1 = arith.constant 0 : i32
    return %c0_i32, %c0_i32_0 : i32, i32
  }
  func.func @transform_4(%arg0: i32) -> (i32, i32) {
    %c0_i32 = arith.constant 0 : i32
    %c0_i32_0 = arith.constant 0 : i32
    %c0_i32_1 = arith.constant 0 : i32
    return %c0_i32, %c0_i32_0 : i32, i32
  }
  func.func @transform_5(%arg0: i32) -> (i32, i32) {
    %c0_i32 = arith.constant 0 : i32
    %c0_i32_0 = arith.constant 0 : i32
    return %arg0, %c0_i32 : i32, i32
  }
}

module attributes {stable_mosaic.version = 11 : i64} {
  func.func @_fused_mm_kernel(%arg0: i32, %arg1: memref<128x384xbf16, #tpu.memory_space<vmem>>, %arg2: memref<384x128xbf16, #tpu.memory_space<vmem>>, %arg3: memref<128x128xbf16, #tpu.memory_space<vmem>>, %arg4: memref<128x128xbf16, #tpu.memory_space<vmem>>, %arg5: memref<1x128xf32, #tpu.memory_space<vmem>>, %arg6: memref<128x128xbf16, #tpu.memory_space<vmem>>) attributes {dimension_semantics = [#tpu.dimension_semantics<parallel>], iteration_bounds = array<i64: 1>, scalar_prefetch = 0 : i64, scratch_operands = 0 : i64, tpu.core_type = #tpu.core_type<tc>, window_params = [{transform_indices = @transform_0, window_bounds = array<i64: 128, 384>}, {pipeline_mode = #tpu.pipeline_mode<synchronous>, transform_indices = @transform_1, window_bounds = array<i64: 384, 128>}, {transform_indices = @transform_2, window_bounds = array<i64: 128, 128>}, {pipeline_mode = #tpu.pipeline_mode<synchronous>, transform_indices = @transform_3, window_bounds = array<i64: 128, 128>}, {pipeline_mode = #tpu.pipeline_mode<synchronous>, transform_indices = @transform_4, window_bounds = array<i64: 1, 128>}, {transform_indices = @transform_5, window_bounds = array<i64: 128, 128>}]} {
    %c0 = arith.constant 0 : index
    %c0_0 = arith.constant 0 : index
    %0 = vector.load %arg1[%c0, %c0_0] : memref<128x384xbf16, #tpu.memory_space<vmem>>, vector<128x384xbf16>
    %c0_1 = arith.constant 0 : index
    %c0_2 = arith.constant 0 : index
    %1 = vector.load %arg2[%c0_1, %c0_2] : memref<384x128xbf16, #tpu.memory_space<vmem>>, vector<384x128xbf16>
    %cst = arith.constant dense<0.000000e+00> : vector<128x128xf32>
    %2 = tpu.matmul %0, %1, %cst {dimension_numbers = #tpu.dot_dimension_numbers<[1], [0], [0], [1], [0, 0, 1, 1], [], []>} : vector<128x384xbf16>, vector<384x128xbf16>, vector<128x128xf32> -> vector<128x128xf32>
    %c0_3 = arith.constant 0 : index
    %c0_4 = arith.constant 0 : index
    %3 = vector.load %arg3[%c0_3, %c0_4] : memref<128x128xbf16, #tpu.memory_space<vmem>>, vector<128x128xbf16>
    %c0_5 = arith.constant 0 : index
    %c0_6 = arith.constant 0 : index
    %4 = vector.load %arg4[%c0_5, %c0_6] : memref<128x128xbf16, #tpu.memory_space<vmem>>, vector<128x128xbf16>
    %cst_7 = arith.constant dense<0.000000e+00> : vector<128x128xf32>
    %5 = tpu.matmul %3, %4, %cst_7 {dimension_numbers = #tpu.dot_dimension_numbers<[1], [0], [0], [1], [0, 0, 1, 1], [], []>} : vector<128x128xbf16>, vector<128x128xbf16>, vector<128x128xf32> -> vector<128x128xf32>
    %6 = arith.addf %2, %5 : vector<128x128xf32>
    %c0_8 = arith.constant 0 : index
    %c0_9 = arith.constant 0 : index
    %7 = vector.load %arg5[%c0_8, %c0_9] : memref<1x128xf32, #tpu.memory_space<vmem>>, vector<1x128xf32>
    %8 = vector.broadcast %7 : vector<1x128xf32> to vector<128x128xf32>
    %9 = arith.addf %6, %8 : vector<128x128xf32>
    %cst_10 = arith.constant 0.000000e+00 : f32
    %10 = vector.broadcast %cst_10 : f32 to vector<128x128xf32>
    %11 = arith.maximumf %9, %10 : vector<128x128xf32>
    %12 = arith.truncf %11 : vector<128x128xf32> to vector<128x128xbf16>
    %c0_11 = arith.constant 0 : index
    %c0_12 = arith.constant 0 : index
    %13 = vector.load %arg6[%c0_11, %c0_12] : memref<128x128xbf16, #tpu.memory_space<vmem>>, vector<128x128xbf16>
    tpu.vector_store %arg6[%c0_11, %c0_12], %12 {strides = array<i32>} : memref<128x128xbf16, #tpu.memory_space<vmem>>, vector<128x128xbf16>,
    return
  }
  func.func @transform_0(%arg0: i32) -> (i32, i32) {
    %c0_i32 = arith.constant 0 : i32
    %c0_i32_0 = arith.constant 0 : i32
    return %arg0, %c0_i32 : i32, i32
  }
  func.func @transform_1(%arg0: i32) -> (i32, i32) {
    %c0_i32 = arith.constant 0 : i32
    %c0_i32_0 = arith.constant 0 : i32
    %c0_i32_1 = arith.constant 0 : i32
    return %c0_i32, %c0_i32_0 : i32, i32
  }
  func.func @transform_2(%arg0: i32) -> (i32, i32) {
    %c0_i32 = arith.constant 0 : i32
    %c0_i32_0 = arith.constant 0 : i32
    return %arg0, %c0_i32 : i32, i32
  }
  func.func @transform_3(%arg0: i32) -> (i32, i32) {
    %c0_i32 = arith.constant 0 : i32
    %c0_i32_0 = arith.constant 0 : i32
    %c0_i32_1 = arith.constant 0 : i32
    return %c0_i32, %c0_i32_0 : i32, i32
  }
  func.func @transform_4(%arg0: i32) -> (i32, i32) {
    %c0_i32 = arith.constant 0 : i32
    %c0_i32_0 = arith.constant 0 : i32
    %c0_i32_1 = arith.constant 0 : i32
    return %c0_i32, %c0_i32_0 : i32, i32
  }
  func.func @transform_5(%arg0: i32) -> (i32, i32) {
    %c0_i32 = arith.constant 0 : i32
    %c0_i32_0 = arith.constant 0 : i32
    return %arg0, %c0_i32 : i32, i32
  }
}

module attributes {stable_mosaic.version = 11 : i64} {
  func.func @_blend_kernel(%arg0: i32, %arg1: memref<64x512xbf16, #tpu.memory_space<vmem>>, %arg2: memref<64x512xbf16, #tpu.memory_space<vmem>>, %arg3: memref<64x512xbf16, #tpu.memory_space<vmem>>, %arg4: memref<64x512xbf16, #tpu.memory_space<vmem>>, %arg5: memref<64x1xf32, #tpu.memory_space<vmem>>, %arg6: memref<1x512xf32, #tpu.memory_space<vmem>>, %arg7: memref<64x512xbf16, #tpu.memory_space<vmem>>) attributes {dimension_semantics = [#tpu.dimension_semantics<parallel>], iteration_bounds = array<i64: 1>, scalar_prefetch = 0 : i64, scratch_operands = 0 : i64, tpu.core_type = #tpu.core_type<tc>, window_params = [{transform_indices = @transform_0, window_bounds = array<i64: 64, 512>}, {transform_indices = @transform_1, window_bounds = array<i64: 64, 512>}, {transform_indices = @transform_2, window_bounds = array<i64: 64, 512>}, {transform_indices = @transform_3, window_bounds = array<i64: 64, 512>}, {transform_indices = @transform_4, window_bounds = array<i64: 64, 1>}, {pipeline_mode = #tpu.pipeline_mode<synchronous>, transform_indices = @transform_5, window_bounds = array<i64: 1, 512>}, {transform_indices = @transform_6, window_bounds = array<i64: 64, 512>}]} {
    %c0 = arith.constant 0 : index
    %c0_0 = arith.constant 0 : index
    %0 = vector.load %arg5[%c0, %c0_0] : memref<64x1xf32, #tpu.memory_space<vmem>>, vector<64x1xf32>
    %c0_1 = arith.constant 0 : index
    %c0_2 = arith.constant 0 : index
    %1 = vector.load %arg6[%c0_1, %c0_2] : memref<1x512xf32, #tpu.memory_space<vmem>>, vector<1x512xf32>
    %cst = arith.constant 1.000000e+00 : f32
    %2 = vector.broadcast %cst : f32 to vector<64x1xf32>
    %3 = arith.subf %2, %0 : vector<64x1xf32>
    %cst_3 = arith.constant 1.000000e+00 : f32
    %4 = vector.broadcast %cst_3 : f32 to vector<1x512xf32>
    %5 = arith.subf %4, %1 : vector<1x512xf32>
    %c0_4 = arith.constant 0 : index
    %c0_5 = arith.constant 0 : index
    %6 = vector.load %arg1[%c0_4, %c0_5] : memref<64x512xbf16, #tpu.memory_space<vmem>>, vector<64x512xbf16>
    %7 = arith.extf %6 : vector<64x512xbf16> to vector<64x512xf32>
    %8 = vector.broadcast %3 : vector<64x1xf32> to vector<64x512xf32>
    %9 = vector.broadcast %5 : vector<1x512xf32> to vector<64x512xf32>
    %10 = arith.mulf %8, %9 : vector<64x512xf32>
    %11 = arith.mulf %7, %10 : vector<64x512xf32>
    %c0_6 = arith.constant 0 : index
    %c0_7 = arith.constant 0 : index
    %12 = vector.load %arg2[%c0_6, %c0_7] : memref<64x512xbf16, #tpu.memory_space<vmem>>, vector<64x512xbf16>
    %13 = arith.extf %12 : vector<64x512xbf16> to vector<64x512xf32>
    %14 = vector.broadcast %3 : vector<64x1xf32> to vector<64x512xf32>
    %15 = vector.broadcast %1 : vector<1x512xf32> to vector<64x512xf32>
    %16 = arith.mulf %14, %15 : vector<64x512xf32>
    %17 = arith.mulf %13, %16 : vector<64x512xf32>
    %18 = arith.addf %11, %17 : vector<64x512xf32>
    %c0_8 = arith.constant 0 : index
    %c0_9 = arith.constant 0 : index
    %19 = vector.load %arg3[%c0_8, %c0_9] : memref<64x512xbf16, #tpu.memory_space<vmem>>, vector<64x512xbf16>
    %20 = arith.extf %19 : vector<64x512xbf16> to vector<64x512xf32>
    %21 = vector.broadcast %0 : vector<64x1xf32> to vector<64x512xf32>
    %22 = vector.broadcast %5 : vector<1x512xf32> to vector<64x512xf32>
    %23 = arith.mulf %21, %22 : vector<64x512xf32>
    %24 = arith.mulf %20, %23 : vector<64x512xf32>
    %25 = arith.addf %18, %24 : vector<64x512xf32>
    %c0_10 = arith.constant 0 : index
    %c0_11 = arith.constant 0 : index
    %26 = vector.load %arg4[%c0_10, %c0_11] : memref<64x512xbf16, #tpu.memory_space<vmem>>, vector<64x512xbf16>
    %27 = arith.extf %26 : vector<64x512xbf16> to vector<64x512xf32>
    %28 = vector.broadcast %0 : vector<64x1xf32> to vector<64x512xf32>
    %29 = vector.broadcast %1 : vector<1x512xf32> to vector<64x512xf32>
    %30 = arith.mulf %28, %29 : vector<64x512xf32>
    %31 = arith.mulf %27, %30 : vector<64x512xf32>
    %32 = arith.addf %25, %31 : vector<64x512xf32>
    %33 = arith.truncf %32 : vector<64x512xf32> to vector<64x512xbf16>
    %c0_12 = arith.constant 0 : index
    %c0_13 = arith.constant 0 : index
    %34 = vector.load %arg7[%c0_12, %c0_13] : memref<64x512xbf16, #tpu.memory_space<vmem>>, vector<64x512xbf16>
    tpu.vector_store %arg7[%c0_12, %c0_13], %33 {strides = array<i32>} : memref<64x512xbf16, #tpu.memory_space<vmem>>, vector<64x512xbf16>,
    return
  }
  func.func @transform_0(%arg0: i32) -> (i32, i32) {
    %c0_i32 = arith.constant 0 : i32
    %c0_i32_0 = arith.constant 0 : i32
    return %arg0, %c0_i32 : i32, i32
  }
  func.func @transform_1(%arg0: i32) -> (i32, i32) {
    %c0_i32 = arith.constant 0 : i32
    %c0_i32_0 = arith.constant 0 : i32
    return %arg0, %c0_i32 : i32, i32
  }
  func.func @transform_2(%arg0: i32) -> (i32, i32) {
    %c0_i32 = arith.constant 0 : i32
    %c0_i32_0 = arith.constant 0 : i32
    return %arg0, %c0_i32 : i32, i32
  }
  func.func @transform_3(%arg0: i32) -> (i32, i32) {
    %c0_i32 = arith.constant 0 : i32
    %c0_i32_0 = arith.constant 0 : i32
    return %arg0, %c0_i32 : i32, i32
  }
  func.func @transform_4(%arg0: i32) -> (i32, i32) {
    %c0_i32 = arith.constant 0 : i32
    %c0_i32_0 = arith.constant 0 : i32
    return %arg0, %c0_i32 : i32, i32
  }
  func.func @transform_5(%arg0: i32) -> (i32, i32) {
    %c0_i32 = arith.constant 0 : i32
    %c0_i32_0 = arith.constant 0 : i32
    %c0_i32_1 = arith.constant 0 : i32
    return %c0_i32, %c0_i32_0 : i32, i32
  }
  func.func @transform_6(%arg0: i32) -> (i32, i32) {
    %c0_i32 = arith.constant 0 : i32
    %c0_i32_0 = arith.constant 0 : i32
    return %arg0, %c0_i32 : i32, i32
  }
}

module attributes {stable_mosaic.version = 11 : i64} {
  func.func @_fused_mm_kernel(%arg0: i32, %arg1: memref<512x256xbf16, #tpu.memory_space<vmem>>, %arg2: memref<256x128xbf16, #tpu.memory_space<vmem>>, %arg3: memref<512x128xbf16, #tpu.memory_space<vmem>>, %arg4: memref<128x128xbf16, #tpu.memory_space<vmem>>, %arg5: memref<1x128xf32, #tpu.memory_space<vmem>>, %arg6: memref<128x128xf32, #tpu.memory_space<vmem>>, %arg7: memref<1x128xf32, #tpu.memory_space<vmem>>, %arg8: memref<512x128xf32, #tpu.memory_space<vmem>>) attributes {dimension_semantics = [#tpu.dimension_semantics<parallel>], iteration_bounds = array<i64: 4>, scalar_prefetch = 0 : i64, scratch_operands = 0 : i64, tpu.core_type = #tpu.core_type<tc>, window_params = [{transform_indices = @transform_0, window_bounds = array<i64: 512, 256>}, {pipeline_mode = #tpu.pipeline_mode<synchronous>, transform_indices = @transform_1, window_bounds = array<i64: 256, 128>}, {transform_indices = @transform_2, window_bounds = array<i64: 512, 128>}, {pipeline_mode = #tpu.pipeline_mode<synchronous>, transform_indices = @transform_3, window_bounds = array<i64: 128, 128>}, {pipeline_mode = #tpu.pipeline_mode<synchronous>, transform_indices = @transform_4, window_bounds = array<i64: 1, 128>}, {pipeline_mode = #tpu.pipeline_mode<synchronous>, transform_indices = @transform_5, window_bounds = array<i64: 128, 128>}, {pipeline_mode = #tpu.pipeline_mode<synchronous>, transform_indices = @transform_6, window_bounds = array<i64: 1, 128>}, {transform_indices = @transform_7, window_bounds = array<i64: 512, 128>}]} {
    %c0 = arith.constant 0 : index
    %c0_0 = arith.constant 0 : index
    %0 = vector.load %arg1[%c0, %c0_0] : memref<512x256xbf16, #tpu.memory_space<vmem>>, vector<512x256xbf16>
    %c0_1 = arith.constant 0 : index
    %c0_2 = arith.constant 0 : index
    %1 = vector.load %arg2[%c0_1, %c0_2] : memref<256x128xbf16, #tpu.memory_space<vmem>>, vector<256x128xbf16>
    %cst = arith.constant dense<0.000000e+00> : vector<512x128xf32>
    %2 = tpu.matmul %0, %1, %cst {dimension_numbers = #tpu.dot_dimension_numbers<[1], [0], [0], [1], [0, 0, 1, 1], [], []>} : vector<512x256xbf16>, vector<256x128xbf16>, vector<512x128xf32> -> vector<512x128xf32>
    %c0_3 = arith.constant 0 : index
    %c0_4 = arith.constant 0 : index
    %3 = vector.load %arg3[%c0_3, %c0_4] : memref<512x128xbf16, #tpu.memory_space<vmem>>, vector<512x128xbf16>
    %c0_5 = arith.constant 0 : index
    %c0_6 = arith.constant 0 : index
    %4 = vector.load %arg4[%c0_5, %c0_6] : memref<128x128xbf16, #tpu.memory_space<vmem>>, vector<128x128xbf16>
    %cst_7 = arith.constant dense<0.000000e+00> : vector<512x128xf32>
    %5 = tpu.matmul %3, %4, %cst_7 {dimension_numbers = #tpu.dot_dimension_numbers<[1], [0], [0], [1], [0, 0, 1, 1], [], []>} : vector<512x128xbf16>, vector<128x128xbf16>, vector<512x128xf32> -> vector<512x128xf32>
    %6 = arith.addf %2, %5 : vector<512x128xf32>
    %c0_8 = arith.constant 0 : index
    %c0_9 = arith.constant 0 : index
    %7 = vector.load %arg5[%c0_8, %c0_9] : memref<1x128xf32, #tpu.memory_space<vmem>>, vector<1x128xf32>
    %8 = vector.broadcast %7 : vector<1x128xf32> to vector<512x128xf32>
    %9 = arith.addf %6, %8 : vector<512x128xf32>
    %cst_10 = arith.constant 0.000000e+00 : f32
    %10 = vector.broadcast %cst_10 : f32 to vector<512x128xf32>
    %11 = arith.maximumf %9, %10 : vector<512x128xf32>
    %c0_11 = arith.constant 0 : index
    %c0_12 = arith.constant 0 : index
    %12 = vector.load %arg6[%c0_11, %c0_12] : memref<128x128xf32, #tpu.memory_space<vmem>>, vector<128x128xf32>
    %cst_13 = arith.constant dense<0.000000e+00> : vector<512x128xf32>
    %13 = tpu.matmul %11, %12, %cst_13 {dimension_numbers = #tpu.dot_dimension_numbers<[1], [0], [0], [1], [0, 0, 1, 1], [], []>} : vector<512x128xf32>, vector<128x128xf32>, vector<512x128xf32> -> vector<512x128xf32>
    %c0_14 = arith.constant 0 : index
    %c0_15 = arith.constant 0 : index
    %14 = vector.load %arg7[%c0_14, %c0_15] : memref<1x128xf32, #tpu.memory_space<vmem>>, vector<1x128xf32>
    %15 = vector.broadcast %14 : vector<1x128xf32> to vector<512x128xf32>
    %16 = arith.addf %13, %15 : vector<512x128xf32>
    %c0_16 = arith.constant 0 : index
    %c0_17 = arith.constant 0 : index
    %17 = vector.load %arg8[%c0_16, %c0_17] : memref<512x128xf32, #tpu.memory_space<vmem>>, vector<512x128xf32>
    tpu.vector_store %arg8[%c0_16, %c0_17], %16 {strides = array<i32>} : memref<512x128xf32, #tpu.memory_space<vmem>>, vector<512x128xf32>,
    return
  }
  func.func @transform_0(%arg0: i32) -> (i32, i32) {
    %c0_i32 = arith.constant 0 : i32
    %c0_i32_0 = arith.constant 0 : i32
    return %arg0, %c0_i32 : i32, i32
  }
  func.func @transform_1(%arg0: i32) -> (i32, i32) {
    %c0_i32 = arith.constant 0 : i32
    %c0_i32_0 = arith.constant 0 : i32
    %c0_i32_1 = arith.constant 0 : i32
    return %c0_i32, %c0_i32_0 : i32, i32
  }
  func.func @transform_2(%arg0: i32) -> (i32, i32) {
    %c0_i32 = arith.constant 0 : i32
    %c0_i32_0 = arith.constant 0 : i32
    return %arg0, %c0_i32 : i32, i32
  }
  func.func @transform_3(%arg0: i32) -> (i32, i32) {
    %c0_i32 = arith.constant 0 : i32
    %c0_i32_0 = arith.constant 0 : i32
    %c0_i32_1 = arith.constant 0 : i32
    return %c0_i32, %c0_i32_0 : i32, i32
  }
  func.func @transform_4(%arg0: i32) -> (i32, i32) {
    %c0_i32 = arith.constant 0 : i32
    %c0_i32_0 = arith.constant 0 : i32
    %c0_i32_1 = arith.constant 0 : i32
    return %c0_i32, %c0_i32_0 : i32, i32
  }
  func.func @transform_5(%arg0: i32) -> (i32, i32) {
    %c0_i32 = arith.constant 0 : i32
    %c0_i32_0 = arith.constant 0 : i32
    %c0_i32_1 = arith.constant 0 : i32
    return %c0_i32, %c0_i32_0 : i32, i32
  }
  func.func @transform_6(%arg0: i32) -> (i32, i32) {
    %c0_i32 = arith.constant 0 : i32
    %c0_i32_0 = arith.constant 0 : i32
    %c0_i32_1 = arith.constant 0 : i32
    return %c0_i32, %c0_i32_0 : i32, i32
  }
  func.func @transform_7(%arg0: i32) -> (i32, i32) {
    %c0_i32 = arith.constant 0 : i32
    %c0_i32_0 = arith.constant 0 : i32
    return %arg0, %c0_i32 : i32, i32
  }
}

</mosaic_0001>

<llo_original>
// kernel: resnet_segmentation_forward.15
$region0: #{resnet_segmentation_forward.15}
  #allocation0 [shape = 'u32[]', space=smem, size = 0x4, offset = 0x4, fixed_abs, tag = 'smem constant byte address 0x4 - core index']
  #allocation1 [shape = 'u32[72,128]{1,0:T(1,128)}', space=vmem, size = 0x9000, scoped, tag = 'internal scratch']
  %s0 = inlined_call_operand.vmem [shape: bf16[128,128], index: 0, kind: input, shape index: {}]
  %s1 = inlined_call_operand.vmem [shape: bf16[128,128], index: 1, kind: input, shape index: {}]
  %s2 = inlined_call_operand.vmem [shape: f32[1,128], index: 2, kind: input, shape index: {}]
  %s3 = inlined_call_operand.vmem [shape: bf16[128,128], index: 3, kind: output, shape index: {}]
  %s4 = sld [smem:[#allocation0]]
  $region22: #{resnet_segmentation_forward.15} parent=0
    _
  %s6 = ssub.s32 1, %s4
  %s7 = scalar_select 0, %s6, %s4
  // Predicated region
  $region2: #{resnet_segmentation_forward.15} parent=0 // pred_check
    _
  $region3: #{resnet_segmentation_forward.15} parent=0 // pred_check_branch
    %9 = sbr.rel (0) target = $region5
  $region4: #{resnet_segmentation_forward.15} parent=0 // pred_region
    _
  $region5: #{resnet_segmentation_forward.15} parent=0 // pred_fallthru
    _
  // Predicated region
  $region6: #{resnet_segmentation_forward.15} parent=0 // pred_check
    _
  $region7: #{resnet_segmentation_forward.15} parent=0 // pred_check_branch
    %11 = sbr.rel (0) target = $region9
  $region8: #{resnet_segmentation_forward.15} parent=0 // pred_region
    _
  $region9: #{resnet_segmentation_forward.15} parent=0 // pred_fallthru
    _
  // Predicated region
  $region10: #{resnet_segmentation_forward.15} parent=0 // pred_check
    _
  $region11: #{resnet_segmentation_forward.15} parent=0 // pred_check_branch
    %13 = sbr.rel (0) target = $region13
  $region12: #{resnet_segmentation_forward.15} parent=0 // pred_region
    _
  $region13: #{resnet_segmentation_forward.15} parent=0 // pred_fallthru
    _
  %v14 = vld [vmem:[%s0] sm:$0xf]
  %v15 = vld [vmem:[%s0 + $0x4] sm:$0xf]
  %v16 = vld [vmem:[%s0 + $0x8] sm:$0xf]
  %v17 = vld [vmem:[%s0 + $0xc] sm:$0xf]
  %v18 = vld [vmem:[%s0 + $0x10] sm:$0xf]
  %v19 = vld [vmem:[%s0 + $0x14] sm:$0xf]
  %v20 = vld [vmem:[%s0 + $0x18] sm:$0xf]
  %v21 = vld [vmem:[%s0 + $0x1c] sm:$0xf]
  %v22 = vld [vmem:[%s0 + $0x20] sm:$0xf]
  %v23 = vld [vmem:[%s0 + $0x24] sm:$0xf]
  %v24 = vld [vmem:[%s0 + $0x28] sm:$0xf]
  %v25 = vld [vmem:[%s0 + $0x2c] sm:$0xf]
  %v26 = vld [vmem:[%s0 + $0x30] sm:$0xf]
  %v27 = vld [vmem:[%s0 + $0x34] sm:$0xf]
  %v28 = vld [vmem:[%s0 + $0x38] sm:$0xf]
  %v29 = vld [vmem:[%s0 + $0x3c] sm:$0xf]
  %v30 = vld [vmem:[%s1] sm:$0xf]
  %v31 = vld [vmem:[%s1 + $0x4] sm:$0xf]
  %v32 = vld [vmem:[%s1 + $0x8] sm:$0xf]
  %v33 = vld [vmem:[%s1 + $0xc] sm:$0xf]
  %v34 = vld [vmem:[%s1 + $0x10] sm:$0xf]
  %v35 = vld [vmem:[%s1 + $0x14] sm:$0xf]
  %v36 = vld [vmem:[%s1 + $0x18] sm:$0xf]
  %v37 = vld [vmem:[%s1 + $0x1c] sm:$0xf]
  %v38 = vld [vmem:[%s1 + $0x20] sm:$0xf]
  %v39 = vld [vmem:[%s1 + $0x24] sm:$0xf]
  %v40 = vld [vmem:[%s1 + $0x28] sm:$0xf]
  %v41 = vld [vmem:[%s1 + $0x2c] sm:$0xf]
  %v42 = vld [vmem:[%s1 + $0x30] sm:$0xf]
  %v43 = vld [vmem:[%s1 + $0x34] sm:$0xf]
  %v44 = vld [vmem:[%s1 + $0x38] sm:$0xf]
  %v45 = vld [vmem:[%s1 + $0x3c] sm:$0xf]
  %v46 = vld [vmem:[%s2] sm:$0x1]
  %v48 = vperm.slane %v46, 0
  %v66 = vunpack.c.l.b16 %v14
  %v67 = vunpack.c.l.b16 %v15
  %v68 = vunpack.c.l.b16 %v16
  %v69 = vunpack.c.l.b16 %v17
  %v70 = vunpack.c.l.b16 %v18
  %v71 = vunpack.c.l.b16 %v19
  %v72 = vunpack.c.l.b16 %v20
  %v73 = vunpack.c.l.b16 %v21
  %v74 = vunpack.c.l.b16 %v22
  %v75 = vunpack.c.l.b16 %v23
  %v76 = vunpack.c.l.b16 %v24
  %v77 = vunpack.c.l.b16 %v25
  %v78 = vunpack.c.l.b16 %v26
  %v79 = vunpack.c.l.b16 %v27
  %v80 = vunpack.c.l.b16 %v28
  %v81 = vunpack.c.l.b16 %v29
  %v82 = vpack.c.b16 %v67, %v66
  %v83 = vpack.c.b16 %v69, %v68
  %v84 = vpack.c.b16 %v71, %v70
  %v85 = vpack.c.b16 %v73, %v72
  %v86 = vpack.c.b16 %v75, %v74
  %v87 = vpack.c.b16 %v77, %v76
  %v88 = vpack.c.b16 %v79, %v78
  %v89 = vpack.c.b16 %v81, %v80
  %v114 = vunpack.c.l.b16 %v30
  %v115 = vunpack.c.l.b16 %v31
  %v116 = vunpack.c.l.b16 %v32
  %v117 = vunpack.c.l.b16 %v33
  %v118 = vunpack.c.l.b16 %v34
  %v119 = vunpack.c.l.b16 %v35
  %v120 = vunpack.c.l.b16 %v36
  %v121 = vunpack.c.l.b16 %v37
  %v122 = vunpack.c.l.b16 %v38
  %v123 = vunpack.c.l.b16 %v39
  %v124 = vunpack.c.l.b16 %v40
  %v125 = vunpack.c.l.b16 %v41
  %v126 = vunpack.c.l.b16 %v42
  %v127 = vunpack.c.l.b16 %v43
  %v128 = vunpack.c.l.b16 %v44
  %v129 = vunpack.c.l.b16 %v45
  %v130 = vpack.c.b16 %v115, %v114
  %v131 = vpack.c.b16 %v117, %v116
  %v132 = vpack.c.b16 %v119, %v118
  %v133 = vpack.c.b16 %v121, %v120
  %v134 = vpack.c.b16 %v123, %v122
  %v135 = vpack.c.b16 %v125, %v124
  %v136 = vpack.c.b16 %v127, %v126
  %v137 = vpack.c.b16 %v129, %v128
  %146 = vmatpush.bf16.msra.mxu0 %v137
  %147 = vmatpush.bf16.msra.mxu0 %v136
  %148 = vmatpush.bf16.msra.mxu0 %v135
  %149 = vmatpush.bf16.msra.mxu0 %v134
  %150 = vmatpush.bf16.msra.mxu0 %v133
  %151 = vmatpush.bf16.msra.mxu0 %v132
  %152 = vmatpush.bf16.msra.mxu0 %v131
  %153 = vmatpush.bf16.msra.mxu0 %v130
  %154 = vmatmul.bf16.gmra.mxu0 %v82
  %v155 = vpop.f32.mrf.mxu0
  %v156 = vadd.f32 %v48, %v155
  %v157 = vpop.f32.mrf.mxu0
  %v158 = vadd.f32 %v48, %v157
  %159 = vmatmul.bf16.gmra.mxu0 %v83
  %v160 = vpop.f32.mrf.mxu0
  %v161 = vadd.f32 %v48, %v160
  %v162 = vpop.f32.mrf.mxu0
  %v163 = vadd.f32 %v48, %v162
  %164 = vmatmul.bf16.gmra.mxu0 %v84
  %v165 = vpop.f32.mrf.mxu0
  %v166 = vadd.f32 %v48, %v165
  %v167 = vpop.f32.mrf.mxu0
  %v168 = vadd.f32 %v48, %v167
  %169 = vmatmul.bf16.gmra.mxu0 %v85
  %v170 = vpop.f32.mrf.mxu0
  %v171 = vadd.f32 %v48, %v170
  %v172 = vpop.f32.mrf.mxu0
  %v173 = vadd.f32 %v48, %v172
  %174 = vmatmul.bf16.gmra.mxu0 %v86
  %v175 = vpop.f32.mrf.mxu0
  %v176 = vadd.f32 %v48, %v175
  %v177 = vpop.f32.mrf.mxu0
  %v178 = vadd.f32 %v48, %v177
  %179 = vmatmul.bf16.gmra.mxu0 %v87
  %v180 = vpop.f32.mrf.mxu0
  %v181 = vadd.f32 %v48, %v180
  %v182 = vpop.f32.mrf.mxu0
  %v183 = vadd.f32 %v48, %v182
  %184 = vmatmul.bf16.gmra.mxu0 %v88
  %v185 = vpop.f32.mrf.mxu0
  %v186 = vadd.f32 %v48, %v185
  %v187 = vpop.f32.mrf.mxu0
  %v188 = vadd.f32 %v48, %v187
  %189 = vmatmul.bf16.gmra.mxu0 %v89
  %v190 = vpop.f32.mrf.mxu0
  %v191 = vadd.f32 %v48, %v190
  %v192 = vpop.f32.mrf.mxu0
  %v193 = vadd.f32 %v48, %v192
  %194 = vdwg.mxu0
  %v195 = vmax.f32 %v156, 0.0
  %v196 = vmax.f32 %v158, 0.0
  %v197 = vmax.f32 %v161, 0.0
  %v198 = vmax.f32 %v163, 0.0
  %v199 = vmax.f32 %v166, 0.0
  %v200 = vmax.f32 %v168, 0.0
  %v201 = vmax.f32 %v171, 0.0
  %v202 = vmax.f32 %v173, 0.0
  %v203 = vmax.f32 %v176, 0.0
  %v204 = vmax.f32 %v178, 0.0
  %v205 = vmax.f32 %v181, 0.0
  %v206 = vmax.f32 %v183, 0.0
  %v207 = vmax.f32 %v186, 0.0
  %v208 = vmax.f32 %v188, 0.0
  %v209 = vmax.f32 %v191, 0.0
  %v210 = vmax.f32 %v193, 0.0
  %v211 = vpack.c.bf16 %v195, %v195
  %v212 = vpack.c.bf16 %v196, %v196
  %v213 = vpack.c.bf16 %v197, %v197
  %v214 = vpack.c.bf16 %v198, %v198
  %v215 = vpack.c.bf16 %v199, %v199
  %v216 = vpack.c.bf16 %v200, %v200
  %v217 = vpack.c.bf16 %v201, %v201
  %v218 = vpack.c.bf16 %v202, %v202
  %v219 = vpack.c.bf16 %v203, %v203
  %v220 = vpack.c.bf16 %v204, %v204
  %v221 = vpack.c.bf16 %v205, %v205
  %v222 = vpack.c.bf16 %v206, %v206
  %v223 = vpack.c.bf16 %v207, %v207
  %v224 = vpack.c.bf16 %v208, %v208
  %v225 = vpack.c.bf16 %v209, %v209
  %v226 = vpack.c.bf16 %v210, %v210
  %227 = vst [vmem:[%s3] sm:$0xf] %v211
  %228 = vst [vmem:[%s3 + $0x4] sm:$0xf] %v212
  %229 = vst [vmem:[%s3 + $0x8] sm:$0xf] %v213
  %230 = vst [vmem:[%s3 + $0xc] sm:$0xf] %v214
  %231 = vst [vmem:[%s3 + $0x10] sm:$0xf] %v215
  %232 = vst [vmem:[%s3 + $0x14] sm:$0xf] %v216
  %233 = vst [vmem:[%s3 + $0x18] sm:$0xf] %v217
  %234 = vst [vmem:[%s3 + $0x1c] sm:$0xf] %v218
  %235 = vst [vmem:[%s3 + $0x20] sm:$0xf] %v219
  %236 = vst [vmem:[%s3 + $0x24] sm:$0xf] %v220
  %237 = vst [vmem:[%s3 + $0x28] sm:$0xf] %v221
  %238 = vst [vmem:[%s3 + $0x2c] sm:$0xf] %v222
  %239 = vst [vmem:[%s3 + $0x30] sm:$0xf] %v223
  %240 = vst [vmem:[%s3 + $0x34] sm:$0xf] %v224
  %241 = vst [vmem:[%s3 + $0x38] sm:$0xf] %v225
  %242 = vst [vmem:[%s3 + $0x3c] sm:$0xf] %v226
  // Predicated region
  $region14: #{resnet_segmentation_forward.15} parent=0 // pred_check
    _
  $region15: #{resnet_segmentation_forward.15} parent=0 // pred_check_branch
    %244 = sbr.rel (0) target = $region17
  $region16: #{resnet_segmentation_forward.15} parent=0 // pred_region
    _
  $region17: #{resnet_segmentation_forward.15} parent=0 // pred_fallthru
    _
  // Predicated region
  $region18: #{resnet_segmentation_forward.15} parent=0 // pred_check
    _
  $region19: #{resnet_segmentation_forward.15} parent=0 // pred_check_branch
    %246 = sbr.rel (0) target = $region21
  $region20: #{resnet_segmentation_forward.15} parent=0 // pred_region
    _
  $region21: #{resnet_segmentation_forward.15} parent=0 // pred_fallthru
    _

// kernel: resnet_segmentation_forward.14
$region0: #{resnet_segmentation_forward.14}
  #allocation0 [shape = 'u32[]', space=smem, size = 0x4, offset = 0x4, fixed_abs, tag = 'smem constant byte address 0x4 - core index']
  #allocation1 [shape = 'u32[72,128]{1,0:T(1,128)}', space=vmem, size = 0x9000, scoped, tag = 'internal scratch']
  %s0 = inlined_call_operand.vmem [shape: bf16[512,512], index: 0, kind: input, shape index: {}]
  %s1 = inlined_call_operand.vmem [shape: bf16[512,128], index: 1, kind: input, shape index: {}]
  %s2 = inlined_call_operand.vmem [shape: f32[1,128], index: 2, kind: input, shape index: {}]
  %s3 = inlined_call_operand.vmem [shape: bf16[512,128], index: 3, kind: output, shape index: {}]
  %s4 = sld [smem:[#allocation0]]
  $region22: #{resnet_segmentation_forward.14} parent=0
    _
  %s6 = ssub.s32 1, %s4
  %s7 = scalar_select 0, %s6, %s4
  // Predicated region
  $region2: #{resnet_segmentation_forward.14} parent=0 // pred_check
    _
  $region3: #{resnet_segmentation_forward.14} parent=0 // pred_check_branch
    %9 = sbr.rel (0) target = $region5
  $region4: #{resnet_segmentation_forward.14} parent=0 // pred_region
    _
  $region5: #{resnet_segmentation_forward.14} parent=0 // pred_fallthru
    _
  // Predicated region
  $region6: #{resnet_segmentation_forward.14} parent=0 // pred_check
    _
  $region7: #{resnet_segmentation_forward.14} parent=0 // pred_check_branch
    %11 = sbr.rel (0) target = $region9
  $region8: #{resnet_segmentation_forward.14} parent=0 // pred_region
    _
  $region9: #{resnet_segmentation_forward.14} parent=0 // pred_fallthru
    _
  // Predicated region
  $region10: #{resnet_segmentation_forward.14} parent=0 // pred_check
    _
  $region11: #{resnet_segmentation_forward.14} parent=0 // pred_check_branch
    %13 = sbr.rel (0) target = $region13
  $region12: #{resnet_segmentation_forward.14} parent=0 // pred_region
    _
  $region13: #{resnet_segmentation_forward.14} parent=0 // pred_fallthru
    _
  %v14 = vld [vmem:[%s0] sm:$0xff]
  %v15 = vld [vmem:[%s0 + $0x8] sm:$0xff]
  %v16 = vld [vmem:[%s0 + $0x10] sm:$0xff]
  %v17 = vld [vmem:[%s0 + $0x18] sm:$0xff]
  %v18 = vld [vmem:[%s0 + $0x20] sm:$0xff]
  %v19 = vld [vmem:[%s0 + $0x28] sm:$0xff]
  %v20 = vld [vmem:[%s0 + $0x30] sm:$0xff]
  %v21 = vld [vmem:[%s0 + $0x38] sm:$0xff]
  %v22 = vld [vmem:[%s0 + $0x40] sm:$0xff]
  %v23 = vld [vmem:[%s0 + $0x48] sm:$0xff]
  %v24 = vld [vmem:[%s0 + $0x50] sm:$0xff]
  %v25 = vld [vmem:[%s0 + $0x58] sm:$0xff]
  %v26 = vld [vmem:[%s0 + $0x60] sm:$0xff]
  %v27 = vld [vmem:[%s0 + $0x68] sm:$0xff]
  %v28 = vld [vmem:[%s0 + $0x70] sm:$0xff]
  %v29 = vld [vmem:[%s0 + $0x78] sm:$0xff]
  %v30 = vld [vmem:[%s0 + $0x80] sm:$0xff]
  %v31 = vld [vmem:[%s0 + $0x88] sm:$0xff]
  %v32 = vld [vmem:[%s0 + $0x90] sm:$0xff]
  %v33 = vld [vmem:[%s0 + $0x98] sm:$0xff]
  %v34 = vld [vmem:[%s0 + $0xa0] sm:$0xff]
  %v35 = vld [vmem:[%s0 + $0xa8] sm:$0xff]
  %v36 = vld [vmem:[%s0 + $0xb0] sm:$0xff]
  %v37 = vld [vmem:[%s0 + $0xb8] sm:$0xff]
  %v38 = vld [vmem:[%s0 + $0xc0] sm:$0xff]
  %v39 = vld [vmem:[%s0 + $0xc8] sm:$0xff]
  %v40 = vld [vmem:[%s0 + $0xd0] sm:$0xff]
  %v41 = vld [vmem:[%s0 + $0xd8] sm:$0xff]
  %v42 = vld [vmem:[%s0 + $0xe0] sm:$0xff]
  %v43 = vld [vmem:[%s0 + $0xe8] sm:$0xff]
  %v44 = vld [vmem:[%s0 + $0xf0] sm:$0xff]
  %v45 = vld [vmem:[%s0 + $0xf8] sm:$0xff]
  %v46 = vld [vmem:[%s0 + $0x100] sm:$0xff]
  %v47 = vld [vmem:[%s0 + $0x108] sm:$0xff]
  %v48 = vld [vmem:[%s0 + $0x110] sm:$0xff]
  %v49 = vld [vmem:[%s0 + $0x118] sm:$0xff]
  %v50 = vld [vmem:[%s0 + $0x120] sm:$0xff]
  %v51 = vld [vmem:[%s0 + $0x128] sm:$0xff]
  %v52 = vld [vmem:[%s0 + $0x130] sm:$0xff]
  %v53 = vld [vmem:[%s0 + $0x138] sm:$0xff]
  %v54 = vld [vmem:[%s0 + $0x140] sm:$0xff]
  %v55 = vld [vmem:[%s0 + $0x148] sm:$0xff]
  %v56 = vld [vmem:[%s0 + $0x150] sm:$0xff]
  %v57 = vld [vmem:[%s0 + $0x158] sm:$0xff]
  %v58 = vld [vmem:[%s0 + $0x160] sm:$0xff]
  %v59 = vld [vmem:[%s0 + $0x168] sm:$0xff]
  %v60 = vld [vmem:[%s0 + $0x170] sm:$0xff]
  %v61 = vld [vmem:[%s0 + $0x178] sm:$0xff]
  %v62 = vld [vmem:[%s0 + $0x180] sm:$0xff]
  %v63 = vld [vmem:[%s0 + $0x188] sm:$0xff]
  %v64 = vld [vmem:[%s0 + $0x190] sm:$0xff]
  %v65 = vld [vmem:[%s0 + $0x198] sm:$0xff]
  %v66 = vld [vmem:[%s0 + $0x1a0] sm:$0xff]
  %v67 = vld [vmem:[%s0 + $0x1a8] sm:$0xff]
  %v68 = vld [vmem:[%s0 + $0x1b0] sm:$0xff]
  %v69 = vld [vmem:[%s0 + $0x1b8] sm:$0xff]
  %v70 = vld [vmem:[%s0 + $0x1c0] sm:$0xff]
  %v71 = vld [vmem:[%s0 + $0x1c8] sm:$0xff]
  %v72 = vld [vmem:[%s0 + $0x1d0] sm:$0xff]
  %v73 = vld [vmem:[%s0 + $0x1d8] sm:$0xff]
  %v74 = vld [vmem:[%s0 + $0x1e0] sm:$0xff]
  %v75 = vld [vmem:[%s0 + $0x1e8] sm:$0xff]
  %v76 = vld [vmem:[%s0 + $0x1f0] sm:$0xff]
  %v77 = vld [vmem:[%s0 + $0x1f8] sm:$0xff]
  %v78 = vld [vmem:[%s0 + $0x200] sm:$0xff]
  %v79 = vld [vmem:[%s0 + $0x208] sm:$0xff]
  %v80 = vld [vmem:[%s0 + $0x210] sm:$0xff]
  %v81 = vld [vmem:[%s0 + $0x218] sm:$0xff]
  %v82 = vld [vmem:[%s0 + $0x220] sm:$0xff]
  %v83 = vld [vmem:[%s0 + $0x228] sm:$0xff]
  %v84 = vld [vmem:[%s0 + $0x230] sm:$0xff]
  %v85 = vld [vmem:[%s0 + $0x238] sm:$0xff]
  %v86 = vld [vmem:[%s0 + $0x240] sm:$0xff]
  %v87 = vld [vmem:[%s0 + $0x248] sm:$0xff]
  %v88 = vld [vmem:[%s0 + $0x250] sm:$0xff]
  %v89 = vld [vmem:[%s0 + $0x258] sm:$0xff]
  %v90 = vld [vmem:[%s0 + $0x260] sm:$0xff]
  %v91 = vld [vmem:[%s0 + $0x268] sm:$0xff]
  %v92 = vld [vmem:[%s0 + $0x270] sm:$0xff]
  %v93 = vld [vmem:[%s0 + $0x278] sm:$0xff]
  %v94 = vld [vmem:[%s0 + $0x280] sm:$0xff]
  %v95 = vld [vmem:[%s0 + $0x288] sm:$0xff]
  %v96 = vld [vmem:[%s0 + $0x290] sm:$0xff]
  %v97 = vld [vmem:[%s0 + $0x298] sm:$0xff]
  %v98 = vld [vmem:[%s0 + $0x2a0] sm:$0xff]
  %v99 = vld [vmem:[%s0 + $0x2a8] sm:$0xff]
  %v100 = vld [vmem:[%s0 + $0x2b0] sm:$0xff]
  %v101 = vld [vmem:[%s0 + $0x2b8] sm:$0xff]
  %v102 = vld [vmem:[%s0 + $0x2c0] sm:$0xff]
  %v103 = vld [vmem:[%s0 + $0x2c8] sm:$0xff]
  %v104 = vld [vmem:[%s0 + $0x2d0] sm:$0xff]
  %v105 = vld [vmem:[%s0 + $0x2d8] sm:$0xff]
  %v106 = vld [vmem:[%s0 + $0x2e0] sm:$0xff]
  %v107 = vld [vmem:[%s0 + $0x2e8] sm:$0xff]
  %v108 = vld [vmem:[%s0 + $0x2f0] sm:$0xff]
  %v109 = vld [vmem:[%s0 + $0x2f8] sm:$0xff]
  %v110 = vld [vmem:[%s0 + $0x300] sm:$0xff]
  %v111 = vld [vmem:[%s0 + $0x308] sm:$0xff]
  %v112 = vld [vmem:[%s0 + $0x310] sm:$0xff]
  %v113 = vld [vmem:[%s0 + $0x318] sm:$0xff]
  %v114 = vld [vmem:[%s0 + $0x320] sm:$0xff]
  %v115 = vld [vmem:[%s0 + $0x328] sm:$0xff]
  %v116 = vld [vmem:[%s0 + $0x330] sm:$0xff]
  %v117 = vld [vmem:[%s0 + $0x338] sm:$0xff]
  %v118 = vld [vmem:[%s0 + $0x340] sm:$0xff]
  %v119 = vld [vmem:[%s0 + $0x348] sm:$0xff]
  %v120 = vld [vmem:[%s0 + $0x350] sm:$0xff]
  %v121 = vld [vmem:[%s0 + $0x358] sm:$0xff]
  %v122 = vld [vmem:[%s0 + $0x360] sm:$0xff]
  %v123 = vld [vmem:[%s0 + $0x368] sm:$0xff]
  %v124 = vld [vmem:[%s0 + $0x370] sm:$0xff]
  %v125 = vld [vmem:[%s0 + $0x378] sm:$0xff]
  %v126 = vld [vmem:[%s0 + $0x380] sm:$0xff]
  %v127 = vld [vmem:[%s0 + $0x388] sm:$0xff]
  %v128 = vld [vmem:[%s0 + $0x390] sm:$0xff]
  %v129 = vld [vmem:[%s0 + $0x398] sm:$0xff]
  %v130 = vld [vmem:[%s0 + $0x3a0] sm:$0xff]
  %v131 = vld [vmem:[%s0 + $0x3a8] sm:$0xff]
  %v132 = vld [vmem:[%s0 + $0x3b0] sm:$0xff]
  %v133 = vld [vmem:[%s0 + $0x3b8] sm:$0xff]
  %v134 = vld [vmem:[%s0 + $0x3c0] sm:$0xff]
  %v135 = vld [vmem:[%s0 + $0x3c8] sm:$0xff]
  %v136 = vld [vmem:[%s0 + $0x3d0] sm:$0xff]
  %v137 = vld [vmem:[%s0 + $0x3d8] sm:$0xff]
  %v138 = vld [vmem:[%s0 + $0x3e0] sm:$0xff]
  %v139 = vld [vmem:[%s0 + $0x3e8] sm:$0xff]
  %v140 = vld [vmem:[%s0 + $0x3f0] sm:$0xff]
  %v141 = vld [vmem:[%s0 + $0x3f8] sm:$0xff]
  %v142 = vld [vmem:[%s1] sm:$0xf]
  %v143 = vld [vmem:[%s1 + $0x4] sm:$0xf]
  %v144 = vld [vmem:[%s1 + $0x8] sm:$0xf]
  %v145 = vld [vmem:[%s1 + $0xc] sm:$0xf]
  %v146 = vld [vmem:[%s1 + $0x10] sm:$0xf]
  %v147 = vld [vmem:[%s1 + $0x14] sm:$0xf]
  %v148 = vld [vmem:[%s1 + $0x18] sm:$0xf]
  %v149 = vld [vmem:[%s1 + $0x1c] sm:$0xf]
  %v150 = vld [vmem:[%s1 + $0x20] sm:$0xf]
  %v151 = vld [vmem:[%s1 + $0x24] sm:$0xf]
  %v152 = vld [vmem:[%s1 + $0x28] sm:$0xf]
  %v153 = vld [vmem:[%s1 + $0x2c] sm:$0xf]
  %v154 = vld [vmem:[%s1 + $0x30] sm:$0xf]
  %v155 = vld [vmem:[%s1 + $0x34] sm:$0xf]
  %v156 = vld [vmem:[%s1 + $0x38] sm:$0xf]
  %v157 = vld [vmem:[%s1 + $0x3c] sm:$0xf]
  %v158 = vld [vmem:[%s1 + $0x40] sm:$0xf]
  %v159 = vld [vmem:[%s1 + $0x44] sm:$0xf]
  %v160 = vld [vmem:[%s1 + $0x48] sm:$0xf]
  %v161 = vld [vmem:[%s1 + $0x4c] sm:$0xf]
  %v162 = vld [vmem:[%s1 + $0x50] sm:$0xf]
  %v163 = vld [vmem:[%s1 + $0x54] sm:$0xf]
  %v164 = vld [vmem:[%s1 + $0x58] sm:$0xf]
  %v165 = vld [vmem:[%s1 + $0x5c] sm:$0xf]
  %v166 = vld [vmem:[%s1 + $0x60] sm:$0xf]
  %v167 = vld [vmem:[%s1 + $0x64] sm:$0xf]
  %v168 = vld [vmem:[%s1 + $0x68] sm:$0xf]
  %v169 = vld [vmem:[%s1 + $0x6c] sm:$0xf]
  %v170 = vld [vmem:[%s1 + $0x70] sm:$0xf]
  %v171 = vld [vmem:[%s1 + $0x74] sm:$0xf]
  %v172 = vld [vmem:[%s1 + $0x78] sm:$0xf]
  %v173 = vld [vmem:[%s1 + $0x7c] sm:$0xf]
  %v174 = vld [vmem:[%s1 + $0x80] sm:$0xf]
  %v175 = vld [vmem:[%s1 + $0x84] sm:$0xf]
  %v176 = vld [vmem:[%s1 + $0x88] sm:$0xf]
  %v177 = vld [vmem:[%s1 + $0x8c] sm:$0xf]
  %v178 = vld [vmem:[%s1 + $0x90] sm:$0xf]
  %v179 = vld [vmem:[%s1 + $0x94] sm:$0xf]
  %v180 = vld [vmem:[%s1 + $0x98] sm:$0xf]
  %v181 = vld [vmem:[%s1 + $0x9c] sm:$0xf]
  %v182 = vld [vmem:[%s1 + $0xa0] sm:$0xf]
  %v183 = vld [vmem:[%s1 + $0xa4] sm:$0xf]
  %v184 = vld [vmem:[%s1 + $0xa8] sm:$0xf]
  %v185 = vld [vmem:[%s1 + $0xac] sm:$0xf]
  %v186 = vld [vmem:[%s1 + $0xb0] sm:$0xf]
  %v187 = vld [vmem:[%s1 + $0xb4] sm:$0xf]
  %v188 = vld [vmem:[%s1 + $0xb8] sm:$0xf]
  %v189 = vld [vmem:[%s1 + $0xbc] sm:$0xf]
  %v190 = vld [vmem:[%s1 + $0xc0] sm:$0xf]
  %v191 = vld [vmem:[%s1 + $0xc4] sm:$0xf]
  %v192 = vld [vmem:[%s1 + $0xc8] sm:$0xf]
  %v193 = vld [vmem:[%s1 + $0xcc] sm:$0xf]
  %v194 = vld [vmem:[%s1 + $0xd0] sm:$0xf]
  %v195 = vld [vmem:[%s1 + $0xd4] sm:$0xf]
  %v196 = vld [vmem:[%s1 + $0xd8] sm:$0xf]
  %v197 = vld [vmem:[%s1 + $0xdc] sm:$0xf]
  %v198 = vld [vmem:[%s1 + $0xe0] sm:$0xf]
  %v199 = vld [vmem:[%s1 + $0xe4] sm:$0xf]
  %v200 = vld [vmem:[%s1 + $0xe8] sm:$0xf]
  %v201 = vld [vmem:[%s1 + $0xec] sm:$0xf]
  %v202 = vld [vmem:[%s1 + $0xf0] sm:$0xf]
  %v203 = vld [vmem:[%s1 + $0xf4] sm:$0xf]
  %v204 = vld [vmem:[%s1 + $0xf8] sm:$0xf]
  %v205 = vld [vmem:[%s1 + $0xfc] sm:$0xf]
  %v206 = vld [vmem:[%s2] sm:$0x1]
  %v208 = vperm.slane %v206, 0
  %v338 = vunpack.c.l.b16 %v14
  %v339 = vunpack.c.h.b16 %v14
  %v340 = vunpack.c.l.b16 %v15
  %v341 = vunpack.c.h.b16 %v15
  %v342 = vunpack.c.l.b16 %v16
  %v343 = vunpack.c.h.b16 %v16
  %v344 = vunpack.c.l.b16 %v17
  %v345 = vunpack.c.h.b16 %v17
  %v346 = vunpack.c.l.b16 %v18
  %v347 = vunpack.c.h.b16 %v18
  %v348 = vunpack.c.l.b16 %v19
  %v349 = vunpack.c.h.b16 %v19
  %v350 = vunpack.c.l.b16 %v20
  %v351 = vunpack.c.h.b16 %v20
  %v352 = vunpack.c.l.b16 %v21
  %v353 = vunpack.c.h.b16 %v21
  %v354 = vunpack.c.l.b16 %v22
  %v355 = vunpack.c.h.b16 %v22
  %v356 = vunpack.c.l.b16 %v23
  %v357 = vunpack.c.h.b16 %v23
  %v358 = vunpack.c.l.b16 %v24
  %v359 = vunpack.c.h.b16 %v24
  %v360 = vunpack.c.l.b16 %v25
  %v361 = vunpack.c.h.b16 %v25
  %v362 = vunpack.c.l.b16 %v26
  %v363 = vunpack.c.h.b16 %v26
  %v364 = vunpack.c.l.b16 %v27
  %v365 = vunpack.c.h.b16 %v27
  %v366 = vunpack.c.l.b16 %v28
  %v367 = vunpack.c.h.b16 %v28
  %v368 = vunpack.c.l.b16 %v29
  %v369 = vunpack.c.h.b16 %v29
  %v370 = vunpack.c.l.b16 %v30
  %v371 = vunpack.c.h.b16 %v30
  %v372 = vunpack.c.l.b16 %v31
  %v373 = vunpack.c.h.b16 %v31
  %v374 = vunpack.c.l.b16 %v32
  %v375 = vunpack.c.h.b16 %v32
  %v376 = vunpack.c.l.b16 %v33
  %v377 = vunpack.c.h.b16 %v33
  %v378 = vunpack.c.l.b16 %v34
  %v379 = vunpack.c.h.b16 %v34
  %v380 = vunpack.c.l.b16 %v35
  %v381 = vunpack.c.h.b16 %v35
  %v382 = vunpack.c.l.b16 %v36
  %v383 = vunpack.c.h.b16 %v36
  %v384 = vunpack.c.l.b16 %v37
  %v385 = vunpack.c.h.b16 %v37
  %v386 = vunpack.c.l.b16 %v38
  %v387 = vunpack.c.h.b16 %v38
  %v388 = vunpack.c.l.b16 %v39
  %v389 = vunpack.c.h.b16 %v39
  %v390 = vunpack.c.l.b16 %v40
  %v391 = vunpack.c.h.b16 %v40
  %v392 = vunpack.c.l.b16 %v41
  %v393 = vunpack.c.h.b16 %v41
  %v394 = vunpack.c.l.b16 %v42
  %v395 = vunpack.c.h.b16 %v42
  %v396 = vunpack.c.l.b16 %v43
  %v397 = vunpack.c.h.b16 %v43
  %v398 = vunpack.c.l.b16 %v44
  %v399 = vunpack.c.h.b16 %v44
  %v400 = vunpack.c.l.b16 %v45
  %v401 = vunpack.c.h.b16 %v45
  %v402 = vunpack.c.l.b16 %v46
  %v403 = vunpack.c.h.b16 %v46
  %v404 = vunpack.c.l.b16 %v47
  %v405 = vunpack.c.h.b16 %v47
  %v406 = vunpack.c.l.b16 %v48
  %v407 = vunpack.c.h.b16 %v48
  %v408 = vunpack.c.l.b16 %v49
  %v409 = vunpack.c.h.b16 %v49
  %v410 = vunpack.c.l.b16 %v50
  %v411 = vunpack.c.h.b16 %v50
  %v412 = vunpack.c.l.b16 %v51
  %v413 = vunpack.c.h.b16 %v51
  %v414 = vunpack.c.l.b16 %v52
  %v415 = vunpack.c.h.b16 %v52
  %v416 = vunpack.c.l.b16 %v53
  %v417 = vunpack.c.h.b16 %v53
  %v418 = vunpack.c.l.b16 %v54
  %v419 = vunpack.c.h.b16 %v54
  %v420 = vunpack.c.l.b16 %v55
  %v421 = vunpack.c.h.b16 %v55
  %v422 = vunpack.c.l.b16 %v56
  %v423 = vunpack.c.h.b16 %v56
  %v424 = vunpack.c.l.b16 %v57
  %v425 = vunpack.c.h.b16 %v57
  %v426 = vunpack.c.l.b16 %v58
  %v427 = vunpack.c.h.b16 %v58
  %v428 = vunpack.c.l.b16 %v59
  %v429 = vunpack.c.h.b16 %v59
  %v430 = vunpack.c.l.b16 %v60
  %v431 = vunpack.c.h.b16 %v60
  %v432 = vunpack.c.l.b16 %v61
  %v433 = vunpack.c.h.b16 %v61
  %v434 = vunpack.c.l.b16 %v62
  %v435 = vunpack.c.h.b16 %v62
  %v436 = vunpack.c.l.b16 %v63
  %v437 = vunpack.c.h.b16 %v63
  %v438 = vunpack.c.l.b16 %v64
  %v439 = vunpack.c.h.b16 %v64
  %v440 = vunpack.c.l.b16 %v65
  %v441 = vunpack.c.h.b16 %v65
  %v442 = vunpack.c.l.b16 %v66
  %v443 = vunpack.c.h.b16 %v66
  %v444 = vunpack.c.l.b16 %v67
  %v445 = vunpack.c.h.b16 %v67
  %v446 = vunpack.c.l.b16 %v68
  %v447 = vunpack.c.h.b16 %v68
  %v448 = vunpack.c.l.b16 %v69
  %v449 = vunpack.c.h.b16 %v69
  %v450 = vunpack.c.l.b16 %v70
  %v451 = vunpack.c.h.b16 %v70
  %v452 = vunpack.c.l.b16 %v71
  %v453 = vunpack.c.h.b16 %v71
  %v454 = vunpack.c.l.b16 %v72
  %v455 = vunpack.c.h.b16 %v72
  %v456 = vunpack.c.l.b16 %v73
  %v457 = vunpack.c.h.b16 %v73
  %v458 = vunpack.c.l.b16 %v74
  %v459 = vunpack.c.h.b16 %v74
  %v460 = vunpack.c.l.b16 %v75
  %v461 = vunpack.c.h.b16 %v75
  %v462 = vunpack.c.l.b16 %v76
  %v463 = vunpack.c.h.b16 %v76
  %v464 = vunpack.c.l.b16 %v77
  %v465 = vunpack.c.h.b16 %v77
  %v466 = vunpack.c.l.b16 %v78
  %v467 = vunpack.c.h.b16 %v78
  %v468 = vunpack.c.l.b16 %v79
  %v469 = vunpack.c.h.b16 %v79
  %v470 = vunpack.c.l.b16 %v80
  %v471 = vunpack.c.h.b16 %v80
  %v472 = vunpack.c.l.b16 %v81
  %v473 = vunpack.c.h.b16 %v81
  %v474 = vunpack.c.l.b16 %v82
  %v475 = vunpack.c.h.b16 %v82
  %v476 = vunpack.c.l.b16 %v83
  %v477 = vunpack.c.h.b16 %v83
  %v478 = vunpack.c.l.b16 %v84
  %v479 = vunpack.c.h.b16 %v84
  %v480 = vunpack.c.l.b16 %v85
  %v481 = vunpack.c.h.b16 %v85
  %v482 = vunpack.c.l.b16 %v86
  %v483 = vunpack.c.h.b16 %v86
  %v484 = vunpack.c.l.b16 %v87
  %v485 = vunpack.c.h.b16 %v87
  %v486 = vunpack.c.l.b16 %v88
  %v487 = vunpack.c.h.b16 %v88
  %v488 = vunpack.c.l.b16 %v89
  %v489 = vunpack.c.h.b16 %v89
  %v490 = vunpack.c.l.b16 %v90
  %v491 = vunpack.c.h.b16 %v90
  %v492 = vunpack.c.l.b16 %v91
  %v493 = vunpack.c.h.b16 %v91
  %v494 = vunpack.c.l.b16 %v92
  %v495 = vunpack.c.h.b16 %v92
  %v496 = vunpack.c.l.b16 %v93
  %v497 = vunpack.c.h.b16 %v93
  %v498 = vunpack.c.l.b16 %v94
  %v499 = vunpack.c.h.b16 %v94
  %v500 = vunpack.c.l.b16 %v95
  %v501 = vunpack.c.h.b16 %v95
  %v502 = vunpack.c.l.b16 %v96
  %v503 = vunpack.c.h.b16 %v96
  %v504 = vunpack.c.l.b16 %v97
  %v505 = vunpack.c.h.b16 %v97
  %v506 = vunpack.c.l.b16 %v98
  %v507 = vunpack.c.h.b16 %v98
  %v508 = vunpack.c.l.b16 %v99
  %v509 = vunpack.c.h.b16 %v99
  %v510 = vunpack.c.l.b16 %v100
  %v511 = vunpack.c.h.b16 %v100
  %v512 = vunpack.c.l.b16 %v101
  %v513 = vunpack.c.h.b16 %v101
  %v514 = vunpack.c.l.b16 %v102
  %v515 = vunpack.c.h.b16 %v102
  %v516 = vunpack.c.l.b16 %v103
  %v517 = vunpack.c.h.b16 %v103
  %v518 = vunpack.c.l.b16 %v104
  %v519 = vunpack.c.h.b16 %v104
  %v520 = vunpack.c.l.b16 %v105
  %v521 = vunpack.c.h.b16 %v105
  %v522 = vunpack.c.l.b16 %v106
  %v523 = vunpack.c.h.b16 %v106
  %v524 = vunpack.c.l.b16 %v107
  %v525 = vunpack.c.h.b16 %v107
  %v526 = vunpack.c.l.b16 %v108
  %v527 = vunpack.c.h.b16 %v108
  %v528 = vunpack.c.l.b16 %v109
  %v529 = vunpack.c.h.b16 %v109
  %v530 = vunpack.c.l.b16 %v110
  %v531 = vunpack.c.h.b16 %v110
  %v532 = vunpack.c.l.b16 %v111
  %v533 = vunpack.c.h.b16 %v111
  %v534 = vunpack.c.l.b16 %v112
  %v535 = vunpack.c.h.b16 %v112
  %v536 = vunpack.c.l.b16 %v113
  %v537 = vunpack.c.h.b16 %v113
  %v538 = vunpack.c.l.b16 %v114
  %v539 = vunpack.c.h.b16 %v114
  %v540 = vunpack.c.l.b16 %v115
  %v541 = vunpack.c.h.b16 %v115
  %v542 = vunpack.c.l.b16 %v116
  %v543 = vunpack.c.h.b16 %v116
  %v544 = vunpack.c.l.b16 %v117
  %v545 = vunpack.c.h.b16 %v117
  %v546 = vunpack.c.l.b16 %v118
  %v547 = vunpack.c.h.b16 %v118
  %v548 = vunpack.c.l.b16 %v119
  %v549 = vunpack.c.h.b16 %v119
  %v550 = vunpack.c.l.b16 %v120
  %v551 = vunpack.c.h.b16 %v120
  %v552 = vunpack.c.l.b16 %v121
  %v553 = vunpack.c.h.b16 %v121
  %v554 = vunpack.c.l.b16 %v122
  %v555 = vunpack.c.h.b16 %v122
  %v556 = vunpack.c.l.b16 %v123
  %v557 = vunpack.c.h.b16 %v123
  %v558 = vunpack.c.l.b16 %v124
  %v559 = vunpack.c.h.b16 %v124
  %v560 = vunpack.c.l.b16 %v125
  %v561 = vunpack.c.h.b16 %v125
  %v562 = vunpack.c.l.b16 %v126
  %v563 = vunpack.c.h.b16 %v126
  %v564 = vunpack.c.l.b16 %v127
  %v565 = vunpack.c.h.b16 %v127
  %v566 = vunpack.c.l.b16 %v128
  %v567 = vunpack.c.h.b16 %v128
  %v568 = vunpack.c.l.b16 %v129
  %v569 = vunpack.c.h.b16 %v129
  %v570 = vunpack.c.l.b16 %v130
  %v571 = vunpack.c.h.b16 %v130
  %v572 = vunpack.c.l.b16 %v131
  %v573 = vunpack.c.h.b16 %v131
  %v574 = vunpack.c.l.b16 %v132
  %v575 = vunpack.c.h.b16 %v132
  %v576 = vunpack.c.l.b16 %v133
  %v577 = vunpack.c.h.b16 %v133
  %v578 = vunpack.c.l.b16 %v134
  %v579 = vunpack.c.h.b16 %v134
  %v580 = vunpack.c.l.b16 %v135
  %v581 = vunpack.c.h.b16 %v135
  %v582 = vunpack.c.l.b16 %v136
  %v583 = vunpack.c.h.b16 %v136
  %v584 = vunpack.c.l.b16 %v137
  %v585 = vunpack.c.h.b16 %v137
  %v586 = vunpack.c.l.b16 %v138
  %v587 = vunpack.c.h.b16 %v138
  %v588 = vunpack.c.l.b16 %v139
  %v589 = vunpack.c.h.b16 %v139
  %v590 = vunpack.c.l.b16 %v140
  %v591 = vunpack.c.h.b16 %v140
  %v592 = vunpack.c.l.b16 %v141
  %v593 = vunpack.c.h.b16 %v141
  %v594 = vpack.c.b16 %v342, %v338
  %v595 = vpack.c.b16 %v343, %v339
  %v596 = vpack.c.b16 %v344, %v340
  %v597 = vpack.c.b16 %v345, %v341
  %v598 = vpack.c.b16 %v350, %v346
  %v599 = vpack.c.b16 %v351, %v347
  %v600 = vpack.c.b16 %v352, %v348
  %v601 = vpack.c.b16 %v353, %v349
  %v602 = vpack.c.b16 %v358, %v354
  %v603 = vpack.c.b16 %v359, %v355
  %v604 = vpack.c.b16 %v360, %v356
  %v605 = vpack.c.b16 %v361, %v357
  %v606 = vpack.c.b16 %v366, %v362
  %v607 = vpack.c.b16 %v367, %v363
  %v608 = vpack.c.b16 %v368, %v364
  %v609 = vpack.c.b16 %v369, %v365
  %v610 = vpack.c.b16 %v374, %v370
  %v611 = vpack.c.b16 %v375, %v371
  %v612 = vpack.c.b16 %v376, %v372
  %v613 = vpack.c.b16 %v377, %v373
  %v614 = vpack.c.b16 %v382, %v378
  %v615 = vpack.c.b16 %v383, %v379
  %v616 = vpack.c.b16 %v384, %v380
  %v617 = vpack.c.b16 %v385, %v381
  %v618 = vpack.c.b16 %v390, %v386
  %v619 = vpack.c.b16 %v391, %v387
  %v620 = vpack.c.b16 %v392, %v388
  %v621 = vpack.c.b16 %v393, %v389
  %v622 = vpack.c.b16 %v398, %v394
  %v623 = vpack.c.b16 %v399, %v395
  %v624 = vpack.c.b16 %v400, %v396
  %v625 = vpack.c.b16 %v401, %v397
  %v626 = vpack.c.b16 %v406, %v402
  %v627 = vpack.c.b16 %v407, %v403
  %v628 = vpack.c.b16 %v408, %v404
  %v629 = vpack.c.b16 %v409, %v405
  %v630 = vpack.c.b16 %v414, %v410
  %v631 = vpack.c.b16 %v415, %v411
  %v632 = vpack.c.b16 %v416, %v412
  %v633 = vpack.c.b16 %v417, %v413
  %v634 = vpack.c.b16 %v422, %v418
  %v635 = vpack.c.b16 %v423, %v419
  %v636 = vpack.c.b16 %v424, %v420
  %v637 = vpack.c.b16 %v425, %v421
  %v638 = vpack.c.b16 %v430, %v426
  %v639 = vpack.c.b16 %v431, %v427
  %v640 = vpack.c.b16 %v432, %v428
  %v641 = vpack.c.b16 %v433, %v429
  %v642 = vpack.c.b16 %v438, %v434
  %v643 = vpack.c.b16 %v439, %v435
  %v644 = vpack.c.b16 %v440, %v436
  %v645 = vpack.c.b16 %v441, %v437
  %v646 = vpack.c.b16 %v446, %v442
  %v647 = vpack.c.b16 %v447, %v443
  %v648 = vpack.c.b16 %v448, %v444
  %v649 = vpack.c.b16 %v449, %v445
  %v650 = vpack.c.b16 %v454, %v450
  %v651 = vpack.c.b16 %v455, %v451
  %v652 = vpack.c.b16 %v456, %v452
  %v653 = vpack.c.b16 %v457, %v453
  %v654 = vpack.c.b16 %v462, %v458
  %v655 = vpack.c.b16 %v463, %v459
  %v656 = vpack.c.b16 %v464, %v460
  %v657 = vpack.c.b16 %v465, %v461
  %v658 = vpack.c.b16 %v470, %v466
  %v659 = vpack.c.b16 %v471, %v467
  %v660 = vpack.c.b16 %v472, %v468
  %v661 = vpack.c.b16 %v473, %v469
  %v662 = vpack.c.b16 %v478, %v474
  %v663 = vpack.c.b16 %v479, %v475
  %v664 = vpack.c.b16 %v480, %v476
  %v665 = vpack.c.b16 %v481, %v477
  %v666 = vpack.c.b16 %v486, %v482
  %v667 = vpack.c.b16 %v487, %v483
  %v668 = vpack.c.b16 %v488, %v484
  %v669 = vpack.c.b16 %v489, %v485
  %v670 = vpack.c.b16 %v494, %v490
  %v671 = vpack.c.b16 %v495, %v491
  %v672 = vpack.c.b16 %v496, %v492
  %v673 = vpack.c.b16 %v497, %v493
  %v674 = vpack.c.b16 %v502, %v498
  %v675 = vpack.c.b16 %v503, %v499
  %v676 = vpack.c.b16 %v504, %v500
  %v677 = vpack.c.b16 %v505, %v501
  %v678 = vpack.c.b16 %v510, %v506
  %v679 = vpack.c.b16 %v511, %v507
  %v680 = vpack.c.b16 %v512, %v508
  %v681 = vpack.c.b16 %v513, %v509
  %v682 = vpack.c.b16 %v518, %v514
  %v683 = vpack.c.b16 %v519, %v515
  %v684 = vpack.c.b16 %v520, %v516
  %v685 = vpack.c.b16 %v521, %v517
  %v686 = vpack.c.b16 %v526, %v522
  %v687 = vpack.c.b16 %v527, %v523
  %v688 = vpack.c.b16 %v528, %v524
  %v689 = vpack.c.b16 %v529, %v525
  %v690 = vpack.c.b16 %v534, %v530
  %v691 = vpack.c.b16 %v535, %v531
  %v692 = vpack.c.b16 %v536, %v532
  %v693 = vpack.c.b16 %v537, %v533
  %v694 = vpack.c.b16 %v542, %v538
  %v695 = vpack.c.b16 %v543, %v539
  %v696 = vpack.c.b16 %v544, %v540
  %v697 = vpack.c.b16 %v545, %v541
  %v698 = vpack.c.b16 %v550, %v546
  %v699 = vpack.c.b16 %v551, %v547
  %v700 = vpack.c.b16 %v552, %v548
  %v701 = vpack.c.b16 %v553, %v549
  %v702 = vpack.c.b16 %v558, %v554
  %v703 = vpack.c.b16 %v559, %v555
  %v704 = vpack.c.b16 %v560, %v556
  %v705 = vpack.c.b16 %v561, %v557
  %v706 = vpack.c.b16 %v566, %v562
  %v707 = vpack.c.b16 %v567, %v563
  %v708 = vpack.c.b16 %v568, %v564
  %v709 = vpack.c.b16 %v569, %v565
  %v710 = vpack.c.b16 %v574, %v570
  %v711 = vpack.c.b16 %v575, %v571
  %v712 = vpack.c.b16 %v576, %v572
  %v713 = vpack.c.b16 %v577, %v573
  %v714 = vpack.c.b16 %v582, %v578
  %v715 = vpack.c.b16 %v583, %v579
  %v716 = vpack.c.b16 %v584, %v580
  %v717 = vpack.c.b16 %v585, %v581
  %v718 = vpack.c.b16 %v590, %v586
  %v719 = vpack.c.b16 %v591, %v587
  %v720 = vpack.c.b16 %v592, %v588
  %v721 = vpack.c.b16 %v593, %v589
  %v914 = vunpack.c.l.b16 %v142
  %v915 = vunpack.c.l.b16 %v143
  %v916 = vunpack.c.l.b16 %v144
  %v917 = vunpack.c.l.b16 %v145
  %v918 = vunpack.c.l.b16 %v146
  %v919 = vunpack.c.l.b16 %v147
  %v920 = vunpack.c.l.b16 %v148
  %v921 = vunpack.c.l.b16 %v149
  %v922 = vunpack.c.l.b16 %v150
  %v923 = vunpack.c.l.b16 %v151
  %v924 = vunpack.c.l.b16 %v152
  %v925 = vunpack.c.l.b16 %v153
  %v926 = vunpack.c.l.b16 %v154
  %v927 = vunpack.c.l.b16 %v155
  %v928 = vunpack.c.l.b16 %v156
  %v929 = vunpack.c.l.b16 %v157
  %v930 = vunpack.c.l.b16 %v158
  %v931 = vunpack.c.l.b16 %v159
  %v932 = vunpack.c.l.b16 %v160
  %v933 = vunpack.c.l.b16 %v161
  %v934 = vunpack.c.l.b16 %v162
  %v935 = vunpack.c.l.b16 %v163
  %v936 = vunpack.c.l.b16 %v164
  %v937 = vunpack.c.l.b16 %v165
  %v938 = vunpack.c.l.b16 %v166
  %v939 = vunpack.c.l.b16 %v167
  %v940 = vunpack.c.l.b16 %v168
  %v941 = vunpack.c.l.b16 %v169
  %v942 = vunpack.c.l.b16 %v170
  %v943 = vunpack.c.l.b16 %v171
  %v944 = vunpack.c.l.b16 %v172
  %v945 = vunpack.c.l.b16 %v173
  %v946 = vunpack.c.l.b16 %v174
  %v947 = vunpack.c.l.b16 %v175
  %v948 = vunpack.c.l.b16 %v176
  %v949 = vunpack.c.l.b16 %v177
  %v950 = vunpack.c.l.b16 %v178
  %v951 = vunpack.c.l.b16 %v179
  %v952 = vunpack.c.l.b16 %v180
  %v953 = vunpack.c.l.b16 %v181
  %v954 = vunpack.c.l.b16 %v182
  %v955 = vunpack.c.l.b16 %v183
  %v956 = vunpack.c.l.b16 %v184
  %v957 = vunpack.c.l.b16 %v185
  %v958 = vunpack.c.l.b16 %v186
  %v959 = vunpack.c.l.b16 %v187
  %v960 = vunpack.c.l.b16 %v188
  %v961 = vunpack.c.l.b16 %v189
  %v962 = vunpack.c.l.b16 %v190
  %v963 = vunpack.c.l.b16 %v191
  %v964 = vunpack.c.l.b16 %v192
  %v965 = vunpack.c.l.b16 %v193
  %v966 = vunpack.c.l.b16 %v194
  %v967 = vunpack.c.l.b16 %v195
  %v968 = vunpack.c.l.b16 %v196
  %v969 = vunpack.c.l.b16 %v197
  %v970 = vunpack.c.l.b16 %v198
  %v971 = vunpack.c.l.b16 %v199
  %v972 = vunpack.c.l.b16 %v200
  %v973 = vunpack.c.l.b16 %v201
  %v974 = vunpack.c.l.b16 %v202
  %v975 = vunpack.c.l.b16 %v203
  %v976 = vunpack.c.l.b16 %v204
  %v977 = vunpack.c.l.b16 %v205
  %v978 = vpack.c.b16 %v915, %v914
  %v979 = vpack.c.b16 %v917, %v916
  %v980 = vpack.c.b16 %v919, %v918
  %v981 = vpack.c.b16 %v921, %v920
  %v982 = vpack.c.b16 %v923, %v922
  %v983 = vpack.c.b16 %v925, %v924
  %v984 = vpack.c.b16 %v927, %v926
  %v985 = vpack.c.b16 %v929, %v928
  %v986 = vpack.c.b16 %v931, %v930
  %v987 = vpack.c.b16 %v933, %v932
  %v988 = vpack.c.b16 %v935, %v934
  %v989 = vpack.c.b16 %v937, %v936
  %v990 = vpack.c.b16 %v939, %v938
  %v991 = vpack.c.b16 %v941, %v940
  %v992 = vpack.c.b16 %v943, %v942
  %v993 = vpack.c.b16 %v945, %v944
  %v994 = vpack.c.b16 %v947, %v946
  %v995 = vpack.c.b16 %v949, %v948
  %v996 = vpack.c.b16 %v951, %v950
  %v997 = vpack.c.b16 %v953, %v952
  %v998 = vpack.c.b16 %v955, %v954
  %v999 = vpack.c.b16 %v957, %v956
  %v1000 = vpack.c.b16 %v959, %v958
  %v1001 = vpack.c.b16 %v961, %v960
  %v1002 = vpack.c.b16 %v963, %v962
  %v1003 = vpack.c.b16 %v965, %v964
  %v1004 = vpack.c.b16 %v967, %v966
  %v1005 = vpack.c.b16 %v969, %v968
  %v1006 = vpack.c.b16 %v971, %v970
  %v1007 = vpack.c.b16 %v973, %v972
  %v1008 = vpack.c.b16 %v975, %v974
  %v1009 = vpack.c.b16 %v977, %v976
  %1042 = vmatpush.bf16.msra.mxu0 %v985
  %1043 = vmatpush.bf16.msra.mxu0 %v984
  %1044 = vmatpush.bf16.msra.mxu0 %v983
  %1045 = vmatpush.bf16.msra.mxu0 %v982
  %1046 = vmatpush.bf16.msra.mxu0 %v981
  %1047 = vmatpush.bf16.msra.mxu0 %v980
  %1048 = vmatpush.bf16.msra.mxu0 %v979
  %1049 = vmatpush.bf16.msra.mxu0 %v978
  %1050 = vmatmul.bf16.gmra.mxu0 %v594
  %v1051 = vpop.f32.mrf.mxu0
  %v1052 = vadd.f32 %v208, %v1051
  %v1053 = vpop.f32.mrf.mxu0
  %v1054 = vadd.f32 %v208, %v1053
  %1055 = vmatmul.bf16.gmra.mxu0 %v598
  %v1056 = vpop.f32.mrf.mxu0
  %v1057 = vadd.f32 %v208, %v1056
  %v1058 = vpop.f32.mrf.mxu0
  %v1059 = vadd.f32 %v208, %v1058
  %1060 = vmatmul.bf16.gmra.mxu0 %v602
  %v1061 = vpop.f32.mrf.mxu0
  %v1062 = vadd.f32 %v208, %v1061
  %v1063 = vpop.f32.mrf.mxu0
  %v1064 = vadd.f32 %v208, %v1063
  %1065 = vmatmul.bf16.gmra.mxu0 %v606
  %v1066 = vpop.f32.mrf.mxu0
  %v1067 = vadd.f32 %v208, %v1066
  %v1068 = vpop.f32.mrf.mxu0
  %v1069 = vadd.f32 %v208, %v1068
  %1070 = vmatmul.bf16.gmra.mxu0 %v610
  %v1071 = vpop.f32.mrf.mxu0
  %v1072 = vadd.f32 %v208, %v1071
  %v1073 = vpop.f32.mrf.mxu0
  %v1074 = vadd.f32 %v208, %v1073
  %1075 = vmatmul.bf16.gmra.mxu0 %v614
  %v1076 = vpop.f32.mrf.mxu0
  %v1077 = vadd.f32 %v208, %v1076
  %v1078 = vpop.f32.mrf.mxu0
  %v1079 = vadd.f32 %v208, %v1078
  %1080 = vmatmul.bf16.gmra.mxu0 %v618
  %v1081 = vpop.f32.mrf.mxu0
  %v1082 = vadd.f32 %v208, %v1081
  %v1083 = vpop.f32.mrf.mxu0
  %v1084 = vadd.f32 %v208, %v1083
  %1085 = vmatmul.bf16.gmra.mxu0 %v622
  %v1086 = vpop.f32.mrf.mxu0
  %v1087 = vadd.f32 %v208, %v1086
  %v1088 = vpop.f32.mrf.mxu0
  %v1089 = vadd.f32 %v208, %v1088
  %1090 = vmatmul.bf16.gmra.mxu0 %v626
  %v1091 = vpop.f32.mrf.mxu0
  %v1092 = vadd.f32 %v208, %v1091
  %v1093 = vpop.f32.mrf.mxu0
  %v1094 = vadd.f32 %v208, %v1093
  %1095 = vmatmul.bf16.gmra.mxu0 %v630
  %v1096 = vpop.f32.mrf.mxu0
  %v1097 = vadd.f32 %v208, %v1096
  %v1098 = vpop.f32.mrf.mxu0
  %v1099 = vadd.f32 %v208, %v1098
  %1100 = vmatmul.bf16.gmra.mxu0 %v634
  %v1101 = vpop.f32.mrf.mxu0
  %v1102 = vadd.f32 %v208, %v1101
  %v1103 = vpop.f32.mrf.mxu0
  %v1104 = vadd.f32 %v208, %v1103
  %1105 = vmatmul.bf16.gmra.mxu0 %v638
  %v1106 = vpop.f32.mrf.mxu0
  %v1107 = vadd.f32 %v208, %v1106
  %v1108 = vpop.f32.mrf.mxu0
  %v1109 = vadd.f32 %v208, %v1108
  %1110 = vmatmul.bf16.gmra.mxu0 %v642
  %v1111 = vpop.f32.mrf.mxu0
  %v1112 = vadd.f32 %v208, %v1111
  %v1113 = vpop.f32.mrf.mxu0
  %v1114 = vadd.f32 %v208, %v1113
  %1115 = vmatmul.bf16.gmra.mxu0 %v646
  %v1116 = vpop.f32.mrf.mxu0
  %v1117 = vadd.f32 %v208, %v1116
  %v1118 = vpop.f32.mrf.mxu0
  %v1119 = vadd.f32 %v208, %v1118
  %1120 = vmatmul.bf16.gmra.mxu0 %v650
  %v1121 = vpop.f32.mrf.mxu0
  %v1122 = vadd.f32 %v208, %v1121
  %v1123 = vpop.f32.mrf.mxu0
  %v1124 = vadd.f32 %v208, %v1123
  %1125 = vmatmul.bf16.gmra.mxu0 %v654
  %v1126 = vpop.f32.mrf.mxu0
  %v1127 = vadd.f32 %v208, %v1126
  %v1128 = vpop.f32.mrf.mxu0
  %v1129 = vadd.f32 %v208, %v1128
  %1130 = vmatmul.bf16.gmra.mxu0 %v658
  %v1131 = vpop.f32.mrf.mxu0
  %v1132 = vadd.f32 %v208, %v1131
  %v1133 = vpop.f32.mrf.mxu0
  %v1134 = vadd.f32 %v208, %v1133
  %1135 = vmatmul.bf16.gmra.mxu0 %v662
  %v1136 = vpop.f32.mrf.mxu0
  %v1137 = vadd.f32 %v208, %v1136
  %v1138 = vpop.f32.mrf.mxu0
  %v1139 = vadd.f32 %v208, %v1138
  %1140 = vmatmul.bf16.gmra.mxu0 %v666
  %v1141 = vpop.f32.mrf.mxu0
  %v1142 = vadd.f32 %v208, %v1141
  %v1143 = vpop.f32.mrf.mxu0
  %v1144 = vadd.f32 %v208, %v1143
  %1145 = vmatmul.bf16.gmra.mxu0 %v670
  %v1146 = vpop.f32.mrf.mxu0
  %v1147 = vadd.f32 %v208, %v1146
  %v1148 = vpop.f32.mrf.mxu0
  %v1149 = vadd.f32 %v208, %v1148
  %1150 = vmatmul.bf16.gmra.mxu0 %v674
  %v1151 = vpop.f32.mrf.mxu0
  %v1152 = vadd.f32 %v208, %v1151
  %v1153 = vpop.f32.mrf.mxu0
  %v1154 = vadd.f32 %v208, %v1153
  %1155 = vmatmul.bf16.gmra.mxu0 %v678
  %v1156 = vpop.f32.mrf.mxu0
  %v1157 = vadd.f32 %v208, %v1156
  %v1158 = vpop.f32.mrf.mxu0
  %v1159 = vadd.f32 %v208, %v1158
  %1160 = vmatmul.bf16.gmra.mxu0 %v682
  %v1161 = vpop.f32.mrf.mxu0
  %v1162 = vadd.f32 %v208, %v1161
  %v1163 = vpop.f32.mrf.mxu0
  %v1164 = vadd.f32 %v208, %v1163
  %1165 = vmatmul.bf16.gmra.mxu0 %v686
  %v1166 = vpop.f32.mrf.mxu0
  %v1167 = vadd.f32 %v208, %v1166
  %v1168 = vpop.f32.mrf.mxu0
  %v1169 = vadd.f32 %v208, %v1168
  %1170 = vmatmul.bf16.gmra.mxu0 %v690
  %v1171 = vpop.f32.mrf.mxu0
  %v1172 = vadd.f32 %v208, %v1171
  %v1173 = vpop.f32.mrf.mxu0
  %v1174 = vadd.f32 %v208, %v1173
  %1175 = vmatmul.bf16.gmra.mxu0 %v694
  %v1176 = vpop.f32.mrf.mxu0
  %v1177 = vadd.f32 %v208, %v1176
  %v1178 = vpop.f32.mrf.mxu0
  %v1179 = vadd.f32 %v208, %v1178
  %1180 = vmatmul.bf16.gmra.mxu0 %v698
  %v1181 = vpop.f32.mrf.mxu0
  %v1182 = vadd.f32 %v208, %v1181
  %v1183 = vpop.f32.mrf.mxu0
  %v1184 = vadd.f32 %v208, %v1183
  %1185 = vmatmul.bf16.gmra.mxu0 %v702
  %v1186 = vpop.f32.mrf.mxu0
  %v1187 = vadd.f32 %v208, %v1186
  %v1188 = vpop.f32.mrf.mxu0
  %v1189 = vadd.f32 %v208, %v1188
  %1190 = vmatmul.bf16.gmra.mxu0 %v706
  %v1191 = vpop.f32.mrf.mxu0
  %v1192 = vadd.f32 %v208, %v1191
  %v1193 = vpop.f32.mrf.mxu0
  %v1194 = vadd.f32 %v208, %v1193
  %1195 = vmatmul.bf16.gmra.mxu0 %v710
  %v1196 = vpop.f32.mrf.mxu0
  %v1197 = vadd.f32 %v208, %v1196
  %v1198 = vpop.f32.mrf.mxu0
  %v1199 = vadd.f32 %v208, %v1198
  %1200 = vmatmul.bf16.gmra.mxu0 %v714
  %v1201 = vpop.f32.mrf.mxu0
  %v1202 = vadd.f32 %v208, %v1201
  %v1203 = vpop.f32.mrf.mxu0
  %v1204 = vadd.f32 %v208, %v1203
  %1205 = vmatmul.bf16.gmra.mxu0 %v718
  %v1206 = vpop.f32.mrf.mxu0
  %v1207 = vadd.f32 %v208, %v1206
  %v1208 = vpop.f32.mrf.mxu0
  %v1209 = vadd.f32 %v208, %v1208
  %1210 = vdwg.mxu0
  %1211 = vmatpush.bf16.msra.mxu0 %v993
  %1212 = vmatpush.bf16.msra.mxu0 %v992
  %1213 = vmatpush.bf16.msra.mxu0 %v991
  %1214 = vmatpush.bf16.msra.mxu0 %v990
  %1215 = vmatpush.bf16.msra.mxu0 %v989
  %1216 = vmatpush.bf16.msra.mxu0 %v988
  %1217 = vmatpush.bf16.msra.mxu0 %v987
  %1218 = vmatpush.bf16.msra.mxu0 %v986
  %1219 = vmatmul.bf16.gmra.mxu0 %v595
  %v1220 = vpop.f32.mrf.mxu0
  %v1221 = vadd.f32 %v1052, %v1220
  %v1222 = vpop.f32.mrf.mxu0
  %v1223 = vadd.f32 %v1054, %v1222
  %1224 = vmatmul.bf16.gmra.mxu0 %v599
  %v1225 = vpop.f32.mrf.mxu0
  %v1226 = vadd.f32 %v1057, %v1225
  %v1227 = vpop.f32.mrf.mxu0
  %v1228 = vadd.f32 %v1059, %v1227
  %1229 = vmatmul.bf16.gmra.mxu0 %v603
  %v1230 = vpop.f32.mrf.mxu0
  %v1231 = vadd.f32 %v1062, %v1230
  %v1232 = vpop.f32.mrf.mxu0
  %v1233 = vadd.f32 %v1064, %v1232
  %1234 = vmatmul.bf16.gmra.mxu0 %v607
  %v1235 = vpop.f32.mrf.mxu0
  %v1236 = vadd.f32 %v1067, %v1235
  %v1237 = vpop.f32.mrf.mxu0
  %v1238 = vadd.f32 %v1069, %v1237
  %1239 = vmatmul.bf16.gmra.mxu0 %v611
  %v1240 = vpop.f32.mrf.mxu0
  %v1241 = vadd.f32 %v1072, %v1240
  %v1242 = vpop.f32.mrf.mxu0
  %v1243 = vadd.f32 %v1074, %v1242
  %1244 = vmatmul.bf16.gmra.mxu0 %v615
  %v1245 = vpop.f32.mrf.mxu0
  %v1246 = vadd.f32 %v1077, %v1245
  %v1247 = vpop.f32.mrf.mxu0
  %v1248 = vadd.f32 %v1079, %v1247
  %1249 = vmatmul.bf16.gmra.mxu0 %v619
  %v1250 = vpop.f32.mrf.mxu0
  %v1251 = vadd.f32 %v1082, %v1250
  %v1252 = vpop.f32.mrf.mxu0
  %v1253 = vadd.f32 %v1084, %v1252
  %1254 = vmatmul.bf16.gmra.mxu0 %v623
  %v1255 = vpop.f32.mrf.mxu0
  %v1256 = vadd.f32 %v1087, %v1255
  %v1257 = vpop.f32.mrf.mxu0
  %v1258 = vadd.f32 %v1089, %v1257
  %1259 = vmatmul.bf16.gmra.mxu0 %v627
  %v1260 = vpop.f32.mrf.mxu0
  %v1261 = vadd.f32 %v1092, %v1260
  %v1262 = vpop.f32.mrf.mxu0
  %v1263 = vadd.f32 %v1094, %v1262
  %1264 = vmatmul.bf16.gmra.mxu0 %v631
  %v1265 = vpop.f32.mrf.mxu0
  %v1266 = vadd.f32 %v1097, %v1265
  %v1267 = vpop.f32.mrf.mxu0
  %v1268 = vadd.f32 %v1099, %v1267
  %1269 = vmatmul.bf16.gmra.mxu0 %v635
  %v1270 = vpop.f32.mrf.mxu0
  %v1271 = vadd.f32 %v1102, %v1270
  %v1272 = vpop.f32.mrf.mxu0
  %v1273 = vadd.f32 %v1104, %v1272
  %1274 = vmatmul.bf16.gmra.mxu0 %v639
  %v1275 = vpop.f32.mrf.mxu0
  %v1276 = vadd.f32 %v1107, %v1275
  %v1277 = vpop.f32.mrf.mxu0
  %v1278 = vadd.f32 %v1109, %v1277
  %1279 = vmatmul.bf16.gmra.mxu0 %v643
  %v1280 = vpop.f32.mrf.mxu0
  %v1281 = vadd.f32 %v1112, %v1280
  %v1282 = vpop.f32.mrf.mxu0
  %v1283 = vadd.f32 %v1114, %v1282
  %1284 = vmatmul.bf16.gmra.mxu0 %v647
  %v1285 = vpop.f32.mrf.mxu0
  %v1286 = vadd.f32 %v1117, %v1285
  %v1287 = vpop.f32.mrf.mxu0
  %v1288 = vadd.f32 %v1119, %v1287
  %1289 = vmatmul.bf16.gmra.mxu0 %v651
  %v1290 = vpop.f32.mrf.mxu0
  %v1291 = vadd.f32 %v1122, %v1290
  %v1292 = vpop.f32.mrf.mxu0
  %v1293 = vadd.f32 %v1124, %v1292
  %1294 = vmatmul.bf16.gmra.mxu0 %v655
  %v1295 = vpop.f32.mrf.mxu0
  %v1296 = vadd.f32 %v1127, %v1295
  %v1297 = vpop.f32.mrf.mxu0
  %v1298 = vadd.f32 %v1129, %v1297
  %1299 = vmatmul.bf16.gmra.mxu0 %v659
  %v1300 = vpop.f32.mrf.mxu0
  %v1301 = vadd.f32 %v1132, %v1300
  %v1302 = vpop.f32.mrf.mxu0
  %v1303 = vadd.f32 %v1134, %v1302
  %1304 = vmatmul.bf16.gmra.mxu0 %v663
  %v1305 = vpop.f32.mrf.mxu0
  %v1306 = vadd.f32 %v1137, %v1305
  %v1307 = vpop.f32.mrf.mxu0
  %v1308 = vadd.f32 %v1139, %v1307
  %1309 = vmatmul.bf16.gmra.mxu0 %v667
  %v1310 = vpop.f32.mrf.mxu0
  %v1311 = vadd.f32 %v1142, %v1310
  %v1312 = vpop.f32.mrf.mxu0
  %v1313 = vadd.f32 %v1144, %v1312
  %1314 = vmatmul.bf16.gmra.mxu0 %v671
  %v1315 = vpop.f32.mrf.mxu0
  %v1316 = vadd.f32 %v1147, %v1315
  %v1317 = vpop.f32.mrf.mxu0
  %v1318 = vadd.f32 %v1149, %v1317
  %1319 = vmatmul.bf16.gmra.mxu0 %v675
  %v1320 = vpop.f32.mrf.mxu0
  %v1321 = vadd.f32 %v1152, %v1320
  %v1322 = vpop.f32.mrf.mxu0
  %v1323 = vadd.f32 %v1154, %v1322
  %1324 = vmatmul.bf16.gmra.mxu0 %v679
  %v1325 = vpop.f32.mrf.mxu0
  %v1326 = vadd.f32 %v1157, %v1325
  %v1327 = vpop.f32.mrf.mxu0
  %v1328 = vadd.f32 %v1159, %v1327
  %1329 = vmatmul.bf16.gmra.mxu0 %v683
  %v1330 = vpop.f32.mrf.mxu0
  %v1331 = vadd.f32 %v1162, %v1330
  %v1332 = vpop.f32.mrf.mxu0
  %v1333 = vadd.f32 %v1164, %v1332
  %1334 = vmatmul.bf16.gmra.mxu0 %v687
  %v1335 = vpop.f32.mrf.mxu0
  %v1336 = vadd.f32 %v1167, %v1335
  %v1337 = vpop.f32.mrf.mxu0
  %v1338 = vadd.f32 %v1169, %v1337
  %1339 = vmatmul.bf16.gmra.mxu0 %v691
  %v1340 = vpop.f32.mrf.mxu0
  %v1341 = vadd.f32 %v1172, %v1340
  %v1342 = vpop.f32.mrf.mxu0
  %v1343 = vadd.f32 %v1174, %v1342
  %1344 = vmatmul.bf16.gmra.mxu0 %v695
  %v1345 = vpop.f32.mrf.mxu0
  %v1346 = vadd.f32 %v1177, %v1345
  %v1347 = vpop.f32.mrf.mxu0
  %v1348 = vadd.f32 %v1179, %v1347
  %1349 = vmatmul.bf16.gmra.mxu0 %v699
  %v1350 = vpop.f32.mrf.mxu0
  %v1351 = vadd.f32 %v1182, %v1350
  %v1352 = vpop.f32.mrf.mxu0
  %v1353 = vadd.f32 %v1184, %v1352
  %1354 = vmatmul.bf16.gmra.mxu0 %v703
  %v1355 = vpop.f32.mrf.mxu0
  %v1356 = vadd.f32 %v1187, %v1355
  %v1357 = vpop.f32.mrf.mxu0
  %v1358 = vadd.f32 %v1189, %v1357
  %1359 = vmatmul.bf16.gmra.mxu0 %v707
  %v1360 = vpop.f32.mrf.mxu0
  %v1361 = vadd.f32 %v1192, %v1360
  %v1362 = vpop.f32.mrf.mxu0
  %v1363 = vadd.f32 %v1194, %v1362
  %1364 = vmatmul.bf16.gmra.mxu0 %v711
  %v1365 = vpop.f32.mrf.mxu0
  %v1366 = vadd.f32 %v1197, %v1365
  %v1367 = vpop.f32.mrf.mxu0
  %v1368 = vadd.f32 %v1199, %v1367
  %1369 = vmatmul.bf16.gmra.mxu0 %v715
  %v1370 = vpop.f32.mrf.mxu0
  %v1371 = vadd.f32 %v1202, %v1370
  %v1372 = vpop.f32.mrf.mxu0
  %v1373 = vadd.f32 %v1204, %v1372
  %1374 = vmatmul.bf16.gmra.mxu0 %v719
  %v1375 = vpop.f32.mrf.mxu0
  %v1376 = vadd.f32 %v1207, %v1375
  %v1377 = vpop.f32.mrf.mxu0
  %v1378 = vadd.f32 %v1209, %v1377
  %1379 = vdwg.mxu0
  %1380 = vmatpush.bf16.msra.mxu0 %v1001
  %1381 = vmatpush.bf16.msra.mxu0 %v1000
  %1382 = vmatpush.bf16.msra.mxu0 %v999
  %1383 = vmatpush.bf16.msra.mxu0 %v998
  %1384 = vmatpush.bf16.msra.mxu0 %v997
  %1385 = vmatpush.bf16.msra.mxu0 %v996
  %1386 = vmatpush.bf16.msra.mxu0 %v995
  %1387 = vmatpush.bf16.msra.mxu0 %v994
  %1388 = vmatmul.bf16.gmra.mxu0 %v596
  %v1389 = vpop.f32.mrf.mxu0
  %v1390 = vadd.f32 %v1221, %v1389
  %v1391 = vpop.f32.mrf.mxu0
  %v1392 = vadd.f32 %v1223, %v1391
  %1393 = vmatmul.bf16.gmra.mxu0 %v600
  %v1394 = vpop.f32.mrf.mxu0
  %v1395 = vadd.f32 %v1226, %v1394
  %v1396 = vpop.f32.mrf.mxu0
  %v1397 = vadd.f32 %v1228, %v1396
  %1398 = vmatmul.bf16.gmra.mxu0 %v604
  %v1399 = vpop.f32.mrf.mxu0
  %v1400 = vadd.f32 %v1231, %v1399
  %v1401 = vpop.f32.mrf.mxu0
  %v1402 = vadd.f32 %v1233, %v1401
  %1403 = vmatmul.bf16.gmra.mxu0 %v608
  %v1404 = vpop.f32.mrf.mxu0
  %v1405 = vadd.f32 %v1236, %v1404
  %v1406 = vpop.f32.mrf.mxu0
  %v1407 = vadd.f32 %v1238, %v1406
  %1408 = vmatmul.bf16.gmra.mxu0 %v612
  %v1409 = vpop.f32.mrf.mxu0
  %v1410 = vadd.f32 %v1241, %v1409
  %v1411 = vpop.f32.mrf.mxu0
  %v1412 = vadd.f32 %v1243, %v1411
  %1413 = vmatmul.bf16.gmra.mxu0 %v616
  %v1414 = vpop.f32.mrf.mxu0
  %v1415 = vadd.f32 %v1246, %v1414
  %v1416 = vpop.f32.mrf.mxu0
  %v1417 = vadd.f32 %v1248, %v1416
  %1418 = vmatmul.bf16.gmra.mxu0 %v620
  %v1419 = vpop.f32.mrf.mxu0
  %v1420 = vadd.f32 %v1251, %v1419
  %v1421 = vpop.f32.mrf.mxu0
  %v1422 = vadd.f32 %v1253, %v1421
  %1423 = vmatmul.bf16.gmra.mxu0 %v624
  %v1424 = vpop.f32.mrf.mxu0
  %v1425 = vadd.f32 %v1256, %v1424
  %v1426 = vpop.f32.mrf.mxu0
  %v1427 = vadd.f32 %v1258, %v1426
  %1428 = vmatmul.bf16.gmra.mxu0 %v628
  %v1429 = vpop.f32.mrf.mxu0
  %v1430 = vadd.f32 %v1261, %v1429
  %v1431 = vpop.f32.mrf.mxu0
  %v1432 = vadd.f32 %v1263, %v1431
  %1433 = vmatmul.bf16.gmra.mxu0 %v632
  %v1434 = vpop.f32.mrf.mxu0
  %v1435 = vadd.f32 %v1266, %v1434
  %v1436 = vpop.f32.mrf.mxu0
  %v1437 = vadd.f32 %v1268, %v1436
  %1438 = vmatmul.bf16.gmra.mxu0 %v636
  %v1439 = vpop.f32.mrf.mxu0
  %v1440 = vadd.f32 %v1271, %v1439
  %v1441 = vpop.f32.mrf.mxu0
  %v1442 = vadd.f32 %v1273, %v1441
  %1443 = vmatmul.bf16.gmra.mxu0 %v640
  %v1444 = vpop.f32.mrf.mxu0
  %v1445 = vadd.f32 %v1276, %v1444
  %v1446 = vpop.f32.mrf.mxu0
  %v1447 = vadd.f32 %v1278, %v1446
  %1448 = vmatmul.bf16.gmra.mxu0 %v644
  %v1449 = vpop.f32.mrf.mxu0
  %v1450 = vadd.f32 %v1281, %v1449
  %v1451 = vpop.f32.mrf.mxu0
  %v1452 = vadd.f32 %v1283, %v1451
  %1453 = vmatmul.bf16.gmra.mxu0 %v648
  %v1454 = vpop.f32.mrf.mxu0
  %v1455 = vadd.f32 %v1286, %v1454
  %v1456 = vpop.f32.mrf.mxu0
  %v1457 = vadd.f32 %v1288, %v1456
  %1458 = vmatmul.bf16.gmra.mxu0 %v652
  %v1459 = vpop.f32.mrf.mxu0
  %v1460 = vadd.f32 %v1291, %v1459
  %v1461 = vpop.f32.mrf.mxu0
  %v1462 = vadd.f32 %v1293, %v1461
  %1463 = vmatmul.bf16.gmra.mxu0 %v656
  %v1464 = vpop.f32.mrf.mxu0
  %v1465 = vadd.f32 %v1296, %v1464
  %v1466 = vpop.f32.mrf.mxu0
  %v1467 = vadd.f32 %v1298, %v1466
  %1468 = vmatmul.bf16.gmra.mxu0 %v660
  %v1469 = vpop.f32.mrf.mxu0
  %v1470 = vadd.f32 %v1301, %v1469
  %v1471 = vpop.f32.mrf.mxu0
  %v1472 = vadd.f32 %v1303, %v1471
  %1473 = vmatmul.bf16.gmra.mxu0 %v664
  %v1474 = vpop.f32.mrf.mxu0
  %v1475 = vadd.f32 %v1306, %v1474
  %v1476 = vpop.f32.mrf.mxu0
  %v1477 = vadd.f32 %v1308, %v1476
  %1478 = vmatmul.bf16.gmra.mxu0 %v668
  %v1479 = vpop.f32.mrf.mxu0
  %v1480 = vadd.f32 %v1311, %v1479
  %v1481 = vpop.f32.mrf.mxu0
  %v1482 = vadd.f32 %v1313, %v1481
  %1483 = vmatmul.bf16.gmra.mxu0 %v672
  %v1484 = vpop.f32.mrf.mxu0
  %v1485 = vadd.f32 %v1316, %v1484
  %v1486 = vpop.f32.mrf.mxu0
  %v1487 = vadd.f32 %v1318, %v1486
  %1488 = vmatmul.bf16.gmra.mxu0 %v676
  %v1489 = vpop.f32.mrf.mxu0
  %v1490 = vadd.f32 %v1321, %v1489
  %v1491 = vpop.f32.mrf.mxu0
  %v1492 = vadd.f32 %v1323, %v1491
  %1493 = vmatmul.bf16.gmra.mxu0 %v680
  %v1494 = vpop.f32.mrf.mxu0
  %v1495 = vadd.f32 %v1326, %v1494
  %v1496 = vpop.f32.mrf.mxu0
  %v1497 = vadd.f32 %v1328, %v1496
  %1498 = vmatmul.bf16.gmra.mxu0 %v684
  %v1499 = vpop.f32.mrf.mxu0
  %v1500 = vadd.f32 %v1331, %v1499
  %v1501 = vpop.f32.mrf.mxu0
  %v1502 = vadd.f32 %v1333, %v1501
  %1503 = vmatmul.bf16.gmra.mxu0 %v688
  %v1504 = vpop.f32.mrf.mxu0
  %v1505 = vadd.f32 %v1336, %v1504
  %v1506 = vpop.f32.mrf.mxu0
  %v1507 = vadd.f32 %v1338, %v1506
  %1508 = vmatmul.bf16.gmra.mxu0 %v692
  %v1509 = vpop.f32.mrf.mxu0
  %v1510 = vadd.f32 %v1341, %v1509
  %v1511 = vpop.f32.mrf.mxu0
  %v1512 = vadd.f32 %v1343, %v1511
  %1513 = vmatmul.bf16.gmra.mxu0 %v696
  %v1514 = vpop.f32.mrf.mxu0
  %v1515 = vadd.f32 %v1346, %v1514
  %v1516 = vpop.f32.mrf.mxu0
  %v1517 = vadd.f32 %v1348, %v1516
  %1518 = vmatmul.bf16.gmra.mxu0 %v700
  %v1519 = vpop.f32.mrf.mxu0
  %v1520 = vadd.f32 %v1351, %v1519
  %v1521 = vpop.f32.mrf.mxu0
  %v1522 = vadd.f32 %v1353, %v1521
  %1523 = vmatmul.bf16.gmra.mxu0 %v704
  %v1524 = vpop.f32.mrf.mxu0
  %v1525 = vadd.f32 %v1356, %v1524
  %v1526 = vpop.f32.mrf.mxu0
  %v1527 = vadd.f32 %v1358, %v1526
  %1528 = vmatmul.bf16.gmra.mxu0 %v708
  %v1529 = vpop.f32.mrf.mxu0
  %v1530 = vadd.f32 %v1361, %v1529
  %v1531 = vpop.f32.mrf.mxu0
  %v1532 = vadd.f32 %v1363, %v1531
  %1533 = vmatmul.bf16.gmra.mxu0 %v712
  %v1534 = vpop.f32.mrf.mxu0
  %v1535 = vadd.f32 %v1366, %v1534
  %v1536 = vpop.f32.mrf.mxu0
  %v1537 = vadd.f32 %v1368, %v1536
  %1538 = vmatmul.bf16.gmra.mxu0 %v716
  %v1539 = vpop.f32.mrf.mxu0
  %v1540 = vadd.f32 %v1371, %v1539
  %v1541 = vpop.f32.mrf.mxu0
  %v1542 = vadd.f32 %v1373, %v1541
  %1543 = vmatmul.bf16.gmra.mxu0 %v720
  %v1544 = vpop.f32.mrf.mxu0
  %v1545 = vadd.f32 %v1376, %v1544
  %v1546 = vpop.f32.mrf.mxu0
  %v1547 = vadd.f32 %v1378, %v1546
  %1548 = vdwg.mxu0
  %1549 = vmatpush.bf16.msra.mxu0 %v1009
  %1550 = vmatpush.bf16.msra.mxu0 %v1008
  %1551 = vmatpush.bf16.msra.mxu0 %v1007
  %1552 = vmatpush.bf16.msra.mxu0 %v1006
  %1553 = vmatpush.bf16.msra.mxu0 %v1005
  %1554 = vmatpush.bf16.msra.mxu0 %v1004
  %1555 = vmatpush.bf16.msra.mxu0 %v1003
  %1556 = vmatpush.bf16.msra.mxu0 %v1002
  %1557 = vmatmul.bf16.gmra.mxu0 %v597
  %v1558 = vpop.f32.mrf.mxu0
  %v1559 = vadd.f32 %v1390, %v1558
  %v1560 = vpop.f32.mrf.mxu0
  %v1561 = vadd.f32 %v1392, %v1560
  %1562 = vmatmul.bf16.gmra.mxu0 %v601
  %v1563 = vpop.f32.mrf.mxu0
  %v1564 = vadd.f32 %v1395, %v1563
  %v1565 = vpop.f32.mrf.mxu0
  %v1566 = vadd.f32 %v1397, %v1565
  %1567 = vmatmul.bf16.gmra.mxu0 %v605
  %v1568 = vpop.f32.mrf.mxu0
  %v1569 = vadd.f32 %v1400, %v1568
  %v1570 = vpop.f32.mrf.mxu0
  %v1571 = vadd.f32 %v1402, %v1570
  %1572 = vmatmul.bf16.gmra.mxu0 %v609
  %v1573 = vpop.f32.mrf.mxu0
  %v1574 = vadd.f32 %v1405, %v1573
  %v1575 = vpop.f32.mrf.mxu0
  %v1576 = vadd.f32 %v1407, %v1575
  %1577 = vmatmul.bf16.gmra.mxu0 %v613
  %v1578 = vpop.f32.mrf.mxu0
  %v1579 = vadd.f32 %v1410, %v1578
  %v1580 = vpop.f32.mrf.mxu0
  %v1581 = vadd.f32 %v1412, %v1580
  %1582 = vmatmul.bf16.gmra.mxu0 %v617
  %v1583 = vpop.f32.mrf.mxu0
  %v1584 = vadd.f32 %v1415, %v1583
  %v1585 = vpop.f32.mrf.mxu0
  %v1586 = vadd.f32 %v1417, %v1585
  %1587 = vmatmul.bf16.gmra.mxu0 %v621
  %v1588 = vpop.f32.mrf.mxu0
  %v1589 = vadd.f32 %v1420, %v1588
  %v1590 = vpop.f32.mrf.mxu0
  %v1591 = vadd.f32 %v1422, %v1590
  %1592 = vmatmul.bf16.gmra.mxu0 %v625
  %v1593 = vpop.f32.mrf.mxu0
  %v1594 = vadd.f32 %v1425, %v1593
  %v1595 = vpop.f32.mrf.mxu0
  %v1596 = vadd.f32 %v1427, %v1595
  %1597 = vmatmul.bf16.gmra.mxu0 %v629
  %v1598 = vpop.f32.mrf.mxu0
  %v1599 = vadd.f32 %v1430, %v1598
  %v1600 = vpop.f32.mrf.mxu0
  %v1601 = vadd.f32 %v1432, %v1600
  %1602 = vmatmul.bf16.gmra.mxu0 %v633
  %v1603 = vpop.f32.mrf.mxu0
  %v1604 = vadd.f32 %v1435, %v1603
  %v1605 = vpop.f32.mrf.mxu0
  %v1606 = vadd.f32 %v1437, %v1605
  %1607 = vmatmul.bf16.gmra.mxu0 %v637
  %v1608 = vpop.f32.mrf.mxu0
  %v1609 = vadd.f32 %v1440, %v1608
  %v1610 = vpop.f32.mrf.mxu0
  %v1611 = vadd.f32 %v1442, %v1610
  %1612 = vmatmul.bf16.gmra.mxu0 %v641
  %v1613 = vpop.f32.mrf.mxu0
  %v1614 = vadd.f32 %v1445, %v1613
  %v1615 = vpop.f32.mrf.mxu0
  %v1616 = vadd.f32 %v1447, %v1615
  %1617 = vmatmul.bf16.gmra.mxu0 %v645
  %v1618 = vpop.f32.mrf.mxu0
  %v1619 = vadd.f32 %v1450, %v1618
  %v1620 = vpop.f32.mrf.mxu0
  %v1621 = vadd.f32 %v1452, %v1620
  %1622 = vmatmul.bf16.gmra.mxu0 %v649
  %v1623 = vpop.f32.mrf.mxu0
  %v1624 = vadd.f32 %v1455, %v1623
  %v1625 = vpop.f32.mrf.mxu0
  %v1626 = vadd.f32 %v1457, %v1625
  %1627 = vmatmul.bf16.gmra.mxu0 %v653
  %v1628 = vpop.f32.mrf.mxu0
  %v1629 = vadd.f32 %v1460, %v1628
  %v1630 = vpop.f32.mrf.mxu0
  %v1631 = vadd.f32 %v1462, %v1630
  %1632 = vmatmul.bf16.gmra.mxu0 %v657
  %v1633 = vpop.f32.mrf.mxu0
  %v1634 = vadd.f32 %v1465, %v1633
  %v1635 = vpop.f32.mrf.mxu0
  %v1636 = vadd.f32 %v1467, %v1635
  %1637 = vmatmul.bf16.gmra.mxu0 %v661
  %v1638 = vpop.f32.mrf.mxu0
  %v1639 = vadd.f32 %v1470, %v1638
  %v1640 = vpop.f32.mrf.mxu0
  %v1641 = vadd.f32 %v1472, %v1640
  %1642 = vmatmul.bf16.gmra.mxu0 %v665
  %v1643 = vpop.f32.mrf.mxu0
  %v1644 = vadd.f32 %v1475, %v1643
  %v1645 = vpop.f32.mrf.mxu0
  %v1646 = vadd.f32 %v1477, %v1645
  %1647 = vmatmul.bf16.gmra.mxu0 %v669
  %v1648 = vpop.f32.mrf.mxu0
  %v1649 = vadd.f32 %v1480, %v1648
  %v1650 = vpop.f32.mrf.mxu0
  %v1651 = vadd.f32 %v1482, %v1650
  %1652 = vmatmul.bf16.gmra.mxu0 %v673
  %v1653 = vpop.f32.mrf.mxu0
  %v1654 = vadd.f32 %v1485, %v1653
  %v1655 = vpop.f32.mrf.mxu0
  %v1656 = vadd.f32 %v1487, %v1655
  %1657 = vmatmul.bf16.gmra.mxu0 %v677
  %v1658 = vpop.f32.mrf.mxu0
  %v1659 = vadd.f32 %v1490, %v1658
  %v1660 = vpop.f32.mrf.mxu0
  %v1661 = vadd.f32 %v1492, %v1660
  %1662 = vmatmul.bf16.gmra.mxu0 %v681
  %v1663 = vpop.f32.mrf.mxu0
  %v1664 = vadd.f32 %v1495, %v1663
  %v1665 = vpop.f32.mrf.mxu0
  %v1666 = vadd.f32 %v1497, %v1665
  %1667 = vmatmul.bf16.gmra.mxu0 %v685
  %v1668 = vpop.f32.mrf.mxu0
  %v1669 = vadd.f32 %v1500, %v1668
  %v1670 = vpop.f32.mrf.mxu0
  %v1671 = vadd.f32 %v1502, %v1670
  %1672 = vmatmul.bf16.gmra.mxu0 %v689
  %v1673 = vpop.f32.mrf.mxu0
  %v1674 = vadd.f32 %v1505, %v1673
  %v1675 = vpop.f32.mrf.mxu0
  %v1676 = vadd.f32 %v1507, %v1675
  %1677 = vmatmul.bf16.gmra.mxu0 %v693
  %v1678 = vpop.f32.mrf.mxu0
  %v1679 = vadd.f32 %v1510, %v1678
  %v1680 = vpop.f32.mrf.mxu0
  %v1681 = vadd.f32 %v1512, %v1680
  %1682 = vmatmul.bf16.gmra.mxu0 %v697
  %v1683 = vpop.f32.mrf.mxu0
  %v1684 = vadd.f32 %v1515, %v1683
  %v1685 = vpop.f32.mrf.mxu0
  %v1686 = vadd.f32 %v1517, %v1685
  %1687 = vmatmul.bf16.gmra.mxu0 %v701
  %v1688 = vpop.f32.mrf.mxu0
  %v1689 = vadd.f32 %v1520, %v1688
  %v1690 = vpop.f32.mrf.mxu0
  %v1691 = vadd.f32 %v1522, %v1690
  %1692 = vmatmul.bf16.gmra.mxu0 %v705
  %v1693 = vpop.f32.mrf.mxu0
  %v1694 = vadd.f32 %v1525, %v1693
  %v1695 = vpop.f32.mrf.mxu0
  %v1696 = vadd.f32 %v1527, %v1695
  %1697 = vmatmul.bf16.gmra.mxu0 %v709
  %v1698 = vpop.f32.mrf.mxu0
  %v1699 = vadd.f32 %v1530, %v1698
  %v1700 = vpop.f32.mrf.mxu0
  %v1701 = vadd.f32 %v1532, %v1700
  %1702 = vmatmul.bf16.gmra.mxu0 %v713
  %v1703 = vpop.f32.mrf.mxu0
  %v1704 = vadd.f32 %v1535, %v1703
  %v1705 = vpop.f32.mrf.mxu0
  %v1706 = vadd.f32 %v1537, %v1705
  %1707 = vmatmul.bf16.gmra.mxu0 %v717
  %v1708 = vpop.f32.mrf.mxu0
  %v1709 = vadd.f32 %v1540, %v1708
  %v1710 = vpop.f32.mrf.mxu0
  %v1711 = vadd.f32 %v1542, %v1710
  %1712 = vmatmul.bf16.gmra.mxu0 %v721
  %v1713 = vpop.f32.mrf.mxu0
  %v1714 = vadd.f32 %v1545, %v1713
  %v1715 = vpop.f32.mrf.mxu0
  %v1716 = vadd.f32 %v1547, %v1715
  %1717 = vdwg.mxu0
  %v1718 = vmax.f32 %v1559, 0.0
  %v1719 = vmax.f32 %v1561, 0.0
  %v1720 = vmax.f32 %v1564, 0.0
  %v1721 = vmax.f32 %v1566, 0.0
  %v1722 = vmax.f32 %v1569, 0.0
  %v1723 = vmax.f32 %v1571, 0.0
  %v1724 = vmax.f32 %v1574, 0.0
  %v1725 = vmax.f32 %v1576, 0.0
  %v1726 = vmax.f32 %v1579, 0.0
  %v1727 = vmax.f32 %v1581, 0.0
  %v1728 = vmax.f32 %v1584, 0.0
  %v1729 = vmax.f32 %v1586, 0.0
  %v1730 = vmax.f32 %v1589, 0.0
  %v1731 = vmax.f32 %v1591, 0.0
  %v1732 = vmax.f32 %v1594, 0.0
  %v1733 = vmax.f32 %v1596, 0.0
  %v1734 = vmax.f32 %v1599, 0.0
  %v1735 = vmax.f32 %v1601, 0.0
  %v1736 = vmax.f32 %v1604, 0.0
  %v1737 = vmax.f32 %v1606, 0.0
  %v1738 = vmax.f32 %v1609, 0.0
  %v1739 = vmax.f32 %v1611, 0.0
  %v1740 = vmax.f32 %v1614, 0.0
  %v1741 = vmax.f32 %v1616, 0.0
  %v1742 = vmax.f32 %v1619, 0.0
  %v1743 = vmax.f32 %v1621, 0.0
  %v1744 = vmax.f32 %v1624, 0.0
  %v1745 = vmax.f32 %v1626, 0.0
  %v1746 = vmax.f32 %v1629, 0.0
  %v1747 = vmax.f32 %v1631, 0.0
  %v1748 = vmax.f32 %v1634, 0.0
  %v1749 = vmax.f32 %v1636, 0.0
  %v1750 = vmax.f32 %v1639, 0.0
  %v1751 = vmax.f32 %v1641, 0.0
  %v1752 = vmax.f32 %v1644, 0.0
  %v1753 = vmax.f32 %v1646, 0.0
  %v1754 = vmax.f32 %v1649, 0.0
  %v1755 = vmax.f32 %v1651, 0.0
  %v1756 = vmax.f32 %v1654, 0.0
  %v1757 = vmax.f32 %v1656, 0.0
  %v1758 = vmax.f32 %v1659, 0.0
  %v1759 = vmax.f32 %v1661, 0.0
  %v1760 = vmax.f32 %v1664, 0.0
  %v1761 = vmax.f32 %v1666, 0.0
  %v1762 = vmax.f32 %v1669, 0.0
  %v1763 = vmax.f32 %v1671, 0.0
  %v1764 = vmax.f32 %v1674, 0.0
  %v1765 = vmax.f32 %v1676, 0.0
  %v1766 = vmax.f32 %v1679, 0.0
  %v1767 = vmax.f32 %v1681, 0.0
  %v1768 = vmax.f32 %v1684, 0.0
  %v1769 = vmax.f32 %v1686, 0.0
  %v1770 = vmax.f32 %v1689, 0.0
  %v1771 = vmax.f32 %v1691, 0.0
  %v1772 = vmax.f32 %v1694, 0.0
  %v1773 = vmax.f32 %v1696, 0.0
  %v1774 = vmax.f32 %v1699, 0.0
  %v1775 = vmax.f32 %v1701, 0.0
  %v1776 = vmax.f32 %v1704, 0.0
  %v1777 = vmax.f32 %v1706, 0.0
  %v1778 = vmax.f32 %v1709, 0.0
  %v1779 = vmax.f32 %v1711, 0.0
  %v1780 = vmax.f32 %v1714, 0.0
  %v1781 = vmax.f32 %v1716, 0.0
  %v1782 = vpack.c.bf16 %v1718, %v1718
  %v1783 = vpack.c.bf16 %v1719, %v1719
  %v1784 = vpack.c.bf16 %v1720, %v1720
  %v1785 = vpack.c.bf16 %v1721, %v1721
  %v1786 = vpack.c.bf16 %v1722, %v1722
  %v1787 = vpack.c.bf16 %v1723, %v1723
  %v1788 = vpack.c.bf16 %v1724, %v1724
  %v1789 = vpack.c.bf16 %v1725, %v1725
  %v1790 = vpack.c.bf16 %v1726, %v1726
  %v1791 = vpack.c.bf16 %v1727, %v1727
  %v1792 = vpack.c.bf16 %v1728, %v1728
  %v1793 = vpack.c.bf16 %v1729, %v1729
  %v1794 = vpack.c.bf16 %v1730, %v1730
  %v1795 = vpack.c.bf16 %v1731, %v1731
  %v1796 = vpack.c.bf16 %v1732, %v1732
  %v1797 = vpack.c.bf16 %v1733, %v1733
  %v1798 = vpack.c.bf16 %v1734, %v1734
  %v1799 = vpack.c.bf16 %v1735, %v1735
  %v1800 = vpack.c.bf16 %v1736, %v1736
  %v1801 = vpack.c.bf16 %v1737, %v1737
  %v1802 = vpack.c.bf16 %v1738, %v1738
  %v1803 = vpack.c.bf16 %v1739, %v1739
  %v1804 = vpack.c.bf16 %v1740, %v1740
  %v1805 = vpack.c.bf16 %v1741, %v1741
  %v1806 = vpack.c.bf16 %v1742, %v1742
  %v1807 = vpack.c.bf16 %v1743, %v1743
  %v1808 = vpack.c.bf16 %v1744, %v1744
  %v1809 = vpack.c.bf16 %v1745, %v1745
  %v1810 = vpack.c.bf16 %v1746, %v1746
  %v1811 = vpack.c.bf16 %v1747, %v1747
  %v1812 = vpack.c.bf16 %v1748, %v1748
  %v1813 = vpack.c.bf16 %v1749, %v1749
  %v1814 = vpack.c.bf16 %v1750, %v1750
  %v1815 = vpack.c.bf16 %v1751, %v1751
  %v1816 = vpack.c.bf16 %v1752, %v1752
  %v1817 = vpack.c.bf16 %v1753, %v1753
  %v1818 = vpack.c.bf16 %v1754, %v1754
  %v1819 = vpack.c.bf16 %v1755, %v1755
  %v1820 = vpack.c.bf16 %v1756, %v1756
  %v1821 = vpack.c.bf16 %v1757, %v1757
  %v1822 = vpack.c.bf16 %v1758, %v1758
  %v1823 = vpack.c.bf16 %v1759, %v1759
  %v1824 = vpack.c.bf16 %v1760, %v1760
  %v1825 = vpack.c.bf16 %v1761, %v1761
  %v1826 = vpack.c.bf16 %v1762, %v1762
  %v1827 = vpack.c.bf16 %v1763, %v1763
  %v1828 = vpack.c.bf16 %v1764, %v1764
  %v1829 = vpack.c.bf16 %v1765, %v1765
  %v1830 = vpack.c.bf16 %v1766, %v1766
  %v1831 = vpack.c.bf16 %v1767, %v1767
  %v1832 = vpack.c.bf16 %v1768, %v1768
  %v1833 = vpack.c.bf16 %v1769, %v1769
  %v1834 = vpack.c.bf16 %v1770, %v1770
  %v1835 = vpack.c.bf16 %v1771, %v1771
  %v1836 = vpack.c.bf16 %v1772, %v1772
  %v1837 = vpack.c.bf16 %v1773, %v1773
  %v1838 = vpack.c.bf16 %v1774, %v1774
  %v1839 = vpack.c.bf16 %v1775, %v1775
  %v1840 = vpack.c.bf16 %v1776, %v1776
  %v1841 = vpack.c.bf16 %v1777, %v1777
  %v1842 = vpack.c.bf16 %v1778, %v1778
  %v1843 = vpack.c.bf16 %v1779, %v1779
  %v1844 = vpack.c.bf16 %v1780, %v1780
  %v1845 = vpack.c.bf16 %v1781, %v1781
  %1846 = vst [vmem:[%s3] sm:$0xf] %v1782
  %1847 = vst [vmem:[%s3 + $0x4] sm:$0xf] %v1783
  %1848 = vst [vmem:[%s3 + $0x8] sm:$0xf] %v1784
  %1849 = vst [vmem:[%s3 + $0xc] sm:$0xf] %v1785
  %1850 = vst [vmem:[%s3 + $0x10] sm:$0xf] %v1786
  %1851 = vst [vmem:[%s3 + $0x14] sm:$0xf] %v1787
  %1852 = vst [vmem:[%s3 + $0x18] sm:$0xf] %v1788
  %1853 = vst [vmem:[%s3 + $0x1c] sm:$0xf] %v1789
  %1854 = vst [vmem:[%s3 + $0x20] sm:$0xf] %v1790
  %1855 = vst [vmem:[%s3 + $0x24] sm:$0xf] %v1791
  %1856 = vst [vmem:[%s3 + $0x28] sm:$0xf] %v1792
  %1857 = vst [vmem:[%s3 + $0x2c] sm:$0xf] %v1793
  %1858 = vst [vmem:[%s3 + $0x30] sm:$0xf] %v1794
  %1859 = vst [vmem:[%s3 + $0x34] sm:$0xf] %v1795
  %1860 = vst [vmem:[%s3 + $0x38] sm:$0xf] %v1796
  %1861 = vst [vmem:[%s3 + $0x3c] sm:$0xf] %v1797
  %1862 = vst [vmem:[%s3 + $0x40] sm:$0xf] %v1798
  %1863 = vst [vmem:[%s3 + $0x44] sm:$0xf] %v1799
  %1864 = vst [vmem:[%s3 + $0x48] sm:$0xf] %v1800
  %1865 = vst [vmem:[%s3 + $0x4c] sm:$0xf] %v1801
  %1866 = vst [vmem:[%s3 + $0x50] sm:$0xf] %v1802
  %1867 = vst [vmem:[%s3 + $0x54] sm:$0xf] %v1803
  %1868 = vst [vmem:[%s3 + $0x58] sm:$0xf] %v1804
  %1869 = vst [vmem:[%s3 + $0x5c] sm:$0xf] %v1805
  %1870 = vst [vmem:[%s3 + $0x60] sm:$0xf] %v1806
  %1871 = vst [vmem:[%s3 + $0x64] sm:$0xf] %v1807
  %1872 = vst [vmem:[%s3 + $0x68] sm:$0xf] %v1808
  %1873 = vst [vmem:[%s3 + $0x6c] sm:$0xf] %v1809
  %1874 = vst [vmem:[%s3 + $0x70] sm:$0xf] %v1810
  %1875 = vst [vmem:[%s3 + $0x74] sm:$0xf] %v1811
  %1876 = vst [vmem:[%s3 + $0x78] sm:$0xf] %v1812
  %1877 = vst [vmem:[%s3 + $0x7c] sm:$0xf] %v1813
  %1878 = vst [vmem:[%s3 + $0x80] sm:$0xf] %v1814
  %1879 = vst [vmem:[%s3 + $0x84] sm:$0xf] %v1815
  %1880 = vst [vmem:[%s3 + $0x88] sm:$0xf] %v1816
  %1881 = vst [vmem:[%s3 + $0x8c] sm:$0xf] %v1817
  %1882 = vst [vmem:[%s3 + $0x90] sm:$0xf] %v1818
  %1883 = vst [vmem:[%s3 + $0x94] sm:$0xf] %v1819
  %1884 = vst [vmem:[%s3 + $0x98] sm:$0xf] %v1820
  %1885 = vst [vmem:[%s3 + $0x9c] sm:$0xf] %v1821
  %1886 = vst [vmem:[%s3 + $0xa0] sm:$0xf] %v1822
  %1887 = vst [vmem:[%s3 + $0xa4] sm:$0xf] %v1823
  %1888 = vst [vmem:[%s3 + $0xa8] sm:$0xf] %v1824
  %1889 = vst [vmem:[%s3 + $0xac] sm:$0xf] %v1825
  %1890 = vst [vmem:[%s3 + $0xb0] sm:$0xf] %v1826
  %1891 = vst [vmem:[%s3 + $0xb4] sm:$0xf] %v1827
  %1892 = vst [vmem:[%s3 + $0xb8] sm:$0xf] %v1828
  %1893 = vst [vmem:[%s3 + $0xbc] sm:$0xf] %v1829
  %1894 = vst [vmem:[%s3 + $0xc0] sm:$0xf] %v1830
  %1895 = vst [vmem:[%s3 + $0xc4] sm:$0xf] %v1831
  %1896 = vst [vmem:[%s3 + $0xc8] sm:$0xf] %v1832
  %1897 = vst [vmem:[%s3 + $0xcc] sm:$0xf] %v1833
  %1898 = vst [vmem:[%s3 + $0xd0] sm:$0xf] %v1834
  %1899 = vst [vmem:[%s3 + $0xd4] sm:$0xf] %v1835
  %1900 = vst [vmem:[%s3 + $0xd8] sm:$0xf] %v1836
  %1901 = vst [vmem:[%s3 + $0xdc] sm:$0xf] %v1837
  %1902 = vst [vmem:[%s3 + $0xe0] sm:$0xf] %v1838
  %1903 = vst [vmem:[%s3 + $0xe4] sm:$0xf] %v1839
  %1904 = vst [vmem:[%s3 + $0xe8] sm:$0xf] %v1840
  %1905 = vst [vmem:[%s3 + $0xec] sm:$0xf] %v1841
  %1906 = vst [vmem:[%s3 + $0xf0] sm:$0xf] %v1842
  %1907 = vst [vmem:[%s3 + $0xf4] sm:$0xf] %v1843
  %1908 = vst [vmem:[%s3 + $0xf8] sm:$0xf] %v1844
  %1909 = vst [vmem:[%s3 + $0xfc] sm:$0xf] %v1845
  // Predicated region
  $region14: #{resnet_segmentation_forward.14} parent=0 // pred_check
    _
  $region15: #{resnet_segmentation_forward.14} parent=0 // pred_check_branch
    %1911 = sbr.rel (0) target = $region17
  $region16: #{resnet_segmentation_forward.14} parent=0 // pred_region
    _
  $region17: #{resnet_segmentation_forward.14} parent=0 // pred_fallthru
    _
  // Predicated region
  $region18: #{resnet_segmentation_forward.14} parent=0 // pred_check
    _
  $region19: #{resnet_segmentation_forward.14} parent=0 // pred_check_branch
    %1913 = sbr.rel (0) target = $region21
  $region20: #{resnet_segmentation_forward.14} parent=0 // pred_region
    _
  $region21: #{resnet_segmentation_forward.14} parent=0 // pred_fallthru
    _

// kernel: resnet_segmentation_forward.16
$region0: #{resnet_segmentation_forward.16}
  #allocation0 [shape = 'u32[]', space=smem, size = 0x4, offset = 0x4, fixed_abs, tag = 'smem constant byte address 0x4 - core index']
  #allocation1 [shape = 'u32[72,128]{1,0:T(1,128)}', space=vmem, size = 0x9000, scoped, tag = 'internal scratch']
  %s0 = inlined_call_operand.vmem [shape: bf16[128,128], index: 0, kind: input, shape index: {}]
  %s1 = inlined_call_operand.vmem [shape: bf16[128,128], index: 1, kind: input, shape index: {}]
  %s2 = inlined_call_operand.vmem [shape: f32[1,128], index: 2, kind: input, shape index: {}]
  %s3 = inlined_call_operand.vmem [shape: bf16[128,128], index: 3, kind: input, shape index: {}]
  %s4 = inlined_call_operand.vmem [shape: bf16[128,128], index: 4, kind: output, shape index: {}]
  %s5 = sld [smem:[#allocation0]]
  $region26: #{resnet_segmentation_forward.16} parent=0
    _
  %s7 = ssub.s32 1, %s5
  %s8 = scalar_select 0, %s7, %s5
  // Predicated region
  $region2: #{resnet_segmentation_forward.16} parent=0 // pred_check
    _
  $region3: #{resnet_segmentation_forward.16} parent=0 // pred_check_branch
    %10 = sbr.rel (0) target = $region5
  $region4: #{resnet_segmentation_forward.16} parent=0 // pred_region
    _
  $region5: #{resnet_segmentation_forward.16} parent=0 // pred_fallthru
    _
  // Predicated region
  $region6: #{resnet_segmentation_forward.16} parent=0 // pred_check
    _
  $region7: #{resnet_segmentation_forward.16} parent=0 // pred_check_branch
    %12 = sbr.rel (0) target = $region9
  $region8: #{resnet_segmentation_forward.16} parent=0 // pred_region
    _
  $region9: #{resnet_segmentation_forward.16} parent=0 // pred_fallthru
    _
  // Predicated region
  $region10: #{resnet_segmentation_forward.16} parent=0 // pred_check
    _
  $region11: #{resnet_segmentation_forward.16} parent=0 // pred_check_branch
    %14 = sbr.rel (0) target = $region13
  $region12: #{resnet_segmentation_forward.16} parent=0 // pred_region
    _
  $region13: #{resnet_segmentation_forward.16} parent=0 // pred_fallthru
    _
  // Predicated region
  $region14: #{resnet_segmentation_forward.16} parent=0 // pred_check
    _
  $region15: #{resnet_segmentation_forward.16} parent=0 // pred_check_branch
    %16 = sbr.rel (0) target = $region17
  $region16: #{resnet_segmentation_forward.16} parent=0 // pred_region
    _
  $region17: #{resnet_segmentation_forward.16} parent=0 // pred_fallthru
    _
  %v17 = vld [vmem:[%s0] sm:$0xf]
  %v18 = vld [vmem:[%s0 + $0x4] sm:$0xf]
  %v19 = vld [vmem:[%s0 + $0x8] sm:$0xf]
  %v20 = vld [vmem:[%s0 + $0xc] sm:$0xf]
  %v21 = vld [vmem:[%s0 + $0x10] sm:$0xf]
  %v22 = vld [vmem:[%s0 + $0x14] sm:$0xf]
  %v23 = vld [vmem:[%s0 + $0x18] sm:$0xf]
  %v24 = vld [vmem:[%s0 + $0x1c] sm:$0xf]
  %v25 = vld [vmem:[%s0 + $0x20] sm:$0xf]
  %v26 = vld [vmem:[%s0 + $0x24] sm:$0xf]
  %v27 = vld [vmem:[%s0 + $0x28] sm:$0xf]
  %v28 = vld [vmem:[%s0 + $0x2c] sm:$0xf]
  %v29 = vld [vmem:[%s0 + $0x30] sm:$0xf]
  %v30 = vld [vmem:[%s0 + $0x34] sm:$0xf]
  %v31 = vld [vmem:[%s0 + $0x38] sm:$0xf]
  %v32 = vld [vmem:[%s0 + $0x3c] sm:$0xf]
  %v33 = vld [vmem:[%s1] sm:$0xf]
  %v34 = vld [vmem:[%s1 + $0x4] sm:$0xf]
  %v35 = vld [vmem:[%s1 + $0x8] sm:$0xf]
  %v36 = vld [vmem:[%s1 + $0xc] sm:$0xf]
  %v37 = vld [vmem:[%s1 + $0x10] sm:$0xf]
  %v38 = vld [vmem:[%s1 + $0x14] sm:$0xf]
  %v39 = vld [vmem:[%s1 + $0x18] sm:$0xf]
  %v40 = vld [vmem:[%s1 + $0x1c] sm:$0xf]
  %v41 = vld [vmem:[%s1 + $0x20] sm:$0xf]
  %v42 = vld [vmem:[%s1 + $0x24] sm:$0xf]
  %v43 = vld [vmem:[%s1 + $0x28] sm:$0xf]
  %v44 = vld [vmem:[%s1 + $0x2c] sm:$0xf]
  %v45 = vld [vmem:[%s1 + $0x30] sm:$0xf]
  %v46 = vld [vmem:[%s1 + $0x34] sm:$0xf]
  %v47 = vld [vmem:[%s1 + $0x38] sm:$0xf]
  %v48 = vld [vmem:[%s1 + $0x3c] sm:$0xf]
  %v49 = vld [vmem:[%s2] sm:$0x1]
  %v51 = vperm.slane %v49, 0
  %v69 = vunpack.c.l.b16 %v17
  %v70 = vunpack.c.l.b16 %v18
  %v71 = vunpack.c.l.b16 %v19
  %v72 = vunpack.c.l.b16 %v20
  %v73 = vunpack.c.l.b16 %v21
  %v74 = vunpack.c.l.b16 %v22
  %v75 = vunpack.c.l.b16 %v23
  %v76 = vunpack.c.l.b16 %v24
  %v77 = vunpack.c.l.b16 %v25
  %v78 = vunpack.c.l.b16 %v26
  %v79 = vunpack.c.l.b16 %v27
  %v80 = vunpack.c.l.b16 %v28
  %v81 = vunpack.c.l.b16 %v29
  %v82 = vunpack.c.l.b16 %v30
  %v83 = vunpack.c.l.b16 %v31
  %v84 = vunpack.c.l.b16 %v32
  %v85 = vpack.c.b16 %v70, %v69
  %v86 = vpack.c.b16 %v72, %v71
  %v87 = vpack.c.b16 %v74, %v73
  %v88 = vpack.c.b16 %v76, %v75
  %v89 = vpack.c.b16 %v78, %v77
  %v90 = vpack.c.b16 %v80, %v79
  %v91 = vpack.c.b16 %v82, %v81
  %v92 = vpack.c.b16 %v84, %v83
  %v117 = vunpack.c.l.b16 %v33
  %v118 = vunpack.c.l.b16 %v34
  %v119 = vunpack.c.l.b16 %v35
  %v120 = vunpack.c.l.b16 %v36
  %v121 = vunpack.c.l.b16 %v37
  %v122 = vunpack.c.l.b16 %v38
  %v123 = vunpack.c.l.b16 %v39
  %v124 = vunpack.c.l.b16 %v40
  %v125 = vunpack.c.l.b16 %v41
  %v126 = vunpack.c.l.b16 %v42
  %v127 = vunpack.c.l.b16 %v43
  %v128 = vunpack.c.l.b16 %v44
  %v129 = vunpack.c.l.b16 %v45
  %v130 = vunpack.c.l.b16 %v46
  %v131 = vunpack.c.l.b16 %v47
  %v132 = vunpack.c.l.b16 %v48
  %v133 = vpack.c.b16 %v118, %v117
  %v134 = vpack.c.b16 %v120, %v119
  %v135 = vpack.c.b16 %v122, %v121
  %v136 = vpack.c.b16 %v124, %v123
  %v137 = vpack.c.b16 %v126, %v125
  %v138 = vpack.c.b16 %v128, %v127
  %v139 = vpack.c.b16 %v130, %v129
  %v140 = vpack.c.b16 %v132, %v131
  %149 = vmatpush.bf16.msra.mxu0 %v140
  %150 = vmatpush.bf16.msra.mxu0 %v139
  %151 = vmatpush.bf16.msra.mxu0 %v138
  %152 = vmatpush.bf16.msra.mxu0 %v137
  %153 = vmatpush.bf16.msra.mxu0 %v136
  %154 = vmatpush.bf16.msra.mxu0 %v135
  %155 = vmatpush.bf16.msra.mxu0 %v134
  %156 = vmatpush.bf16.msra.mxu0 %v133
  %157 = vmatmul.bf16.gmra.mxu0 %v85
  %v158 = vpop.f32.mrf.mxu0
  %v159 = vadd.f32 %v51, %v158
  %v160 = vpop.f32.mrf.mxu0
  %v161 = vadd.f32 %v51, %v160
  %162 = vmatmul.bf16.gmra.mxu0 %v86
  %v163 = vpop.f32.mrf.mxu0
  %v164 = vadd.f32 %v51, %v163
  %v165 = vpop.f32.mrf.mxu0
  %v166 = vadd.f32 %v51, %v165
  %167 = vmatmul.bf16.gmra.mxu0 %v87
  %v168 = vpop.f32.mrf.mxu0
  %v169 = vadd.f32 %v51, %v168
  %v170 = vpop.f32.mrf.mxu0
  %v171 = vadd.f32 %v51, %v170
  %172 = vmatmul.bf16.gmra.mxu0 %v88
  %v173 = vpop.f32.mrf.mxu0
  %v174 = vadd.f32 %v51, %v173
  %v175 = vpop.f32.mrf.mxu0
  %v176 = vadd.f32 %v51, %v175
  %177 = vmatmul.bf16.gmra.mxu0 %v89
  %v178 = vpop.f32.mrf.mxu0
  %v179 = vadd.f32 %v51, %v178
  %v180 = vpop.f32.mrf.mxu0
  %v181 = vadd.f32 %v51, %v180
  %182 = vmatmul.bf16.gmra.mxu0 %v90
  %v183 = vpop.f32.mrf.mxu0
  %v184 = vadd.f32 %v51, %v183
  %v185 = vpop.f32.mrf.mxu0
  %v186 = vadd.f32 %v51, %v185
  %187 = vmatmul.bf16.gmra.mxu0 %v91
  %v188 = vpop.f32.mrf.mxu0
  %v189 = vadd.f32 %v51, %v188
  %v190 = vpop.f32.mrf.mxu0
  %v191 = vadd.f32 %v51, %v190
  %192 = vmatmul.bf16.gmra.mxu0 %v92
  %v193 = vpop.f32.mrf.mxu0
  %v194 = vadd.f32 %v51, %v193
  %v195 = vpop.f32.mrf.mxu0
  %v196 = vadd.f32 %v51, %v195
  %197 = vdwg.mxu0
  %v198 = vld [vmem:[%s3] sm:$0xf]
  %v199 = vld [vmem:[%s3 + $0x4] sm:$0xf]
  %v200 = vld [vmem:[%s3 + $0x8] sm:$0xf]
  %v201 = vld [vmem:[%s3 + $0xc] sm:$0xf]
  %v202 = vld [vmem:[%s3 + $0x10] sm:$0xf]
  %v203 = vld [vmem:[%s3 + $0x14] sm:$0xf]
  %v204 = vld [vmem:[%s3 + $0x18] sm:$0xf]
  %v205 = vld [vmem:[%s3 + $0x1c] sm:$0xf]
  %v206 = vld [vmem:[%s3 + $0x20] sm:$0xf]
  %v207 = vld [vmem:[%s3 + $0x24] sm:$0xf]
  %v208 = vld [vmem:[%s3 + $0x28] sm:$0xf]
  %v209 = vld [vmem:[%s3 + $0x2c] sm:$0xf]
  %v210 = vld [vmem:[%s3 + $0x30] sm:$0xf]
  %v211 = vld [vmem:[%s3 + $0x34] sm:$0xf]
  %v212 = vld [vmem:[%s3 + $0x38] sm:$0xf]
  %v213 = vld [vmem:[%s3 + $0x3c] sm:$0xf]
  %v214 = vunpack.c.l.bf16 %v198
  %v215 = vunpack.c.l.bf16 %v199
  %v216 = vunpack.c.l.bf16 %v200
  %v217 = vunpack.c.l.bf16 %v201
  %v218 = vunpack.c.l.bf16 %v202
  %v219 = vunpack.c.l.bf16 %v203
  %v220 = vunpack.c.l.bf16 %v204
  %v221 = vunpack.c.l.bf16 %v205
  %v222 = vunpack.c.l.bf16 %v206
  %v223 = vunpack.c.l.bf16 %v207
  %v224 = vunpack.c.l.bf16 %v208
  %v225 = vunpack.c.l.bf16 %v209
  %v226 = vunpack.c.l.bf16 %v210
  %v227 = vunpack.c.l.bf16 %v211
  %v228 = vunpack.c.l.bf16 %v212
  %v229 = vunpack.c.l.bf16 %v213
  %v230 = vadd.f32 %v159, %v214
  %v231 = vadd.f32 %v161, %v215
  %v232 = vadd.f32 %v164, %v216
  %v233 = vadd.f32 %v166, %v217
  %v234 = vadd.f32 %v169, %v218
  %v235 = vadd.f32 %v171, %v219
  %v236 = vadd.f32 %v174, %v220
  %v237 = vadd.f32 %v176, %v221
  %v238 = vadd.f32 %v179, %v222
  %v239 = vadd.f32 %v181, %v223
  %v240 = vadd.f32 %v184, %v224
  %v241 = vadd.f32 %v186, %v225
  %v242 = vadd.f32 %v189, %v226
  %v243 = vadd.f32 %v191, %v227
  %v244 = vadd.f32 %v194, %v228
  %v245 = vadd.f32 %v196, %v229
  %v246 = vmax.f32 %v230, 0.0
  %v247 = vmax.f32 %v231, 0.0
  %v248 = vmax.f32 %v232, 0.0
  %v249 = vmax.f32 %v233, 0.0
  %v250 = vmax.f32 %v234, 0.0
  %v251 = vmax.f32 %v235, 0.0
  %v252 = vmax.f32 %v236, 0.0
  %v253 = vmax.f32 %v237, 0.0
  %v254 = vmax.f32 %v238, 0.0
  %v255 = vmax.f32 %v239, 0.0
  %v256 = vmax.f32 %v240, 0.0
  %v257 = vmax.f32 %v241, 0.0
  %v258 = vmax.f32 %v242, 0.0
  %v259 = vmax.f32 %v243, 0.0
  %v260 = vmax.f32 %v244, 0.0
  %v261 = vmax.f32 %v245, 0.0
  %v262 = vpack.c.bf16 %v246, %v246
  %v263 = vpack.c.bf16 %v247, %v247
  %v264 = vpack.c.bf16 %v248, %v248
  %v265 = vpack.c.bf16 %v249, %v249
  %v266 = vpack.c.bf16 %v250, %v250
  %v267 = vpack.c.bf16 %v251, %v251
  %v268 = vpack.c.bf16 %v252, %v252
  %v269 = vpack.c.bf16 %v253, %v253
  %v270 = vpack.c.bf16 %v254, %v254
  %v271 = vpack.c.bf16 %v255, %v255
  %v272 = vpack.c.bf16 %v256, %v256
  %v273 = vpack.c.bf16 %v257, %v257
  %v274 = vpack.c.bf16 %v258, %v258
  %v275 = vpack.c.bf16 %v259, %v259
  %v276 = vpack.c.bf16 %v260, %v260
  %v277 = vpack.c.bf16 %v261, %v261
  %278 = vst [vmem:[%s4] sm:$0xf] %v262
  %279 = vst [vmem:[%s4 + $0x4] sm:$0xf] %v263
  %280 = vst [vmem:[%s4 + $0x8] sm:$0xf] %v264
  %281 = vst [vmem:[%s4 + $0xc] sm:$0xf] %v265
  %282 = vst [vmem:[%s4 + $0x10] sm:$0xf] %v266
  %283 = vst [vmem:[%s4 + $0x14] sm:$0xf] %v267
  %284 = vst [vmem:[%s4 + $0x18] sm:$0xf] %v268
  %285 = vst [vmem:[%s4 + $0x1c] sm:$0xf] %v269
  %286 = vst [vmem:[%s4 + $0x20] sm:$0xf] %v270
  %287 = vst [vmem:[%s4 + $0x24] sm:$0xf] %v271
  %288 = vst [vmem:[%s4 + $0x28] sm:$0xf] %v272
  %289 = vst [vmem:[%s4 + $0x2c] sm:$0xf] %v273
  %290 = vst [vmem:[%s4 + $0x30] sm:$0xf] %v274
  %291 = vst [vmem:[%s4 + $0x34] sm:$0xf] %v275
  %292 = vst [vmem:[%s4 + $0x38] sm:$0xf] %v276
  %293 = vst [vmem:[%s4 + $0x3c] sm:$0xf] %v277
  // Predicated region
  $region18: #{resnet_segmentation_forward.16} parent=0 // pred_check
    _
  $region19: #{resnet_segmentation_forward.16} parent=0 // pred_check_branch
    %295 = sbr.rel (0) target = $region21
  $region20: #{resnet_segmentation_forward.16} parent=0 // pred_region
    _
  $region21: #{resnet_segmentation_forward.16} parent=0 // pred_fallthru
    _
  // Predicated region
  $region22: #{resnet_segmentation_forward.16} parent=0 // pred_check
    _
  $region23: #{resnet_segmentation_forward.16} parent=0 // pred_check_branch
    %297 = sbr.rel (0) target = $region25
  $region24: #{resnet_segmentation_forward.16} parent=0 // pred_region
    _
  $region25: #{resnet_segmentation_forward.16} parent=0 // pred_fallthru
    _

// kernel: resnet_segmentation_forward.17
$region0: #{resnet_segmentation_forward.17}
  #allocation0 [shape = 'u32[]', space=smem, size = 0x4, offset = 0x4, fixed_abs, tag = 'smem constant byte address 0x4 - core index']
  #allocation1 [shape = 'u32[72,128]{1,0:T(1,128)}', space=vmem, size = 0x9000, scoped, tag = 'internal scratch']
  %s0 = inlined_call_operand.vmem [shape: bf16[32,128], index: 0, kind: input, shape index: {}]
  %s1 = inlined_call_operand.vmem [shape: bf16[128,128], index: 1, kind: input, shape index: {}]
  %s2 = inlined_call_operand.vmem [shape: f32[1,128], index: 2, kind: input, shape index: {}]
  %s3 = inlined_call_operand.vmem [shape: bf16[32,128], index: 3, kind: output, shape index: {}]
  %s4 = sld [smem:[#allocation0]]
  $region22: #{resnet_segmentation_forward.17} parent=0
    _
  %s6 = ssub.s32 1, %s4
  %s7 = scalar_select 0, %s6, %s4
  // Predicated region
  $region2: #{resnet_segmentation_forward.17} parent=0 // pred_check
    _
  $region3: #{resnet_segmentation_forward.17} parent=0 // pred_check_branch
    %9 = sbr.rel (0) target = $region5
  $region4: #{resnet_segmentation_forward.17} parent=0 // pred_region
    _
  $region5: #{resnet_segmentation_forward.17} parent=0 // pred_fallthru
    _
  // Predicated region
  $region6: #{resnet_segmentation_forward.17} parent=0 // pred_check
    _
  $region7: #{resnet_segmentation_forward.17} parent=0 // pred_check_branch
    %11 = sbr.rel (0) target = $region9
  $region8: #{resnet_segmentation_forward.17} parent=0 // pred_region
    _
  $region9: #{resnet_segmentation_forward.17} parent=0 // pred_fallthru
    _
  // Predicated region
  $region10: #{resnet_segmentation_forward.17} parent=0 // pred_check
    _
  $region11: #{resnet_segmentation_forward.17} parent=0 // pred_check_branch
    %13 = sbr.rel (0) target = $region13
  $region12: #{resnet_segmentation_forward.17} parent=0 // pred_region
    _
  $region13: #{resnet_segmentation_forward.17} parent=0 // pred_fallthru
    _
  %v14 = vld [vmem:[%s0] sm:$0xf]
  %v15 = vld [vmem:[%s0 + $0x4] sm:$0xf]
  %v16 = vld [vmem:[%s0 + $0x8] sm:$0xf]
  %v17 = vld [vmem:[%s0 + $0xc] sm:$0xf]
  %v18 = vld [vmem:[%s1] sm:$0xf]
  %v19 = vld [vmem:[%s1 + $0x4] sm:$0xf]
  %v20 = vld [vmem:[%s1 + $0x8] sm:$0xf]
  %v21 = vld [vmem:[%s1 + $0xc] sm:$0xf]
  %v22 = vld [vmem:[%s1 + $0x10] sm:$0xf]
  %v23 = vld [vmem:[%s1 + $0x14] sm:$0xf]
  %v24 = vld [vmem:[%s1 + $0x18] sm:$0xf]
  %v25 = vld [vmem:[%s1 + $0x1c] sm:$0xf]
  %v26 = vld [vmem:[%s1 + $0x20] sm:$0xf]
  %v27 = vld [vmem:[%s1 + $0x24] sm:$0xf]
  %v28 = vld [vmem:[%s1 + $0x28] sm:$0xf]
  %v29 = vld [vmem:[%s1 + $0x2c] sm:$0xf]
  %v30 = vld [vmem:[%s1 + $0x30] sm:$0xf]
  %v31 = vld [vmem:[%s1 + $0x34] sm:$0xf]
  %v32 = vld [vmem:[%s1 + $0x38] sm:$0xf]
  %v33 = vld [vmem:[%s1 + $0x3c] sm:$0xf]
  %v34 = vld [vmem:[%s2] sm:$0x1]
  %v36 = vperm.slane %v34, 0
  %v42 = vunpack.c.l.b16 %v14
  %v43 = vunpack.c.l.b16 %v15
  %v44 = vunpack.c.l.b16 %v16
  %v45 = vunpack.c.l.b16 %v17
  %v46 = vpack.c.b16 %v43, %v42
  %v47 = vpack.c.b16 %v45, %v44
  %v66 = vunpack.c.l.b16 %v18
  %v67 = vunpack.c.l.b16 %v19
  %v68 = vunpack.c.l.b16 %v20
  %v69 = vunpack.c.l.b16 %v21
  %v70 = vunpack.c.l.b16 %v22
  %v71 = vunpack.c.l.b16 %v23
  %v72 = vunpack.c.l.b16 %v24
  %v73 = vunpack.c.l.b16 %v25
  %v74 = vunpack.c.l.b16 %v26
  %v75 = vunpack.c.l.b16 %v27
  %v76 = vunpack.c.l.b16 %v28
  %v77 = vunpack.c.l.b16 %v29
  %v78 = vunpack.c.l.b16 %v30
  %v79 = vunpack.c.l.b16 %v31
  %v80 = vunpack.c.l.b16 %v32
  %v81 = vunpack.c.l.b16 %v33
  %v82 = vpack.c.b16 %v67, %v66
  %v83 = vpack.c.b16 %v69, %v68
  %v84 = vpack.c.b16 %v71, %v70
  %v85 = vpack.c.b16 %v73, %v72
  %v86 = vpack.c.b16 %v75, %v74
  %v87 = vpack.c.b16 %v77, %v76
  %v88 = vpack.c.b16 %v79, %v78
  %v89 = vpack.c.b16 %v81, %v80
  %98 = vmatpush.bf16.msra.mxu0 %v89
  %99 = vmatpush.bf16.msra.mxu0 %v88
  %100 = vmatpush.bf16.msra.mxu0 %v87
  %101 = vmatpush.bf16.msra.mxu0 %v86
  %102 = vmatpush.bf16.msra.mxu0 %v85
  %103 = vmatpush.bf16.msra.mxu0 %v84
  %104 = vmatpush.bf16.msra.mxu0 %v83
  %105 = vmatpush.bf16.msra.mxu0 %v82
  %106 = vmatmul.bf16.gmra.mxu0 %v46
  %v107 = vpop.f32.mrf.mxu0
  %v108 = vadd.f32 %v36, %v107
  %v109 = vpop.f32.mrf.mxu0
  %v110 = vadd.f32 %v36, %v109
  %111 = vmatmul.bf16.gmra.mxu0 %v47
  %v112 = vpop.f32.mrf.mxu0
  %v113 = vadd.f32 %v36, %v112
  %v114 = vpop.f32.mrf.mxu0
  %v115 = vadd.f32 %v36, %v114
  %116 = vdwg.mxu0
  %v117 = vmax.f32 %v108, 0.0
  %v118 = vmax.f32 %v110, 0.0
  %v119 = vmax.f32 %v113, 0.0
  %v120 = vmax.f32 %v115, 0.0
  %v121 = vpack.c.bf16 %v117, %v117
  %v122 = vpack.c.bf16 %v118, %v118
  %v123 = vpack.c.bf16 %v119, %v119
  %v124 = vpack.c.bf16 %v120, %v120
  %125 = vst [vmem:[%s3] sm:$0xf] %v121
  %126 = vst [vmem:[%s3 + $0x4] sm:$0xf] %v122
  %127 = vst [vmem:[%s3 + $0x8] sm:$0xf] %v123
  %128 = vst [vmem:[%s3 + $0xc] sm:$0xf] %v124
  // Predicated region
  $region14: #{resnet_segmentation_forward.17} parent=0 // pred_check
    _
  $region15: #{resnet_segmentation_forward.17} parent=0 // pred_check_branch
    %130 = sbr.rel (0) target = $region17
  $region16: #{resnet_segmentation_forward.17} parent=0 // pred_region
    _
  $region17: #{resnet_segmentation_forward.17} parent=0 // pred_fallthru
    _
  // Predicated region
  $region18: #{resnet_segmentation_forward.17} parent=0 // pred_check
    _
  $region19: #{resnet_segmentation_forward.17} parent=0 // pred_check_branch
    %132 = sbr.rel (0) target = $region21
  $region20: #{resnet_segmentation_forward.17} parent=0 // pred_region
    _
  $region21: #{resnet_segmentation_forward.17} parent=0 // pred_fallthru
    _

// kernel: resnet_segmentation_forward.18
$region0: #{resnet_segmentation_forward.18}
  #allocation0 [shape = 'u32[]', space=smem, size = 0x4, offset = 0x4, fixed_abs, tag = 'smem constant byte address 0x4 - core index']
  #allocation1 [shape = 'u32[72,128]{1,0:T(1,128)}', space=vmem, size = 0x9000, scoped, tag = 'internal scratch']
  %s0 = inlined_call_operand.vmem [shape: bf16[32,256], index: 0, kind: input, shape index: {}]
  %s1 = inlined_call_operand.vmem [shape: bf16[256,128], index: 1, kind: input, shape index: {}]
  %s2 = inlined_call_operand.vmem [shape: bf16[32,8], index: 2, kind: input, shape index: {}]
  %s3 = inlined_call_operand.vmem [shape: bf16[8,128], index: 3, kind: input, shape index: {}]
  %s4 = inlined_call_operand.vmem [shape: f32[1,128], index: 4, kind: input, shape index: {}]
  %s5 = inlined_call_operand.vmem [shape: bf16[32,128], index: 5, kind: output, shape index: {}]
  %s6 = sld [smem:[#allocation0]]
  $region30: #{resnet_segmentation_forward.18} parent=0
    _
  %s8 = ssub.s32 1, %s6
  %s9 = scalar_select 0, %s8, %s6
  // Predicated region
  $region2: #{resnet_segmentation_forward.18} parent=0 // pred_check
    _
  $region3: #{resnet_segmentation_forward.18} parent=0 // pred_check_branch
    %11 = sbr.rel (0) target = $region5
  $region4: #{resnet_segmentation_forward.18} parent=0 // pred_region
    _
  $region5: #{resnet_segmentation_forward.18} parent=0 // pred_fallthru
    _
  // Predicated region
  $region6: #{resnet_segmentation_forward.18} parent=0 // pred_check
    _
  $region7: #{resnet_segmentation_forward.18} parent=0 // pred_check_branch
    %13 = sbr.rel (0) target = $region9
  $region8: #{resnet_segmentation_forward.18} parent=0 // pred_region
    _
  $region9: #{resnet_segmentation_forward.18} parent=0 // pred_fallthru
    _
  // Predicated region
  $region10: #{resnet_segmentation_forward.18} parent=0 // pred_check
    _
  $region11: #{resnet_segmentation_forward.18} parent=0 // pred_check_branch
    %15 = sbr.rel (0) target = $region13
  $region12: #{resnet_segmentation_forward.18} parent=0 // pred_region
    _
  $region13: #{resnet_segmentation_forward.18} parent=0 // pred_fallthru
    _
  // Predicated region
  $region14: #{resnet_segmentation_forward.18} parent=0 // pred_check
    _
  $region15: #{resnet_segmentation_forward.18} parent=0 // pred_check_branch
    %17 = sbr.rel (0) target = $region17
  $region16: #{resnet_segmentation_forward.18} parent=0 // pred_region
    _
  $region17: #{resnet_segmentation_forward.18} parent=0 // pred_fallthru
    _
  // Predicated region
  $region18: #{resnet_segmentation_forward.18} parent=0 // pred_check
    _
  $region19: #{resnet_segmentation_forward.18} parent=0 // pred_check_branch
    %19 = sbr.rel (0) target = $region21
  $region20: #{resnet_segmentation_forward.18} parent=0 // pred_region
    _
  $region21: #{resnet_segmentation_forward.18} parent=0 // pred_fallthru
    _
  %v21 = vld [vmem:[%s0] sm:$0xff]
  %v22 = vld [vmem:[%s0 + $0x8] sm:$0xff]
  %v23 = vld [vmem:[%s0 + $0x10] sm:$0xff]
  %v24 = vld [vmem:[%s0 + $0x18] sm:$0xff]
  %v25 = vld [vmem:[%s1] sm:$0xf]
  %v26 = vld [vmem:[%s1 + $0x4] sm:$0xf]
  %v27 = vld [vmem:[%s1 + $0x8] sm:$0xf]
  %v28 = vld [vmem:[%s1 + $0xc] sm:$0xf]
  %v29 = vld [vmem:[%s1 + $0x10] sm:$0xf]
  %v30 = vld [vmem:[%s1 + $0x14] sm:$0xf]
  %v31 = vld [vmem:[%s1 + $0x18] sm:$0xf]
  %v32 = vld [vmem:[%s1 + $0x1c] sm:$0xf]
  %v33 = vld [vmem:[%s1 + $0x20] sm:$0xf]
  %v34 = vld [vmem:[%s1 + $0x24] sm:$0xf]
  %v35 = vld [vmem:[%s1 + $0x28] sm:$0xf]
  %v36 = vld [vmem:[%s1 + $0x2c] sm:$0xf]
  %v37 = vld [vmem:[%s1 + $0x30] sm:$0xf]
  %v38 = vld [vmem:[%s1 + $0x34] sm:$0xf]
  %v39 = vld [vmem:[%s1 + $0x38] sm:$0xf]
  %v40 = vld [vmem:[%s1 + $0x3c] sm:$0xf]
  %v41 = vld [vmem:[%s1 + $0x40] sm:$0xf]
  %v42 = vld [vmem:[%s1 + $0x44] sm:$0xf]
  %v43 = vld [vmem:[%s1 + $0x48] sm:$0xf]
  %v44 = vld [vmem:[%s1 + $0x4c] sm:$0xf]
  %v45 = vld [vmem:[%s1 + $0x50] sm:$0xf]
  %v46 = vld [vmem:[%s1 + $0x54] sm:$0xf]
  %v47 = vld [vmem:[%s1 + $0x58] sm:$0xf]
  %v48 = vld [vmem:[%s1 + $0x5c] sm:$0xf]
  %v49 = vld [vmem:[%s1 + $0x60] sm:$0xf]
  %v50 = vld [vmem:[%s1 + $0x64] sm:$0xf]
  %v51 = vld [vmem:[%s1 + $0x68] sm:$0xf]
  %v52 = vld [vmem:[%s1 + $0x6c] sm:$0xf]
  %v53 = vld [vmem:[%s1 + $0x70] sm:$0xf]
  %v54 = vld [vmem:[%s1 + $0x74] sm:$0xf]
  %v55 = vld [vmem:[%s1 + $0x78] sm:$0xf]
  %v56 = vld [vmem:[%s1 + $0x7c] sm:$0xf]
  %v57 = vld [vmem:[%s2] sm:$0xf]
  %v58 = vld [vmem:[%s2 + $0x4] sm:$0xf]
  %v59 = vld [vmem:[%s2 + $0x8] sm:$0xf]
  %v60 = vld [vmem:[%s2 + $0xc] sm:$0xf]
  %v61 = vld [vmem:[%s3] sm:$0xf]
  %v66 = vunpack.c.l.b16 %v57
  %v67 = vunpack.c.l.b16 %v58
  %v68 = vunpack.c.l.b16 %v59
  %v69 = vunpack.c.l.b16 %v60
  %v70 = vpack.c.b16 %v67, %v66
  %v71 = vpack.c.b16 %v69, %v68
  %vm72 = vcmask 64512
  %v74 = vsel %vm72, %v70, 0
  %v77 = vsel %vm72, %v71, 0
  %vm79 = vcmask 1043456
  %v81 = vsel %vm79, %v61, 0
  %83 = vmatpush.bf16.msra.mxu0 0
  %84 = vmatpush.bf16.msra.mxu0 0
  %85 = vmatpush.bf16.msra.mxu0 0
  %86 = vmatpush.bf16.msra.mxu0 0
  %87 = vmatpush.bf16.msra.mxu0 0
  %88 = vmatpush.bf16.msra.mxu0 0
  %89 = vmatpush.bf16.msra.mxu0 0
  %90 = vmatpush.bf16.msra.mxu0 %v81
  %91 = vmatmul.bf16.gmra.mxu0 %v74
  %v92 = vpop.f32.mrf.mxu0
  %v93 = vadd.f32 0.0, %v92
  %v94 = vpop.f32.mrf.mxu0
  %v95 = vadd.f32 0.0, %v94
  %96 = vmatmul.bf16.gmra.mxu0 %v77
  %v97 = vpop.f32.mrf.mxu0
  %v98 = vadd.f32 0.0, %v97
  %v99 = vpop.f32.mrf.mxu0
  %v100 = vadd.f32 0.0, %v99
  %101 = vdwg.mxu0
  %v106 = vunpack.c.l.b16 %v21
  %v107 = vunpack.c.h.b16 %v21
  %v108 = vunpack.c.l.b16 %v22
  %v109 = vunpack.c.h.b16 %v22
  %v110 = vunpack.c.l.b16 %v23
  %v111 = vunpack.c.h.b16 %v23
  %v112 = vunpack.c.l.b16 %v24
  %v113 = vunpack.c.h.b16 %v24
  %v114 = vpack.c.b16 %v108, %v106
  %v115 = vpack.c.b16 %v109, %v107
  %v116 = vpack.c.b16 %v112, %v110
  %v117 = vpack.c.b16 %v113, %v111
  %v154 = vunpack.c.l.b16 %v25
  %v155 = vunpack.c.l.b16 %v26
  %v156 = vunpack.c.l.b16 %v27
  %v157 = vunpack.c.l.b16 %v28
  %v158 = vunpack.c.l.b16 %v29
  %v159 = vunpack.c.l.b16 %v30
  %v160 = vunpack.c.l.b16 %v31
  %v161 = vunpack.c.l.b16 %v32
  %v162 = vunpack.c.l.b16 %v33
  %v163 = vunpack.c.l.b16 %v34
  %v164 = vunpack.c.l.b16 %v35
  %v165 = vunpack.c.l.b16 %v36
  %v166 = vunpack.c.l.b16 %v37
  %v167 = vunpack.c.l.b16 %v38
  %v168 = vunpack.c.l.b16 %v39
  %v169 = vunpack.c.l.b16 %v40
  %v170 = vunpack.c.l.b16 %v41
  %v171 = vunpack.c.l.b16 %v42
  %v172 = vunpack.c.l.b16 %v43
  %v173 = vunpack.c.l.b16 %v44
  %v174 = vunpack.c.l.b16 %v45
  %v175 = vunpack.c.l.b16 %v46
  %v176 = vunpack.c.l.b16 %v47
  %v177 = vunpack.c.l.b16 %v48
  %v178 = vunpack.c.l.b16 %v49
  %v179 = vunpack.c.l.b16 %v50
  %v180 = vunpack.c.l.b16 %v51
  %v181 = vunpack.c.l.b16 %v52
  %v182 = vunpack.c.l.b16 %v53
  %v183 = vunpack.c.l.b16 %v54
  %v184 = vunpack.c.l.b16 %v55
  %v185 = vunpack.c.l.b16 %v56
  %v186 = vpack.c.b16 %v155, %v154
  %v187 = vpack.c.b16 %v157, %v156
  %v188 = vpack.c.b16 %v159, %v158
  %v189 = vpack.c.b16 %v161, %v160
  %v190 = vpack.c.b16 %v163, %v162
  %v191 = vpack.c.b16 %v165, %v164
  %v192 = vpack.c.b16 %v167, %v166
  %v193 = vpack.c.b16 %v169, %v168
  %v194 = vpack.c.b16 %v171, %v170
  %v195 = vpack.c.b16 %v173, %v172
  %v196 = vpack.c.b16 %v175, %v174
  %v197 = vpack.c.b16 %v177, %v176
  %v198 = vpack.c.b16 %v179, %v178
  %v199 = vpack.c.b16 %v181, %v180
  %v200 = vpack.c.b16 %v183, %v182
  %v201 = vpack.c.b16 %v185, %v184
  %218 = vmatpush.bf16.msra.mxu0 %v193
  %219 = vmatpush.bf16.msra.mxu0 %v192
  %220 = vmatpush.bf16.msra.mxu0 %v191
  %221 = vmatpush.bf16.msra.mxu0 %v190
  %222 = vmatpush.bf16.msra.mxu0 %v189
  %223 = vmatpush.bf16.msra.mxu0 %v188
  %224 = vmatpush.bf16.msra.mxu0 %v187
  %225 = vmatpush.bf16.msra.mxu0 %v186
  %226 = vmatmul.bf16.gmra.mxu0 %v114
  %v227 = vpop.f32.mrf.mxu0
  %v228 = vadd.f32 %v93, %v227
  %v229 = vpop.f32.mrf.mxu0
  %v230 = vadd.f32 %v95, %v229
  %231 = vmatmul.bf16.gmra.mxu0 %v116
  %v232 = vpop.f32.mrf.mxu0
  %v233 = vadd.f32 %v98, %v232
  %v234 = vpop.f32.mrf.mxu0
  %v235 = vadd.f32 %v100, %v234
  %236 = vdwg.mxu0
  %237 = vmatpush.bf16.msra.mxu0 %v201
  %238 = vmatpush.bf16.msra.mxu0 %v200
  %239 = vmatpush.bf16.msra.mxu0 %v199
  %240 = vmatpush.bf16.msra.mxu0 %v198
  %241 = vmatpush.bf16.msra.mxu0 %v197
  %242 = vmatpush.bf16.msra.mxu0 %v196
  %243 = vmatpush.bf16.msra.mxu0 %v195
  %244 = vmatpush.bf16.msra.mxu0 %v194
  %245 = vmatmul.bf16.gmra.mxu0 %v115
  %v246 = vpop.f32.mrf.mxu0
  %v247 = vadd.f32 %v228, %v246
  %v248 = vpop.f32.mrf.mxu0
  %v249 = vadd.f32 %v230, %v248
  %250 = vmatmul.bf16.gmra.mxu0 %v117
  %v251 = vpop.f32.mrf.mxu0
  %v252 = vadd.f32 %v233, %v251
  %v253 = vpop.f32.mrf.mxu0
  %v254 = vadd.f32 %v235, %v253
  %255 = vdwg.mxu0
  %v256 = vld [vmem:[%s4] sm:$0x1]
  %v258 = vperm.slane %v256, 0
  %v260 = vadd.f32 %v247, %v258
  %v261 = vadd.f32 %v249, %v258
  %v262 = vadd.f32 %v252, %v258
  %v263 = vadd.f32 %v254, %v258
  %v264 = vmax.f32 %v260, 0.0
  %v265 = vmax.f32 %v261, 0.0
  %v266 = vmax.f32 %v262, 0.0
  %v267 = vmax.f32 %v263, 0.0
  %v268 = vpack.c.bf16 %v264, %v264
  %v269 = vpack.c.bf16 %v265, %v265
  %v270 = vpack.c.bf16 %v266, %v266
  %v271 = vpack.c.bf16 %v267, %v267
  %272 = vst [vmem:[%s5] sm:$0xf] %v268
  %273 = vst [vmem:[%s5 + $0x4] sm:$0xf] %v269
  %274 = vst [vmem:[%s5 + $0x8] sm:$0xf] %v270
  %275 = vst [vmem:[%s5 + $0xc] sm:$0xf] %v271
  // Predicated region
  $region22: #{resnet_segmentation_forward.18} parent=0 // pred_check
    _
  $region23: #{resnet_segmentation_forward.18} parent=0 // pred_check_branch
    %277 = sbr.rel (0) target = $region25
  $region24: #{resnet_segmentation_forward.18} parent=0 // pred_region
    _
  $region25: #{resnet_segmentation_forward.18} parent=0 // pred_fallthru
    _
  // Predicated region
  $region26: #{resnet_segmentation_forward.18} parent=0 // pred_check
    _
  $region27: #{resnet_segmentation_forward.18} parent=0 // pred_check_branch
    %279 = sbr.rel (0) target = $region29
  $region28: #{resnet_segmentation_forward.18} parent=0 // pred_region
    _
  $region29: #{resnet_segmentation_forward.18} parent=0 // pred_fallthru
    _

// kernel: resnet_segmentation_forward.19
$region0: #{resnet_segmentation_forward.19}
  #allocation0 [shape = 'u32[]', space=smem, size = 0x4, offset = 0x4, fixed_abs, tag = 'smem constant byte address 0x4 - core index']
  #allocation1 [shape = 'u32[72,128]{1,0:T(1,128)}', space=vmem, size = 0x9000, scoped, tag = 'internal scratch']
  %s0 = inlined_call_operand.vmem [shape: bf16[8,256], index: 0, kind: input, shape index: {}]
  %s1 = inlined_call_operand.vmem [shape: bf16[256,128], index: 1, kind: input, shape index: {}]
  %s2 = inlined_call_operand.vmem [shape: f32[1,128], index: 2, kind: input, shape index: {}]
  %s3 = inlined_call_operand.vmem [shape: bf16[8,128], index: 3, kind: output, shape index: {}]
  %s4 = sld [smem:[#allocation0]]
  $region22: #{resnet_segmentation_forward.19} parent=0
    _
  %s6 = ssub.s32 1, %s4
  %s7 = scalar_select 0, %s6, %s4
  // Predicated region
  $region2: #{resnet_segmentation_forward.19} parent=0 // pred_check
    _
  $region3: #{resnet_segmentation_forward.19} parent=0 // pred_check_branch
    %9 = sbr.rel (0) target = $region5
  $region4: #{resnet_segmentation_forward.19} parent=0 // pred_region
    _
  $region5: #{resnet_segmentation_forward.19} parent=0 // pred_fallthru
    _
  // Predicated region
  $region6: #{resnet_segmentation_forward.19} parent=0 // pred_check
    _
  $region7: #{resnet_segmentation_forward.19} parent=0 // pred_check_branch
    %11 = sbr.rel (0) target = $region9
  $region8: #{resnet_segmentation_forward.19} parent=0 // pred_region
    _
  $region9: #{resnet_segmentation_forward.19} parent=0 // pred_fallthru
    _
  // Predicated region
  $region10: #{resnet_segmentation_forward.19} parent=0 // pred_check
    _
  $region11: #{resnet_segmentation_forward.19} parent=0 // pred_check_branch
    %13 = sbr.rel (0) target = $region13
  $region12: #{resnet_segmentation_forward.19} parent=0 // pred_region
    _
  $region13: #{resnet_segmentation_forward.19} parent=0 // pred_fallthru
    _
  %v14 = vld [vmem:[%s0] sm:$0xff]
  %v15 = vld [vmem:[%s1] sm:$0xf]
  %v16 = vld [vmem:[%s1 + $0x4] sm:$0xf]
  %v17 = vld [vmem:[%s1 + $0x8] sm:$0xf]
  %v18 = vld [vmem:[%s1 + $0xc] sm:$0xf]
  %v19 = vld [vmem:[%s1 + $0x10] sm:$0xf]
  %v20 = vld [vmem:[%s1 + $0x14] sm:$0xf]
  %v21 = vld [vmem:[%s1 + $0x18] sm:$0xf]
  %v22 = vld [vmem:[%s1 + $0x1c] sm:$0xf]
  %v23 = vld [vmem:[%s1 + $0x20] sm:$0xf]
  %v24 = vld [vmem:[%s1 + $0x24] sm:$0xf]
  %v25 = vld [vmem:[%s1 + $0x28] sm:$0xf]
  %v26 = vld [vmem:[%s1 + $0x2c] sm:$0xf]
  %v27 = vld [vmem:[%s1 + $0x30] sm:$0xf]
  %v28 = vld [vmem:[%s1 + $0x34] sm:$0xf]
  %v29 = vld [vmem:[%s1 + $0x38] sm:$0xf]
  %v30 = vld [vmem:[%s1 + $0x3c] sm:$0xf]
  %v31 = vld [vmem:[%s1 + $0x40] sm:$0xf]
  %v32 = vld [vmem:[%s1 + $0x44] sm:$0xf]
  %v33 = vld [vmem:[%s1 + $0x48] sm:$0xf]
  %v34 = vld [vmem:[%s1 + $0x4c] sm:$0xf]
  %v35 = vld [vmem:[%s1 + $0x50] sm:$0xf]
  %v36 = vld [vmem:[%s1 + $0x54] sm:$0xf]
  %v37 = vld [vmem:[%s1 + $0x58] sm:$0xf]
  %v38 = vld [vmem:[%s1 + $0x5c] sm:$0xf]
  %v39 = vld [vmem:[%s1 + $0x60] sm:$0xf]
  %v40 = vld [vmem:[%s1 + $0x64] sm:$0xf]
  %v41 = vld [vmem:[%s1 + $0x68] sm:$0xf]
  %v42 = vld [vmem:[%s1 + $0x6c] sm:$0xf]
  %v43 = vld [vmem:[%s1 + $0x70] sm:$0xf]
  %v44 = vld [vmem:[%s1 + $0x74] sm:$0xf]
  %v45 = vld [vmem:[%s1 + $0x78] sm:$0xf]
  %v46 = vld [vmem:[%s1 + $0x7c] sm:$0xf]
  %v47 = vld [vmem:[%s2] sm:$0x1]
  %v49 = vperm.slane %v47, 0
  %v52 = vunpack.c.l.b16 %v14
  %v53 = vunpack.c.h.b16 %v14
  %v54 = vpack.c.b16 %v52, %v52
  %v55 = vpack.c.b16 %v53, %v53
  %v90 = vunpack.c.l.b16 %v15
  %v91 = vunpack.c.l.b16 %v16
  %v92 = vunpack.c.l.b16 %v17
  %v93 = vunpack.c.l.b16 %v18
  %v94 = vunpack.c.l.b16 %v19
  %v95 = vunpack.c.l.b16 %v20
  %v96 = vunpack.c.l.b16 %v21
  %v97 = vunpack.c.l.b16 %v22
  %v98 = vunpack.c.l.b16 %v23
  %v99 = vunpack.c.l.b16 %v24
  %v100 = vunpack.c.l.b16 %v25
  %v101 = vunpack.c.l.b16 %v26
  %v102 = vunpack.c.l.b16 %v27
  %v103 = vunpack.c.l.b16 %v28
  %v104 = vunpack.c.l.b16 %v29
  %v105 = vunpack.c.l.b16 %v30
  %v106 = vunpack.c.l.b16 %v31
  %v107 = vunpack.c.l.b16 %v32
  %v108 = vunpack.c.l.b16 %v33
  %v109 = vunpack.c.l.b16 %v34
  %v110 = vunpack.c.l.b16 %v35
  %v111 = vunpack.c.l.b16 %v36
  %v112 = vunpack.c.l.b16 %v37
  %v113 = vunpack.c.l.b16 %v38
  %v114 = vunpack.c.l.b16 %v39
  %v115 = vunpack.c.l.b16 %v40
  %v116 = vunpack.c.l.b16 %v41
  %v117 = vunpack.c.l.b16 %v42
  %v118 = vunpack.c.l.b16 %v43
  %v119 = vunpack.c.l.b16 %v44
  %v120 = vunpack.c.l.b16 %v45
  %v121 = vunpack.c.l.b16 %v46
  %v122 = vpack.c.b16 %v91, %v90
  %v123 = vpack.c.b16 %v93, %v92
  %v124 = vpack.c.b16 %v95, %v94
  %v125 = vpack.c.b16 %v97, %v96
  %v126 = vpack.c.b16 %v99, %v98
  %v127 = vpack.c.b16 %v101, %v100
  %v128 = vpack.c.b16 %v103, %v102
  %v129 = vpack.c.b16 %v105, %v104
  %v130 = vpack.c.b16 %v107, %v106
  %v131 = vpack.c.b16 %v109, %v108
  %v132 = vpack.c.b16 %v111, %v110
  %v133 = vpack.c.b16 %v113, %v112
  %v134 = vpack.c.b16 %v115, %v114
  %v135 = vpack.c.b16 %v117, %v116
  %v136 = vpack.c.b16 %v119, %v118
  %v137 = vpack.c.b16 %v121, %v120
  %154 = vmatpush.bf16.msra.mxu0 %v129
  %155 = vmatpush.bf16.msra.mxu0 %v128
  %156 = vmatpush.bf16.msra.mxu0 %v127
  %157 = vmatpush.bf16.msra.mxu0 %v126
  %158 = vmatpush.bf16.msra.mxu0 %v125
  %159 = vmatpush.bf16.msra.mxu0 %v124
  %160 = vmatpush.bf16.msra.mxu0 %v123
  %161 = vmatpush.bf16.msra.mxu0 %v122
  %162 = vmatmul.bf16.gmra.mxu0 %v54
  %v163 = vpop.f32.mrf.mxu0
  %v164 = vadd.f32 %v49, %v163
  %v165 = vpop.f32.mrf.mxu0
  %166 = vdwg.mxu0
  %167 = vmatpush.bf16.msra.mxu0 %v137
  %168 = vmatpush.bf16.msra.mxu0 %v136
  %169 = vmatpush.bf16.msra.mxu0 %v135
  %170 = vmatpush.bf16.msra.mxu0 %v134
  %171 = vmatpush.bf16.msra.mxu0 %v133
  %172 = vmatpush.bf16.msra.mxu0 %v132
  %173 = vmatpush.bf16.msra.mxu0 %v131
  %174 = vmatpush.bf16.msra.mxu0 %v130
  %175 = vmatmul.bf16.gmra.mxu0 %v55
  %v176 = vpop.f32.mrf.mxu0
  %v177 = vadd.f32 %v164, %v176
  %v178 = vpop.f32.mrf.mxu0
  %179 = vdwg.mxu0
  %v180 = vmax.f32 %v177, 0.0
  %v181 = vpack.c.bf16 %v180, %v180
  %182 = vst [vmem:[%s3] sm:$0xf] %v181
  // Predicated region
  $region14: #{resnet_segmentation_forward.19} parent=0 // pred_check
    _
  $region15: #{resnet_segmentation_forward.19} parent=0 // pred_check_branch
    %184 = sbr.rel (0) target = $region17
  $region16: #{resnet_segmentation_forward.19} parent=0 // pred_region
    _
  $region17: #{resnet_segmentation_forward.19} parent=0 // pred_fallthru
    _
  // Predicated region
  $region18: #{resnet_segmentation_forward.19} parent=0 // pred_check
    _
  $region19: #{resnet_segmentation_forward.19} parent=0 // pred_check_branch
    %186 = sbr.rel (0) target = $region21
  $region20: #{resnet_segmentation_forward.19} parent=0 // pred_region
    _
  $region21: #{resnet_segmentation_forward.19} parent=0 // pred_fallthru
    _

// kernel: resnet_segmentation_forward.20
$region0: #{resnet_segmentation_forward.20}
  #allocation0 [shape = 'u32[]', space=smem, size = 0x4, offset = 0x4, fixed_abs, tag = 'smem constant byte address 0x4 - core index']
  #allocation1 [shape = 'u32[72,128]{1,0:T(1,128)}', space=vmem, size = 0x9000, scoped, tag = 'internal scratch']
  %s0 = inlined_call_operand.vmem [shape: bf16[8,384], index: 0, kind: input, shape index: {}]
  %s1 = inlined_call_operand.vmem [shape: bf16[384,128], index: 1, kind: input, shape index: {}]
  %s2 = inlined_call_operand.vmem [shape: bf16[8,16], index: 2, kind: input, shape index: {}]
  %s3 = inlined_call_operand.vmem [shape: bf16[16,128], index: 3, kind: input, shape index: {}]
  %s4 = inlined_call_operand.vmem [shape: f32[1,128], index: 4, kind: input, shape index: {}]
  %s5 = inlined_call_operand.vmem [shape: bf16[8,128], index: 5, kind: output, shape index: {}]
  %s6 = sld [smem:[#allocation0]]
  $region30: #{resnet_segmentation_forward.20} parent=0
    _
  %s8 = ssub.s32 1, %s6
  %s9 = scalar_select 0, %s8, %s6
  // Predicated region
  $region2: #{resnet_segmentation_forward.20} parent=0 // pred_check
    _
  $region3: #{resnet_segmentation_forward.20} parent=0 // pred_check_branch
    %11 = sbr.rel (0) target = $region5
  $region4: #{resnet_segmentation_forward.20} parent=0 // pred_region
    _
  $region5: #{resnet_segmentation_forward.20} parent=0 // pred_fallthru
    _
  // Predicated region
  $region6: #{resnet_segmentation_forward.20} parent=0 // pred_check
    _
  $region7: #{resnet_segmentation_forward.20} parent=0 // pred_check_branch
    %13 = sbr.rel (0) target = $region9
  $region8: #{resnet_segmentation_forward.20} parent=0 // pred_region
    _
  $region9: #{resnet_segmentation_forward.20} parent=0 // pred_fallthru
    _
  // Predicated region
  $region10: #{resnet_segmentation_forward.20} parent=0 // pred_check
    _
  $region11: #{resnet_segmentation_forward.20} parent=0 // pred_check_branch
    %15 = sbr.rel (0) target = $region13
  $region12: #{resnet_segmentation_forward.20} parent=0 // pred_region
    _
  $region13: #{resnet_segmentation_forward.20} parent=0 // pred_fallthru
    _
  // Predicated region
  $region14: #{resnet_segmentation_forward.20} parent=0 // pred_check
    _
  $region15: #{resnet_segmentation_forward.20} parent=0 // pred_check_branch
    %17 = sbr.rel (0) target = $region17
  $region16: #{resnet_segmentation_forward.20} parent=0 // pred_region
    _
  $region17: #{resnet_segmentation_forward.20} parent=0 // pred_fallthru
    _
  // Predicated region
  $region18: #{resnet_segmentation_forward.20} parent=0 // pred_check
    _
  $region19: #{resnet_segmentation_forward.20} parent=0 // pred_check_branch
    %19 = sbr.rel (0) target = $region21
  $region20: #{resnet_segmentation_forward.20} parent=0 // pred_region
    _
  $region21: #{resnet_segmentation_forward.20} parent=0 // pred_fallthru
    _
  %v21 = vld [vmem:[%s0] sm:$0xff]
  %v22 = vld [vmem:[%s0 + $0x8] sm:$0xf]
  %v23 = vld [vmem:[%s1] sm:$0xf]
  %v24 = vld [vmem:[%s1 + $0x4] sm:$0xf]
  %v25 = vld [vmem:[%s1 + $0x8] sm:$0xf]
  %v26 = vld [vmem:[%s1 + $0xc] sm:$0xf]
  %v27 = vld [vmem:[%s1 + $0x10] sm:$0xf]
  %v28 = vld [vmem:[%s1 + $0x14] sm:$0xf]
  %v29 = vld [vmem:[%s1 + $0x18] sm:$0xf]
  %v30 = vld [vmem:[%s1 + $0x1c] sm:$0xf]
  %v31 = vld [vmem:[%s1 + $0x20] sm:$0xf]
  %v32 = vld [vmem:[%s1 + $0x24] sm:$0xf]
  %v33 = vld [vmem:[%s1 + $0x28] sm:$0xf]
  %v34 = vld [vmem:[%s1 + $0x2c] sm:$0xf]
  %v35 = vld [vmem:[%s1 + $0x30] sm:$0xf]
  %v36 = vld [vmem:[%s1 + $0x34] sm:$0xf]
  %v37 = vld [vmem:[%s1 + $0x38] sm:$0xf]
  %v38 = vld [vmem:[%s1 + $0x3c] sm:$0xf]
  %v39 = vld [vmem:[%s1 + $0x40] sm:$0xf]
  %v40 = vld [vmem:[%s1 + $0x44] sm:$0xf]
  %v41 = vld [vmem:[%s1 + $0x48] sm:$0xf]
  %v42 = vld [vmem:[%s1 + $0x4c] sm:$0xf]
  %v43 = vld [vmem:[%s1 + $0x50] sm:$0xf]
  %v44 = vld [vmem:[%s1 + $0x54] sm:$0xf]
  %v45 = vld [vmem:[%s1 + $0x58] sm:$0xf]
  %v46 = vld [vmem:[%s1 + $0x5c] sm:$0xf]
  %v47 = vld [vmem:[%s1 + $0x60] sm:$0xf]
  %v48 = vld [vmem:[%s1 + $0x64] sm:$0xf]
  %v49 = vld [vmem:[%s1 + $0x68] sm:$0xf]
  %v50 = vld [vmem:[%s1 + $0x6c] sm:$0xf]
  %v51 = vld [vmem:[%s1 + $0x70] sm:$0xf]
  %v52 = vld [vmem:[%s1 + $0x74] sm:$0xf]
  %v53 = vld [vmem:[%s1 + $0x78] sm:$0xf]
  %v54 = vld [vmem:[%s1 + $0x7c] sm:$0xf]
  %v55 = vld [vmem:[%s1 + $0x80] sm:$0xf]
  %v56 = vld [vmem:[%s1 + $0x84] sm:$0xf]
  %v57 = vld [vmem:[%s1 + $0x88] sm:$0xf]
  %v58 = vld [vmem:[%s1 + $0x8c] sm:$0xf]
  %v59 = vld [vmem:[%s1 + $0x90] sm:$0xf]
  %v60 = vld [vmem:[%s1 + $0x94] sm:$0xf]
  %v61 = vld [vmem:[%s1 + $0x98] sm:$0xf]
  %v62 = vld [vmem:[%s1 + $0x9c] sm:$0xf]
  %v63 = vld [vmem:[%s1 + $0xa0] sm:$0xf]
  %v64 = vld [vmem:[%s1 + $0xa4] sm:$0xf]
  %v65 = vld [vmem:[%s1 + $0xa8] sm:$0xf]
  %v66 = vld [vmem:[%s1 + $0xac] sm:$0xf]
  %v67 = vld [vmem:[%s1 + $0xb0] sm:$0xf]
  %v68 = vld [vmem:[%s1 + $0xb4] sm:$0xf]
  %v69 = vld [vmem:[%s1 + $0xb8] sm:$0xf]
  %v70 = vld [vmem:[%s1 + $0xbc] sm:$0xf]
  %v71 = vld [vmem:[%s2] sm:$0xf]
  %v72 = vld [vmem:[%s3] sm:$0xf]
  %v73 = vld [vmem:[%s3 + $0x4] sm:$0xf]
  %v76 = vunpack.c.l.b16 %v72
  %v77 = vunpack.c.l.b16 %v73
  %v78 = vpack.c.b16 %v77, %v76
  %vm80 = vcmask 130048
  %v82 = vsel %vm80, %v71, 0
  %84 = vmatpush.bf16.msra.mxu0 0
  %85 = vmatpush.bf16.msra.mxu0 0
  %86 = vmatpush.bf16.msra.mxu0 0
  %87 = vmatpush.bf16.msra.mxu0 0
  %88 = vmatpush.bf16.msra.mxu0 0
  %89 = vmatpush.bf16.msra.mxu0 0
  %90 = vmatpush.bf16.msra.mxu0 0
  %91 = vmatpush.bf16.msra.mxu0 %v78
  %92 = vmatmul.bf16.gmra.mxu0 %v82
  %v93 = vpop.f32.mrf.mxu0
  %v94 = vadd.f32 0.0, %v93
  %v95 = vpop.f32.mrf.mxu0
  %96 = vdwg.mxu0
  %v99 = vunpack.c.l.b16 %v21
  %v100 = vunpack.c.h.b16 %v21
  %v101 = vunpack.c.l.b16 %v22
  %v102 = vpack.c.b16 %v99, %v99
  %v103 = vpack.c.b16 %v100, %v100
  %v104 = vpack.c.b16 %v101, %v101
  %v156 = vunpack.c.l.b16 %v23
  %v157 = vunpack.c.l.b16 %v24
  %v158 = vunpack.c.l.b16 %v25
  %v159 = vunpack.c.l.b16 %v26
  %v160 = vunpack.c.l.b16 %v27
  %v161 = vunpack.c.l.b16 %v28
  %v162 = vunpack.c.l.b16 %v29
  %v163 = vunpack.c.l.b16 %v30
  %v164 = vunpack.c.l.b16 %v31
  %v165 = vunpack.c.l.b16 %v32
  %v166 = vunpack.c.l.b16 %v33
  %v167 = vunpack.c.l.b16 %v34
  %v168 = vunpack.c.l.b16 %v35
  %v169 = vunpack.c.l.b16 %v36
  %v170 = vunpack.c.l.b16 %v37
  %v171 = vunpack.c.l.b16 %v38
  %v172 = vunpack.c.l.b16 %v39
  %v173 = vunpack.c.l.b16 %v40
  %v174 = vunpack.c.l.b16 %v41
  %v175 = vunpack.c.l.b16 %v42
  %v176 = vunpack.c.l.b16 %v43
  %v177 = vunpack.c.l.b16 %v44
  %v178 = vunpack.c.l.b16 %v45
  %v179 = vunpack.c.l.b16 %v46
  %v180 = vunpack.c.l.b16 %v47
  %v181 = vunpack.c.l.b16 %v48
  %v182 = vunpack.c.l.b16 %v49
  %v183 = vunpack.c.l.b16 %v50
  %v184 = vunpack.c.l.b16 %v51
  %v185 = vunpack.c.l.b16 %v52
  %v186 = vunpack.c.l.b16 %v53
  %v187 = vunpack.c.l.b16 %v54
  %v188 = vunpack.c.l.b16 %v55
  %v189 = vunpack.c.l.b16 %v56
  %v190 = vunpack.c.l.b16 %v57
  %v191 = vunpack.c.l.b16 %v58
  %v192 = vunpack.c.l.b16 %v59
  %v193 = vunpack.c.l.b16 %v60
  %v194 = vunpack.c.l.b16 %v61
  %v195 = vunpack.c.l.b16 %v62
  %v196 = vunpack.c.l.b16 %v63
  %v197 = vunpack.c.l.b16 %v64
  %v198 = vunpack.c.l.b16 %v65
  %v199 = vunpack.c.l.b16 %v66
  %v200 = vunpack.c.l.b16 %v67
  %v201 = vunpack.c.l.b16 %v68
  %v202 = vunpack.c.l.b16 %v69
  %v203 = vunpack.c.l.b16 %v70
  %v204 = vpack.c.b16 %v157, %v156
  %v205 = vpack.c.b16 %v159, %v158
  %v206 = vpack.c.b16 %v161, %v160
  %v207 = vpack.c.b16 %v163, %v162
  %v208 = vpack.c.b16 %v165, %v164
  %v209 = vpack.c.b16 %v167, %v166
  %v210 = vpack.c.b16 %v169, %v168
  %v211 = vpack.c.b16 %v171, %v170
  %v212 = vpack.c.b16 %v173, %v172
  %v213 = vpack.c.b16 %v175, %v174
  %v214 = vpack.c.b16 %v177, %v176
  %v215 = vpack.c.b16 %v179, %v178
  %v216 = vpack.c.b16 %v181, %v180
  %v217 = vpack.c.b16 %v183, %v182
  %v218 = vpack.c.b16 %v185, %v184
  %v219 = vpack.c.b16 %v187, %v186
  %v220 = vpack.c.b16 %v189, %v188
  %v221 = vpack.c.b16 %v191, %v190
  %v222 = vpack.c.b16 %v193, %v192
  %v223 = vpack.c.b16 %v195, %v194
  %v224 = vpack.c.b16 %v197, %v196
  %v225 = vpack.c.b16 %v199, %v198
  %v226 = vpack.c.b16 %v201, %v200
  %v227 = vpack.c.b16 %v203, %v202
  %252 = vmatpush.bf16.msra.mxu0 %v211
  %253 = vmatpush.bf16.msra.mxu0 %v210
  %254 = vmatpush.bf16.msra.mxu0 %v209
  %255 = vmatpush.bf16.msra.mxu0 %v208
  %256 = vmatpush.bf16.msra.mxu0 %v207
  %257 = vmatpush.bf16.msra.mxu0 %v206
  %258 = vmatpush.bf16.msra.mxu0 %v205
  %259 = vmatpush.bf16.msra.mxu0 %v204
  %260 = vmatmul.bf16.gmra.mxu0 %v102
  %v261 = vpop.f32.mrf.mxu0
  %v262 = vadd.f32 %v94, %v261
  %v263 = vpop.f32.mrf.mxu0
  %264 = vdwg.mxu0
  %265 = vmatpush.bf16.msra.mxu0 %v219
  %266 = vmatpush.bf16.msra.mxu0 %v218
  %267 = vmatpush.bf16.msra.mxu0 %v217
  %268 = vmatpush.bf16.msra.mxu0 %v216
  %269 = vmatpush.bf16.msra.mxu0 %v215
  %270 = vmatpush.bf16.msra.mxu0 %v214
  %271 = vmatpush.bf16.msra.mxu0 %v213
  %272 = vmatpush.bf16.msra.mxu0 %v212
  %273 = vmatmul.bf16.gmra.mxu0 %v103
  %v274 = vpop.f32.mrf.mxu0
  %v275 = vadd.f32 %v262, %v274
  %v276 = vpop.f32.mrf.mxu0
  %277 = vdwg.mxu0
  %278 = vmatpush.bf16.msra.mxu0 %v227
  %279 = vmatpush.bf16.msra.mxu0 %v226
  %280 = vmatpush.bf16.msra.mxu0 %v225
  %281 = vmatpush.bf16.msra.mxu0 %v224
  %282 = vmatpush.bf16.msra.mxu0 %v223
  %283 = vmatpush.bf16.msra.mxu0 %v222
  %284 = vmatpush.bf16.msra.mxu0 %v221
  %285 = vmatpush.bf16.msra.mxu0 %v220
  %286 = vmatmul.bf16.gmra.mxu0 %v104
  %v287 = vpop.f32.mrf.mxu0
  %v288 = vadd.f32 %v275, %v287
  %v289 = vpop.f32.mrf.mxu0
  %290 = vdwg.mxu0
  %v291 = vld [vmem:[%s4] sm:$0x1]
  %v293 = vperm.slane %v291, 0
  %v295 = vadd.f32 %v288, %v293
  %v296 = vmax.f32 %v295, 0.0
  %v297 = vpack.c.bf16 %v296, %v296
  %298 = vst [vmem:[%s5] sm:$0xf] %v297
  // Predicated region
  $region22: #{resnet_segmentation_forward.20} parent=0 // pred_check
    _
  $region23: #{resnet_segmentation_forward.20} parent=0 // pred_check_branch
    %300 = sbr.rel (0) target = $region25
  $region24: #{resnet_segmentation_forward.20} parent=0 // pred_region
    _
  $region25: #{resnet_segmentation_forward.20} parent=0 // pred_fallthru
    _
  // Predicated region
  $region26: #{resnet_segmentation_forward.20} parent=0 // pred_check
    _
  $region27: #{resnet_segmentation_forward.20} parent=0 // pred_check_branch
    %302 = sbr.rel (0) target = $region29
  $region28: #{resnet_segmentation_forward.20} parent=0 // pred_region
    _
  $region29: #{resnet_segmentation_forward.20} parent=0 // pred_fallthru
    _

// kernel: resnet_segmentation_forward.21
$region0: #{resnet_segmentation_forward.21}
  #allocation0 [shape = 'u32[]', space=smem, size = 0x4, offset = 0x4, fixed_abs, tag = 'smem constant byte address 0x4 - core index']
  #allocation1 [shape = 'u32[72,128]{1,0:T(1,128)}', space=vmem, size = 0x9000, scoped, tag = 'internal scratch']
  %s0 = inlined_call_operand.vmem [shape: bf16[2,384], index: 0, kind: input, shape index: {}]
  %s1 = inlined_call_operand.vmem [shape: bf16[384,128], index: 1, kind: input, shape index: {}]
  %s2 = inlined_call_operand.vmem [shape: f32[1,128], index: 2, kind: input, shape index: {}]
  %s3 = inlined_call_operand.vmem [shape: bf16[2,128], index: 3, kind: output, shape index: {}]
  %s4 = sld [smem:[#allocation0]]
  $region22: #{resnet_segmentation_forward.21} parent=0
    _
  %s6 = ssub.s32 1, %s4
  %s7 = scalar_select 0, %s6, %s4
  // Predicated region
  $region2: #{resnet_segmentation_forward.21} parent=0 // pred_check
    _
  $region3: #{resnet_segmentation_forward.21} parent=0 // pred_check_branch
    %9 = sbr.rel (0) target = $region5
  $region4: #{resnet_segmentation_forward.21} parent=0 // pred_region
    _
  $region5: #{resnet_segmentation_forward.21} parent=0 // pred_fallthru
    _
  // Predicated region
  $region6: #{resnet_segmentation_forward.21} parent=0 // pred_check
    _
  $region7: #{resnet_segmentation_forward.21} parent=0 // pred_check_branch
    %11 = sbr.rel (0) target = $region9
  $region8: #{resnet_segmentation_forward.21} parent=0 // pred_region
    _
  $region9: #{resnet_segmentation_forward.21} parent=0 // pred_fallthru
    _
  // Predicated region
  $region10: #{resnet_segmentation_forward.21} parent=0 // pred_check
    _
  $region11: #{resnet_segmentation_forward.21} parent=0 // pred_check_branch
    %13 = sbr.rel (0) target = $region13
  $region12: #{resnet_segmentation_forward.21} parent=0 // pred_region
    _
  $region13: #{resnet_segmentation_forward.21} parent=0 // pred_fallthru
    _
  %v14 = vld [vmem:[%s0] sm:$0x7]
  %v15 = vld [vmem:[%s1] sm:$0xf]
  %v16 = vld [vmem:[%s1 + $0x4] sm:$0xf]
  %v17 = vld [vmem:[%s1 + $0x8] sm:$0xf]
  %v18 = vld [vmem:[%s1 + $0xc] sm:$0xf]
  %v19 = vld [vmem:[%s1 + $0x10] sm:$0xf]
  %v20 = vld [vmem:[%s1 + $0x14] sm:$0xf]
  %v21 = vld [vmem:[%s1 + $0x18] sm:$0xf]
  %v22 = vld [vmem:[%s1 + $0x1c] sm:$0xf]
  %v23 = vld [vmem:[%s1 + $0x20] sm:$0xf]
  %v24 = vld [vmem:[%s1 + $0x24] sm:$0xf]
  %v25 = vld [vmem:[%s1 + $0x28] sm:$0xf]
  %v26 = vld [vmem:[%s1 + $0x2c] sm:$0xf]
  %v27 = vld [vmem:[%s1 + $0x30] sm:$0xf]
  %v28 = vld [vmem:[%s1 + $0x34] sm:$0xf]
  %v29 = vld [vmem:[%s1 + $0x38] sm:$0xf]
  %v30 = vld [vmem:[%s1 + $0x3c] sm:$0xf]
  %v31 = vld [vmem:[%s1 + $0x40] sm:$0xf]
  %v32 = vld [vmem:[%s1 + $0x44] sm:$0xf]
  %v33 = vld [vmem:[%s1 + $0x48] sm:$0xf]
  %v34 = vld [vmem:[%s1 + $0x4c] sm:$0xf]
  %v35 = vld [vmem:[%s1 + $0x50] sm:$0xf]
  %v36 = vld [vmem:[%s1 + $0x54] sm:$0xf]
  %v37 = vld [vmem:[%s1 + $0x58] sm:$0xf]
  %v38 = vld [vmem:[%s1 + $0x5c] sm:$0xf]
  %v39 = vld [vmem:[%s1 + $0x60] sm:$0xf]
  %v40 = vld [vmem:[%s1 + $0x64] sm:$0xf]
  %v41 = vld [vmem:[%s1 + $0x68] sm:$0xf]
  %v42 = vld [vmem:[%s1 + $0x6c] sm:$0xf]
  %v43 = vld [vmem:[%s1 + $0x70] sm:$0xf]
  %v44 = vld [vmem:[%s1 + $0x74] sm:$0xf]
  %v45 = vld [vmem:[%s1 + $0x78] sm:$0xf]
  %v46 = vld [vmem:[%s1 + $0x7c] sm:$0xf]
  %v47 = vld [vmem:[%s1 + $0x80] sm:$0xf]
  %v48 = vld [vmem:[%s1 + $0x84] sm:$0xf]
  %v49 = vld [vmem:[%s1 + $0x88] sm:$0xf]
  %v50 = vld [vmem:[%s1 + $0x8c] sm:$0xf]
  %v51 = vld [vmem:[%s1 + $0x90] sm:$0xf]
  %v52 = vld [vmem:[%s1 + $0x94] sm:$0xf]
  %v53 = vld [vmem:[%s1 + $0x98] sm:$0xf]
  %v54 = vld [vmem:[%s1 + $0x9c] sm:$0xf]
  %v55 = vld [vmem:[%s1 + $0xa0] sm:$0xf]
  %v56 = vld [vmem:[%s1 + $0xa4] sm:$0xf]
  %v57 = vld [vmem:[%s1 + $0xa8] sm:$0xf]
  %v58 = vld [vmem:[%s1 + $0xac] sm:$0xf]
  %v59 = vld [vmem:[%s1 + $0xb0] sm:$0xf]
  %v60 = vld [vmem:[%s1 + $0xb4] sm:$0xf]
  %v61 = vld [vmem:[%s1 + $0xb8] sm:$0xf]
  %v62 = vld [vmem:[%s1 + $0xbc] sm:$0xf]
  %v63 = vld [vmem:[%s2] sm:$0x1]
  %v65 = vperm.slane %v63, 0
  %68 = vst [vmem:[#allocation1] ss:$9 sm:$0xff] %v14
  %v69 = vld [vmem:[#allocation1] sm:$0xff]
  %v70 = vld [vmem:[#allocation1 + $0x9] sm:$0xff]
  %v71 = vld [vmem:[#allocation1 + $0x12] sm:$0xff]
  %v123 = vunpack.c.l.b16 %v15
  %v124 = vunpack.c.l.b16 %v16
  %v125 = vunpack.c.l.b16 %v17
  %v126 = vunpack.c.l.b16 %v18
  %v127 = vunpack.c.l.b16 %v19
  %v128 = vunpack.c.l.b16 %v20
  %v129 = vunpack.c.l.b16 %v21
  %v130 = vunpack.c.l.b16 %v22
  %v131 = vunpack.c.l.b16 %v23
  %v132 = vunpack.c.l.b16 %v24
  %v133 = vunpack.c.l.b16 %v25
  %v134 = vunpack.c.l.b16 %v26
  %v135 = vunpack.c.l.b16 %v27
  %v136 = vunpack.c.l.b16 %v28
  %v137 = vunpack.c.l.b16 %v29
  %v138 = vunpack.c.l.b16 %v30
  %v139 = vunpack.c.l.b16 %v31
  %v140 = vunpack.c.l.b16 %v32
  %v141 = vunpack.c.l.b16 %v33
  %v142 = vunpack.c.l.b16 %v34
  %v143 = vunpack.c.l.b16 %v35
  %v144 = vunpack.c.l.b16 %v36
  %v145 = vunpack.c.l.b16 %v37
  %v146 = vunpack.c.l.b16 %v38
  %v147 = vunpack.c.l.b16 %v39
  %v148 = vunpack.c.l.b16 %v40
  %v149 = vunpack.c.l.b16 %v41
  %v150 = vunpack.c.l.b16 %v42
  %v151 = vunpack.c.l.b16 %v43
  %v152 = vunpack.c.l.b16 %v44
  %v153 = vunpack.c.l.b16 %v45
  %v154 = vunpack.c.l.b16 %v46
  %v155 = vunpack.c.l.b16 %v47
  %v156 = vunpack.c.l.b16 %v48
  %v157 = vunpack.c.l.b16 %v49
  %v158 = vunpack.c.l.b16 %v50
  %v159 = vunpack.c.l.b16 %v51
  %v160 = vunpack.c.l.b16 %v52
  %v161 = vunpack.c.l.b16 %v53
  %v162 = vunpack.c.l.b16 %v54
  %v163 = vunpack.c.l.b16 %v55
  %v164 = vunpack.c.l.b16 %v56
  %v165 = vunpack.c.l.b16 %v57
  %v166 = vunpack.c.l.b16 %v58
  %v167 = vunpack.c.l.b16 %v59
  %v168 = vunpack.c.l.b16 %v60
  %v169 = vunpack.c.l.b16 %v61
  %v170 = vunpack.c.l.b16 %v62
  %v171 = vpack.c.b16 %v124, %v123
  %v172 = vpack.c.b16 %v126, %v125
  %v173 = vpack.c.b16 %v128, %v127
  %v174 = vpack.c.b16 %v130, %v129
  %v175 = vpack.c.b16 %v132, %v131
  %v176 = vpack.c.b16 %v134, %v133
  %v177 = vpack.c.b16 %v136, %v135
  %v178 = vpack.c.b16 %v138, %v137
  %v179 = vpack.c.b16 %v140, %v139
  %v180 = vpack.c.b16 %v142, %v141
  %v181 = vpack.c.b16 %v144, %v143
  %v182 = vpack.c.b16 %v146, %v145
  %v183 = vpack.c.b16 %v148, %v147
  %v184 = vpack.c.b16 %v150, %v149
  %v185 = vpack.c.b16 %v152, %v151
  %v186 = vpack.c.b16 %v154, %v153
  %v187 = vpack.c.b16 %v156, %v155
  %v188 = vpack.c.b16 %v158, %v157
  %v189 = vpack.c.b16 %v160, %v159
  %v190 = vpack.c.b16 %v162, %v161
  %v191 = vpack.c.b16 %v164, %v163
  %v192 = vpack.c.b16 %v166, %v165
  %v193 = vpack.c.b16 %v168, %v167
  %v194 = vpack.c.b16 %v170, %v169
  %219 = vmatpush.bf16.msra.mxu0 %v178
  %220 = vmatpush.bf16.msra.mxu0 %v177
  %221 = vmatpush.bf16.msra.mxu0 %v176
  %222 = vmatpush.bf16.msra.mxu0 %v175
  %223 = vmatpush.bf16.msra.mxu0 %v174
  %224 = vmatpush.bf16.msra.mxu0 %v173
  %225 = vmatpush.bf16.msra.mxu0 %v172
  %226 = vmatpush.bf16.msra.mxu0 %v171
  %227 = vmatmul.bf16.gmra.mxu0 %v69
  %v228 = vpop.f32.mrf.mxu0
  %v229 = vadd.f32 %v65, %v228
  %v230 = vpop.f32.mrf.mxu0
  %231 = vdwg.mxu0
  %232 = vmatpush.bf16.msra.mxu0 %v186
  %233 = vmatpush.bf16.msra.mxu0 %v185
  %234 = vmatpush.bf16.msra.mxu0 %v184
  %235 = vmatpush.bf16.msra.mxu0 %v183
  %236 = vmatpush.bf16.msra.mxu0 %v182
  %237 = vmatpush.bf16.msra.mxu0 %v181
  %238 = vmatpush.bf16.msra.mxu0 %v180
  %239 = vmatpush.bf16.msra.mxu0 %v179
  %240 = vmatmul.bf16.gmra.mxu0 %v70
  %v241 = vpop.f32.mrf.mxu0
  %v242 = vadd.f32 %v229, %v241
  %v243 = vpop.f32.mrf.mxu0
  %244 = vdwg.mxu0
  %245 = vmatpush.bf16.msra.mxu0 %v194
  %246 = vmatpush.bf16.msra.mxu0 %v193
  %247 = vmatpush.bf16.msra.mxu0 %v192
  %248 = vmatpush.bf16.msra.mxu0 %v191
  %249 = vmatpush.bf16.msra.mxu0 %v190
  %250 = vmatpush.bf16.msra.mxu0 %v189
  %251 = vmatpush.bf16.msra.mxu0 %v188
  %252 = vmatpush.bf16.msra.mxu0 %v187
  %253 = vmatmul.bf16.gmra.mxu0 %v71
  %v254 = vpop.f32.mrf.mxu0
  %v255 = vadd.f32 %v242, %v254
  %v256 = vpop.f32.mrf.mxu0
  %257 = vdwg.mxu0
  %v258 = vmax.f32 %v255, 0.0
  %v259 = vpack.c.bf16 %v258, %v258
  %260 = vst [vmem:[%s3] sm:$0x1] %v259
  // Predicated region
  $region14: #{resnet_segmentation_forward.21} parent=0 // pred_check
    _
  $region15: #{resnet_segmentation_forward.21} parent=0 // pred_check_branch
    %262 = sbr.rel (0) target = $region17
  $region16: #{resnet_segmentation_forward.21} parent=0 // pred_region
    _
  $region17: #{resnet_segmentation_forward.21} parent=0 // pred_fallthru
    _
  // Predicated region
  $region18: #{resnet_segmentation_forward.21} parent=0 // pred_check
    _
  $region19: #{resnet_segmentation_forward.21} parent=0 // pred_check_branch
    %264 = sbr.rel (0) target = $region21
  $region20: #{resnet_segmentation_forward.21} parent=0 // pred_region
    _
  $region21: #{resnet_segmentation_forward.21} parent=0 // pred_fallthru
    _

// kernel: resnet_segmentation_forward.22
$region0: #{resnet_segmentation_forward.22}
  #allocation0 [shape = 'u32[]', space=smem, size = 0x4, offset = 0x4, fixed_abs, tag = 'smem constant byte address 0x4 - core index']
  #allocation1 [shape = 'u32[72,128]{1,0:T(1,128)}', space=vmem, size = 0x9000, scoped, tag = 'internal scratch']
  %s0 = inlined_call_operand.vmem [shape: bf16[2,640], index: 0, kind: input, shape index: {}]
  %s1 = inlined_call_operand.vmem [shape: bf16[640,128], index: 1, kind: input, shape index: {}]
  %s2 = inlined_call_operand.vmem [shape: bf16[2,32], index: 2, kind: input, shape index: {}]
  %s3 = inlined_call_operand.vmem [shape: bf16[32,128], index: 3, kind: input, shape index: {}]
  %s4 = inlined_call_operand.vmem [shape: f32[1,128], index: 4, kind: input, shape index: {}]
  %s5 = inlined_call_operand.vmem [shape: bf16[2,128], index: 5, kind: output, shape index: {}]
  %s6 = sld [smem:[#allocation0]]
  $region30: #{resnet_segmentation_forward.22} parent=0
    _
  %s8 = ssub.s32 1, %s6
  %s9 = scalar_select 0, %s8, %s6
  // Predicated region
  $region2: #{resnet_segmentation_forward.22} parent=0 // pred_check
    _
  $region3: #{resnet_segmentation_forward.22} parent=0 // pred_check_branch
    %11 = sbr.rel (0) target = $region5
  $region4: #{resnet_segmentation_forward.22} parent=0 // pred_region
    _
  $region5: #{resnet_segmentation_forward.22} parent=0 // pred_fallthru
    _
  // Predicated region
  $region6: #{resnet_segmentation_forward.22} parent=0 // pred_check
    _
  $region7: #{resnet_segmentation_forward.22} parent=0 // pred_check_branch
    %13 = sbr.rel (0) target = $region9
  $region8: #{resnet_segmentation_forward.22} parent=0 // pred_region
    _
  $region9: #{resnet_segmentation_forward.22} parent=0 // pred_fallthru
    _
  // Predicated region
  $region10: #{resnet_segmentation_forward.22} parent=0 // pred_check
    _
  $region11: #{resnet_segmentation_forward.22} parent=0 // pred_check_branch
    %15 = sbr.rel (0) target = $region13
  $region12: #{resnet_segmentation_forward.22} parent=0 // pred_region
    _
  $region13: #{resnet_segmentation_forward.22} parent=0 // pred_fallthru
    _
  // Predicated region
  $region14: #{resnet_segmentation_forward.22} parent=0 // pred_check
    _
  $region15: #{resnet_segmentation_forward.22} parent=0 // pred_check_branch
    %17 = sbr.rel (0) target = $region17
  $region16: #{resnet_segmentation_forward.22} parent=0 // pred_region
    _
  $region17: #{resnet_segmentation_forward.22} parent=0 // pred_fallthru
    _
  // Predicated region
  $region18: #{resnet_segmentation_forward.22} parent=0 // pred_check
    _
  $region19: #{resnet_segmentation_forward.22} parent=0 // pred_check_branch
    %19 = sbr.rel (0) target = $region21
  $region20: #{resnet_segmentation_forward.22} parent=0 // pred_region
    _
  $region21: #{resnet_segmentation_forward.22} parent=0 // pred_fallthru
    _
  %v21 = vld [vmem:[%s0] sm:$0x1f]
  %v22 = vld [vmem:[%s1] sm:$0xf]
  %v23 = vld [vmem:[%s1 + $0x4] sm:$0xf]
  %v24 = vld [vmem:[%s1 + $0x8] sm:$0xf]
  %v25 = vld [vmem:[%s1 + $0xc] sm:$0xf]
  %v26 = vld [vmem:[%s1 + $0x10] sm:$0xf]
  %v27 = vld [vmem:[%s1 + $0x14] sm:$0xf]
  %v28 = vld [vmem:[%s1 + $0x18] sm:$0xf]
  %v29 = vld [vmem:[%s1 + $0x1c] sm:$0xf]
  %v30 = vld [vmem:[%s1 + $0x20] sm:$0xf]
  %v31 = vld [vmem:[%s1 + $0x24] sm:$0xf]
  %v32 = vld [vmem:[%s1 + $0x28] sm:$0xf]
  %v33 = vld [vmem:[%s1 + $0x2c] sm:$0xf]
  %v34 = vld [vmem:[%s1 + $0x30] sm:$0xf]
  %v35 = vld [vmem:[%s1 + $0x34] sm:$0xf]
  %v36 = vld [vmem:[%s1 + $0x38] sm:$0xf]
  %v37 = vld [vmem:[%s1 + $0x3c] sm:$0xf]
  %v38 = vld [vmem:[%s1 + $0x40] sm:$0xf]
  %v39 = vld [vmem:[%s1 + $0x44] sm:$0xf]
  %v40 = vld [vmem:[%s1 + $0x48] sm:$0xf]
  %v41 = vld [vmem:[%s1 + $0x4c] sm:$0xf]
  %v42 = vld [vmem:[%s1 + $0x50] sm:$0xf]
  %v43 = vld [vmem:[%s1 + $0x54] sm:$0xf]
  %v44 = vld [vmem:[%s1 + $0x58] sm:$0xf]
  %v45 = vld [vmem:[%s1 + $0x5c] sm:$0xf]
  %v46 = vld [vmem:[%s1 + $0x60] sm:$0xf]
  %v47 = vld [vmem:[%s1 + $0x64] sm:$0xf]
  %v48 = vld [vmem:[%s1 + $0x68] sm:$0xf]
  %v49 = vld [vmem:[%s1 + $0x6c] sm:$0xf]
  %v50 = vld [vmem:[%s1 + $0x70] sm:$0xf]
  %v51 = vld [vmem:[%s1 + $0x74] sm:$0xf]
  %v52 = vld [vmem:[%s1 + $0x78] sm:$0xf]
  %v53 = vld [vmem:[%s1 + $0x7c] sm:$0xf]
  %v54 = vld [vmem:[%s1 + $0x80] sm:$0xf]
  %v55 = vld [vmem:[%s1 + $0x84] sm:$0xf]
  %v56 = vld [vmem:[%s1 + $0x88] sm:$0xf]
  %v57 = vld [vmem:[%s1 + $0x8c] sm:$0xf]
  %v58 = vld [vmem:[%s1 + $0x90] sm:$0xf]
  %v59 = vld [vmem:[%s1 + $0x94] sm:$0xf]
  %v60 = vld [vmem:[%s1 + $0x98] sm:$0xf]
  %v61 = vld [vmem:[%s1 + $0x9c] sm:$0xf]
  %v62 = vld [vmem:[%s1 + $0xa0] sm:$0xf]
  %v63 = vld [vmem:[%s1 + $0xa4] sm:$0xf]
  %v64 = vld [vmem:[%s1 + $0xa8] sm:$0xf]
  %v65 = vld [vmem:[%s1 + $0xac] sm:$0xf]
  %v66 = vld [vmem:[%s1 + $0xb0] sm:$0xf]
  %v67 = vld [vmem:[%s1 + $0xb4] sm:$0xf]
  %v68 = vld [vmem:[%s1 + $0xb8] sm:$0xf]
  %v69 = vld [vmem:[%s1 + $0xbc] sm:$0xf]
  %v70 = vld [vmem:[%s1 + $0xc0] sm:$0xf]
  %v71 = vld [vmem:[%s1 + $0xc4] sm:$0xf]
  %v72 = vld [vmem:[%s1 + $0xc8] sm:$0xf]
  %v73 = vld [vmem:[%s1 + $0xcc] sm:$0xf]
  %v74 = vld [vmem:[%s1 + $0xd0] sm:$0xf]
  %v75 = vld [vmem:[%s1 + $0xd4] sm:$0xf]
  %v76 = vld [vmem:[%s1 + $0xd8] sm:$0xf]
  %v77 = vld [vmem:[%s1 + $0xdc] sm:$0xf]
  %v78 = vld [vmem:[%s1 + $0xe0] sm:$0xf]
  %v79 = vld [vmem:[%s1 + $0xe4] sm:$0xf]
  %v80 = vld [vmem:[%s1 + $0xe8] sm:$0xf]
  %v81 = vld [vmem:[%s1 + $0xec] sm:$0xf]
  %v82 = vld [vmem:[%s1 + $0xf0] sm:$0xf]
  %v83 = vld [vmem:[%s1 + $0xf4] sm:$0xf]
  %v84 = vld [vmem:[%s1 + $0xf8] sm:$0xf]
  %v85 = vld [vmem:[%s1 + $0xfc] sm:$0xf]
  %v86 = vld [vmem:[%s1 + $0x100] sm:$0xf]
  %v87 = vld [vmem:[%s1 + $0x104] sm:$0xf]
  %v88 = vld [vmem:[%s1 + $0x108] sm:$0xf]
  %v89 = vld [vmem:[%s1 + $0x10c] sm:$0xf]
  %v90 = vld [vmem:[%s1 + $0x110] sm:$0xf]
  %v91 = vld [vmem:[%s1 + $0x114] sm:$0xf]
  %v92 = vld [vmem:[%s1 + $0x118] sm:$0xf]
  %v93 = vld [vmem:[%s1 + $0x11c] sm:$0xf]
  %v94 = vld [vmem:[%s1 + $0x120] sm:$0xf]
  %v95 = vld [vmem:[%s1 + $0x124] sm:$0xf]
  %v96 = vld [vmem:[%s1 + $0x128] sm:$0xf]
  %v97 = vld [vmem:[%s1 + $0x12c] sm:$0xf]
  %v98 = vld [vmem:[%s1 + $0x130] sm:$0xf]
  %v99 = vld [vmem:[%s1 + $0x134] sm:$0xf]
  %v100 = vld [vmem:[%s1 + $0x138] sm:$0xf]
  %v101 = vld [vmem:[%s1 + $0x13c] sm:$0xf]
  %v102 = vld [vmem:[%s2] sm:$0x1]
  %v103 = vld [vmem:[%s3] sm:$0xf]
  %v104 = vld [vmem:[%s3 + $0x4] sm:$0xf]
  %v105 = vld [vmem:[%s3 + $0x8] sm:$0xf]
  %v106 = vld [vmem:[%s3 + $0xc] sm:$0xf]
  %v111 = vunpack.c.l.b16 %v103
  %v112 = vunpack.c.l.b16 %v104
  %v113 = vunpack.c.l.b16 %v105
  %v114 = vunpack.c.l.b16 %v106
  %v115 = vpack.c.b16 %v112, %v111
  %v116 = vpack.c.b16 %v114, %v113
  %vm119 = vcmask 261120
  %v121 = vsel %vm119, %v102, 0
  %123 = vmatpush.bf16.msra.mxu0 0
  %124 = vmatpush.bf16.msra.mxu0 0
  %125 = vmatpush.bf16.msra.mxu0 0
  %126 = vmatpush.bf16.msra.mxu0 0
  %127 = vmatpush.bf16.msra.mxu0 0
  %128 = vmatpush.bf16.msra.mxu0 0
  %129 = vmatpush.bf16.msra.mxu0 %v116
  %130 = vmatpush.bf16.msra.mxu0 %v115
  %131 = vmatmul.bf16.gmra.mxu0 %v121
  %v132 = vpop.f32.mrf.mxu0
  %v133 = vadd.f32 0.0, %v132
  %v134 = vpop.f32.mrf.mxu0
  %135 = vdwg.mxu0
  %137 = vst [vmem:[#allocation1] ss:$9 sm:$0xff] %v21
  %v138 = vld [vmem:[#allocation1] sm:$0xff]
  %v139 = vld [vmem:[#allocation1 + $0x9] sm:$0xff]
  %v140 = vld [vmem:[#allocation1 + $0x12] sm:$0xff]
  %v141 = vld [vmem:[#allocation1 + $0x1b] sm:$0xff]
  %v142 = vld [vmem:[#allocation1 + $0x24] sm:$0xff]
  %v228 = vunpack.c.l.b16 %v22
  %v229 = vunpack.c.l.b16 %v23
  %v230 = vunpack.c.l.b16 %v24
  %v231 = vunpack.c.l.b16 %v25
  %v232 = vunpack.c.l.b16 %v26
  %v233 = vunpack.c.l.b16 %v27
  %v234 = vunpack.c.l.b16 %v28
  %v235 = vunpack.c.l.b16 %v29
  %v236 = vunpack.c.l.b16 %v30
  %v237 = vunpack.c.l.b16 %v31
  %v238 = vunpack.c.l.b16 %v32
  %v239 = vunpack.c.l.b16 %v33
  %v240 = vunpack.c.l.b16 %v34
  %v241 = vunpack.c.l.b16 %v35
  %v242 = vunpack.c.l.b16 %v36
  %v243 = vunpack.c.l.b16 %v37
  %v244 = vunpack.c.l.b16 %v38
  %v245 = vunpack.c.l.b16 %v39
  %v246 = vunpack.c.l.b16 %v40
  %v247 = vunpack.c.l.b16 %v41
  %v248 = vunpack.c.l.b16 %v42
  %v249 = vunpack.c.l.b16 %v43
  %v250 = vunpack.c.l.b16 %v44
  %v251 = vunpack.c.l.b16 %v45
  %v252 = vunpack.c.l.b16 %v46
  %v253 = vunpack.c.l.b16 %v47
  %v254 = vunpack.c.l.b16 %v48
  %v255 = vunpack.c.l.b16 %v49
  %v256 = vunpack.c.l.b16 %v50
  %v257 = vunpack.c.l.b16 %v51
  %v258 = vunpack.c.l.b16 %v52
  %v259 = vunpack.c.l.b16 %v53
  %v260 = vunpack.c.l.b16 %v54
  %v261 = vunpack.c.l.b16 %v55
  %v262 = vunpack.c.l.b16 %v56
  %v263 = vunpack.c.l.b16 %v57
  %v264 = vunpack.c.l.b16 %v58
  %v265 = vunpack.c.l.b16 %v59
  %v266 = vunpack.c.l.b16 %v60
  %v267 = vunpack.c.l.b16 %v61
  %v268 = vunpack.c.l.b16 %v62
  %v269 = vunpack.c.l.b16 %v63
  %v270 = vunpack.c.l.b16 %v64
  %v271 = vunpack.c.l.b16 %v65
  %v272 = vunpack.c.l.b16 %v66
  %v273 = vunpack.c.l.b16 %v67
  %v274 = vunpack.c.l.b16 %v68
  %v275 = vunpack.c.l.b16 %v69
  %v276 = vunpack.c.l.b16 %v70
  %v277 = vunpack.c.l.b16 %v71
  %v278 = vunpack.c.l.b16 %v72
  %v279 = vunpack.c.l.b16 %v73
  %v280 = vunpack.c.l.b16 %v74
  %v281 = vunpack.c.l.b16 %v75
  %v282 = vunpack.c.l.b16 %v76
  %v283 = vunpack.c.l.b16 %v77
  %v284 = vunpack.c.l.b16 %v78
  %v285 = vunpack.c.l.b16 %v79
  %v286 = vunpack.c.l.b16 %v80
  %v287 = vunpack.c.l.b16 %v81
  %v288 = vunpack.c.l.b16 %v82
  %v289 = vunpack.c.l.b16 %v83
  %v290 = vunpack.c.l.b16 %v84
  %v291 = vunpack.c.l.b16 %v85
  %v292 = vunpack.c.l.b16 %v86
  %v293 = vunpack.c.l.b16 %v87
  %v294 = vunpack.c.l.b16 %v88
  %v295 = vunpack.c.l.b16 %v89
  %v296 = vunpack.c.l.b16 %v90
  %v297 = vunpack.c.l.b16 %v91
  %v298 = vunpack.c.l.b16 %v92
  %v299 = vunpack.c.l.b16 %v93
  %v300 = vunpack.c.l.b16 %v94
  %v301 = vunpack.c.l.b16 %v95
  %v302 = vunpack.c.l.b16 %v96
  %v303 = vunpack.c.l.b16 %v97
  %v304 = vunpack.c.l.b16 %v98
  %v305 = vunpack.c.l.b16 %v99
  %v306 = vunpack.c.l.b16 %v100
  %v307 = vunpack.c.l.b16 %v101
  %v308 = vpack.c.b16 %v229, %v228
  %v309 = vpack.c.b16 %v231, %v230
  %v310 = vpack.c.b16 %v233, %v232
  %v311 = vpack.c.b16 %v235, %v234
  %v312 = vpack.c.b16 %v237, %v236
  %v313 = vpack.c.b16 %v239, %v238
  %v314 = vpack.c.b16 %v241, %v240
  %v315 = vpack.c.b16 %v243, %v242
  %v316 = vpack.c.b16 %v245, %v244
  %v317 = vpack.c.b16 %v247, %v246
  %v318 = vpack.c.b16 %v249, %v248
  %v319 = vpack.c.b16 %v251, %v250
  %v320 = vpack.c.b16 %v253, %v252
  %v321 = vpack.c.b16 %v255, %v254
  %v322 = vpack.c.b16 %v257, %v256
  %v323 = vpack.c.b16 %v259, %v258
  %v324 = vpack.c.b16 %v261, %v260
  %v325 = vpack.c.b16 %v263, %v262
  %v326 = vpack.c.b16 %v265, %v264
  %v327 = vpack.c.b16 %v267, %v266
  %v328 = vpack.c.b16 %v269, %v268
  %v329 = vpack.c.b16 %v271, %v270
  %v330 = vpack.c.b16 %v273, %v272
  %v331 = vpack.c.b16 %v275, %v274
  %v332 = vpack.c.b16 %v277, %v276
  %v333 = vpack.c.b16 %v279, %v278
  %v334 = vpack.c.b16 %v281, %v280
  %v335 = vpack.c.b16 %v283, %v282
  %v336 = vpack.c.b16 %v285, %v284
  %v337 = vpack.c.b16 %v287, %v286
  %v338 = vpack.c.b16 %v289, %v288
  %v339 = vpack.c.b16 %v291, %v290
  %v340 = vpack.c.b16 %v293, %v292
  %v341 = vpack.c.b16 %v295, %v294
  %v342 = vpack.c.b16 %v297, %v296
  %v343 = vpack.c.b16 %v299, %v298
  %v344 = vpack.c.b16 %v301, %v300
  %v345 = vpack.c.b16 %v303, %v302
  %v346 = vpack.c.b16 %v305, %v304
  %v347 = vpack.c.b16 %v307, %v306
  %388 = vmatpush.bf16.msra.mxu0 %v315
  %389 = vmatpush.bf16.msra.mxu0 %v314
  %390 = vmatpush.bf16.msra.mxu0 %v313
  %391 = vmatpush.bf16.msra.mxu0 %v312
  %392 = vmatpush.bf16.msra.mxu0 %v311
  %393 = vmatpush.bf16.msra.mxu0 %v310
  %394 = vmatpush.bf16.msra.mxu0 %v309
  %395 = vmatpush.bf16.msra.mxu0 %v308
  %396 = vmatmul.bf16.gmra.mxu0 %v138
  %v397 = vpop.f32.mrf.mxu0
  %v398 = vadd.f32 %v133, %v397
  %v399 = vpop.f32.mrf.mxu0
  %400 = vdwg.mxu0
  %401 = vmatpush.bf16.msra.mxu0 %v323
  %402 = vmatpush.bf16.msra.mxu0 %v322
  %403 = vmatpush.bf16.msra.mxu0 %v321
  %404 = vmatpush.bf16.msra.mxu0 %v320
  %405 = vmatpush.bf16.msra.mxu0 %v319
  %406 = vmatpush.bf16.msra.mxu0 %v318
  %407 = vmatpush.bf16.msra.mxu0 %v317
  %408 = vmatpush.bf16.msra.mxu0 %v316
  %409 = vmatmul.bf16.gmra.mxu0 %v139
  %v410 = vpop.f32.mrf.mxu0
  %v411 = vadd.f32 %v398, %v410
  %v412 = vpop.f32.mrf.mxu0
  %413 = vdwg.mxu0
  %414 = vmatpush.bf16.msra.mxu0 %v331
  %415 = vmatpush.bf16.msra.mxu0 %v330
  %416 = vmatpush.bf16.msra.mxu0 %v329
  %417 = vmatpush.bf16.msra.mxu0 %v328
  %418 = vmatpush.bf16.msra.mxu0 %v327
  %419 = vmatpush.bf16.msra.mxu0 %v326
  %420 = vmatpush.bf16.msra.mxu0 %v325
  %421 = vmatpush.bf16.msra.mxu0 %v324
  %422 = vmatmul.bf16.gmra.mxu0 %v140
  %v423 = vpop.f32.mrf.mxu0
  %v424 = vadd.f32 %v411, %v423
  %v425 = vpop.f32.mrf.mxu0
  %426 = vdwg.mxu0
  %427 = vmatpush.bf16.msra.mxu0 %v339
  %428 = vmatpush.bf16.msra.mxu0 %v338
  %429 = vmatpush.bf16.msra.mxu0 %v337
  %430 = vmatpush.bf16.msra.mxu0 %v336
  %431 = vmatpush.bf16.msra.mxu0 %v335
  %432 = vmatpush.bf16.msra.mxu0 %v334
  %433 = vmatpush.bf16.msra.mxu0 %v333
  %434 = vmatpush.bf16.msra.mxu0 %v332
  %435 = vmatmul.bf16.gmra.mxu0 %v141
  %v436 = vpop.f32.mrf.mxu0
  %v437 = vadd.f32 %v424, %v436
  %v438 = vpop.f32.mrf.mxu0
  %439 = vdwg.mxu0
  %440 = vmatpush.bf16.msra.mxu0 %v347
  %441 = vmatpush.bf16.msra.mxu0 %v346
  %442 = vmatpush.bf16.msra.mxu0 %v345
  %443 = vmatpush.bf16.msra.mxu0 %v344
  %444 = vmatpush.bf16.msra.mxu0 %v343
  %445 = vmatpush.bf16.msra.mxu0 %v342
  %446 = vmatpush.bf16.msra.mxu0 %v341
  %447 = vmatpush.bf16.msra.mxu0 %v340
  %448 = vmatmul.bf16.gmra.mxu0 %v142
  %v449 = vpop.f32.mrf.mxu0
  %v450 = vadd.f32 %v437, %v449
  %v451 = vpop.f32.mrf.mxu0
  %452 = vdwg.mxu0
  %v453 = vld [vmem:[%s4] sm:$0x1]
  %v455 = vperm.slane %v453, 0
  %v457 = vadd.f32 %v450, %v455
  %v458 = vmax.f32 %v457, 0.0
  %v459 = vpack.c.bf16 %v458, %v458
  %460 = vst [vmem:[%s5] sm:$0x1] %v459
  // Predicated region
  $region22: #{resnet_segmentation_forward.22} parent=0 // pred_check
    _
  $region23: #{resnet_segmentation_forward.22} parent=0 // pred_check_branch
    %462 = sbr.rel (0) target = $region25
  $region24: #{resnet_segmentation_forward.22} parent=0 // pred_region
    _
  $region25: #{resnet_segmentation_forward.22} parent=0 // pred_fallthru
    _
  // Predicated region
  $region26: #{resnet_segmentation_forward.22} parent=0 // pred_check
    _
  $region27: #{resnet_segmentation_forward.22} parent=0 // pred_check_branch
    %464 = sbr.rel (0) target = $region29
  $region28: #{resnet_segmentation_forward.22} parent=0 // pred_region
    _
  $region29: #{resnet_segmentation_forward.22} parent=0 // pred_fallthru
    _

// kernel: resnet_segmentation_forward.23
$region0: #{resnet_segmentation_forward.23}
  #allocation0 [shape = 'u32[]', space=smem, size = 0x4, offset = 0x4, fixed_abs, tag = 'smem constant byte address 0x4 - core index']
  #allocation1 [shape = 'u32[72,128]{1,0:T(1,128)}', space=vmem, size = 0x9000, scoped, tag = 'internal scratch']
  %s0 = inlined_call_operand.vmem [shape: bf16[8,640], index: 0, kind: input, shape index: {}]
  %s1 = inlined_call_operand.vmem [shape: bf16[640,128], index: 1, kind: input, shape index: {}]
  %s2 = inlined_call_operand.vmem [shape: bf16[8,384], index: 2, kind: input, shape index: {}]
  %s3 = inlined_call_operand.vmem [shape: bf16[384,128], index: 3, kind: input, shape index: {}]
  %s4 = inlined_call_operand.vmem [shape: f32[1,128], index: 4, kind: input, shape index: {}]
  %s5 = inlined_call_operand.vmem [shape: bf16[8,128], index: 5, kind: output, shape index: {}]
  %s6 = sld [smem:[#allocation0]]
  $region30: #{resnet_segmentation_forward.23} parent=0
    _
  %s8 = ssub.s32 1, %s6
  %s9 = scalar_select 0, %s8, %s6
  // Predicated region
  $region2: #{resnet_segmentation_forward.23} parent=0 // pred_check
    _
  $region3: #{resnet_segmentation_forward.23} parent=0 // pred_check_branch
    %11 = sbr.rel (0) target = $region5
  $region4: #{resnet_segmentation_forward.23} parent=0 // pred_region
    _
  $region5: #{resnet_segmentation_forward.23} parent=0 // pred_fallthru
    _
  // Predicated region
  $region6: #{resnet_segmentation_forward.23} parent=0 // pred_check
    _
  $region7: #{resnet_segmentation_forward.23} parent=0 // pred_check_branch
    %13 = sbr.rel (0) target = $region9
  $region8: #{resnet_segmentation_forward.23} parent=0 // pred_region
    _
  $region9: #{resnet_segmentation_forward.23} parent=0 // pred_fallthru
    _
  // Predicated region
  $region10: #{resnet_segmentation_forward.23} parent=0 // pred_check
    _
  $region11: #{resnet_segmentation_forward.23} parent=0 // pred_check_branch
    %15 = sbr.rel (0) target = $region13
  $region12: #{resnet_segmentation_forward.23} parent=0 // pred_region
    _
  $region13: #{resnet_segmentation_forward.23} parent=0 // pred_fallthru
    _
  // Predicated region
  $region14: #{resnet_segmentation_forward.23} parent=0 // pred_check
    _
  $region15: #{resnet_segmentation_forward.23} parent=0 // pred_check_branch
    %17 = sbr.rel (0) target = $region17
  $region16: #{resnet_segmentation_forward.23} parent=0 // pred_region
    _
  $region17: #{resnet_segmentation_forward.23} parent=0 // pred_fallthru
    _
  // Predicated region
  $region18: #{resnet_segmentation_forward.23} parent=0 // pred_check
    _
  $region19: #{resnet_segmentation_forward.23} parent=0 // pred_check_branch
    %19 = sbr.rel (0) target = $region21
  $region20: #{resnet_segmentation_forward.23} parent=0 // pred_region
    _
  $region21: #{resnet_segmentation_forward.23} parent=0 // pred_fallthru
    _
  %v20 = vld [vmem:[%s0] sm:$0xff]
  %v21 = vld [vmem:[%s0 + $0x8] sm:$0xff]
  %v22 = vld [vmem:[%s0 + $0x10] sm:$0xf]
  %v23 = vld [vmem:[%s1] sm:$0xf]
  %v24 = vld [vmem:[%s1 + $0x4] sm:$0xf]
  %v25 = vld [vmem:[%s1 + $0x8] sm:$0xf]
  %v26 = vld [vmem:[%s1 + $0xc] sm:$0xf]
  %v27 = vld [vmem:[%s1 + $0x10] sm:$0xf]
  %v28 = vld [vmem:[%s1 + $0x14] sm:$0xf]
  %v29 = vld [vmem:[%s1 + $0x18] sm:$0xf]
  %v30 = vld [vmem:[%s1 + $0x1c] sm:$0xf]
  %v31 = vld [vmem:[%s1 + $0x20] sm:$0xf]
  %v32 = vld [vmem:[%s1 + $0x24] sm:$0xf]
  %v33 = vld [vmem:[%s1 + $0x28] sm:$0xf]
  %v34 = vld [vmem:[%s1 + $0x2c] sm:$0xf]
  %v35 = vld [vmem:[%s1 + $0x30] sm:$0xf]
  %v36 = vld [vmem:[%s1 + $0x34] sm:$0xf]
  %v37 = vld [vmem:[%s1 + $0x38] sm:$0xf]
  %v38 = vld [vmem:[%s1 + $0x3c] sm:$0xf]
  %v39 = vld [vmem:[%s1 + $0x40] sm:$0xf]
  %v40 = vld [vmem:[%s1 + $0x44] sm:$0xf]
  %v41 = vld [vmem:[%s1 + $0x48] sm:$0xf]
  %v42 = vld [vmem:[%s1 + $0x4c] sm:$0xf]
  %v43 = vld [vmem:[%s1 + $0x50] sm:$0xf]
  %v44 = vld [vmem:[%s1 + $0x54] sm:$0xf]
  %v45 = vld [vmem:[%s1 + $0x58] sm:$0xf]
  %v46 = vld [vmem:[%s1 + $0x5c] sm:$0xf]
  %v47 = vld [vmem:[%s1 + $0x60] sm:$0xf]
  %v48 = vld [vmem:[%s1 + $0x64] sm:$0xf]
  %v49 = vld [vmem:[%s1 + $0x68] sm:$0xf]
  %v50 = vld [vmem:[%s1 + $0x6c] sm:$0xf]
  %v51 = vld [vmem:[%s1 + $0x70] sm:$0xf]
  %v52 = vld [vmem:[%s1 + $0x74] sm:$0xf]
  %v53 = vld [vmem:[%s1 + $0x78] sm:$0xf]
  %v54 = vld [vmem:[%s1 + $0x7c] sm:$0xf]
  %v55 = vld [vmem:[%s1 + $0x80] sm:$0xf]
  %v56 = vld [vmem:[%s1 + $0x84] sm:$0xf]
  %v57 = vld [vmem:[%s1 + $0x88] sm:$0xf]
  %v58 = vld [vmem:[%s1 + $0x8c] sm:$0xf]
  %v59 = vld [vmem:[%s1 + $0x90] sm:$0xf]
  %v60 = vld [vmem:[%s1 + $0x94] sm:$0xf]
  %v61 = vld [vmem:[%s1 + $0x98] sm:$0xf]
  %v62 = vld [vmem:[%s1 + $0x9c] sm:$0xf]
  %v63 = vld [vmem:[%s1 + $0xa0] sm:$0xf]
  %v64 = vld [vmem:[%s1 + $0xa4] sm:$0xf]
  %v65 = vld [vmem:[%s1 + $0xa8] sm:$0xf]
  %v66 = vld [vmem:[%s1 + $0xac] sm:$0xf]
  %v67 = vld [vmem:[%s1 + $0xb0] sm:$0xf]
  %v68 = vld [vmem:[%s1 + $0xb4] sm:$0xf]
  %v69 = vld [vmem:[%s1 + $0xb8] sm:$0xf]
  %v70 = vld [vmem:[%s1 + $0xbc] sm:$0xf]
  %v71 = vld [vmem:[%s1 + $0xc0] sm:$0xf]
  %v72 = vld [vmem:[%s1 + $0xc4] sm:$0xf]
  %v73 = vld [vmem:[%s1 + $0xc8] sm:$0xf]
  %v74 = vld [vmem:[%s1 + $0xcc] sm:$0xf]
  %v75 = vld [vmem:[%s1 + $0xd0] sm:$0xf]
  %v76 = vld [vmem:[%s1 + $0xd4] sm:$0xf]
  %v77 = vld [vmem:[%s1 + $0xd8] sm:$0xf]
  %v78 = vld [vmem:[%s1 + $0xdc] sm:$0xf]
  %v79 = vld [vmem:[%s1 + $0xe0] sm:$0xf]
  %v80 = vld [vmem:[%s1 + $0xe4] sm:$0xf]
  %v81 = vld [vmem:[%s1 + $0xe8] sm:$0xf]
  %v82 = vld [vmem:[%s1 + $0xec] sm:$0xf]
  %v83 = vld [vmem:[%s1 + $0xf0] sm:$0xf]
  %v84 = vld [vmem:[%s1 + $0xf4] sm:$0xf]
  %v85 = vld [vmem:[%s1 + $0xf8] sm:$0xf]
  %v86 = vld [vmem:[%s1 + $0xfc] sm:$0xf]
  %v87 = vld [vmem:[%s1 + $0x100] sm:$0xf]
  %v88 = vld [vmem:[%s1 + $0x104] sm:$0xf]
  %v89 = vld [vmem:[%s1 + $0x108] sm:$0xf]
  %v90 = vld [vmem:[%s1 + $0x10c] sm:$0xf]
  %v91 = vld [vmem:[%s1 + $0x110] sm:$0xf]
  %v92 = vld [vmem:[%s1 + $0x114] sm:$0xf]
  %v93 = vld [vmem:[%s1 + $0x118] sm:$0xf]
  %v94 = vld [vmem:[%s1 + $0x11c] sm:$0xf]
  %v95 = vld [vmem:[%s1 + $0x120] sm:$0xf]
  %v96 = vld [vmem:[%s1 + $0x124] sm:$0xf]
  %v97 = vld [vmem:[%s1 + $0x128] sm:$0xf]
  %v98 = vld [vmem:[%s1 + $0x12c] sm:$0xf]
  %v99 = vld [vmem:[%s1 + $0x130] sm:$0xf]
  %v100 = vld [vmem:[%s1 + $0x134] sm:$0xf]
  %v101 = vld [vmem:[%s1 + $0x138] sm:$0xf]
  %v102 = vld [vmem:[%s1 + $0x13c] sm:$0xf]
  %v103 = vld [vmem:[%s2] sm:$0xff]
  %v104 = vld [vmem:[%s2 + $0x8] sm:$0xf]
  %v105 = vld [vmem:[%s3] sm:$0xf]
  %v106 = vld [vmem:[%s3 + $0x4] sm:$0xf]
  %v107 = vld [vmem:[%s3 + $0x8] sm:$0xf]
  %v108 = vld [vmem:[%s3 + $0xc] sm:$0xf]
  %v109 = vld [vmem:[%s3 + $0x10] sm:$0xf]
  %v110 = vld [vmem:[%s3 + $0x14] sm:$0xf]
  %v111 = vld [vmem:[%s3 + $0x18] sm:$0xf]
  %v112 = vld [vmem:[%s3 + $0x1c] sm:$0xf]
  %v113 = vld [vmem:[%s3 + $0x20] sm:$0xf]
  %v114 = vld [vmem:[%s3 + $0x24] sm:$0xf]
  %v115 = vld [vmem:[%s3 + $0x28] sm:$0xf]
  %v116 = vld [vmem:[%s3 + $0x2c] sm:$0xf]
  %v117 = vld [vmem:[%s3 + $0x30] sm:$0xf]
  %v118 = vld [vmem:[%s3 + $0x34] sm:$0xf]
  %v119 = vld [vmem:[%s3 + $0x38] sm:$0xf]
  %v120 = vld [vmem:[%s3 + $0x3c] sm:$0xf]
  %v121 = vld [vmem:[%s3 + $0x40] sm:$0xf]
  %v122 = vld [vmem:[%s3 + $0x44] sm:$0xf]
  %v123 = vld [vmem:[%s3 + $0x48] sm:$0xf]
  %v124 = vld [vmem:[%s3 + $0x4c] sm:$0xf]
  %v125 = vld [vmem:[%s3 + $0x50] sm:$0xf]
  %v126 = vld [vmem:[%s3 + $0x54] sm:$0xf]
  %v127 = vld [vmem:[%s3 + $0x58] sm:$0xf]
  %v128 = vld [vmem:[%s3 + $0x5c] sm:$0xf]
  %v129 = vld [vmem:[%s3 + $0x60] sm:$0xf]
  %v130 = vld [vmem:[%s3 + $0x64] sm:$0xf]
  %v131 = vld [vmem:[%s3 + $0x68] sm:$0xf]
  %v132 = vld [vmem:[%s3 + $0x6c] sm:$0xf]
  %v133 = vld [vmem:[%s3 + $0x70] sm:$0xf]
  %v134 = vld [vmem:[%s3 + $0x74] sm:$0xf]
  %v135 = vld [vmem:[%s3 + $0x78] sm:$0xf]
  %v136 = vld [vmem:[%s3 + $0x7c] sm:$0xf]
  %v137 = vld [vmem:[%s3 + $0x80] sm:$0xf]
  %v138 = vld [vmem:[%s3 + $0x84] sm:$0xf]
  %v139 = vld [vmem:[%s3 + $0x88] sm:$0xf]
  %v140 = vld [vmem:[%s3 + $0x8c] sm:$0xf]
  %v141 = vld [vmem:[%s3 + $0x90] sm:$0xf]
  %v142 = vld [vmem:[%s3 + $0x94] sm:$0xf]
  %v143 = vld [vmem:[%s3 + $0x98] sm:$0xf]
  %v144 = vld [vmem:[%s3 + $0x9c] sm:$0xf]
  %v145 = vld [vmem:[%s3 + $0xa0] sm:$0xf]
  %v146 = vld [vmem:[%s3 + $0xa4] sm:$0xf]
  %v147 = vld [vmem:[%s3 + $0xa8] sm:$0xf]
  %v148 = vld [vmem:[%s3 + $0xac] sm:$0xf]
  %v149 = vld [vmem:[%s3 + $0xb0] sm:$0xf]
  %v150 = vld [vmem:[%s3 + $0xb4] sm:$0xf]
  %v151 = vld [vmem:[%s3 + $0xb8] sm:$0xf]
  %v152 = vld [vmem:[%s3 + $0xbc] sm:$0xf]
  %v155 = vunpack.c.l.b16 %v103
  %v156 = vunpack.c.h.b16 %v103
  %v157 = vunpack.c.l.b16 %v104
  %v158 = vpack.c.b16 %v155, %v155
  %v159 = vpack.c.b16 %v156, %v156
  %v160 = vpack.c.b16 %v157, %v157
  %v212 = vunpack.c.l.b16 %v105
  %v213 = vunpack.c.l.b16 %v106
  %v214 = vunpack.c.l.b16 %v107
  %v215 = vunpack.c.l.b16 %v108
  %v216 = vunpack.c.l.b16 %v109
  %v217 = vunpack.c.l.b16 %v110
  %v218 = vunpack.c.l.b16 %v111
  %v219 = vunpack.c.l.b16 %v112
  %v220 = vunpack.c.l.b16 %v113
  %v221 = vunpack.c.l.b16 %v114
  %v222 = vunpack.c.l.b16 %v115
  %v223 = vunpack.c.l.b16 %v116
  %v224 = vunpack.c.l.b16 %v117
  %v225 = vunpack.c.l.b16 %v118
  %v226 = vunpack.c.l.b16 %v119
  %v227 = vunpack.c.l.b16 %v120
  %v228 = vunpack.c.l.b16 %v121
  %v229 = vunpack.c.l.b16 %v122
  %v230 = vunpack.c.l.b16 %v123
  %v231 = vunpack.c.l.b16 %v124
  %v232 = vunpack.c.l.b16 %v125
  %v233 = vunpack.c.l.b16 %v126
  %v234 = vunpack.c.l.b16 %v127
  %v235 = vunpack.c.l.b16 %v128
  %v236 = vunpack.c.l.b16 %v129
  %v237 = vunpack.c.l.b16 %v130
  %v238 = vunpack.c.l.b16 %v131
  %v239 = vunpack.c.l.b16 %v132
  %v240 = vunpack.c.l.b16 %v133
  %v241 = vunpack.c.l.b16 %v134
  %v242 = vunpack.c.l.b16 %v135
  %v243 = vunpack.c.l.b16 %v136
  %v244 = vunpack.c.l.b16 %v137
  %v245 = vunpack.c.l.b16 %v138
  %v246 = vunpack.c.l.b16 %v139
  %v247 = vunpack.c.l.b16 %v140
  %v248 = vunpack.c.l.b16 %v141
  %v249 = vunpack.c.l.b16 %v142
  %v250 = vunpack.c.l.b16 %v143
  %v251 = vunpack.c.l.b16 %v144
  %v252 = vunpack.c.l.b16 %v145
  %v253 = vunpack.c.l.b16 %v146
  %v254 = vunpack.c.l.b16 %v147
  %v255 = vunpack.c.l.b16 %v148
  %v256 = vunpack.c.l.b16 %v149
  %v257 = vunpack.c.l.b16 %v150
  %v258 = vunpack.c.l.b16 %v151
  %v259 = vunpack.c.l.b16 %v152
  %v260 = vpack.c.b16 %v213, %v212
  %v261 = vpack.c.b16 %v215, %v214
  %v262 = vpack.c.b16 %v217, %v216
  %v263 = vpack.c.b16 %v219, %v218
  %v264 = vpack.c.b16 %v221, %v220
  %v265 = vpack.c.b16 %v223, %v222
  %v266 = vpack.c.b16 %v225, %v224
  %v267 = vpack.c.b16 %v227, %v226
  %v268 = vpack.c.b16 %v229, %v228
  %v269 = vpack.c.b16 %v231, %v230
  %v270 = vpack.c.b16 %v233, %v232
  %v271 = vpack.c.b16 %v235, %v234
  %v272 = vpack.c.b16 %v237, %v236
  %v273 = vpack.c.b16 %v239, %v238
  %v274 = vpack.c.b16 %v241, %v240
  %v275 = vpack.c.b16 %v243, %v242
  %v276 = vpack.c.b16 %v245, %v244
  %v277 = vpack.c.b16 %v247, %v246
  %v278 = vpack.c.b16 %v249, %v248
  %v279 = vpack.c.b16 %v251, %v250
  %v280 = vpack.c.b16 %v253, %v252
  %v281 = vpack.c.b16 %v255, %v254
  %v282 = vpack.c.b16 %v257, %v256
  %v283 = vpack.c.b16 %v259, %v258
  %308 = vmatpush.bf16.msra.mxu0 %v267
  %309 = vmatpush.bf16.msra.mxu0 %v266
  %310 = vmatpush.bf16.msra.mxu0 %v265
  %311 = vmatpush.bf16.msra.mxu0 %v264
  %312 = vmatpush.bf16.msra.mxu0 %v263
  %313 = vmatpush.bf16.msra.mxu0 %v262
  %314 = vmatpush.bf16.msra.mxu0 %v261
  %315 = vmatpush.bf16.msra.mxu0 %v260
  %316 = vmatmul.bf16.gmra.mxu0 %v158
  %v317 = vpop.f32.mrf.mxu0
  %v318 = vadd.f32 0.0, %v317
  %v319 = vpop.f32.mrf.mxu0
  %320 = vdwg.mxu0
  %321 = vmatpush.bf16.msra.mxu0 %v275
  %322 = vmatpush.bf16.msra.mxu0 %v274
  %323 = vmatpush.bf16.msra.mxu0 %v273
  %324 = vmatpush.bf16.msra.mxu0 %v272
  %325 = vmatpush.bf16.msra.mxu0 %v271
  %326 = vmatpush.bf16.msra.mxu0 %v270
  %327 = vmatpush.bf16.msra.mxu0 %v269
  %328 = vmatpush.bf16.msra.mxu0 %v268
  %329 = vmatmul.bf16.gmra.mxu0 %v159
  %v330 = vpop.f32.mrf.mxu0
  %v331 = vadd.f32 %v318, %v330
  %v332 = vpop.f32.mrf.mxu0
  %333 = vdwg.mxu0
  %334 = vmatpush.bf16.msra.mxu0 %v283
  %335 = vmatpush.bf16.msra.mxu0 %v282
  %336 = vmatpush.bf16.msra.mxu0 %v281
  %337 = vmatpush.bf16.msra.mxu0 %v280
  %338 = vmatpush.bf16.msra.mxu0 %v279
  %339 = vmatpush.bf16.msra.mxu0 %v278
  %340 = vmatpush.bf16.msra.mxu0 %v277
  %341 = vmatpush.bf16.msra.mxu0 %v276
  %342 = vmatmul.bf16.gmra.mxu0 %v160
  %v343 = vpop.f32.mrf.mxu0
  %v344 = vadd.f32 %v331, %v343
  %v345 = vpop.f32.mrf.mxu0
  %346 = vdwg.mxu0
  %v350 = vunpack.c.l.b16 %v20
  %v351 = vunpack.c.h.b16 %v20
  %v352 = vunpack.c.l.b16 %v21
  %v353 = vunpack.c.h.b16 %v21
  %v354 = vunpack.c.l.b16 %v22
  %v355 = vpack.c.b16 %v350, %v350
  %v356 = vpack.c.b16 %v351, %v351
  %v357 = vpack.c.b16 %v352, %v352
  %v358 = vpack.c.b16 %v353, %v353
  %v359 = vpack.c.b16 %v354, %v354
  %v445 = vunpack.c.l.b16 %v23
  %v446 = vunpack.c.l.b16 %v24
  %v447 = vunpack.c.l.b16 %v25
  %v448 = vunpack.c.l.b16 %v26
  %v449 = vunpack.c.l.b16 %v27
  %v450 = vunpack.c.l.b16 %v28
  %v451 = vunpack.c.l.b16 %v29
  %v452 = vunpack.c.l.b16 %v30
  %v453 = vunpack.c.l.b16 %v31
  %v454 = vunpack.c.l.b16 %v32
  %v455 = vunpack.c.l.b16 %v33
  %v456 = vunpack.c.l.b16 %v34
  %v457 = vunpack.c.l.b16 %v35
  %v458 = vunpack.c.l.b16 %v36
  %v459 = vunpack.c.l.b16 %v37
  %v460 = vunpack.c.l.b16 %v38
  %v461 = vunpack.c.l.b16 %v39
  %v462 = vunpack.c.l.b16 %v40
  %v463 = vunpack.c.l.b16 %v41
  %v464 = vunpack.c.l.b16 %v42
  %v465 = vunpack.c.l.b16 %v43
  %v466 = vunpack.c.l.b16 %v44
  %v467 = vunpack.c.l.b16 %v45
  %v468 = vunpack.c.l.b16 %v46
  %v469 = vunpack.c.l.b16 %v47
  %v470 = vunpack.c.l.b16 %v48
  %v471 = vunpack.c.l.b16 %v49
  %v472 = vunpack.c.l.b16 %v50
  %v473 = vunpack.c.l.b16 %v51
  %v474 = vunpack.c.l.b16 %v52
  %v475 = vunpack.c.l.b16 %v53
  %v476 = vunpack.c.l.b16 %v54
  %v477 = vunpack.c.l.b16 %v55
  %v478 = vunpack.c.l.b16 %v56
  %v479 = vunpack.c.l.b16 %v57
  %v480 = vunpack.c.l.b16 %v58
  %v481 = vunpack.c.l.b16 %v59
  %v482 = vunpack.c.l.b16 %v60
  %v483 = vunpack.c.l.b16 %v61
  %v484 = vunpack.c.l.b16 %v62
  %v485 = vunpack.c.l.b16 %v63
  %v486 = vunpack.c.l.b16 %v64
  %v487 = vunpack.c.l.b16 %v65
  %v488 = vunpack.c.l.b16 %v66
  %v489 = vunpack.c.l.b16 %v67
  %v490 = vunpack.c.l.b16 %v68
  %v491 = vunpack.c.l.b16 %v69
  %v492 = vunpack.c.l.b16 %v70
  %v493 = vunpack.c.l.b16 %v71
  %v494 = vunpack.c.l.b16 %v72
  %v495 = vunpack.c.l.b16 %v73
  %v496 = vunpack.c.l.b16 %v74
  %v497 = vunpack.c.l.b16 %v75
  %v498 = vunpack.c.l.b16 %v76
  %v499 = vunpack.c.l.b16 %v77
  %v500 = vunpack.c.l.b16 %v78
  %v501 = vunpack.c.l.b16 %v79
  %v502 = vunpack.c.l.b16 %v80
  %v503 = vunpack.c.l.b16 %v81
  %v504 = vunpack.c.l.b16 %v82
  %v505 = vunpack.c.l.b16 %v83
  %v506 = vunpack.c.l.b16 %v84
  %v507 = vunpack.c.l.b16 %v85
  %v508 = vunpack.c.l.b16 %v86
  %v509 = vunpack.c.l.b16 %v87
  %v510 = vunpack.c.l.b16 %v88
  %v511 = vunpack.c.l.b16 %v89
  %v512 = vunpack.c.l.b16 %v90
  %v513 = vunpack.c.l.b16 %v91
  %v514 = vunpack.c.l.b16 %v92
  %v515 = vunpack.c.l.b16 %v93
  %v516 = vunpack.c.l.b16 %v94
  %v517 = vunpack.c.l.b16 %v95
  %v518 = vunpack.c.l.b16 %v96
  %v519 = vunpack.c.l.b16 %v97
  %v520 = vunpack.c.l.b16 %v98
  %v521 = vunpack.c.l.b16 %v99
  %v522 = vunpack.c.l.b16 %v100
  %v523 = vunpack.c.l.b16 %v101
  %v524 = vunpack.c.l.b16 %v102
  %v525 = vpack.c.b16 %v446, %v445
  %v526 = vpack.c.b16 %v448, %v447
  %v527 = vpack.c.b16 %v450, %v449
  %v528 = vpack.c.b16 %v452, %v451
  %v529 = vpack.c.b16 %v454, %v453
  %v530 = vpack.c.b16 %v456, %v455
  %v531 = vpack.c.b16 %v458, %v457
  %v532 = vpack.c.b16 %v460, %v459
  %v533 = vpack.c.b16 %v462, %v461
  %v534 = vpack.c.b16 %v464, %v463
  %v535 = vpack.c.b16 %v466, %v465
  %v536 = vpack.c.b16 %v468, %v467
  %v537 = vpack.c.b16 %v470, %v469
  %v538 = vpack.c.b16 %v472, %v471
  %v539 = vpack.c.b16 %v474, %v473
  %v540 = vpack.c.b16 %v476, %v475
  %v541 = vpack.c.b16 %v478, %v477
  %v542 = vpack.c.b16 %v480, %v479
  %v543 = vpack.c.b16 %v482, %v481
  %v544 = vpack.c.b16 %v484, %v483
  %v545 = vpack.c.b16 %v486, %v485
  %v546 = vpack.c.b16 %v488, %v487
  %v547 = vpack.c.b16 %v490, %v489
  %v548 = vpack.c.b16 %v492, %v491
  %v549 = vpack.c.b16 %v494, %v493
  %v550 = vpack.c.b16 %v496, %v495
  %v551 = vpack.c.b16 %v498, %v497
  %v552 = vpack.c.b16 %v500, %v499
  %v553 = vpack.c.b16 %v502, %v501
  %v554 = vpack.c.b16 %v504, %v503
  %v555 = vpack.c.b16 %v506, %v505
  %v556 = vpack.c.b16 %v508, %v507
  %v557 = vpack.c.b16 %v510, %v509
  %v558 = vpack.c.b16 %v512, %v511
  %v559 = vpack.c.b16 %v514, %v513
  %v560 = vpack.c.b16 %v516, %v515
  %v561 = vpack.c.b16 %v518, %v517
  %v562 = vpack.c.b16 %v520, %v519
  %v563 = vpack.c.b16 %v522, %v521
  %v564 = vpack.c.b16 %v524, %v523
  %605 = vmatpush.bf16.msra.mxu0 %v532
  %606 = vmatpush.bf16.msra.mxu0 %v531
  %607 = vmatpush.bf16.msra.mxu0 %v530
  %608 = vmatpush.bf16.msra.mxu0 %v529
  %609 = vmatpush.bf16.msra.mxu0 %v528
  %610 = vmatpush.bf16.msra.mxu0 %v527
  %611 = vmatpush.bf16.msra.mxu0 %v526
  %612 = vmatpush.bf16.msra.mxu0 %v525
  %613 = vmatmul.bf16.gmra.mxu0 %v355
  %v614 = vpop.f32.mrf.mxu0
  %v615 = vadd.f32 %v344, %v614
  %v616 = vpop.f32.mrf.mxu0
  %617 = vdwg.mxu0
  %618 = vmatpush.bf16.msra.mxu0 %v540
  %619 = vmatpush.bf16.msra.mxu0 %v539
  %620 = vmatpush.bf16.msra.mxu0 %v538
  %621 = vmatpush.bf16.msra.mxu0 %v537
  %622 = vmatpush.bf16.msra.mxu0 %v536
  %623 = vmatpush.bf16.msra.mxu0 %v535
  %624 = vmatpush.bf16.msra.mxu0 %v534
  %625 = vmatpush.bf16.msra.mxu0 %v533
  %626 = vmatmul.bf16.gmra.mxu0 %v356
  %v627 = vpop.f32.mrf.mxu0
  %v628 = vadd.f32 %v615, %v627
  %v629 = vpop.f32.mrf.mxu0
  %630 = vdwg.mxu0
  %631 = vmatpush.bf16.msra.mxu0 %v548
  %632 = vmatpush.bf16.msra.mxu0 %v547
  %633 = vmatpush.bf16.msra.mxu0 %v546
  %634 = vmatpush.bf16.msra.mxu0 %v545
  %635 = vmatpush.bf16.msra.mxu0 %v544
  %636 = vmatpush.bf16.msra.mxu0 %v543
  %637 = vmatpush.bf16.msra.mxu0 %v542
  %638 = vmatpush.bf16.msra.mxu0 %v541
  %639 = vmatmul.bf16.gmra.mxu0 %v357
  %v640 = vpop.f32.mrf.mxu0
  %v641 = vadd.f32 %v628, %v640
  %v642 = vpop.f32.mrf.mxu0
  %643 = vdwg.mxu0
  %644 = vmatpush.bf16.msra.mxu0 %v556
  %645 = vmatpush.bf16.msra.mxu0 %v555
  %646 = vmatpush.bf16.msra.mxu0 %v554
  %647 = vmatpush.bf16.msra.mxu0 %v553
  %648 = vmatpush.bf16.msra.mxu0 %v552
  %649 = vmatpush.bf16.msra.mxu0 %v551
  %650 = vmatpush.bf16.msra.mxu0 %v550
  %651 = vmatpush.bf16.msra.mxu0 %v549
  %652 = vmatmul.bf16.gmra.mxu0 %v358
  %v653 = vpop.f32.mrf.mxu0
  %v654 = vadd.f32 %v641, %v653
  %v655 = vpop.f32.mrf.mxu0
  %656 = vdwg.mxu0
  %657 = vmatpush.bf16.msra.mxu0 %v564
  %658 = vmatpush.bf16.msra.mxu0 %v563
  %659 = vmatpush.bf16.msra.mxu0 %v562
  %660 = vmatpush.bf16.msra.mxu0 %v561
  %661 = vmatpush.bf16.msra.mxu0 %v560
  %662 = vmatpush.bf16.msra.mxu0 %v559
  %663 = vmatpush.bf16.msra.mxu0 %v558
  %664 = vmatpush.bf16.msra.mxu0 %v557
  %665 = vmatmul.bf16.gmra.mxu0 %v359
  %v666 = vpop.f32.mrf.mxu0
  %v667 = vadd.f32 %v654, %v666
  %v668 = vpop.f32.mrf.mxu0
  %669 = vdwg.mxu0
  %v670 = vld [vmem:[%s4] sm:$0x1]
  %v672 = vperm.slane %v670, 0
  %v674 = vadd.f32 %v667, %v672
  %v675 = vmax.f32 %v674, 0.0
  %v676 = vpack.c.bf16 %v675, %v675
  %677 = vst [vmem:[%s5] sm:$0xf] %v676
  // Predicated region
  $region22: #{resnet_segmentation_forward.23} parent=0 // pred_check
    _
  $region23: #{resnet_segmentation_forward.23} parent=0 // pred_check_branch
    %679 = sbr.rel (0) target = $region25
  $region24: #{resnet_segmentation_forward.23} parent=0 // pred_region
    _
  $region25: #{resnet_segmentation_forward.23} parent=0 // pred_fallthru
    _
  // Predicated region
  $region26: #{resnet_segmentation_forward.23} parent=0 // pred_check
    _
  $region27: #{resnet_segmentation_forward.23} parent=0 // pred_check_branch
    %681 = sbr.rel (0) target = $region29
  $region28: #{resnet_segmentation_forward.23} parent=0 // pred_region
    _
  $region29: #{resnet_segmentation_forward.23} parent=0 // pred_fallthru
    _

// kernel: resnet_segmentation_forward.24
$region0: #{resnet_segmentation_forward.24}
  #allocation0 [shape = 'u32[]', space=smem, size = 0x4, offset = 0x4, fixed_abs, tag = 'smem constant byte address 0x4 - core index']
  #allocation1 [shape = 'u32[72,128]{1,0:T(1,128)}', space=vmem, size = 0x9000, scoped, tag = 'internal scratch']
  %s0 = inlined_call_operand.vmem [shape: bf16[32,384], index: 0, kind: input, shape index: {}]
  %s1 = inlined_call_operand.vmem [shape: bf16[384,128], index: 1, kind: input, shape index: {}]
  %s2 = inlined_call_operand.vmem [shape: bf16[32,256], index: 2, kind: input, shape index: {}]
  %s3 = inlined_call_operand.vmem [shape: bf16[256,128], index: 3, kind: input, shape index: {}]
  %s4 = inlined_call_operand.vmem [shape: f32[1,128], index: 4, kind: input, shape index: {}]
  %s5 = inlined_call_operand.vmem [shape: bf16[32,128], index: 5, kind: output, shape index: {}]
  %s6 = sld [smem:[#allocation0]]
  $region30: #{resnet_segmentation_forward.24} parent=0
    _
  %s8 = ssub.s32 1, %s6
  %s9 = scalar_select 0, %s8, %s6
  // Predicated region
  $region2: #{resnet_segmentation_forward.24} parent=0 // pred_check
    _
  $region3: #{resnet_segmentation_forward.24} parent=0 // pred_check_branch
    %11 = sbr.rel (0) target = $region5
  $region4: #{resnet_segmentation_forward.24} parent=0 // pred_region
    _
  $region5: #{resnet_segmentation_forward.24} parent=0 // pred_fallthru
    _
  // Predicated region
  $region6: #{resnet_segmentation_forward.24} parent=0 // pred_check
    _
  $region7: #{resnet_segmentation_forward.24} parent=0 // pred_check_branch
    %13 = sbr.rel (0) target = $region9
  $region8: #{resnet_segmentation_forward.24} parent=0 // pred_region
    _
  $region9: #{resnet_segmentation_forward.24} parent=0 // pred_fallthru
    _
  // Predicated region
  $region10: #{resnet_segmentation_forward.24} parent=0 // pred_check
    _
  $region11: #{resnet_segmentation_forward.24} parent=0 // pred_check_branch
    %15 = sbr.rel (0) target = $region13
  $region12: #{resnet_segmentation_forward.24} parent=0 // pred_region
    _
  $region13: #{resnet_segmentation_forward.24} parent=0 // pred_fallthru
    _
  // Predicated region
  $region14: #{resnet_segmentation_forward.24} parent=0 // pred_check
    _
  $region15: #{resnet_segmentation_forward.24} parent=0 // pred_check_branch
    %17 = sbr.rel (0) target = $region17
  $region16: #{resnet_segmentation_forward.24} parent=0 // pred_region
    _
  $region17: #{resnet_segmentation_forward.24} parent=0 // pred_fallthru
    _
  // Predicated region
  $region18: #{resnet_segmentation_forward.24} parent=0 // pred_check
    _
  $region19: #{resnet_segmentation_forward.24} parent=0 // pred_check_branch
    %19 = sbr.rel (0) target = $region21
  $region20: #{resnet_segmentation_forward.24} parent=0 // pred_region
    _
  $region21: #{resnet_segmentation_forward.24} parent=0 // pred_fallthru
    _
  %v20 = vld [vmem:[%s0] sm:$0xff]
  %v21 = vld [vmem:[%s0 + $0x8] sm:$0xf]
  %v22 = vld [vmem:[%s0 + $0xc] sm:$0xff]
  %v23 = vld [vmem:[%s0 + $0x14] sm:$0xf]
  %v24 = vld [vmem:[%s0 + $0x18] sm:$0xff]
  %v25 = vld [vmem:[%s0 + $0x20] sm:$0xf]
  %v26 = vld [vmem:[%s0 + $0x24] sm:$0xff]
  %v27 = vld [vmem:[%s0 + $0x2c] sm:$0xf]
  %v28 = vld [vmem:[%s1] sm:$0xf]
  %v29 = vld [vmem:[%s1 + $0x4] sm:$0xf]
  %v30 = vld [vmem:[%s1 + $0x8] sm:$0xf]
  %v31 = vld [vmem:[%s1 + $0xc] sm:$0xf]
  %v32 = vld [vmem:[%s1 + $0x10] sm:$0xf]
  %v33 = vld [vmem:[%s1 + $0x14] sm:$0xf]
  %v34 = vld [vmem:[%s1 + $0x18] sm:$0xf]
  %v35 = vld [vmem:[%s1 + $0x1c] sm:$0xf]
  %v36 = vld [vmem:[%s1 + $0x20] sm:$0xf]
  %v37 = vld [vmem:[%s1 + $0x24] sm:$0xf]
  %v38 = vld [vmem:[%s1 + $0x28] sm:$0xf]
  %v39 = vld [vmem:[%s1 + $0x2c] sm:$0xf]
  %v40 = vld [vmem:[%s1 + $0x30] sm:$0xf]
  %v41 = vld [vmem:[%s1 + $0x34] sm:$0xf]
  %v42 = vld [vmem:[%s1 + $0x38] sm:$0xf]
  %v43 = vld [vmem:[%s1 + $0x3c] sm:$0xf]
  %v44 = vld [vmem:[%s1 + $0x40] sm:$0xf]
  %v45 = vld [vmem:[%s1 + $0x44] sm:$0xf]
  %v46 = vld [vmem:[%s1 + $0x48] sm:$0xf]
  %v47 = vld [vmem:[%s1 + $0x4c] sm:$0xf]
  %v48 = vld [vmem:[%s1 + $0x50] sm:$0xf]
  %v49 = vld [vmem:[%s1 + $0x54] sm:$0xf]
  %v50 = vld [vmem:[%s1 + $0x58] sm:$0xf]
  %v51 = vld [vmem:[%s1 + $0x5c] sm:$0xf]
  %v52 = vld [vmem:[%s1 + $0x60] sm:$0xf]
  %v53 = vld [vmem:[%s1 + $0x64] sm:$0xf]
  %v54 = vld [vmem:[%s1 + $0x68] sm:$0xf]
  %v55 = vld [vmem:[%s1 + $0x6c] sm:$0xf]
  %v56 = vld [vmem:[%s1 + $0x70] sm:$0xf]
  %v57 = vld [vmem:[%s1 + $0x74] sm:$0xf]
  %v58 = vld [vmem:[%s1 + $0x78] sm:$0xf]
  %v59 = vld [vmem:[%s1 + $0x7c] sm:$0xf]
  %v60 = vld [vmem:[%s1 + $0x80] sm:$0xf]
  %v61 = vld [vmem:[%s1 + $0x84] sm:$0xf]
  %v62 = vld [vmem:[%s1 + $0x88] sm:$0xf]
  %v63 = vld [vmem:[%s1 + $0x8c] sm:$0xf]
  %v64 = vld [vmem:[%s1 + $0x90] sm:$0xf]
  %v65 = vld [vmem:[%s1 + $0x94] sm:$0xf]
  %v66 = vld [vmem:[%s1 + $0x98] sm:$0xf]
  %v67 = vld [vmem:[%s1 + $0x9c] sm:$0xf]
  %v68 = vld [vmem:[%s1 + $0xa0] sm:$0xf]
  %v69 = vld [vmem:[%s1 + $0xa4] sm:$0xf]
  %v70 = vld [vmem:[%s1 + $0xa8] sm:$0xf]
  %v71 = vld [vmem:[%s1 + $0xac] sm:$0xf]
  %v72 = vld [vmem:[%s1 + $0xb0] sm:$0xf]
  %v73 = vld [vmem:[%s1 + $0xb4] sm:$0xf]
  %v74 = vld [vmem:[%s1 + $0xb8] sm:$0xf]
  %v75 = vld [vmem:[%s1 + $0xbc] sm:$0xf]
  %v76 = vld [vmem:[%s2] sm:$0xff]
  %v77 = vld [vmem:[%s2 + $0x8] sm:$0xff]
  %v78 = vld [vmem:[%s2 + $0x10] sm:$0xff]
  %v79 = vld [vmem:[%s2 + $0x18] sm:$0xff]
  %v80 = vld [vmem:[%s3] sm:$0xf]
  %v81 = vld [vmem:[%s3 + $0x4] sm:$0xf]
  %v82 = vld [vmem:[%s3 + $0x8] sm:$0xf]
  %v83 = vld [vmem:[%s3 + $0xc] sm:$0xf]
  %v84 = vld [vmem:[%s3 + $0x10] sm:$0xf]
  %v85 = vld [vmem:[%s3 + $0x14] sm:$0xf]
  %v86 = vld [vmem:[%s3 + $0x18] sm:$0xf]
  %v87 = vld [vmem:[%s3 + $0x1c] sm:$0xf]
  %v88 = vld [vmem:[%s3 + $0x20] sm:$0xf]
  %v89 = vld [vmem:[%s3 + $0x24] sm:$0xf]
  %v90 = vld [vmem:[%s3 + $0x28] sm:$0xf]
  %v91 = vld [vmem:[%s3 + $0x2c] sm:$0xf]
  %v92 = vld [vmem:[%s3 + $0x30] sm:$0xf]
  %v93 = vld [vmem:[%s3 + $0x34] sm:$0xf]
  %v94 = vld [vmem:[%s3 + $0x38] sm:$0xf]
  %v95 = vld [vmem:[%s3 + $0x3c] sm:$0xf]
  %v96 = vld [vmem:[%s3 + $0x40] sm:$0xf]
  %v97 = vld [vmem:[%s3 + $0x44] sm:$0xf]
  %v98 = vld [vmem:[%s3 + $0x48] sm:$0xf]
  %v99 = vld [vmem:[%s3 + $0x4c] sm:$0xf]
  %v100 = vld [vmem:[%s3 + $0x50] sm:$0xf]
  %v101 = vld [vmem:[%s3 + $0x54] sm:$0xf]
  %v102 = vld [vmem:[%s3 + $0x58] sm:$0xf]
  %v103 = vld [vmem:[%s3 + $0x5c] sm:$0xf]
  %v104 = vld [vmem:[%s3 + $0x60] sm:$0xf]
  %v105 = vld [vmem:[%s3 + $0x64] sm:$0xf]
  %v106 = vld [vmem:[%s3 + $0x68] sm:$0xf]
  %v107 = vld [vmem:[%s3 + $0x6c] sm:$0xf]
  %v108 = vld [vmem:[%s3 + $0x70] sm:$0xf]
  %v109 = vld [vmem:[%s3 + $0x74] sm:$0xf]
  %v110 = vld [vmem:[%s3 + $0x78] sm:$0xf]
  %v111 = vld [vmem:[%s3 + $0x7c] sm:$0xf]
  %v116 = vunpack.c.l.b16 %v76
  %v117 = vunpack.c.h.b16 %v76
  %v118 = vunpack.c.l.b16 %v77
  %v119 = vunpack.c.h.b16 %v77
  %v120 = vunpack.c.l.b16 %v78
  %v121 = vunpack.c.h.b16 %v78
  %v122 = vunpack.c.l.b16 %v79
  %v123 = vunpack.c.h.b16 %v79
  %v124 = vpack.c.b16 %v118, %v116
  %v125 = vpack.c.b16 %v119, %v117
  %v126 = vpack.c.b16 %v122, %v120
  %v127 = vpack.c.b16 %v123, %v121
  %v164 = vunpack.c.l.b16 %v80
  %v165 = vunpack.c.l.b16 %v81
  %v166 = vunpack.c.l.b16 %v82
  %v167 = vunpack.c.l.b16 %v83
  %v168 = vunpack.c.l.b16 %v84
  %v169 = vunpack.c.l.b16 %v85
  %v170 = vunpack.c.l.b16 %v86
  %v171 = vunpack.c.l.b16 %v87
  %v172 = vunpack.c.l.b16 %v88
  %v173 = vunpack.c.l.b16 %v89
  %v174 = vunpack.c.l.b16 %v90
  %v175 = vunpack.c.l.b16 %v91
  %v176 = vunpack.c.l.b16 %v92
  %v177 = vunpack.c.l.b16 %v93
  %v178 = vunpack.c.l.b16 %v94
  %v179 = vunpack.c.l.b16 %v95
  %v180 = vunpack.c.l.b16 %v96
  %v181 = vunpack.c.l.b16 %v97
  %v182 = vunpack.c.l.b16 %v98
  %v183 = vunpack.c.l.b16 %v99
  %v184 = vunpack.c.l.b16 %v100
  %v185 = vunpack.c.l.b16 %v101
  %v186 = vunpack.c.l.b16 %v102
  %v187 = vunpack.c.l.b16 %v103
  %v188 = vunpack.c.l.b16 %v104
  %v189 = vunpack.c.l.b16 %v105
  %v190 = vunpack.c.l.b16 %v106
  %v191 = vunpack.c.l.b16 %v107
  %v192 = vunpack.c.l.b16 %v108
  %v193 = vunpack.c.l.b16 %v109
  %v194 = vunpack.c.l.b16 %v110
  %v195 = vunpack.c.l.b16 %v111
  %v196 = vpack.c.b16 %v165, %v164
  %v197 = vpack.c.b16 %v167, %v166
  %v198 = vpack.c.b16 %v169, %v168
  %v199 = vpack.c.b16 %v171, %v170
  %v200 = vpack.c.b16 %v173, %v172
  %v201 = vpack.c.b16 %v175, %v174
  %v202 = vpack.c.b16 %v177, %v176
  %v203 = vpack.c.b16 %v179, %v178
  %v204 = vpack.c.b16 %v181, %v180
  %v205 = vpack.c.b16 %v183, %v182
  %v206 = vpack.c.b16 %v185, %v184
  %v207 = vpack.c.b16 %v187, %v186
  %v208 = vpack.c.b16 %v189, %v188
  %v209 = vpack.c.b16 %v191, %v190
  %v210 = vpack.c.b16 %v193, %v192
  %v211 = vpack.c.b16 %v195, %v194
  %228 = vmatpush.bf16.msra.mxu0 %v203
  %229 = vmatpush.bf16.msra.mxu0 %v202
  %230 = vmatpush.bf16.msra.mxu0 %v201
  %231 = vmatpush.bf16.msra.mxu0 %v200
  %232 = vmatpush.bf16.msra.mxu0 %v199
  %233 = vmatpush.bf16.msra.mxu0 %v198
  %234 = vmatpush.bf16.msra.mxu0 %v197
  %235 = vmatpush.bf16.msra.mxu0 %v196
  %236 = vmatmul.bf16.gmra.mxu0 %v124
  %v237 = vpop.f32.mrf.mxu0
  %v238 = vadd.f32 0.0, %v237
  %v239 = vpop.f32.mrf.mxu0
  %v240 = vadd.f32 0.0, %v239
  %241 = vmatmul.bf16.gmra.mxu0 %v126
  %v242 = vpop.f32.mrf.mxu0
  %v243 = vadd.f32 0.0, %v242
  %v244 = vpop.f32.mrf.mxu0
  %v245 = vadd.f32 0.0, %v244
  %246 = vdwg.mxu0
  %247 = vmatpush.bf16.msra.mxu0 %v211
  %248 = vmatpush.bf16.msra.mxu0 %v210
  %249 = vmatpush.bf16.msra.mxu0 %v209
  %250 = vmatpush.bf16.msra.mxu0 %v208
  %251 = vmatpush.bf16.msra.mxu0 %v207
  %252 = vmatpush.bf16.msra.mxu0 %v206
  %253 = vmatpush.bf16.msra.mxu0 %v205
  %254 = vmatpush.bf16.msra.mxu0 %v204
  %255 = vmatmul.bf16.gmra.mxu0 %v125
  %v256 = vpop.f32.mrf.mxu0
  %v257 = vadd.f32 %v238, %v256
  %v258 = vpop.f32.mrf.mxu0
  %v259 = vadd.f32 %v240, %v258
  %260 = vmatmul.bf16.gmra.mxu0 %v127
  %v261 = vpop.f32.mrf.mxu0
  %v262 = vadd.f32 %v243, %v261
  %v263 = vpop.f32.mrf.mxu0
  %v264 = vadd.f32 %v245, %v263
  %265 = vdwg.mxu0
  %v274 = vunpack.c.l.b16 %v20
  %v275 = vunpack.c.h.b16 %v20
  %v276 = vunpack.c.l.b16 %v21
  %v277 = vunpack.c.l.b16 %v22
  %v278 = vunpack.c.h.b16 %v22
  %v279 = vunpack.c.l.b16 %v23
  %v280 = vunpack.c.l.b16 %v24
  %v281 = vunpack.c.h.b16 %v24
  %v282 = vunpack.c.l.b16 %v25
  %v283 = vunpack.c.l.b16 %v26
  %v284 = vunpack.c.h.b16 %v26
  %v285 = vunpack.c.l.b16 %v27
  %v286 = vpack.c.b16 %v277, %v274
  %v287 = vpack.c.b16 %v278, %v275
  %v288 = vpack.c.b16 %v279, %v276
  %v289 = vpack.c.b16 %v283, %v280
  %v290 = vpack.c.b16 %v284, %v281
  %v291 = vpack.c.b16 %v285, %v282
  %v346 = vunpack.c.l.b16 %v28
  %v347 = vunpack.c.l.b16 %v29
  %v348 = vunpack.c.l.b16 %v30
  %v349 = vunpack.c.l.b16 %v31
  %v350 = vunpack.c.l.b16 %v32
  %v351 = vunpack.c.l.b16 %v33
  %v352 = vunpack.c.l.b16 %v34
  %v353 = vunpack.c.l.b16 %v35
  %v354 = vunpack.c.l.b16 %v36
  %v355 = vunpack.c.l.b16 %v37
  %v356 = vunpack.c.l.b16 %v38
  %v357 = vunpack.c.l.b16 %v39
  %v358 = vunpack.c.l.b16 %v40
  %v359 = vunpack.c.l.b16 %v41
  %v360 = vunpack.c.l.b16 %v42
  %v361 = vunpack.c.l.b16 %v43
  %v362 = vunpack.c.l.b16 %v44
  %v363 = vunpack.c.l.b16 %v45
  %v364 = vunpack.c.l.b16 %v46
  %v365 = vunpack.c.l.b16 %v47
  %v366 = vunpack.c.l.b16 %v48
  %v367 = vunpack.c.l.b16 %v49
  %v368 = vunpack.c.l.b16 %v50
  %v369 = vunpack.c.l.b16 %v51
  %v370 = vunpack.c.l.b16 %v52
  %v371 = vunpack.c.l.b16 %v53
  %v372 = vunpack.c.l.b16 %v54
  %v373 = vunpack.c.l.b16 %v55
  %v374 = vunpack.c.l.b16 %v56
  %v375 = vunpack.c.l.b16 %v57
  %v376 = vunpack.c.l.b16 %v58
  %v377 = vunpack.c.l.b16 %v59
  %v378 = vunpack.c.l.b16 %v60
  %v379 = vunpack.c.l.b16 %v61
  %v380 = vunpack.c.l.b16 %v62
  %v381 = vunpack.c.l.b16 %v63
  %v382 = vunpack.c.l.b16 %v64
  %v383 = vunpack.c.l.b16 %v65
  %v384 = vunpack.c.l.b16 %v66
  %v385 = vunpack.c.l.b16 %v67
  %v386 = vunpack.c.l.b16 %v68
  %v387 = vunpack.c.l.b16 %v69
  %v388 = vunpack.c.l.b16 %v70
  %v389 = vunpack.c.l.b16 %v71
  %v390 = vunpack.c.l.b16 %v72
  %v391 = vunpack.c.l.b16 %v73
  %v392 = vunpack.c.l.b16 %v74
  %v393 = vunpack.c.l.b16 %v75
  %v394 = vpack.c.b16 %v347, %v346
  %v395 = vpack.c.b16 %v349, %v348
  %v396 = vpack.c.b16 %v351, %v350
  %v397 = vpack.c.b16 %v353, %v352
  %v398 = vpack.c.b16 %v355, %v354
  %v399 = vpack.c.b16 %v357, %v356
  %v400 = vpack.c.b16 %v359, %v358
  %v401 = vpack.c.b16 %v361, %v360
  %v402 = vpack.c.b16 %v363, %v362
  %v403 = vpack.c.b16 %v365, %v364
  %v404 = vpack.c.b16 %v367, %v366
  %v405 = vpack.c.b16 %v369, %v368
  %v406 = vpack.c.b16 %v371, %v370
  %v407 = vpack.c.b16 %v373, %v372
  %v408 = vpack.c.b16 %v375, %v374
  %v409 = vpack.c.b16 %v377, %v376
  %v410 = vpack.c.b16 %v379, %v378
  %v411 = vpack.c.b16 %v381, %v380
  %v412 = vpack.c.b16 %v383, %v382
  %v413 = vpack.c.b16 %v385, %v384
  %v414 = vpack.c.b16 %v387, %v386
  %v415 = vpack.c.b16 %v389, %v388
  %v416 = vpack.c.b16 %v391, %v390
  %v417 = vpack.c.b16 %v393, %v392
  %442 = vmatpush.bf16.msra.mxu0 %v401
  %443 = vmatpush.bf16.msra.mxu0 %v400
  %444 = vmatpush.bf16.msra.mxu0 %v399
  %445 = vmatpush.bf16.msra.mxu0 %v398
  %446 = vmatpush.bf16.msra.mxu0 %v397
  %447 = vmatpush.bf16.msra.mxu0 %v396
  %448 = vmatpush.bf16.msra.mxu0 %v395
  %449 = vmatpush.bf16.msra.mxu0 %v394
  %450 = vmatmul.bf16.gmra.mxu0 %v286
  %v451 = vpop.f32.mrf.mxu0
  %v452 = vadd.f32 %v257, %v451
  %v453 = vpop.f32.mrf.mxu0
  %v454 = vadd.f32 %v259, %v453
  %455 = vmatmul.bf16.gmra.mxu0 %v289
  %v456 = vpop.f32.mrf.mxu0
  %v457 = vadd.f32 %v262, %v456
  %v458 = vpop.f32.mrf.mxu0
  %v459 = vadd.f32 %v264, %v458
  %460 = vdwg.mxu0
  %461 = vmatpush.bf16.msra.mxu0 %v409
  %462 = vmatpush.bf16.msra.mxu0 %v408
  %463 = vmatpush.bf16.msra.mxu0 %v407
  %464 = vmatpush.bf16.msra.mxu0 %v406
  %465 = vmatpush.bf16.msra.mxu0 %v405
  %466 = vmatpush.bf16.msra.mxu0 %v404
  %467 = vmatpush.bf16.msra.mxu0 %v403
  %468 = vmatpush.bf16.msra.mxu0 %v402
  %469 = vmatmul.bf16.gmra.mxu0 %v287
  %v470 = vpop.f32.mrf.mxu0
  %v471 = vadd.f32 %v452, %v470
  %v472 = vpop.f32.mrf.mxu0
  %v473 = vadd.f32 %v454, %v472
  %474 = vmatmul.bf16.gmra.mxu0 %v290
  %v475 = vpop.f32.mrf.mxu0
  %v476 = vadd.f32 %v457, %v475
  %v477 = vpop.f32.mrf.mxu0
  %v478 = vadd.f32 %v459, %v477
  %479 = vdwg.mxu0
  %480 = vmatpush.bf16.msra.mxu0 %v417
  %481 = vmatpush.bf16.msra.mxu0 %v416
  %482 = vmatpush.bf16.msra.mxu0 %v415
  %483 = vmatpush.bf16.msra.mxu0 %v414
  %484 = vmatpush.bf16.msra.mxu0 %v413
  %485 = vmatpush.bf16.msra.mxu0 %v412
  %486 = vmatpush.bf16.msra.mxu0 %v411
  %487 = vmatpush.bf16.msra.mxu0 %v410
  %488 = vmatmul.bf16.gmra.mxu0 %v288
  %v489 = vpop.f32.mrf.mxu0
  %v490 = vadd.f32 %v471, %v489
  %v491 = vpop.f32.mrf.mxu0
  %v492 = vadd.f32 %v473, %v491
  %493 = vmatmul.bf16.gmra.mxu0 %v291
  %v494 = vpop.f32.mrf.mxu0
  %v495 = vadd.f32 %v476, %v494
  %v496 = vpop.f32.mrf.mxu0
  %v497 = vadd.f32 %v478, %v496
  %498 = vdwg.mxu0
  %v499 = vld [vmem:[%s4] sm:$0x1]
  %v501 = vperm.slane %v499, 0
  %v503 = vadd.f32 %v490, %v501
  %v504 = vadd.f32 %v492, %v501
  %v505 = vadd.f32 %v495, %v501
  %v506 = vadd.f32 %v497, %v501
  %v507 = vmax.f32 %v503, 0.0
  %v508 = vmax.f32 %v504, 0.0
  %v509 = vmax.f32 %v505, 0.0
  %v510 = vmax.f32 %v506, 0.0
  %v511 = vpack.c.bf16 %v507, %v507
  %v512 = vpack.c.bf16 %v508, %v508
  %v513 = vpack.c.bf16 %v509, %v509
  %v514 = vpack.c.bf16 %v510, %v510
  %515 = vst [vmem:[%s5] sm:$0xf] %v511
  %516 = vst [vmem:[%s5 + $0x4] sm:$0xf] %v512
  %517 = vst [vmem:[%s5 + $0x8] sm:$0xf] %v513
  %518 = vst [vmem:[%s5 + $0xc] sm:$0xf] %v514
  // Predicated region
  $region22: #{resnet_segmentation_forward.24} parent=0 // pred_check
    _
  $region23: #{resnet_segmentation_forward.24} parent=0 // pred_check_branch
    %520 = sbr.rel (0) target = $region25
  $region24: #{resnet_segmentation_forward.24} parent=0 // pred_region
    _
  $region25: #{resnet_segmentation_forward.24} parent=0 // pred_fallthru
    _
  // Predicated region
  $region26: #{resnet_segmentation_forward.24} parent=0 // pred_check
    _
  $region27: #{resnet_segmentation_forward.24} parent=0 // pred_check_branch
    %522 = sbr.rel (0) target = $region29
  $region28: #{resnet_segmentation_forward.24} parent=0 // pred_region
    _
  $region29: #{resnet_segmentation_forward.24} parent=0 // pred_fallthru
    _

// kernel: resnet_segmentation_forward.25
$region0: #{resnet_segmentation_forward.25}
  #allocation0 [shape = 'u32[]', space=smem, size = 0x4, offset = 0x4, fixed_abs, tag = 'smem constant byte address 0x4 - core index']
  #allocation1 [shape = 'u32[72,128]{1,0:T(1,128)}', space=vmem, size = 0x9000, scoped, tag = 'internal scratch']
  %s0 = inlined_call_operand.vmem [shape: bf16[128,384], index: 0, kind: input, shape index: {}]
  %s1 = inlined_call_operand.vmem [shape: bf16[384,128], index: 1, kind: input, shape index: {}]
  %s2 = inlined_call_operand.vmem [shape: bf16[128,128], index: 2, kind: input, shape index: {}]
  %s3 = inlined_call_operand.vmem [shape: bf16[128,128], index: 3, kind: input, shape index: {}]
  %s4 = inlined_call_operand.vmem [shape: f32[1,128], index: 4, kind: input, shape index: {}]
  %s5 = inlined_call_operand.vmem [shape: bf16[128,128], index: 5, kind: output, shape index: {}]
  %s6 = sld [smem:[#allocation0]]
  $region30: #{resnet_segmentation_forward.25} parent=0
    _
  %s8 = ssub.s32 1, %s6
  %s9 = scalar_select 0, %s8, %s6
  // Predicated region
  $region2: #{resnet_segmentation_forward.25} parent=0 // pred_check
    _
  $region3: #{resnet_segmentation_forward.25} parent=0 // pred_check_branch
    %11 = sbr.rel (0) target = $region5
  $region4: #{resnet_segmentation_forward.25} parent=0 // pred_region
    _
  $region5: #{resnet_segmentation_forward.25} parent=0 // pred_fallthru
    _
  // Predicated region
  $region6: #{resnet_segmentation_forward.25} parent=0 // pred_check
    _
  $region7: #{resnet_segmentation_forward.25} parent=0 // pred_check_branch
    %13 = sbr.rel (0) target = $region9
  $region8: #{resnet_segmentation_forward.25} parent=0 // pred_region
    _
  $region9: #{resnet_segmentation_forward.25} parent=0 // pred_fallthru
    _
  // Predicated region
  $region10: #{resnet_segmentation_forward.25} parent=0 // pred_check
    _
  $region11: #{resnet_segmentation_forward.25} parent=0 // pred_check_branch
    %15 = sbr.rel (0) target = $region13
  $region12: #{resnet_segmentation_forward.25} parent=0 // pred_region
    _
  $region13: #{resnet_segmentation_forward.25} parent=0 // pred_fallthru
    _
  // Predicated region
  $region14: #{resnet_segmentation_forward.25} parent=0 // pred_check
    _
  $region15: #{resnet_segmentation_forward.25} parent=0 // pred_check_branch
    %17 = sbr.rel (0) target = $region17
  $region16: #{resnet_segmentation_forward.25} parent=0 // pred_region
    _
  $region17: #{resnet_segmentation_forward.25} parent=0 // pred_fallthru
    _
  // Predicated region
  $region18: #{resnet_segmentation_forward.25} parent=0 // pred_check
    _
  $region19: #{resnet_segmentation_forward.25} parent=0 // pred_check_branch
    %19 = sbr.rel (0) target = $region21
  $region20: #{resnet_segmentation_forward.25} parent=0 // pred_region
    _
  $region21: #{resnet_segmentation_forward.25} parent=0 // pred_fallthru
    _
  %v20 = vld [vmem:[%s0] sm:$0xff]
  %v21 = vld [vmem:[%s0 + $0x8] sm:$0xf]
  %v22 = vld [vmem:[%s0 + $0xc] sm:$0xff]
  %v23 = vld [vmem:[%s0 + $0x14] sm:$0xf]
  %v24 = vld [vmem:[%s0 + $0x18] sm:$0xff]
  %v25 = vld [vmem:[%s0 + $0x20] sm:$0xf]
  %v26 = vld [vmem:[%s0 + $0x24] sm:$0xff]
  %v27 = vld [vmem:[%s0 + $0x2c] sm:$0xf]
  %v28 = vld [vmem:[%s0 + $0x30] sm:$0xff]
  %v29 = vld [vmem:[%s0 + $0x38] sm:$0xf]
  %v30 = vld [vmem:[%s0 + $0x3c] sm:$0xff]
  %v31 = vld [vmem:[%s0 + $0x44] sm:$0xf]
  %v32 = vld [vmem:[%s0 + $0x48] sm:$0xff]
  %v33 = vld [vmem:[%s0 + $0x50] sm:$0xf]
  %v34 = vld [vmem:[%s0 + $0x54] sm:$0xff]
  %v35 = vld [vmem:[%s0 + $0x5c] sm:$0xf]
  %v36 = vld [vmem:[%s0 + $0x60] sm:$0xff]
  %v37 = vld [vmem:[%s0 + $0x68] sm:$0xf]
  %v38 = vld [vmem:[%s0 + $0x6c] sm:$0xff]
  %v39 = vld [vmem:[%s0 + $0x74] sm:$0xf]
  %v40 = vld [vmem:[%s0 + $0x78] sm:$0xff]
  %v41 = vld [vmem:[%s0 + $0x80] sm:$0xf]
  %v42 = vld [vmem:[%s0 + $0x84] sm:$0xff]
  %v43 = vld [vmem:[%s0 + $0x8c] sm:$0xf]
  %v44 = vld [vmem:[%s0 + $0x90] sm:$0xff]
  %v45 = vld [vmem:[%s0 + $0x98] sm:$0xf]
  %v46 = vld [vmem:[%s0 + $0x9c] sm:$0xff]
  %v47 = vld [vmem:[%s0 + $0xa4] sm:$0xf]
  %v48 = vld [vmem:[%s0 + $0xa8] sm:$0xff]
  %v49 = vld [vmem:[%s0 + $0xb0] sm:$0xf]
  %v50 = vld [vmem:[%s0 + $0xb4] sm:$0xff]
  %v51 = vld [vmem:[%s0 + $0xbc] sm:$0xf]
  %v52 = vld [vmem:[%s1] sm:$0xf]
  %v53 = vld [vmem:[%s1 + $0x4] sm:$0xf]
  %v54 = vld [vmem:[%s1 + $0x8] sm:$0xf]
  %v55 = vld [vmem:[%s1 + $0xc] sm:$0xf]
  %v56 = vld [vmem:[%s1 + $0x10] sm:$0xf]
  %v57 = vld [vmem:[%s1 + $0x14] sm:$0xf]
  %v58 = vld [vmem:[%s1 + $0x18] sm:$0xf]
  %v59 = vld [vmem:[%s1 + $0x1c] sm:$0xf]
  %v60 = vld [vmem:[%s1 + $0x20] sm:$0xf]
  %v61 = vld [vmem:[%s1 + $0x24] sm:$0xf]
  %v62 = vld [vmem:[%s1 + $0x28] sm:$0xf]
  %v63 = vld [vmem:[%s1 + $0x2c] sm:$0xf]
  %v64 = vld [vmem:[%s1 + $0x30] sm:$0xf]
  %v65 = vld [vmem:[%s1 + $0x34] sm:$0xf]
  %v66 = vld [vmem:[%s1 + $0x38] sm:$0xf]
  %v67 = vld [vmem:[%s1 + $0x3c] sm:$0xf]
  %v68 = vld [vmem:[%s1 + $0x40] sm:$0xf]
  %v69 = vld [vmem:[%s1 + $0x44] sm:$0xf]
  %v70 = vld [vmem:[%s1 + $0x48] sm:$0xf]
  %v71 = vld [vmem:[%s1 + $0x4c] sm:$0xf]
  %v72 = vld [vmem:[%s1 + $0x50] sm:$0xf]
  %v73 = vld [vmem:[%s1 + $0x54] sm:$0xf]
  %v74 = vld [vmem:[%s1 + $0x58] sm:$0xf]
  %v75 = vld [vmem:[%s1 + $0x5c] sm:$0xf]
  %v76 = vld [vmem:[%s1 + $0x60] sm:$0xf]
  %v77 = vld [vmem:[%s1 + $0x64] sm:$0xf]
  %v78 = vld [vmem:[%s1 + $0x68] sm:$0xf]
  %v79 = vld [vmem:[%s1 + $0x6c] sm:$0xf]
  %v80 = vld [vmem:[%s1 + $0x70] sm:$0xf]
  %v81 = vld [vmem:[%s1 + $0x74] sm:$0xf]
  %v82 = vld [vmem:[%s1 + $0x78] sm:$0xf]
  %v83 = vld [vmem:[%s1 + $0x7c] sm:$0xf]
  %v84 = vld [vmem:[%s1 + $0x80] sm:$0xf]
  %v85 = vld [vmem:[%s1 + $0x84] sm:$0xf]
  %v86 = vld [vmem:[%s1 + $0x88] sm:$0xf]
  %v87 = vld [vmem:[%s1 + $0x8c] sm:$0xf]
  %v88 = vld [vmem:[%s1 + $0x90] sm:$0xf]
  %v89 = vld [vmem:[%s1 + $0x94] sm:$0xf]
  %v90 = vld [vmem:[%s1 + $0x98] sm:$0xf]
  %v91 = vld [vmem:[%s1 + $0x9c] sm:$0xf]
  %v92 = vld [vmem:[%s1 + $0xa0] sm:$0xf]
  %v93 = vld [vmem:[%s1 + $0xa4] sm:$0xf]
  %v94 = vld [vmem:[%s1 + $0xa8] sm:$0xf]
  %v95 = vld [vmem:[%s1 + $0xac] sm:$0xf]
  %v96 = vld [vmem:[%s1 + $0xb0] sm:$0xf]
  %v97 = vld [vmem:[%s1 + $0xb4] sm:$0xf]
  %v98 = vld [vmem:[%s1 + $0xb8] sm:$0xf]
  %v99 = vld [vmem:[%s1 + $0xbc] sm:$0xf]
  %v100 = vld [vmem:[%s2] sm:$0xf]
  %v101 = vld [vmem:[%s2 + $0x4] sm:$0xf]
  %v102 = vld [vmem:[%s2 + $0x8] sm:$0xf]
  %v103 = vld [vmem:[%s2 + $0xc] sm:$0xf]
  %v104 = vld [vmem:[%s2 + $0x10] sm:$0xf]
  %v105 = vld [vmem:[%s2 + $0x14] sm:$0xf]
  %v106 = vld [vmem:[%s2 + $0x18] sm:$0xf]
  %v107 = vld [vmem:[%s2 + $0x1c] sm:$0xf]
  %v108 = vld [vmem:[%s2 + $0x20] sm:$0xf]
  %v109 = vld [vmem:[%s2 + $0x24] sm:$0xf]
  %v110 = vld [vmem:[%s2 + $0x28] sm:$0xf]
  %v111 = vld [vmem:[%s2 + $0x2c] sm:$0xf]
  %v112 = vld [vmem:[%s2 + $0x30] sm:$0xf]
  %v113 = vld [vmem:[%s2 + $0x34] sm:$0xf]
  %v114 = vld [vmem:[%s2 + $0x38] sm:$0xf]
  %v115 = vld [vmem:[%s2 + $0x3c] sm:$0xf]
  %v116 = vld [vmem:[%s3] sm:$0xf]
  %v117 = vld [vmem:[%s3 + $0x4] sm:$0xf]
  %v118 = vld [vmem:[%s3 + $0x8] sm:$0xf]
  %v119 = vld [vmem:[%s3 + $0xc] sm:$0xf]
  %v120 = vld [vmem:[%s3 + $0x10] sm:$0xf]
  %v121 = vld [vmem:[%s3 + $0x14] sm:$0xf]
  %v122 = vld [vmem:[%s3 + $0x18] sm:$0xf]
  %v123 = vld [vmem:[%s3 + $0x1c] sm:$0xf]
  %v124 = vld [vmem:[%s3 + $0x20] sm:$0xf]
  %v125 = vld [vmem:[%s3 + $0x24] sm:$0xf]
  %v126 = vld [vmem:[%s3 + $0x28] sm:$0xf]
  %v127 = vld [vmem:[%s3 + $0x2c] sm:$0xf]
  %v128 = vld [vmem:[%s3 + $0x30] sm:$0xf]
  %v129 = vld [vmem:[%s3 + $0x34] sm:$0xf]
  %v130 = vld [vmem:[%s3 + $0x38] sm:$0xf]
  %v131 = vld [vmem:[%s3 + $0x3c] sm:$0xf]
  %v148 = vunpack.c.l.b16 %v100
  %v149 = vunpack.c.l.b16 %v101
  %v150 = vunpack.c.l.b16 %v102
  %v151 = vunpack.c.l.b16 %v103
  %v152 = vunpack.c.l.b16 %v104
  %v153 = vunpack.c.l.b16 %v105
  %v154 = vunpack.c.l.b16 %v106
  %v155 = vunpack.c.l.b16 %v107
  %v156 = vunpack.c.l.b16 %v108
  %v157 = vunpack.c.l.b16 %v109
  %v158 = vunpack.c.l.b16 %v110
  %v159 = vunpack.c.l.b16 %v111
  %v160 = vunpack.c.l.b16 %v112
  %v161 = vunpack.c.l.b16 %v113
  %v162 = vunpack.c.l.b16 %v114
  %v163 = vunpack.c.l.b16 %v115
  %v164 = vpack.c.b16 %v149, %v148
  %v165 = vpack.c.b16 %v151, %v150
  %v166 = vpack.c.b16 %v153, %v152
  %v167 = vpack.c.b16 %v155, %v154
  %v168 = vpack.c.b16 %v157, %v156
  %v169 = vpack.c.b16 %v159, %v158
  %v170 = vpack.c.b16 %v161, %v160
  %v171 = vpack.c.b16 %v163, %v162
  %v196 = vunpack.c.l.b16 %v116
  %v197 = vunpack.c.l.b16 %v117
  %v198 = vunpack.c.l.b16 %v118
  %v199 = vunpack.c.l.b16 %v119
  %v200 = vunpack.c.l.b16 %v120
  %v201 = vunpack.c.l.b16 %v121
  %v202 = vunpack.c.l.b16 %v122
  %v203 = vunpack.c.l.b16 %v123
  %v204 = vunpack.c.l.b16 %v124
  %v205 = vunpack.c.l.b16 %v125
  %v206 = vunpack.c.l.b16 %v126
  %v207 = vunpack.c.l.b16 %v127
  %v208 = vunpack.c.l.b16 %v128
  %v209 = vunpack.c.l.b16 %v129
  %v210 = vunpack.c.l.b16 %v130
  %v211 = vunpack.c.l.b16 %v131
  %v212 = vpack.c.b16 %v197, %v196
  %v213 = vpack.c.b16 %v199, %v198
  %v214 = vpack.c.b16 %v201, %v200
  %v215 = vpack.c.b16 %v203, %v202
  %v216 = vpack.c.b16 %v205, %v204
  %v217 = vpack.c.b16 %v207, %v206
  %v218 = vpack.c.b16 %v209, %v208
  %v219 = vpack.c.b16 %v211, %v210
  %228 = vmatpush.bf16.msra.mxu0 %v219
  %229 = vmatpush.bf16.msra.mxu0 %v218
  %230 = vmatpush.bf16.msra.mxu0 %v217
  %231 = vmatpush.bf16.msra.mxu0 %v216
  %232 = vmatpush.bf16.msra.mxu0 %v215
  %233 = vmatpush.bf16.msra.mxu0 %v214
  %234 = vmatpush.bf16.msra.mxu0 %v213
  %235 = vmatpush.bf16.msra.mxu0 %v212
  %236 = vmatmul.bf16.gmra.mxu0 %v164
  %v237 = vpop.f32.mrf.mxu0
  %v238 = vadd.f32 0.0, %v237
  %v239 = vpop.f32.mrf.mxu0
  %v240 = vadd.f32 0.0, %v239
  %241 = vmatmul.bf16.gmra.mxu0 %v165
  %v242 = vpop.f32.mrf.mxu0
  %v243 = vadd.f32 0.0, %v242
  %v244 = vpop.f32.mrf.mxu0
  %v245 = vadd.f32 0.0, %v244
  %246 = vmatmul.bf16.gmra.mxu0 %v166
  %v247 = vpop.f32.mrf.mxu0
  %v248 = vadd.f32 0.0, %v247
  %v249 = vpop.f32.mrf.mxu0
  %v250 = vadd.f32 0.0, %v249
  %251 = vmatmul.bf16.gmra.mxu0 %v167
  %v252 = vpop.f32.mrf.mxu0
  %v253 = vadd.f32 0.0, %v252
  %v254 = vpop.f32.mrf.mxu0
  %v255 = vadd.f32 0.0, %v254
  %256 = vmatmul.bf16.gmra.mxu0 %v168
  %v257 = vpop.f32.mrf.mxu0
  %v258 = vadd.f32 0.0, %v257
  %v259 = vpop.f32.mrf.mxu0
  %v260 = vadd.f32 0.0, %v259
  %261 = vmatmul.bf16.gmra.mxu0 %v169
  %v262 = vpop.f32.mrf.mxu0
  %v263 = vadd.f32 0.0, %v262
  %v264 = vpop.f32.mrf.mxu0
  %v265 = vadd.f32 0.0, %v264
  %266 = vmatmul.bf16.gmra.mxu0 %v170
  %v267 = vpop.f32.mrf.mxu0
  %v268 = vadd.f32 0.0, %v267
  %v269 = vpop.f32.mrf.mxu0
  %v270 = vadd.f32 0.0, %v269
  %271 = vmatmul.bf16.gmra.mxu0 %v171
  %v272 = vpop.f32.mrf.mxu0
  %v273 = vadd.f32 0.0, %v272
  %v274 = vpop.f32.mrf.mxu0
  %v275 = vadd.f32 0.0, %v274
  %276 = vdwg.mxu0
  %v309 = vunpack.c.l.b16 %v20
  %v310 = vunpack.c.h.b16 %v20
  %v311 = vunpack.c.l.b16 %v21
  %v312 = vunpack.c.l.b16 %v22
  %v313 = vunpack.c.h.b16 %v22
  %v314 = vunpack.c.l.b16 %v23
  %v315 = vunpack.c.l.b16 %v24
  %v316 = vunpack.c.h.b16 %v24
  %v317 = vunpack.c.l.b16 %v25
  %v318 = vunpack.c.l.b16 %v26
  %v319 = vunpack.c.h.b16 %v26
  %v320 = vunpack.c.l.b16 %v27
  %v321 = vunpack.c.l.b16 %v28
  %v322 = vunpack.c.h.b16 %v28
  %v323 = vunpack.c.l.b16 %v29
  %v324 = vunpack.c.l.b16 %v30
  %v325 = vunpack.c.h.b16 %v30
  %v326 = vunpack.c.l.b16 %v31
  %v327 = vunpack.c.l.b16 %v32
  %v328 = vunpack.c.h.b16 %v32
  %v329 = vunpack.c.l.b16 %v33
  %v330 = vunpack.c.l.b16 %v34
  %v331 = vunpack.c.h.b16 %v34
  %v332 = vunpack.c.l.b16 %v35
  %v333 = vunpack.c.l.b16 %v36
  %v334 = vunpack.c.h.b16 %v36
  %v335 = vunpack.c.l.b16 %v37
  %v336 = vunpack.c.l.b16 %v38
  %v337 = vunpack.c.h.b16 %v38
  %v338 = vunpack.c.l.b16 %v39
  %v339 = vunpack.c.l.b16 %v40
  %v340 = vunpack.c.h.b16 %v40
  %v341 = vunpack.c.l.b16 %v41
  %v342 = vunpack.c.l.b16 %v42
  %v343 = vunpack.c.h.b16 %v42
  %v344 = vunpack.c.l.b16 %v43
  %v345 = vunpack.c.l.b16 %v44
  %v346 = vunpack.c.h.b16 %v44
  %v347 = vunpack.c.l.b16 %v45
  %v348 = vunpack.c.l.b16 %v46
  %v349 = vunpack.c.h.b16 %v46
  %v350 = vunpack.c.l.b16 %v47
  %v351 = vunpack.c.l.b16 %v48
  %v352 = vunpack.c.h.b16 %v48
  %v353 = vunpack.c.l.b16 %v49
  %v354 = vunpack.c.l.b16 %v50
  %v355 = vunpack.c.h.b16 %v50
  %v356 = vunpack.c.l.b16 %v51
  %v357 = vpack.c.b16 %v312, %v309
  %v358 = vpack.c.b16 %v313, %v310
  %v359 = vpack.c.b16 %v314, %v311
  %v360 = vpack.c.b16 %v318, %v315
  %v361 = vpack.c.b16 %v319, %v316
  %v362 = vpack.c.b16 %v320, %v317
  %v363 = vpack.c.b16 %v324, %v321
  %v364 = vpack.c.b16 %v325, %v322
  %v365 = vpack.c.b16 %v326, %v323
  %v366 = vpack.c.b16 %v330, %v327
  %v367 = vpack.c.b16 %v331, %v328
  %v368 = vpack.c.b16 %v332, %v329
  %v369 = vpack.c.b16 %v336, %v333
  %v370 = vpack.c.b16 %v337, %v334
  %v371 = vpack.c.b16 %v338, %v335
  %v372 = vpack.c.b16 %v342, %v339
  %v373 = vpack.c.b16 %v343, %v340
  %v374 = vpack.c.b16 %v344, %v341
  %v375 = vpack.c.b16 %v348, %v345
  %v376 = vpack.c.b16 %v349, %v346
  %v377 = vpack.c.b16 %v350, %v347
  %v378 = vpack.c.b16 %v354, %v351
  %v379 = vpack.c.b16 %v355, %v352
  %v380 = vpack.c.b16 %v356, %v353
  %v453 = vunpack.c.l.b16 %v52
  %v454 = vunpack.c.l.b16 %v53
  %v455 = vunpack.c.l.b16 %v54
  %v456 = vunpack.c.l.b16 %v55
  %v457 = vunpack.c.l.b16 %v56
  %v458 = vunpack.c.l.b16 %v57
  %v459 = vunpack.c.l.b16 %v58
  %v460 = vunpack.c.l.b16 %v59
  %v461 = vunpack.c.l.b16 %v60
  %v462 = vunpack.c.l.b16 %v61
  %v463 = vunpack.c.l.b16 %v62
  %v464 = vunpack.c.l.b16 %v63
  %v465 = vunpack.c.l.b16 %v64
  %v466 = vunpack.c.l.b16 %v65
  %v467 = vunpack.c.l.b16 %v66
  %v468 = vunpack.c.l.b16 %v67
  %v469 = vunpack.c.l.b16 %v68
  %v470 = vunpack.c.l.b16 %v69
  %v471 = vunpack.c.l.b16 %v70
  %v472 = vunpack.c.l.b16 %v71
  %v473 = vunpack.c.l.b16 %v72
  %v474 = vunpack.c.l.b16 %v73
  %v475 = vunpack.c.l.b16 %v74
  %v476 = vunpack.c.l.b16 %v75
  %v477 = vunpack.c.l.b16 %v76
  %v478 = vunpack.c.l.b16 %v77
  %v479 = vunpack.c.l.b16 %v78
  %v480 = vunpack.c.l.b16 %v79
  %v481 = vunpack.c.l.b16 %v80
  %v482 = vunpack.c.l.b16 %v81
  %v483 = vunpack.c.l.b16 %v82
  %v484 = vunpack.c.l.b16 %v83
  %v485 = vunpack.c.l.b16 %v84
  %v486 = vunpack.c.l.b16 %v85
  %v487 = vunpack.c.l.b16 %v86
  %v488 = vunpack.c.l.b16 %v87
  %v489 = vunpack.c.l.b16 %v88
  %v490 = vunpack.c.l.b16 %v89
  %v491 = vunpack.c.l.b16 %v90
  %v492 = vunpack.c.l.b16 %v91
  %v493 = vunpack.c.l.b16 %v92
  %v494 = vunpack.c.l.b16 %v93
  %v495 = vunpack.c.l.b16 %v94
  %v496 = vunpack.c.l.b16 %v95
  %v497 = vunpack.c.l.b16 %v96
  %v498 = vunpack.c.l.b16 %v97
  %v499 = vunpack.c.l.b16 %v98
  %v500 = vunpack.c.l.b16 %v99
  %v501 = vpack.c.b16 %v454, %v453
  %v502 = vpack.c.b16 %v456, %v455
  %v503 = vpack.c.b16 %v458, %v457
  %v504 = vpack.c.b16 %v460, %v459
  %v505 = vpack.c.b16 %v462, %v461
  %v506 = vpack.c.b16 %v464, %v463
  %v507 = vpack.c.b16 %v466, %v465
  %v508 = vpack.c.b16 %v468, %v467
  %v509 = vpack.c.b16 %v470, %v469
  %v510 = vpack.c.b16 %v472, %v471
  %v511 = vpack.c.b16 %v474, %v473
  %v512 = vpack.c.b16 %v476, %v475
  %v513 = vpack.c.b16 %v478, %v477
  %v514 = vpack.c.b16 %v480, %v479
  %v515 = vpack.c.b16 %v482, %v481
  %v516 = vpack.c.b16 %v484, %v483
  %v517 = vpack.c.b16 %v486, %v485
  %v518 = vpack.c.b16 %v488, %v487
  %v519 = vpack.c.b16 %v490, %v489
  %v520 = vpack.c.b16 %v492, %v491
  %v521 = vpack.c.b16 %v494, %v493
  %v522 = vpack.c.b16 %v496, %v495
  %v523 = vpack.c.b16 %v498, %v497
  %v524 = vpack.c.b16 %v500, %v499
  %549 = vmatpush.bf16.msra.mxu0 %v508
  %550 = vmatpush.bf16.msra.mxu0 %v507
  %551 = vmatpush.bf16.msra.mxu0 %v506
  %552 = vmatpush.bf16.msra.mxu0 %v505
  %553 = vmatpush.bf16.msra.mxu0 %v504
  %554 = vmatpush.bf16.msra.mxu0 %v503
  %555 = vmatpush.bf16.msra.mxu0 %v502
  %556 = vmatpush.bf16.msra.mxu0 %v501
  %557 = vmatmul.bf16.gmra.mxu0 %v357
  %v558 = vpop.f32.mrf.mxu0
  %v559 = vadd.f32 %v238, %v558
  %v560 = vpop.f32.mrf.mxu0
  %v561 = vadd.f32 %v240, %v560
  %562 = vmatmul.bf16.gmra.mxu0 %v360
  %v563 = vpop.f32.mrf.mxu0
  %v564 = vadd.f32 %v243, %v563
  %v565 = vpop.f32.mrf.mxu0
  %v566 = vadd.f32 %v245, %v565
  %567 = vmatmul.bf16.gmra.mxu0 %v363
  %v568 = vpop.f32.mrf.mxu0
  %v569 = vadd.f32 %v248, %v568
  %v570 = vpop.f32.mrf.mxu0
  %v571 = vadd.f32 %v250, %v570
  %572 = vmatmul.bf16.gmra.mxu0 %v366
  %v573 = vpop.f32.mrf.mxu0
  %v574 = vadd.f32 %v253, %v573
  %v575 = vpop.f32.mrf.mxu0
  %v576 = vadd.f32 %v255, %v575
  %577 = vmatmul.bf16.gmra.mxu0 %v369
  %v578 = vpop.f32.mrf.mxu0
  %v579 = vadd.f32 %v258, %v578
  %v580 = vpop.f32.mrf.mxu0
  %v581 = vadd.f32 %v260, %v580
  %582 = vmatmul.bf16.gmra.mxu0 %v372
  %v583 = vpop.f32.mrf.mxu0
  %v584 = vadd.f32 %v263, %v583
  %v585 = vpop.f32.mrf.mxu0
  %v586 = vadd.f32 %v265, %v585
  %587 = vmatmul.bf16.gmra.mxu0 %v375
  %v588 = vpop.f32.mrf.mxu0
  %v589 = vadd.f32 %v268, %v588
  %v590 = vpop.f32.mrf.mxu0
  %v591 = vadd.f32 %v270, %v590
  %592 = vmatmul.bf16.gmra.mxu0 %v378
  %v593 = vpop.f32.mrf.mxu0
  %v594 = vadd.f32 %v273, %v593
  %v595 = vpop.f32.mrf.mxu0
  %v596 = vadd.f32 %v275, %v595
  %597 = vdwg.mxu0
  %598 = vmatpush.bf16.msra.mxu0 %v516
  %599 = vmatpush.bf16.msra.mxu0 %v515
  %600 = vmatpush.bf16.msra.mxu0 %v514
  %601 = vmatpush.bf16.msra.mxu0 %v513
  %602 = vmatpush.bf16.msra.mxu0 %v512
  %603 = vmatpush.bf16.msra.mxu0 %v511
  %604 = vmatpush.bf16.msra.mxu0 %v510
  %605 = vmatpush.bf16.msra.mxu0 %v509
  %606 = vmatmul.bf16.gmra.mxu0 %v358
  %v607 = vpop.f32.mrf.mxu0
  %v608 = vadd.f32 %v559, %v607
  %v609 = vpop.f32.mrf.mxu0
  %v610 = vadd.f32 %v561, %v609
  %611 = vmatmul.bf16.gmra.mxu0 %v361
  %v612 = vpop.f32.mrf.mxu0
  %v613 = vadd.f32 %v564, %v612
  %v614 = vpop.f32.mrf.mxu0
  %v615 = vadd.f32 %v566, %v614
  %616 = vmatmul.bf16.gmra.mxu0 %v364
  %v617 = vpop.f32.mrf.mxu0
  %v618 = vadd.f32 %v569, %v617
  %v619 = vpop.f32.mrf.mxu0
  %v620 = vadd.f32 %v571, %v619
  %621 = vmatmul.bf16.gmra.mxu0 %v367
  %v622 = vpop.f32.mrf.mxu0
  %v623 = vadd.f32 %v574, %v622
  %v624 = vpop.f32.mrf.mxu0
  %v625 = vadd.f32 %v576, %v624
  %626 = vmatmul.bf16.gmra.mxu0 %v370
  %v627 = vpop.f32.mrf.mxu0
  %v628 = vadd.f32 %v579, %v627
  %v629 = vpop.f32.mrf.mxu0
  %v630 = vadd.f32 %v581, %v629
  %631 = vmatmul.bf16.gmra.mxu0 %v373
  %v632 = vpop.f32.mrf.mxu0
  %v633 = vadd.f32 %v584, %v632
  %v634 = vpop.f32.mrf.mxu0
  %v635 = vadd.f32 %v586, %v634
  %636 = vmatmul.bf16.gmra.mxu0 %v376
  %v637 = vpop.f32.mrf.mxu0
  %v638 = vadd.f32 %v589, %v637
  %v639 = vpop.f32.mrf.mxu0
  %v640 = vadd.f32 %v591, %v639
  %641 = vmatmul.bf16.gmra.mxu0 %v379
  %v642 = vpop.f32.mrf.mxu0
  %v643 = vadd.f32 %v594, %v642
  %v644 = vpop.f32.mrf.mxu0
  %v645 = vadd.f32 %v596, %v644
  %646 = vdwg.mxu0
  %647 = vmatpush.bf16.msra.mxu0 %v524
  %648 = vmatpush.bf16.msra.mxu0 %v523
  %649 = vmatpush.bf16.msra.mxu0 %v522
  %650 = vmatpush.bf16.msra.mxu0 %v521
  %651 = vmatpush.bf16.msra.mxu0 %v520
  %652 = vmatpush.bf16.msra.mxu0 %v519
  %653 = vmatpush.bf16.msra.mxu0 %v518
  %654 = vmatpush.bf16.msra.mxu0 %v517
  %655 = vmatmul.bf16.gmra.mxu0 %v359
  %v656 = vpop.f32.mrf.mxu0
  %v657 = vadd.f32 %v608, %v656
  %v658 = vpop.f32.mrf.mxu0
  %v659 = vadd.f32 %v610, %v658
  %660 = vmatmul.bf16.gmra.mxu0 %v362
  %v661 = vpop.f32.mrf.mxu0
  %v662 = vadd.f32 %v613, %v661
  %v663 = vpop.f32.mrf.mxu0
  %v664 = vadd.f32 %v615, %v663
  %665 = vmatmul.bf16.gmra.mxu0 %v365
  %v666 = vpop.f32.mrf.mxu0
  %v667 = vadd.f32 %v618, %v666
  %v668 = vpop.f32.mrf.mxu0
  %v669 = vadd.f32 %v620, %v668
  %670 = vmatmul.bf16.gmra.mxu0 %v368
  %v671 = vpop.f32.mrf.mxu0
  %v672 = vadd.f32 %v623, %v671
  %v673 = vpop.f32.mrf.mxu0
  %v674 = vadd.f32 %v625, %v673
  %675 = vmatmul.bf16.gmra.mxu0 %v371
  %v676 = vpop.f32.mrf.mxu0
  %v677 = vadd.f32 %v628, %v676
  %v678 = vpop.f32.mrf.mxu0
  %v679 = vadd.f32 %v630, %v678
  %680 = vmatmul.bf16.gmra.mxu0 %v374
  %v681 = vpop.f32.mrf.mxu0
  %v682 = vadd.f32 %v633, %v681
  %v683 = vpop.f32.mrf.mxu0
  %v684 = vadd.f32 %v635, %v683
  %685 = vmatmul.bf16.gmra.mxu0 %v377
  %v686 = vpop.f32.mrf.mxu0
  %v687 = vadd.f32 %v638, %v686
  %v688 = vpop.f32.mrf.mxu0
  %v689 = vadd.f32 %v640, %v688
  %690 = vmatmul.bf16.gmra.mxu0 %v380
  %v691 = vpop.f32.mrf.mxu0
  %v692 = vadd.f32 %v643, %v691
  %v693 = vpop.f32.mrf.mxu0
  %v694 = vadd.f32 %v645, %v693
  %695 = vdwg.mxu0
  %v696 = vld [vmem:[%s4] sm:$0x1]
  %v698 = vperm.slane %v696, 0
  %v700 = vadd.f32 %v657, %v698
  %v701 = vadd.f32 %v659, %v698
  %v702 = vadd.f32 %v662, %v698
  %v703 = vadd.f32 %v664, %v698
  %v704 = vadd.f32 %v667, %v698
  %v705 = vadd.f32 %v669, %v698
  %v706 = vadd.f32 %v672, %v698
  %v707 = vadd.f32 %v674, %v698
  %v708 = vadd.f32 %v677, %v698
  %v709 = vadd.f32 %v679, %v698
  %v710 = vadd.f32 %v682, %v698
  %v711 = vadd.f32 %v684, %v698
  %v712 = vadd.f32 %v687, %v698
  %v713 = vadd.f32 %v689, %v698
  %v714 = vadd.f32 %v692, %v698
  %v715 = vadd.f32 %v694, %v698
  %v716 = vmax.f32 %v700, 0.0
  %v717 = vmax.f32 %v701, 0.0
  %v718 = vmax.f32 %v702, 0.0
  %v719 = vmax.f32 %v703, 0.0
  %v720 = vmax.f32 %v704, 0.0
  %v721 = vmax.f32 %v705, 0.0
  %v722 = vmax.f32 %v706, 0.0
  %v723 = vmax.f32 %v707, 0.0
  %v724 = vmax.f32 %v708, 0.0
  %v725 = vmax.f32 %v709, 0.0
  %v726 = vmax.f32 %v710, 0.0
  %v727 = vmax.f32 %v711, 0.0
  %v728 = vmax.f32 %v712, 0.0
  %v729 = vmax.f32 %v713, 0.0
  %v730 = vmax.f32 %v714, 0.0
  %v731 = vmax.f32 %v715, 0.0
  %v732 = vpack.c.bf16 %v716, %v716
  %v733 = vpack.c.bf16 %v717, %v717
  %v734 = vpack.c.bf16 %v718, %v718
  %v735 = vpack.c.bf16 %v719, %v719
  %v736 = vpack.c.bf16 %v720, %v720
  %v737 = vpack.c.bf16 %v721, %v721
  %v738 = vpack.c.bf16 %v722, %v722
  %v739 = vpack.c.bf16 %v723, %v723
  %v740 = vpack.c.bf16 %v724, %v724
  %v741 = vpack.c.bf16 %v725, %v725
  %v742 = vpack.c.bf16 %v726, %v726
  %v743 = vpack.c.bf16 %v727, %v727
  %v744 = vpack.c.bf16 %v728, %v728
  %v745 = vpack.c.bf16 %v729, %v729
  %v746 = vpack.c.bf16 %v730, %v730
  %v747 = vpack.c.bf16 %v731, %v731
  %748 = vst [vmem:[%s5] sm:$0xf] %v732
  %749 = vst [vmem:[%s5 + $0x4] sm:$0xf] %v733
  %750 = vst [vmem:[%s5 + $0x8] sm:$0xf] %v734
  %751 = vst [vmem:[%s5 + $0xc] sm:$0xf] %v735
  %752 = vst [vmem:[%s5 + $0x10] sm:$0xf] %v736
  %753 = vst [vmem:[%s5 + $0x14] sm:$0xf] %v737
  %754 = vst [vmem:[%s5 + $0x18] sm:$0xf] %v738
  %755 = vst [vmem:[%s5 + $0x1c] sm:$0xf] %v739
  %756 = vst [vmem:[%s5 + $0x20] sm:$0xf] %v740
  %757 = vst [vmem:[%s5 + $0x24] sm:$0xf] %v741
  %758 = vst [vmem:[%s5 + $0x28] sm:$0xf] %v742
  %759 = vst [vmem:[%s5 + $0x2c] sm:$0xf] %v743
  %760 = vst [vmem:[%s5 + $0x30] sm:$0xf] %v744
  %761 = vst [vmem:[%s5 + $0x34] sm:$0xf] %v745
  %762 = vst [vmem:[%s5 + $0x38] sm:$0xf] %v746
  %763 = vst [vmem:[%s5 + $0x3c] sm:$0xf] %v747
  // Predicated region
  $region22: #{resnet_segmentation_forward.25} parent=0 // pred_check
    _
  $region23: #{resnet_segmentation_forward.25} parent=0 // pred_check_branch
    %765 = sbr.rel (0) target = $region25
  $region24: #{resnet_segmentation_forward.25} parent=0 // pred_region
    _
  $region25: #{resnet_segmentation_forward.25} parent=0 // pred_fallthru
    _
  // Predicated region
  $region26: #{resnet_segmentation_forward.25} parent=0 // pred_check
    _
  $region27: #{resnet_segmentation_forward.25} parent=0 // pred_check_branch
    %767 = sbr.rel (0) target = $region29
  $region28: #{resnet_segmentation_forward.25} parent=0 // pred_region
    _
  $region29: #{resnet_segmentation_forward.25} parent=0 // pred_fallthru
    _

// kernel: tile.8
$region0: #{tile.8}
  #allocation0 [shape = 's32[1]{0}', space=sflag, size = 0x4, scoped, tag = 'scoped memory for tile.8']
  %s0 = inlined_call_operand.vmem [shape: f32[32], index: 0, kind: input, shape index: {}]
  %s1 = inlined_call_operand.vmem [shape: f32[2,32], index: 1, kind: output, shape index: {}]
  // Predicated region
  $region2: #{tile.8} parent=0 // pred_check
    _
  $region3: #{tile.8} parent=0 // pred_check_branch
    %3 = sbr.rel (0) target = $region5
  $region4: #{tile.8} parent=0 // pred_region
    _
  $region5: #{tile.8} parent=0 // pred_fallthru
    _
  %v4 = vld [vmem:[%s0] ss:$0 sm:$0xff]
  %5 = vst [vmem:[%s1] sm:$0x3] %v4

// kernel: tile.0
$region0: #{tile.0}
  %s0 = inlined_call_operand.vmem [shape: f32[2,32], index: 0, kind: input, shape index: {}]
  %s1 = inlined_call_operand.vmem [shape: f32[64,1], index: 1, kind: output, shape index: {}]
  $region1: #{tile.0} parent=0
    #allocation0 [shape = 'u8[4096]{0}', space=vmem, size = 0x1000, scoped, tag = 'scoped mem for input reshape']
    %s3 = ssub.s32 4, 1
    %v4 = vld [vmem:[%s0] sm:%s3]
    %5 = vst [vmem:[#allocation0] sm:%s3] %v4
    %v6 = vld [vmem:[#allocation0] sm:$0x3]
    %vm7 = vcmask 7168
    %8 = vst.msk [vmem:[%s1] sm:$0x1] %vm7, %v6
    %s9 = scalar_lea.vmem %s1, 31
    %10 = vst.msk [vmem:[%s9] sm:$0x2] %vm7, %v6
    %v11 = vld [vmem:[#allocation0] sm:$0x3]
    %12 = vrot.lane.b32.xlu0 %v11, 127
    %v13 = vpop.permute.xlu0 %12
    %vm14 = vcmask 7168
    %s15 = scalar_lea.vmem %s1, 1
    %16 = vst.msk [vmem:[%s15] sm:$0x1] %vm14, %v13
    %s17 = scalar_lea.vmem %s1, 32
    %18 = vst.msk [vmem:[%s17] sm:$0x2] %vm14, %v13
    %v19 = vld [vmem:[#allocation0] sm:$0x3]
    %20 = vrot.lane.b32.xlu0 %v19, 126
    %v21 = vpop.permute.xlu0 %20
    %vm22 = vcmask 7168
    %s23 = scalar_lea.vmem %s1, 2
    %24 = vst.msk [vmem:[%s23] sm:$0x1] %vm22, %v21
    %s25 = scalar_lea.vmem %s1, 33
    %26 = vst.msk [vmem:[%s25] sm:$0x2] %vm22, %v21
    %v27 = vld [vmem:[#allocation0] sm:$0x3]
    %28 = vrot.lane.b32.xlu0 %v27, 125
    %v29 = vpop.permute.xlu0 %28
    %vm30 = vcmask 7168
    %s31 = scalar_lea.vmem %s1, 3
    %32 = vst.msk [vmem:[%s31] sm:$0x1] %vm30, %v29
    %s33 = scalar_lea.vmem %s1, 34
    %34 = vst.msk [vmem:[%s33] sm:$0x2] %vm30, %v29
    %v35 = vld [vmem:[#allocation0] sm:$0x3]
    %36 = vrot.lane.b32.xlu0 %v35, 124
    %v37 = vpop.permute.xlu0 %36
    %vm38 = vcmask 7168
    %s39 = scalar_lea.vmem %s1, 4
    %40 = vst.msk [vmem:[%s39] sm:$0x1] %vm38, %v37
    %s41 = scalar_lea.vmem %s1, 35
    %42 = vst.msk [vmem:[%s41] sm:$0x2] %vm38, %v37
    %v43 = vld [vmem:[#allocation0] sm:$0x3]
    %44 = vrot.lane.b32.xlu0 %v43, 123
    %v45 = vpop.permute.xlu0 %44
    %vm46 = vcmask 7168
    %s47 = scalar_lea.vmem %s1, 5
    %48 = vst.msk [vmem:[%s47] sm:$0x1] %vm46, %v45
    %s49 = scalar_lea.vmem %s1, 36
    %50 = vst.msk [vmem:[%s49] sm:$0x2] %vm46, %v45
    %v51 = vld [vmem:[#allocation0] sm:$0x3]
    %52 = vrot.lane.b32.xlu0 %v51, 122
    %v53 = vpop.permute.xlu0 %52
    %vm54 = vcmask 7168
    %s55 = scalar_lea.vmem %s1, 6
    %56 = vst.msk [vmem:[%s55] sm:$0x1] %vm54, %v53
    %s57 = scalar_lea.vmem %s1, 37
    %58 = vst.msk [vmem:[%s57] sm:$0x2] %vm54, %v53
    %v59 = vld [vmem:[#allocation0] sm:$0x3]
    %60 = vrot.lane.b32.xlu0 %v59, 121
    %v61 = vpop.permute.xlu0 %60
    %vm62 = vcmask 7168
    %s63 = scalar_lea.vmem %s1, 7
    %64 = vst.msk [vmem:[%s63] sm:$0x1] %vm62, %v61
    %s65 = scalar_lea.vmem %s1, 38
    %66 = vst.msk [vmem:[%s65] sm:$0x2] %vm62, %v61
    %v67 = vld [vmem:[#allocation0] sm:$0x3]
    %68 = vrot.lane.b32.xlu0 %v67, 120
    %v69 = vpop.permute.xlu0 %68
    %vm70 = vcmask 7168
    %s71 = scalar_lea.vmem %s1, 8
    %72 = vst.msk [vmem:[%s71] sm:$0x1] %vm70, %v69
    %s73 = scalar_lea.vmem %s1, 39
    %74 = vst.msk [vmem:[%s73] sm:$0x2] %vm70, %v69
    %v75 = vld [vmem:[#allocation0] sm:$0x3]
    %76 = vrot.lane.b32.xlu0 %v75, 119
    %v77 = vpop.permute.xlu0 %76
    %vm78 = vcmask 7168
    %s79 = scalar_lea.vmem %s1, 9
    %80 = vst.msk [vmem:[%s79] sm:$0x1] %vm78, %v77
    %s81 = scalar_lea.vmem %s1, 40
    %82 = vst.msk [vmem:[%s81] sm:$0x2] %vm78, %v77
    %v83 = vld [vmem:[#allocation0] sm:$0x3]
    %84 = vrot.lane.b32.xlu0 %v83, 118
    %v85 = vpop.permute.xlu0 %84
    %vm86 = vcmask 7168
    %s87 = scalar_lea.vmem %s1, 10
    %88 = vst.msk [vmem:[%s87] sm:$0x1] %vm86, %v85
    %s89 = scalar_lea.vmem %s1, 41
    %90 = vst.msk [vmem:[%s89] sm:$0x2] %vm86, %v85
    %v91 = vld [vmem:[#allocation0] sm:$0x3]
    %92 = vrot.lane.b32.xlu0 %v91, 117
    %v93 = vpop.permute.xlu0 %92
    %vm94 = vcmask 7168
    %s95 = scalar_lea.vmem %s1, 11
    %96 = vst.msk [vmem:[%s95] sm:$0x1] %vm94, %v93
    %s97 = scalar_lea.vmem %s1, 42
    %98 = vst.msk [vmem:[%s97] sm:$0x2] %vm94, %v93
    %v99 = vld [vmem:[#allocation0] sm:$0x3]
    %100 = vrot.lane.b32.xlu0 %v99, 116
    %v101 = vpop.permute.xlu0 %100
    %vm102 = vcmask 7168
    %s103 = scalar_lea.vmem %s1, 12
    %104 = vst.msk [vmem:[%s103] sm:$0x1] %vm102, %v101
    %s105 = scalar_lea.vmem %s1, 43
    %106 = vst.msk [vmem:[%s105] sm:$0x2] %vm102, %v101
    %v107 = vld [vmem:[#allocation0] sm:$0x3]
    %108 = vrot.lane.b32.xlu0 %v107, 115
    %v109 = vpop.permute.xlu0 %108
    %vm110 = vcmask 7168
    %s111 = scalar_lea.vmem %s1, 13
    %112 = vst.msk [vmem:[%s111] sm:$0x1] %vm110, %v109
    %s113 = scalar_lea.vmem %s1, 44
    %114 = vst.msk [vmem:[%s113] sm:$0x2] %vm110, %v109
    %v115 = vld [vmem:[#allocation0] sm:$0x3]
    %116 = vrot.lane.b32.xlu0 %v115, 114
    %v117 = vpop.permute.xlu0 %116
    %vm118 = vcmask 7168
    %s119 = scalar_lea.vmem %s1, 14
    %120 = vst.msk [vmem:[%s119] sm:$0x1] %vm118, %v117
    %s121 = scalar_lea.vmem %s1, 45
    %122 = vst.msk [vmem:[%s121] sm:$0x2] %vm118, %v117
    %v123 = vld [vmem:[#allocation0] sm:$0x3]
    %124 = vrot.lane.b32.xlu0 %v123, 113
    %v125 = vpop.permute.xlu0 %124
    %vm126 = vcmask 7168
    %s127 = scalar_lea.vmem %s1, 15
    %128 = vst.msk [vmem:[%s127] sm:$0x1] %vm126, %v125
    %s129 = scalar_lea.vmem %s1, 46
    %130 = vst.msk [vmem:[%s129] sm:$0x2] %vm126, %v125
    %v131 = vld [vmem:[#allocation0] sm:$0x3]
    %132 = vrot.lane.b32.xlu0 %v131, 112
    %v133 = vpop.permute.xlu0 %132
    %vm134 = vcmask 7168
    %s135 = scalar_lea.vmem %s1, 16
    %136 = vst.msk [vmem:[%s135] sm:$0x1] %vm134, %v133
    %s137 = scalar_lea.vmem %s1, 47
    %138 = vst.msk [vmem:[%s137] sm:$0x2] %vm134, %v133
    %v139 = vld [vmem:[#allocation0] sm:$0x3]
    %140 = vrot.lane.b32.xlu0 %v139, 111
    %v141 = vpop.permute.xlu0 %140
    %vm142 = vcmask 7168
    %s143 = scalar_lea.vmem %s1, 17
    %144 = vst.msk [vmem:[%s143] sm:$0x1] %vm142, %v141
    %s145 = scalar_lea.vmem %s1, 48
    %146 = vst.msk [vmem:[%s145] sm:$0x2] %vm142, %v141
    %v147 = vld [vmem:[#allocation0] sm:$0x3]
    %148 = vrot.lane.b32.xlu0 %v147, 110
    %v149 = vpop.permute.xlu0 %148
    %vm150 = vcmask 7168
    %s151 = scalar_lea.vmem %s1, 18
    %152 = vst.msk [vmem:[%s151] sm:$0x1] %vm150, %v149
    %s153 = scalar_lea.vmem %s1, 49
    %154 = vst.msk [vmem:[%s153] sm:$0x2] %vm150, %v149
    %v155 = vld [vmem:[#allocation0] sm:$0x3]
    %156 = vrot.lane.b32.xlu0 %v155, 109
    %v157 = vpop.permute.xlu0 %156
    %vm158 = vcmask 7168
    %s159 = scalar_lea.vmem %s1, 19
    %160 = vst.msk [vmem:[%s159] sm:$0x1] %vm158, %v157
    %s161 = scalar_lea.vmem %s1, 50
    %162 = vst.msk [vmem:[%s161] sm:$0x2] %vm158, %v157
    %v163 = vld [vmem:[#allocation0] sm:$0x3]
    %164 = vrot.lane.b32.xlu0 %v163, 108
    %v165 = vpop.permute.xlu0 %164
    %vm166 = vcmask 7168
    %s167 = scalar_lea.vmem %s1, 20
    %168 = vst.msk [vmem:[%s167] sm:$0x1] %vm166, %v165
    %s169 = scalar_lea.vmem %s1, 51
    %170 = vst.msk [vmem:[%s169] sm:$0x2] %vm166, %v165
    %v171 = vld [vmem:[#allocation0] sm:$0x3]
    %172 = vrot.lane.b32.xlu0 %v171, 107
    %v173 = vpop.permute.xlu0 %172
    %vm174 = vcmask 7168
    %s175 = scalar_lea.vmem %s1, 21
    %176 = vst.msk [vmem:[%s175] sm:$0x1] %vm174, %v173
    %s177 = scalar_lea.vmem %s1, 52
    %178 = vst.msk [vmem:[%s177] sm:$0x2] %vm174, %v173
    %v179 = vld [vmem:[#allocation0] sm:$0x3]
    %180 = vrot.lane.b32.xlu0 %v179, 106
    %v181 = vpop.permute.xlu0 %180
    %vm182 = vcmask 7168
    %s183 = scalar_lea.vmem %s1, 22
    %184 = vst.msk [vmem:[%s183] sm:$0x1] %vm182, %v181
    %s185 = scalar_lea.vmem %s1, 53
    %186 = vst.msk [vmem:[%s185] sm:$0x2] %vm182, %v181
    %v187 = vld [vmem:[#allocation0] sm:$0x3]
    %188 = vrot.lane.b32.xlu0 %v187, 105
    %v189 = vpop.permute.xlu0 %188
    %vm190 = vcmask 7168
    %s191 = scalar_lea.vmem %s1, 23
    %192 = vst.msk [vmem:[%s191] sm:$0x1] %vm190, %v189
    %s193 = scalar_lea.vmem %s1, 54
    %194 = vst.msk [vmem:[%s193] sm:$0x2] %vm190, %v189
    %v195 = vld [vmem:[#allocation0] sm:$0x3]
    %196 = vrot.lane.b32.xlu0 %v195, 104
    %v197 = vpop.permute.xlu0 %196
    %vm198 = vcmask 7168
    %s199 = scalar_lea.vmem %s1, 24
    %200 = vst.msk [vmem:[%s199] sm:$0x1] %vm198, %v197
    %s201 = scalar_lea.vmem %s1, 55
    %202 = vst.msk [vmem:[%s201] sm:$0x2] %vm198, %v197
    %v203 = vld [vmem:[#allocation0] sm:$0x3]
    %204 = vrot.lane.b32.xlu0 %v203, 103
    %v205 = vpop.permute.xlu0 %204
    %vm206 = vcmask 7168
    %s207 = scalar_lea.vmem %s1, 25
    %208 = vst.msk [vmem:[%s207] sm:$0x1] %vm206, %v205
    %s209 = scalar_lea.vmem %s1, 56
    %210 = vst.msk [vmem:[%s209] sm:$0x2] %vm206, %v205
    %v211 = vld [vmem:[#allocation0] sm:$0x3]
    %212 = vrot.lane.b32.xlu0 %v211, 102
    %v213 = vpop.permute.xlu0 %212
    %vm214 = vcmask 7168
    %s215 = scalar_lea.vmem %s1, 26
    %216 = vst.msk [vmem:[%s215] sm:$0x1] %vm214, %v213
    %s217 = scalar_lea.vmem %s1, 57
    %218 = vst.msk [vmem:[%s217] sm:$0x2] %vm214, %v213
    %v219 = vld [vmem:[#allocation0] sm:$0x3]
    %220 = vrot.lane.b32.xlu0 %v219, 101
    %v221 = vpop.permute.xlu0 %220
    %vm222 = vcmask 7168
    %s223 = scalar_lea.vmem %s1, 27
    %224 = vst.msk [vmem:[%s223] sm:$0x1] %vm222, %v221
    %s225 = scalar_lea.vmem %s1, 58
    %226 = vst.msk [vmem:[%s225] sm:$0x2] %vm222, %v221
    %v227 = vld [vmem:[#allocation0] sm:$0x3]
    %228 = vrot.lane.b32.xlu0 %v227, 100
    %v229 = vpop.permute.xlu0 %228
    %vm230 = vcmask 7168
    %s231 = scalar_lea.vmem %s1, 28
    %232 = vst.msk [vmem:[%s231] sm:$0x1] %vm230, %v229
    %s233 = scalar_lea.vmem %s1, 59
    %234 = vst.msk [vmem:[%s233] sm:$0x2] %vm230, %v229
    %v235 = vld [vmem:[#allocation0] sm:$0x3]
    %236 = vrot.lane.b32.xlu0 %v235, 99
    %v237 = vpop.permute.xlu0 %236
    %vm238 = vcmask 7168
    %s239 = scalar_lea.vmem %s1, 29
    %240 = vst.msk [vmem:[%s239] sm:$0x1] %vm238, %v237
    %s241 = scalar_lea.vmem %s1, 60
    %242 = vst.msk [vmem:[%s241] sm:$0x2] %vm238, %v237
    %v243 = vld [vmem:[#allocation0] sm:$0x3]
    %244 = vrot.lane.b32.xlu0 %v243, 98
    %v245 = vpop.permute.xlu0 %244
    %vm246 = vcmask 7168
    %s247 = scalar_lea.vmem %s1, 30
    %248 = vst.msk [vmem:[%s247] sm:$0x1] %vm246, %v245
    %s249 = scalar_lea.vmem %s1, 61
    %250 = vst.msk [vmem:[%s249] sm:$0x2] %vm246, %v245
    %v251 = vld [vmem:[#allocation0] sm:$0x3]
    %252 = vrot.lane.b32.xlu0 %v251, 97
    %v253 = vpop.permute.xlu0 %252
    %vm254 = vcmask 7168
    %s255 = scalar_lea.vmem %s1, 31
    %256 = vst.msk [vmem:[%s255] sm:$0x1] %vm254, %v253
    %s257 = scalar_lea.vmem %s1, 62
    %258 = vst.msk [vmem:[%s257] sm:$0x2] %vm254, %v253

// kernel: resnet_segmentation_forward.26
$region0: #{resnet_segmentation_forward.26}
  #allocation0 [shape = 'u32[]', space=smem, size = 0x4, offset = 0x4, fixed_abs, tag = 'smem constant byte address 0x4 - core index']
  #allocation1 [shape = 'u32[72,128]{1,0:T(1,128)}', space=vmem, size = 0x9000, scoped, tag = 'internal scratch']
  %s0 = inlined_call_operand.vmem [shape: bf16[64,512], index: 0, kind: input, shape index: {}]
  %s1 = inlined_call_operand.vmem [shape: bf16[64,512], index: 1, kind: input, shape index: {}]
  %s2 = inlined_call_operand.vmem [shape: bf16[64,512], index: 2, kind: input, shape index: {}]
  %s3 = inlined_call_operand.vmem [shape: bf16[64,512], index: 3, kind: input, shape index: {}]
  %s4 = inlined_call_operand.vmem [shape: f32[64,1], index: 4, kind: input, shape index: {}]
  %s5 = inlined_call_operand.vmem [shape: f32[1,512], index: 5, kind: input, shape index: {}]
  %s6 = inlined_call_operand.vmem [shape: bf16[64,512], index: 6, kind: output, shape index: {}]
  %s7 = sld [smem:[#allocation0]]
  $region34: #{resnet_segmentation_forward.26} parent=0
    _
  %s9 = ssub.s32 1, %s7
  %s10 = scalar_select 0, %s9, %s7
  // Predicated region
  $region2: #{resnet_segmentation_forward.26} parent=0 // pred_check
    _
  $region3: #{resnet_segmentation_forward.26} parent=0 // pred_check_branch
    %12 = sbr.rel (0) target = $region5
  $region4: #{resnet_segmentation_forward.26} parent=0 // pred_region
    _
  $region5: #{resnet_segmentation_forward.26} parent=0 // pred_fallthru
    _
  // Predicated region
  $region6: #{resnet_segmentation_forward.26} parent=0 // pred_check
    _
  $region7: #{resnet_segmentation_forward.26} parent=0 // pred_check_branch
    %14 = sbr.rel (0) target = $region9
  $region8: #{resnet_segmentation_forward.26} parent=0 // pred_region
    _
  $region9: #{resnet_segmentation_forward.26} parent=0 // pred_fallthru
    _
  // Predicated region
  $region10: #{resnet_segmentation_forward.26} parent=0 // pred_check
    _
  $region11: #{resnet_segmentation_forward.26} parent=0 // pred_check_branch
    %16 = sbr.rel (0) target = $region13
  $region12: #{resnet_segmentation_forward.26} parent=0 // pred_region
    _
  $region13: #{resnet_segmentation_forward.26} parent=0 // pred_fallthru
    _
  // Predicated region
  $region14: #{resnet_segmentation_forward.26} parent=0 // pred_check
    _
  $region15: #{resnet_segmentation_forward.26} parent=0 // pred_check_branch
    %18 = sbr.rel (0) target = $region17
  $region16: #{resnet_segmentation_forward.26} parent=0 // pred_region
    _
  $region17: #{resnet_segmentation_forward.26} parent=0 // pred_fallthru
    _
  // Predicated region
  $region18: #{resnet_segmentation_forward.26} parent=0 // pred_check
    _
  $region19: #{resnet_segmentation_forward.26} parent=0 // pred_check_branch
    %20 = sbr.rel (0) target = $region21
  $region20: #{resnet_segmentation_forward.26} parent=0 // pred_region
    _
  $region21: #{resnet_segmentation_forward.26} parent=0 // pred_fallthru
    _
  // Predicated region
  $region22: #{resnet_segmentation_forward.26} parent=0 // pred_check
    _
  $region23: #{resnet_segmentation_forward.26} parent=0 // pred_check_branch
    %22 = sbr.rel (0) target = $region25
  $region24: #{resnet_segmentation_forward.26} parent=0 // pred_region
    _
  $region25: #{resnet_segmentation_forward.26} parent=0 // pred_fallthru
    _
  %v23 = vld [vmem:[%s4] sm:$0xff]
  %v24 = vld [vmem:[%s4 + $0x8] sm:$0xff]
  %v25 = vld [vmem:[%s4 + $0x10] sm:$0xff]
  %v26 = vld [vmem:[%s4 + $0x18] sm:$0xff]
  %v27 = vld [vmem:[%s4 + $0x20] sm:$0xff]
  %v28 = vld [vmem:[%s4 + $0x28] sm:$0xff]
  %v29 = vld [vmem:[%s4 + $0x30] sm:$0xff]
  %v30 = vld [vmem:[%s4 + $0x38] sm:$0xff]
  %v31 = vld [vmem:[%s5] sm:$0xf]
  %v32 = vsub.f32 1.0, %v23
  %v33 = vsub.f32 1.0, %v24
  %v34 = vsub.f32 1.0, %v25
  %v35 = vsub.f32 1.0, %v26
  %v36 = vsub.f32 1.0, %v27
  %v37 = vsub.f32 1.0, %v28
  %v38 = vsub.f32 1.0, %v29
  %v39 = vsub.f32 1.0, %v30
  %v40 = vsub.f32 1.0, %v31
  %v41 = vld [vmem:[%s0] sm:$0xff]
  %v42 = vld [vmem:[%s0 + $0x8] sm:$0xff]
  %v43 = vld [vmem:[%s0 + $0x10] sm:$0xff]
  %v44 = vld [vmem:[%s0 + $0x18] sm:$0xff]
  %v45 = vld [vmem:[%s0 + $0x20] sm:$0xff]
  %v46 = vld [vmem:[%s0 + $0x28] sm:$0xff]
  %v47 = vld [vmem:[%s0 + $0x30] sm:$0xff]
  %v48 = vld [vmem:[%s0 + $0x38] sm:$0xff]
  %v49 = vld [vmem:[%s0 + $0x40] sm:$0xff]
  %v50 = vld [vmem:[%s0 + $0x48] sm:$0xff]
  %v51 = vld [vmem:[%s0 + $0x50] sm:$0xff]
  %v52 = vld [vmem:[%s0 + $0x58] sm:$0xff]
  %v53 = vld [vmem:[%s0 + $0x60] sm:$0xff]
  %v54 = vld [vmem:[%s0 + $0x68] sm:$0xff]
  %v55 = vld [vmem:[%s0 + $0x70] sm:$0xff]
  %v56 = vld [vmem:[%s0 + $0x78] sm:$0xff]
  %v57 = vunpack.c.l.bf16 %v41
  %v58 = vunpack.c.h.bf16 %v41
  %v59 = vunpack.c.l.bf16 %v42
  %v60 = vunpack.c.h.bf16 %v42
  %v61 = vunpack.c.l.bf16 %v43
  %v62 = vunpack.c.h.bf16 %v43
  %v63 = vunpack.c.l.bf16 %v44
  %v64 = vunpack.c.h.bf16 %v44
  %v65 = vunpack.c.l.bf16 %v45
  %v66 = vunpack.c.h.bf16 %v45
  %v67 = vunpack.c.l.bf16 %v46
  %v68 = vunpack.c.h.bf16 %v46
  %v69 = vunpack.c.l.bf16 %v47
  %v70 = vunpack.c.h.bf16 %v47
  %v71 = vunpack.c.l.bf16 %v48
  %v72 = vunpack.c.h.bf16 %v48
  %v73 = vunpack.c.l.bf16 %v49
  %v74 = vunpack.c.h.bf16 %v49
  %v75 = vunpack.c.l.bf16 %v50
  %v76 = vunpack.c.h.bf16 %v50
  %v77 = vunpack.c.l.bf16 %v51
  %v78 = vunpack.c.h.bf16 %v51
  %v79 = vunpack.c.l.bf16 %v52
  %v80 = vunpack.c.h.bf16 %v52
  %v81 = vunpack.c.l.bf16 %v53
  %v82 = vunpack.c.h.bf16 %v53
  %v83 = vunpack.c.l.bf16 %v54
  %v84 = vunpack.c.h.bf16 %v54
  %v85 = vunpack.c.l.bf16 %v55
  %v86 = vunpack.c.h.bf16 %v55
  %v87 = vunpack.c.l.bf16 %v56
  %v88 = vunpack.c.h.bf16 %v56
  %90 = vset.pattern.permute.xlu0 0
  %91 = vperm.xlu0 %90, %v32
  %v92 = vpop.permute.xlu0 %91
  %95 = vset.pattern.permute.xlu0 0
  %96 = vperm.xlu0 %95, %v33
  %v97 = vpop.permute.xlu0 %96
  %100 = vset.pattern.permute.xlu0 0
  %101 = vperm.xlu0 %100, %v34
  %v102 = vpop.permute.xlu0 %101
  %105 = vset.pattern.permute.xlu0 0
  %106 = vperm.xlu0 %105, %v35
  %v107 = vpop.permute.xlu0 %106
  %110 = vset.pattern.permute.xlu0 0
  %111 = vperm.xlu0 %110, %v36
  %v112 = vpop.permute.xlu0 %111
  %115 = vset.pattern.permute.xlu0 0
  %116 = vperm.xlu0 %115, %v37
  %v117 = vpop.permute.xlu0 %116
  %120 = vset.pattern.permute.xlu0 0
  %121 = vperm.xlu0 %120, %v38
  %v122 = vpop.permute.xlu0 %121
  %125 = vset.pattern.permute.xlu0 0
  %126 = vperm.xlu0 %125, %v39
  %v127 = vpop.permute.xlu0 %126
  %v130 = vperm.slane %v40, 0
  %v131 = vperm.slane %v40, 1
  %v132 = vperm.slane %v40, 2
  %v133 = vperm.slane %v40, 3
  %v138 = vmul.f32 %v92, %v130
  %v139 = vmul.f32 %v92, %v131
  %v140 = vmul.f32 %v92, %v132
  %v141 = vmul.f32 %v92, %v133
  %v142 = vmul.f32 %v97, %v130
  %v143 = vmul.f32 %v97, %v131
  %v144 = vmul.f32 %v97, %v132
  %v145 = vmul.f32 %v97, %v133
  %v146 = vmul.f32 %v102, %v130
  %v147 = vmul.f32 %v102, %v131
  %v148 = vmul.f32 %v102, %v132
  %v149 = vmul.f32 %v102, %v133
  %v150 = vmul.f32 %v107, %v130
  %v151 = vmul.f32 %v107, %v131
  %v152 = vmul.f32 %v107, %v132
  %v153 = vmul.f32 %v107, %v133
  %v154 = vmul.f32 %v112, %v130
  %v155 = vmul.f32 %v112, %v131
  %v156 = vmul.f32 %v112, %v132
  %v157 = vmul.f32 %v112, %v133
  %v158 = vmul.f32 %v117, %v130
  %v159 = vmul.f32 %v117, %v131
  %v160 = vmul.f32 %v117, %v132
  %v161 = vmul.f32 %v117, %v133
  %v162 = vmul.f32 %v122, %v130
  %v163 = vmul.f32 %v122, %v131
  %v164 = vmul.f32 %v122, %v132
  %v165 = vmul.f32 %v122, %v133
  %v166 = vmul.f32 %v127, %v130
  %v167 = vmul.f32 %v127, %v131
  %v168 = vmul.f32 %v127, %v132
  %v169 = vmul.f32 %v127, %v133
  %v170 = vmul.f32 %v57, %v138
  %v171 = vmul.f32 %v58, %v139
  %v172 = vmul.f32 %v59, %v140
  %v173 = vmul.f32 %v60, %v141
  %v174 = vmul.f32 %v61, %v142
  %v175 = vmul.f32 %v62, %v143
  %v176 = vmul.f32 %v63, %v144
  %v177 = vmul.f32 %v64, %v145
  %v178 = vmul.f32 %v65, %v146
  %v179 = vmul.f32 %v66, %v147
  %v180 = vmul.f32 %v67, %v148
  %v181 = vmul.f32 %v68, %v149
  %v182 = vmul.f32 %v69, %v150
  %v183 = vmul.f32 %v70, %v151
  %v184 = vmul.f32 %v71, %v152
  %v185 = vmul.f32 %v72, %v153
  %v186 = vmul.f32 %v73, %v154
  %v187 = vmul.f32 %v74, %v155
  %v188 = vmul.f32 %v75, %v156
  %v189 = vmul.f32 %v76, %v157
  %v190 = vmul.f32 %v77, %v158
  %v191 = vmul.f32 %v78, %v159
  %v192 = vmul.f32 %v79, %v160
  %v193 = vmul.f32 %v80, %v161
  %v194 = vmul.f32 %v81, %v162
  %v195 = vmul.f32 %v82, %v163
  %v196 = vmul.f32 %v83, %v164
  %v197 = vmul.f32 %v84, %v165
  %v198 = vmul.f32 %v85, %v166
  %v199 = vmul.f32 %v86, %v167
  %v200 = vmul.f32 %v87, %v168
  %v201 = vmul.f32 %v88, %v169
  %v202 = vld [vmem:[%s1] sm:$0xff]
  %v203 = vld [vmem:[%s1 + $0x8] sm:$0xff]
  %v204 = vld [vmem:[%s1 + $0x10] sm:$0xff]
  %v205 = vld [vmem:[%s1 + $0x18] sm:$0xff]
  %v206 = vld [vmem:[%s1 + $0x20] sm:$0xff]
  %v207 = vld [vmem:[%s1 + $0x28] sm:$0xff]
  %v208 = vld [vmem:[%s1 + $0x30] sm:$0xff]
  %v209 = vld [vmem:[%s1 + $0x38] sm:$0xff]
  %v210 = vld [vmem:[%s1 + $0x40] sm:$0xff]
  %v211 = vld [vmem:[%s1 + $0x48] sm:$0xff]
  %v212 = vld [vmem:[%s1 + $0x50] sm:$0xff]
  %v213 = vld [vmem:[%s1 + $0x58] sm:$0xff]
  %v214 = vld [vmem:[%s1 + $0x60] sm:$0xff]
  %v215 = vld [vmem:[%s1 + $0x68] sm:$0xff]
  %v216 = vld [vmem:[%s1 + $0x70] sm:$0xff]
  %v217 = vld [vmem:[%s1 + $0x78] sm:$0xff]
  %v218 = vunpack.c.l.bf16 %v202
  %v219 = vunpack.c.h.bf16 %v202
  %v220 = vunpack.c.l.bf16 %v203
  %v221 = vunpack.c.h.bf16 %v203
  %v222 = vunpack.c.l.bf16 %v204
  %v223 = vunpack.c.h.bf16 %v204
  %v224 = vunpack.c.l.bf16 %v205
  %v225 = vunpack.c.h.bf16 %v205
  %v226 = vunpack.c.l.bf16 %v206
  %v227 = vunpack.c.h.bf16 %v206
  %v228 = vunpack.c.l.bf16 %v207
  %v229 = vunpack.c.h.bf16 %v207
  %v230 = vunpack.c.l.bf16 %v208
  %v231 = vunpack.c.h.bf16 %v208
  %v232 = vunpack.c.l.bf16 %v209
  %v233 = vunpack.c.h.bf16 %v209
  %v234 = vunpack.c.l.bf16 %v210
  %v235 = vunpack.c.h.bf16 %v210
  %v236 = vunpack.c.l.bf16 %v211
  %v237 = vunpack.c.h.bf16 %v211
  %v238 = vunpack.c.l.bf16 %v212
  %v239 = vunpack.c.h.bf16 %v212
  %v240 = vunpack.c.l.bf16 %v213
  %v241 = vunpack.c.h.bf16 %v213
  %v242 = vunpack.c.l.bf16 %v214
  %v243 = vunpack.c.h.bf16 %v214
  %v244 = vunpack.c.l.bf16 %v215
  %v245 = vunpack.c.h.bf16 %v215
  %v246 = vunpack.c.l.bf16 %v216
  %v247 = vunpack.c.h.bf16 %v216
  %v248 = vunpack.c.l.bf16 %v217
  %v249 = vunpack.c.h.bf16 %v217
  %v251 = vperm.slane %v31, 0
  %v252 = vperm.slane %v31, 1
  %v253 = vperm.slane %v31, 2
  %v254 = vperm.slane %v31, 3
  %v259 = vmul.f32 %v92, %v251
  %v260 = vmul.f32 %v92, %v252
  %v261 = vmul.f32 %v92, %v253
  %v262 = vmul.f32 %v92, %v254
  %v263 = vmul.f32 %v97, %v251
  %v264 = vmul.f32 %v97, %v252
  %v265 = vmul.f32 %v97, %v253
  %v266 = vmul.f32 %v97, %v254
  %v267 = vmul.f32 %v102, %v251
  %v268 = vmul.f32 %v102, %v252
  %v269 = vmul.f32 %v102, %v253
  %v270 = vmul.f32 %v102, %v254
  %v271 = vmul.f32 %v107, %v251
  %v272 = vmul.f32 %v107, %v252
  %v273 = vmul.f32 %v107, %v253
  %v274 = vmul.f32 %v107, %v254
  %v275 = vmul.f32 %v112, %v251
  %v276 = vmul.f32 %v112, %v252
  %v277 = vmul.f32 %v112, %v253
  %v278 = vmul.f32 %v112, %v254
  %v279 = vmul.f32 %v117, %v251
  %v280 = vmul.f32 %v117, %v252
  %v281 = vmul.f32 %v117, %v253
  %v282 = vmul.f32 %v117, %v254
  %v283 = vmul.f32 %v122, %v251
  %v284 = vmul.f32 %v122, %v252
  %v285 = vmul.f32 %v122, %v253
  %v286 = vmul.f32 %v122, %v254
  %v287 = vmul.f32 %v127, %v251
  %v288 = vmul.f32 %v127, %v252
  %v289 = vmul.f32 %v127, %v253
  %v290 = vmul.f32 %v127, %v254
  %v291 = vmul.f32 %v218, %v259
  %v292 = vmul.f32 %v219, %v260
  %v293 = vmul.f32 %v220, %v261
  %v294 = vmul.f32 %v221, %v262
  %v295 = vmul.f32 %v222, %v263
  %v296 = vmul.f32 %v223, %v264
  %v297 = vmul.f32 %v224, %v265
  %v298 = vmul.f32 %v225, %v266
  %v299 = vmul.f32 %v226, %v267
  %v300 = vmul.f32 %v227, %v268
  %v301 = vmul.f32 %v228, %v269
  %v302 = vmul.f32 %v229, %v270
  %v303 = vmul.f32 %v230, %v271
  %v304 = vmul.f32 %v231, %v272
  %v305 = vmul.f32 %v232, %v273
  %v306 = vmul.f32 %v233, %v274
  %v307 = vmul.f32 %v234, %v275
  %v308 = vmul.f32 %v235, %v276
  %v309 = vmul.f32 %v236, %v277
  %v310 = vmul.f32 %v237, %v278
  %v311 = vmul.f32 %v238, %v279
  %v312 = vmul.f32 %v239, %v280
  %v313 = vmul.f32 %v240, %v281
  %v314 = vmul.f32 %v241, %v282
  %v315 = vmul.f32 %v242, %v283
  %v316 = vmul.f32 %v243, %v284
  %v317 = vmul.f32 %v244, %v285
  %v318 = vmul.f32 %v245, %v286
  %v319 = vmul.f32 %v246, %v287
  %v320 = vmul.f32 %v247, %v288
  %v321 = vmul.f32 %v248, %v289
  %v322 = vmul.f32 %v249, %v290
  %v323 = vadd.f32 %v170, %v291
  %v324 = vadd.f32 %v171, %v292
  %v325 = vadd.f32 %v172, %v293
  %v326 = vadd.f32 %v173, %v294
  %v327 = vadd.f32 %v174, %v295
  %v328 = vadd.f32 %v175, %v296
  %v329 = vadd.f32 %v176, %v297
  %v330 = vadd.f32 %v177, %v298
  %v331 = vadd.f32 %v178, %v299
  %v332 = vadd.f32 %v179, %v300
  %v333 = vadd.f32 %v180, %v301
  %v334 = vadd.f32 %v181, %v302
  %v335 = vadd.f32 %v182, %v303
  %v336 = vadd.f32 %v183, %v304
  %v337 = vadd.f32 %v184, %v305
  %v338 = vadd.f32 %v185, %v306
  %v339 = vadd.f32 %v186, %v307
  %v340 = vadd.f32 %v187, %v308
  %v341 = vadd.f32 %v188, %v309
  %v342 = vadd.f32 %v189, %v310
  %v343 = vadd.f32 %v190, %v311
  %v344 = vadd.f32 %v191, %v312
  %v345 = vadd.f32 %v192, %v313
  %v346 = vadd.f32 %v193, %v314
  %v347 = vadd.f32 %v194, %v315
  %v348 = vadd.f32 %v195, %v316
  %v349 = vadd.f32 %v196, %v317
  %v350 = vadd.f32 %v197, %v318
  %v351 = vadd.f32 %v198, %v319
  %v352 = vadd.f32 %v199, %v320
  %v353 = vadd.f32 %v200, %v321
  %v354 = vadd.f32 %v201, %v322
  %v355 = vld [vmem:[%s2] sm:$0xff]
  %v356 = vld [vmem:[%s2 + $0x8] sm:$0xff]
  %v357 = vld [vmem:[%s2 + $0x10] sm:$0xff]
  %v358 = vld [vmem:[%s2 + $0x18] sm:$0xff]
  %v359 = vld [vmem:[%s2 + $0x20] sm:$0xff]
  %v360 = vld [vmem:[%s2 + $0x28] sm:$0xff]
  %v361 = vld [vmem:[%s2 + $0x30] sm:$0xff]
  %v362 = vld [vmem:[%s2 + $0x38] sm:$0xff]
  %v363 = vld [vmem:[%s2 + $0x40] sm:$0xff]
  %v364 = vld [vmem:[%s2 + $0x48] sm:$0xff]
  %v365 = vld [vmem:[%s2 + $0x50] sm:$0xff]
  %v366 = vld [vmem:[%s2 + $0x58] sm:$0xff]
  %v367 = vld [vmem:[%s2 + $0x60] sm:$0xff]
  %v368 = vld [vmem:[%s2 + $0x68] sm:$0xff]
  %v369 = vld [vmem:[%s2 + $0x70] sm:$0xff]
  %v370 = vld [vmem:[%s2 + $0x78] sm:$0xff]
  %v371 = vunpack.c.l.bf16 %v355
  %v372 = vunpack.c.h.bf16 %v355
  %v373 = vunpack.c.l.bf16 %v356
  %v374 = vunpack.c.h.bf16 %v356
  %v375 = vunpack.c.l.bf16 %v357
  %v376 = vunpack.c.h.bf16 %v357
  %v377 = vunpack.c.l.bf16 %v358
  %v378 = vunpack.c.h.bf16 %v358
  %v379 = vunpack.c.l.bf16 %v359
  %v380 = vunpack.c.h.bf16 %v359
  %v381 = vunpack.c.l.bf16 %v360
  %v382 = vunpack.c.h.bf16 %v360
  %v383 = vunpack.c.l.bf16 %v361
  %v384 = vunpack.c.h.bf16 %v361
  %v385 = vunpack.c.l.bf16 %v362
  %v386 = vunpack.c.h.bf16 %v362
  %v387 = vunpack.c.l.bf16 %v363
  %v388 = vunpack.c.h.bf16 %v363
  %v389 = vunpack.c.l.bf16 %v364
  %v390 = vunpack.c.h.bf16 %v364
  %v391 = vunpack.c.l.bf16 %v365
  %v392 = vunpack.c.h.bf16 %v365
  %v393 = vunpack.c.l.bf16 %v366
  %v394 = vunpack.c.h.bf16 %v366
  %v395 = vunpack.c.l.bf16 %v367
  %v396 = vunpack.c.h.bf16 %v367
  %v397 = vunpack.c.l.bf16 %v368
  %v398 = vunpack.c.h.bf16 %v368
  %v399 = vunpack.c.l.bf16 %v369
  %v400 = vunpack.c.h.bf16 %v369
  %v401 = vunpack.c.l.bf16 %v370
  %v402 = vunpack.c.h.bf16 %v370
  %404 = vset.pattern.permute.xlu0 0
  %405 = vperm.xlu0 %404, %v23
  %v406 = vpop.permute.xlu0 %405
  %409 = vset.pattern.permute.xlu0 0
  %410 = vperm.xlu0 %409, %v24
  %v411 = vpop.permute.xlu0 %410
  %414 = vset.pattern.permute.xlu0 0
  %415 = vperm.xlu0 %414, %v25
  %v416 = vpop.permute.xlu0 %415
  %419 = vset.pattern.permute.xlu0 0
  %420 = vperm.xlu0 %419, %v26
  %v421 = vpop.permute.xlu0 %420
  %424 = vset.pattern.permute.xlu0 0
  %425 = vperm.xlu0 %424, %v27
  %v426 = vpop.permute.xlu0 %425
  %429 = vset.pattern.permute.xlu0 0
  %430 = vperm.xlu0 %429, %v28
  %v431 = vpop.permute.xlu0 %430
  %434 = vset.pattern.permute.xlu0 0
  %435 = vperm.xlu0 %434, %v29
  %v436 = vpop.permute.xlu0 %435
  %439 = vset.pattern.permute.xlu0 0
  %440 = vperm.xlu0 %439, %v30
  %v441 = vpop.permute.xlu0 %440
  %v443 = vmul.f32 %v406, %v130
  %v444 = vmul.f32 %v406, %v131
  %v445 = vmul.f32 %v406, %v132
  %v446 = vmul.f32 %v406, %v133
  %v447 = vmul.f32 %v411, %v130
  %v448 = vmul.f32 %v411, %v131
  %v449 = vmul.f32 %v411, %v132
  %v450 = vmul.f32 %v411, %v133
  %v451 = vmul.f32 %v416, %v130
  %v452 = vmul.f32 %v416, %v131
  %v453 = vmul.f32 %v416, %v132
  %v454 = vmul.f32 %v416, %v133
  %v455 = vmul.f32 %v421, %v130
  %v456 = vmul.f32 %v421, %v131
  %v457 = vmul.f32 %v421, %v132
  %v458 = vmul.f32 %v421, %v133
  %v459 = vmul.f32 %v426, %v130
  %v460 = vmul.f32 %v426, %v131
  %v461 = vmul.f32 %v426, %v132
  %v462 = vmul.f32 %v426, %v133
  %v463 = vmul.f32 %v431, %v130
  %v464 = vmul.f32 %v431, %v131
  %v465 = vmul.f32 %v431, %v132
  %v466 = vmul.f32 %v431, %v133
  %v467 = vmul.f32 %v436, %v130
  %v468 = vmul.f32 %v436, %v131
  %v469 = vmul.f32 %v436, %v132
  %v470 = vmul.f32 %v436, %v133
  %v471 = vmul.f32 %v441, %v130
  %v472 = vmul.f32 %v441, %v131
  %v473 = vmul.f32 %v441, %v132
  %v474 = vmul.f32 %v441, %v133
  %v475 = vmul.f32 %v371, %v443
  %v476 = vmul.f32 %v372, %v444
  %v477 = vmul.f32 %v373, %v445
  %v478 = vmul.f32 %v374, %v446
  %v479 = vmul.f32 %v375, %v447
  %v480 = vmul.f32 %v376, %v448
  %v481 = vmul.f32 %v377, %v449
  %v482 = vmul.f32 %v378, %v450
  %v483 = vmul.f32 %v379, %v451
  %v484 = vmul.f32 %v380, %v452
  %v485 = vmul.f32 %v381, %v453
  %v486 = vmul.f32 %v382, %v454
  %v487 = vmul.f32 %v383, %v455
  %v488 = vmul.f32 %v384, %v456
  %v489 = vmul.f32 %v385, %v457
  %v490 = vmul.f32 %v386, %v458
  %v491 = vmul.f32 %v387, %v459
  %v492 = vmul.f32 %v388, %v460
  %v493 = vmul.f32 %v389, %v461
  %v494 = vmul.f32 %v390, %v462
  %v495 = vmul.f32 %v391, %v463
  %v496 = vmul.f32 %v392, %v464
  %v497 = vmul.f32 %v393, %v465
  %v498 = vmul.f32 %v394, %v466
  %v499 = vmul.f32 %v395, %v467
  %v500 = vmul.f32 %v396, %v468
  %v501 = vmul.f32 %v397, %v469
  %v502 = vmul.f32 %v398, %v470
  %v503 = vmul.f32 %v399, %v471
  %v504 = vmul.f32 %v400, %v472
  %v505 = vmul.f32 %v401, %v473
  %v506 = vmul.f32 %v402, %v474
  %v507 = vadd.f32 %v323, %v475
  %v508 = vadd.f32 %v324, %v476
  %v509 = vadd.f32 %v325, %v477
  %v510 = vadd.f32 %v326, %v478
  %v511 = vadd.f32 %v327, %v479
  %v512 = vadd.f32 %v328, %v480
  %v513 = vadd.f32 %v329, %v481
  %v514 = vadd.f32 %v330, %v482
  %v515 = vadd.f32 %v331, %v483
  %v516 = vadd.f32 %v332, %v484
  %v517 = vadd.f32 %v333, %v485
  %v518 = vadd.f32 %v334, %v486
  %v519 = vadd.f32 %v335, %v487
  %v520 = vadd.f32 %v336, %v488
  %v521 = vadd.f32 %v337, %v489
  %v522 = vadd.f32 %v338, %v490
  %v523 = vadd.f32 %v339, %v491
  %v524 = vadd.f32 %v340, %v492
  %v525 = vadd.f32 %v341, %v493
  %v526 = vadd.f32 %v342, %v494
  %v527 = vadd.f32 %v343, %v495
  %v528 = vadd.f32 %v344, %v496
  %v529 = vadd.f32 %v345, %v497
  %v530 = vadd.f32 %v346, %v498
  %v531 = vadd.f32 %v347, %v499
  %v532 = vadd.f32 %v348, %v500
  %v533 = vadd.f32 %v349, %v501
  %v534 = vadd.f32 %v350, %v502
  %v535 = vadd.f32 %v351, %v503
  %v536 = vadd.f32 %v352, %v504
  %v537 = vadd.f32 %v353, %v505
  %v538 = vadd.f32 %v354, %v506
  %v539 = vld [vmem:[%s3] sm:$0xff]
  %v540 = vld [vmem:[%s3 + $0x8] sm:$0xff]
  %v541 = vld [vmem:[%s3 + $0x10] sm:$0xff]
  %v542 = vld [vmem:[%s3 + $0x18] sm:$0xff]
  %v543 = vld [vmem:[%s3 + $0x20] sm:$0xff]
  %v544 = vld [vmem:[%s3 + $0x28] sm:$0xff]
  %v545 = vld [vmem:[%s3 + $0x30] sm:$0xff]
  %v546 = vld [vmem:[%s3 + $0x38] sm:$0xff]
  %v547 = vld [vmem:[%s3 + $0x40] sm:$0xff]
  %v548 = vld [vmem:[%s3 + $0x48] sm:$0xff]
  %v549 = vld [vmem:[%s3 + $0x50] sm:$0xff]
  %v550 = vld [vmem:[%s3 + $0x58] sm:$0xff]
  %v551 = vld [vmem:[%s3 + $0x60] sm:$0xff]
  %v552 = vld [vmem:[%s3 + $0x68] sm:$0xff]
  %v553 = vld [vmem:[%s3 + $0x70] sm:$0xff]
  %v554 = vld [vmem:[%s3 + $0x78] sm:$0xff]
  %v555 = vunpack.c.l.bf16 %v539
  %v556 = vunpack.c.h.bf16 %v539
  %v557 = vunpack.c.l.bf16 %v540
  %v558 = vunpack.c.h.bf16 %v540
  %v559 = vunpack.c.l.bf16 %v541
  %v560 = vunpack.c.h.bf16 %v541
  %v561 = vunpack.c.l.bf16 %v542
  %v562 = vunpack.c.h.bf16 %v542
  %v563 = vunpack.c.l.bf16 %v543
  %v564 = vunpack.c.h.bf16 %v543
  %v565 = vunpack.c.l.bf16 %v544
  %v566 = vunpack.c.h.bf16 %v544
  %v567 = vunpack.c.l.bf16 %v545
  %v568 = vunpack.c.h.bf16 %v545
  %v569 = vunpack.c.l.bf16 %v546
  %v570 = vunpack.c.h.bf16 %v546
  %v571 = vunpack.c.l.bf16 %v547
  %v572 = vunpack.c.h.bf16 %v547
  %v573 = vunpack.c.l.bf16 %v548
  %v574 = vunpack.c.h.bf16 %v548
  %v575 = vunpack.c.l.bf16 %v549
  %v576 = vunpack.c.h.bf16 %v549
  %v577 = vunpack.c.l.bf16 %v550
  %v578 = vunpack.c.h.bf16 %v550
  %v579 = vunpack.c.l.bf16 %v551
  %v580 = vunpack.c.h.bf16 %v551
  %v581 = vunpack.c.l.bf16 %v552
  %v582 = vunpack.c.h.bf16 %v552
  %v583 = vunpack.c.l.bf16 %v553
  %v584 = vunpack.c.h.bf16 %v553
  %v585 = vunpack.c.l.bf16 %v554
  %v586 = vunpack.c.h.bf16 %v554
  %v587 = vmul.f32 %v406, %v251
  %v588 = vmul.f32 %v406, %v252
  %v589 = vmul.f32 %v406, %v253
  %v590 = vmul.f32 %v406, %v254
  %v591 = vmul.f32 %v411, %v251
  %v592 = vmul.f32 %v411, %v252
  %v593 = vmul.f32 %v411, %v253
  %v594 = vmul.f32 %v411, %v254
  %v595 = vmul.f32 %v416, %v251
  %v596 = vmul.f32 %v416, %v252
  %v597 = vmul.f32 %v416, %v253
  %v598 = vmul.f32 %v416, %v254
  %v599 = vmul.f32 %v421, %v251
  %v600 = vmul.f32 %v421, %v252
  %v601 = vmul.f32 %v421, %v253
  %v602 = vmul.f32 %v421, %v254
  %v603 = vmul.f32 %v426, %v251
  %v604 = vmul.f32 %v426, %v252
  %v605 = vmul.f32 %v426, %v253
  %v606 = vmul.f32 %v426, %v254
  %v607 = vmul.f32 %v431, %v251
  %v608 = vmul.f32 %v431, %v252
  %v609 = vmul.f32 %v431, %v253
  %v610 = vmul.f32 %v431, %v254
  %v611 = vmul.f32 %v436, %v251
  %v612 = vmul.f32 %v436, %v252
  %v613 = vmul.f32 %v436, %v253
  %v614 = vmul.f32 %v436, %v254
  %v615 = vmul.f32 %v441, %v251
  %v616 = vmul.f32 %v441, %v252
  %v617 = vmul.f32 %v441, %v253
  %v618 = vmul.f32 %v441, %v254
  %v619 = vmul.f32 %v555, %v587
  %v620 = vmul.f32 %v556, %v588
  %v621 = vmul.f32 %v557, %v589
  %v622 = vmul.f32 %v558, %v590
  %v623 = vmul.f32 %v559, %v591
  %v624 = vmul.f32 %v560, %v592
  %v625 = vmul.f32 %v561, %v593
  %v626 = vmul.f32 %v562, %v594
  %v627 = vmul.f32 %v563, %v595
  %v628 = vmul.f32 %v564, %v596
  %v629 = vmul.f32 %v565, %v597
  %v630 = vmul.f32 %v566, %v598
  %v631 = vmul.f32 %v567, %v599
  %v632 = vmul.f32 %v568, %v600
  %v633 = vmul.f32 %v569, %v601
  %v634 = vmul.f32 %v570, %v602
  %v635 = vmul.f32 %v571, %v603
  %v636 = vmul.f32 %v572, %v604
  %v637 = vmul.f32 %v573, %v605
  %v638 = vmul.f32 %v574, %v606
  %v639 = vmul.f32 %v575, %v607
  %v640 = vmul.f32 %v576, %v608
  %v641 = vmul.f32 %v577, %v609
  %v642 = vmul.f32 %v578, %v610
  %v643 = vmul.f32 %v579, %v611
  %v644 = vmul.f32 %v580, %v612
  %v645 = vmul.f32 %v581, %v613
  %v646 = vmul.f32 %v582, %v614
  %v647 = vmul.f32 %v583, %v615
  %v648 = vmul.f32 %v584, %v616
  %v649 = vmul.f32 %v585, %v617
  %v650 = vmul.f32 %v586, %v618
  %v651 = vadd.f32 %v507, %v619
  %v652 = vadd.f32 %v508, %v620
  %v653 = vadd.f32 %v509, %v621
  %v654 = vadd.f32 %v510, %v622
  %v655 = vadd.f32 %v511, %v623
  %v656 = vadd.f32 %v512, %v624
  %v657 = vadd.f32 %v513, %v625
  %v658 = vadd.f32 %v514, %v626
  %v659 = vadd.f32 %v515, %v627
  %v660 = vadd.f32 %v516, %v628
  %v661 = vadd.f32 %v517, %v629
  %v662 = vadd.f32 %v518, %v630
  %v663 = vadd.f32 %v519, %v631
  %v664 = vadd.f32 %v520, %v632
  %v665 = vadd.f32 %v521, %v633
  %v666 = vadd.f32 %v522, %v634
  %v667 = vadd.f32 %v523, %v635
  %v668 = vadd.f32 %v524, %v636
  %v669 = vadd.f32 %v525, %v637
  %v670 = vadd.f32 %v526, %v638
  %v671 = vadd.f32 %v527, %v639
  %v672 = vadd.f32 %v528, %v640
  %v673 = vadd.f32 %v529, %v641
  %v674 = vadd.f32 %v530, %v642
  %v675 = vadd.f32 %v531, %v643
  %v676 = vadd.f32 %v532, %v644
  %v677 = vadd.f32 %v533, %v645
  %v678 = vadd.f32 %v534, %v646
  %v679 = vadd.f32 %v535, %v647
  %v680 = vadd.f32 %v536, %v648
  %v681 = vadd.f32 %v537, %v649
  %v682 = vadd.f32 %v538, %v650
  %v683 = vpack.c.bf16 %v652, %v651
  %v684 = vpack.c.bf16 %v654, %v653
  %v685 = vpack.c.bf16 %v656, %v655
  %v686 = vpack.c.bf16 %v658, %v657
  %v687 = vpack.c.bf16 %v660, %v659
  %v688 = vpack.c.bf16 %v662, %v661
  %v689 = vpack.c.bf16 %v664, %v663
  %v690 = vpack.c.bf16 %v666, %v665
  %v691 = vpack.c.bf16 %v668, %v667
  %v692 = vpack.c.bf16 %v670, %v669
  %v693 = vpack.c.bf16 %v672, %v671
  %v694 = vpack.c.bf16 %v674, %v673
  %v695 = vpack.c.bf16 %v676, %v675
  %v696 = vpack.c.bf16 %v678, %v677
  %v697 = vpack.c.bf16 %v680, %v679
  %v698 = vpack.c.bf16 %v682, %v681
  %699 = vst [vmem:[%s6] sm:$0xff] %v683
  %700 = vst [vmem:[%s6 + $0x8] sm:$0xff] %v684
  %701 = vst [vmem:[%s6 + $0x10] sm:$0xff] %v685
  %702 = vst [vmem:[%s6 + $0x18] sm:$0xff] %v686
  %703 = vst [vmem:[%s6 + $0x20] sm:$0xff] %v687
  %704 = vst [vmem:[%s6 + $0x28] sm:$0xff] %v688
  %705 = vst [vmem:[%s6 + $0x30] sm:$0xff] %v689
  %706 = vst [vmem:[%s6 + $0x38] sm:$0xff] %v690
  %707 = vst [vmem:[%s6 + $0x40] sm:$0xff] %v691
  %708 = vst [vmem:[%s6 + $0x48] sm:$0xff] %v692
  %709 = vst [vmem:[%s6 + $0x50] sm:$0xff] %v693
  %710 = vst [vmem:[%s6 + $0x58] sm:$0xff] %v694
  %711 = vst [vmem:[%s6 + $0x60] sm:$0xff] %v695
  %712 = vst [vmem:[%s6 + $0x68] sm:$0xff] %v696
  %713 = vst [vmem:[%s6 + $0x70] sm:$0xff] %v697
  %714 = vst [vmem:[%s6 + $0x78] sm:$0xff] %v698
  // Predicated region
  $region26: #{resnet_segmentation_forward.26} parent=0 // pred_check
    _
  $region27: #{resnet_segmentation_forward.26} parent=0 // pred_check_branch
    %716 = sbr.rel (0) target = $region29
  $region28: #{resnet_segmentation_forward.26} parent=0 // pred_region
    _
  $region29: #{resnet_segmentation_forward.26} parent=0 // pred_fallthru
    _
  // Predicated region
  $region30: #{resnet_segmentation_forward.26} parent=0 // pred_check
    _
  $region31: #{resnet_segmentation_forward.26} parent=0 // pred_check_branch
    %718 = sbr.rel (0) target = $region33
  $region32: #{resnet_segmentation_forward.26} parent=0 // pred_region
    _
  $region33: #{resnet_segmentation_forward.26} parent=0 // pred_fallthru
    _

// kernel: resnet_segmentation_forward.27
$region0: #{resnet_segmentation_forward.27}
  #allocation0 [shape = 'u32[]', space=smem, size = 0x4, offset = 0x4, fixed_abs, tag = 'smem constant byte address 0x4 - core index']
  #allocation1 [shape = 'u32[72,128]{1,0:T(1,128)}', space=vmem, size = 0x9000, scoped, tag = 'internal scratch']
  %s0 = inlined_call_operand.vmem [shape: bf16[2048,256], index: 0, kind: input, shape index: {}]
  %s1 = inlined_call_operand.vmem [shape: bf16[256,128], index: 1, kind: input, shape index: {}]
  %s2 = inlined_call_operand.vmem [shape: bf16[2048,128], index: 2, kind: input, shape index: {}]
  %s3 = inlined_call_operand.vmem [shape: bf16[128,128], index: 3, kind: input, shape index: {}]
  %s4 = inlined_call_operand.vmem [shape: f32[1,128], index: 4, kind: input, shape index: {}]
  %s5 = inlined_call_operand.vmem [shape: f32[128,128], index: 5, kind: input, shape index: {}]
  %s6 = inlined_call_operand.vmem [shape: f32[1,128], index: 6, kind: input, shape index: {}]
  %s7 = inlined_call_operand.vmem [shape: f32[2048,128], index: 7, kind: output, shape index: {}]
  %s8 = sld [smem:[#allocation0]]
  $region61: #{resnet_segmentation_forward.27} parent=0
    _
  %s10 = ssub.s32 1, %s8
  %s11 = scalar_select 0, %s10, %s8
  loop: start=0, step=1, limit=6
  $region2: #{resnet_segmentation_forward.27} parent=0 // loop_pre_header
    _
  $region3: #{resnet_segmentation_forward.27} parent=0 // loop_header
    %s13 = sphi 0, %s17
    %p14 = scmp.ge.s32.totalorder %s13, 6
    %s23 = sphi 0, %s25
    %s26 = sphi 0, %s23
    %s27 = sphi 0, %s26
    %s43 = sphi 0, %s27
    %s47 = sphi 0, %s47
    %s49 = sphi 0, %s47
    %s50 = sphi 0, %s49
    %s64 = sphi 0, %s50
    %s70 = sphi 0, %s72
    %s73 = sphi 0, %s70
    %s74 = sphi 0, %s73
    %s90 = sphi 0, %s74
    %s94 = sphi 0, %s94
    %s96 = sphi 0, %s94
    %s97 = sphi 0, %s96
    %s111 = sphi 0, %s97
    %s115 = sphi 0, %s115
    %s117 = sphi 0, %s115
    %s118 = sphi 0, %s117
    %s132 = sphi 0, %s118
    %s136 = sphi 0, %s136
    %s138 = sphi 0, %s136
    %s139 = sphi 0, %s138
    %s153 = sphi 0, %s139
    %s157 = sphi 0, %s157
    %s159 = sphi 0, %s157
    %s160 = sphi 0, %s159
    %s174 = sphi 0, %s160
    %s180 = sphi 0, %s182
    %s183 = sphi 0, %s180
    %s184 = sphi 0, %s183
    %s200 = sphi 0, %s184
  $region4: #{resnet_segmentation_forward.27} parent=0 // loop_header_branch
    %16 = sbr.rel (%p14) target = $region8
  $region5: #{resnet_segmentation_forward.27} parent=0 // loop_body
    %s18 = ssub.s32 %s13, 1
    %s19 = ssub.s32 %s13, 2
    %s20 = sadd.s32 %s13, 1
    %s21 = ssub.s32 %s13, %s20
    %p22 = scmp.eq.s32.totalorder %s21, 0
    %s24 = sadd.s32 %s23, 1
    %s25 = scalar_select %p22, %s23, %s24
    %p28 = pneg %p22
    %p29 = scmp.eq.s32.totalorder %s13, 3
    %p30 = por %p28, %p29
    %p31 = scmp.ne.s32.totalorder %s23, %s26
    %p32 = scmp.eq.s32.totalorder %s13, 0
    %p33 = por %p31, %p32
    %p34 = scmp.ne.s32.totalorder %s23, %s26
    %p35 = scmp.eq.s32.totalorder %s18, 3
    %p36 = por %p34, %p35
    %p37 = scmp.ne.s32.totalorder %s26, %s27
    %p38 = scmp.eq.s32.totalorder %s18, 0
    %p39 = por %p37, %p38
    %p40 = scmp.ne.s32.totalorder %s26, %s27
    %p41 = scmp.eq.s32.totalorder %s19, 3
    %p42 = por %p40, %p41
    %p44 = scmp.ne.s32.totalorder %s27, %s43
    %p45 = scmp.eq.s32.totalorder %s19, 0
    %p46 = por %p44, %p45
    %s48 = sadd.s32 %s47, 1
    %p51 = scmp.eq.s32.totalorder %s13, 3
    %p52 = scmp.ne.s32.totalorder %s47, %s49
    %p53 = scmp.eq.s32.totalorder %s13, 0
    %p54 = por %p52, %p53
    %p55 = scmp.ne.s32.totalorder %s47, %s49
    %p56 = scmp.eq.s32.totalorder %s18, 3
    %p57 = por %p55, %p56
    %p58 = scmp.ne.s32.totalorder %s49, %s50
    %p59 = scmp.eq.s32.totalorder %s18, 0
    %p60 = por %p58, %p59
    %p61 = scmp.ne.s32.totalorder %s49, %s50
    %p62 = scmp.eq.s32.totalorder %s19, 3
    %p63 = por %p61, %p62
    %p65 = scmp.ne.s32.totalorder %s50, %s64
    %p66 = scmp.eq.s32.totalorder %s19, 0
    %p67 = por %p65, %p66
    %s68 = ssub.s32 %s13, %s20
    %p69 = scmp.eq.s32.totalorder %s68, 0
    %s71 = sadd.s32 %s70, 1
    %s72 = scalar_select %p69, %s70, %s71
    %p75 = pneg %p69
    %p76 = scmp.eq.s32.totalorder %s13, 3
    %p77 = por %p75, %p76
    %p78 = scmp.ne.s32.totalorder %s70, %s73
    %p79 = scmp.eq.s32.totalorder %s13, 0
    %p80 = por %p78, %p79
    %p81 = scmp.ne.s32.totalorder %s70, %s73
    %p82 = scmp.eq.s32.totalorder %s18, 3
    %p83 = por %p81, %p82
    %p84 = scmp.ne.s32.totalorder %s73, %s74
    %p85 = scmp.eq.s32.totalorder %s18, 0
    %p86 = por %p84, %p85
    %p87 = scmp.ne.s32.totalorder %s73, %s74
    %p88 = scmp.eq.s32.totalorder %s19, 3
    %p89 = por %p87, %p88
    %p91 = scmp.ne.s32.totalorder %s74, %s90
    %p92 = scmp.eq.s32.totalorder %s19, 0
    %p93 = por %p91, %p92
    %s95 = sadd.s32 %s94, 1
    %p98 = scmp.eq.s32.totalorder %s13, 3
    %p99 = scmp.ne.s32.totalorder %s94, %s96
    %p100 = scmp.eq.s32.totalorder %s13, 0
    %p101 = por %p99, %p100
    %p102 = scmp.ne.s32.totalorder %s94, %s96
    %p103 = scmp.eq.s32.totalorder %s18, 3
    %p104 = por %p102, %p103
    %p105 = scmp.ne.s32.totalorder %s96, %s97
    %p106 = scmp.eq.s32.totalorder %s18, 0
    %p107 = por %p105, %p106
    %p108 = scmp.ne.s32.totalorder %s96, %s97
    %p109 = scmp.eq.s32.totalorder %s19, 3
    %p110 = por %p108, %p109
    %p112 = scmp.ne.s32.totalorder %s97, %s111
    %p113 = scmp.eq.s32.totalorder %s19, 0
    %p114 = por %p112, %p113
    %s116 = sadd.s32 %s115, 1
    %p119 = scmp.eq.s32.totalorder %s13, 3
    %p120 = scmp.ne.s32.totalorder %s115, %s117
    %p121 = scmp.eq.s32.totalorder %s13, 0
    %p122 = por %p120, %p121
    %p123 = scmp.ne.s32.totalorder %s115, %s117
    %p124 = scmp.eq.s32.totalorder %s18, 3
    %p125 = por %p123, %p124
    %p126 = scmp.ne.s32.totalorder %s117, %s118
    %p127 = scmp.eq.s32.totalorder %s18, 0
    %p128 = por %p126, %p127
    %p129 = scmp.ne.s32.totalorder %s117, %s118
    %p130 = scmp.eq.s32.totalorder %s19, 3
    %p131 = por %p129, %p130
    %p133 = scmp.ne.s32.totalorder %s118, %s132
    %p134 = scmp.eq.s32.totalorder %s19, 0
    %p135 = por %p133, %p134
    %s137 = sadd.s32 %s136, 1
    %p140 = scmp.eq.s32.totalorder %s13, 3
    %p141 = scmp.ne.s32.totalorder %s136, %s138
    %p142 = scmp.eq.s32.totalorder %s13, 0
    %p143 = por %p141, %p142
    %p144 = scmp.ne.s32.totalorder %s136, %s138
    %p145 = scmp.eq.s32.totalorder %s18, 3
    %p146 = por %p144, %p145
    %p147 = scmp.ne.s32.totalorder %s138, %s139
    %p148 = scmp.eq.s32.totalorder %s18, 0
    %p149 = por %p147, %p148
    %p150 = scmp.ne.s32.totalorder %s138, %s139
    %p151 = scmp.eq.s32.totalorder %s19, 3
    %p152 = por %p150, %p151
    %p154 = scmp.ne.s32.totalorder %s139, %s153
    %p155 = scmp.eq.s32.totalorder %s19, 0
    %p156 = por %p154, %p155
    %s158 = sadd.s32 %s157, 1
    %p161 = scmp.eq.s32.totalorder %s13, 3
    %p162 = scmp.ne.s32.totalorder %s157, %s159
    %p163 = scmp.eq.s32.totalorder %s13, 0
    %p164 = por %p162, %p163
    %p165 = scmp.ne.s32.totalorder %s157, %s159
    %p166 = scmp.eq.s32.totalorder %s18, 3
    %p167 = por %p165, %p166
    %p168 = scmp.ne.s32.totalorder %s159, %s160
    %p169 = scmp.eq.s32.totalorder %s18, 0
    %p170 = por %p168, %p169
    %p171 = scmp.ne.s32.totalorder %s159, %s160
    %p172 = scmp.eq.s32.totalorder %s19, 3
    %p173 = por %p171, %p172
    %p175 = scmp.ne.s32.totalorder %s160, %s174
    %p176 = scmp.eq.s32.totalorder %s19, 0
    %p177 = por %p175, %p176
    %s178 = ssub.s32 %s13, %s20
    %p179 = scmp.eq.s32.totalorder %s178, 0
    %s181 = sadd.s32 %s180, 1
    %s182 = scalar_select %p179, %s180, %s181
    %p185 = pneg %p179
    %p186 = scmp.eq.s32.totalorder %s13, 3
    %p187 = por %p185, %p186
    %p188 = scmp.ne.s32.totalorder %s180, %s183
    %p189 = scmp.eq.s32.totalorder %s13, 0
    %p190 = por %p188, %p189
    %p191 = scmp.ne.s32.totalorder %s180, %s183
    %p192 = scmp.eq.s32.totalorder %s18, 3
    %p193 = por %p191, %p192
    %p194 = scmp.ne.s32.totalorder %s183, %s184
    %p195 = scmp.eq.s32.totalorder %s18, 0
    %p196 = por %p194, %p195
    %p197 = scmp.ne.s32.totalorder %s183, %s184
    %p198 = scmp.eq.s32.totalorder %s19, 3
    %p199 = por %p197, %p198
    %p201 = scmp.ne.s32.totalorder %s184, %s200
    %p202 = scmp.eq.s32.totalorder %s19, 0
    %p203 = por %p201, %p202
    %p204 = scmp.le.s32.totalorder 1, %s13
    %p205 = scmp.lt.s32.totalorder %s13, 5
    %p206 = pnand %p204, %p205
    %p207 = pneg %p206
    // Predicated region
    $region9: #{resnet_segmentation_forward.27} parent=5 // pred_check
      _
    $region10: #{resnet_segmentation_forward.27} parent=5 // pred_check_branch
      %209 = sbr.rel (%p206) target = $region12
    $region11: #{resnet_segmentation_forward.27} parent=5 // pred_region
      %s210 = ssub.s32 %s13, 1
      // Predicated region
      $region13: #{resnet_segmentation_forward.27} parent=11 // pred_check
        %p211 = pneg %p60
      $region14: #{resnet_segmentation_forward.27} parent=11 // pred_check_branch
        %213 = sbr.rel (%p211) target = $region16
      $region15: #{resnet_segmentation_forward.27} parent=11 // pred_region
        _
      $region16: #{resnet_segmentation_forward.27} parent=11 // pred_fallthru
        _
      // Predicated region
      $region17: #{resnet_segmentation_forward.27} parent=11 // pred_check
        %p214 = pneg %p107
      $region18: #{resnet_segmentation_forward.27} parent=11 // pred_check_branch
        %216 = sbr.rel (%p214) target = $region20
      $region19: #{resnet_segmentation_forward.27} parent=11 // pred_region
        _
      $region20: #{resnet_segmentation_forward.27} parent=11 // pred_fallthru
        _
      // Predicated region
      $region21: #{resnet_segmentation_forward.27} parent=11 // pred_check
        %p217 = pneg %p128
      $region22: #{resnet_segmentation_forward.27} parent=11 // pred_check_branch
        %219 = sbr.rel (%p217) target = $region24
      $region23: #{resnet_segmentation_forward.27} parent=11 // pred_region
        _
      $region24: #{resnet_segmentation_forward.27} parent=11 // pred_fallthru
        _
      // Predicated region
      $region25: #{resnet_segmentation_forward.27} parent=11 // pred_check
        %p220 = pneg %p149
      $region26: #{resnet_segmentation_forward.27} parent=11 // pred_check_branch
        %222 = sbr.rel (%p220) target = $region28
      $region27: #{resnet_segmentation_forward.27} parent=11 // pred_region
        _
      $region28: #{resnet_segmentation_forward.27} parent=11 // pred_fallthru
        _
      // Predicated region
      $region29: #{resnet_segmentation_forward.27} parent=11 // pred_check
        %p223 = pneg %p170
      $region30: #{resnet_segmentation_forward.27} parent=11 // pred_check_branch
        %225 = sbr.rel (%p223) target = $region32
      $region31: #{resnet_segmentation_forward.27} parent=11 // pred_region
        _
      $region32: #{resnet_segmentation_forward.27} parent=11 // pred_fallthru
        _
    $region12: #{resnet_segmentation_forward.27} parent=5 // pred_fallthru
      _
    %p226 = scmp.lt.s32.totalorder %s13, 4
    // Predicated region
    $region33: #{resnet_segmentation_forward.27} parent=5 // pred_check
      %p227 = pneg %p226
    $region34: #{resnet_segmentation_forward.27} parent=5 // pred_check_branch
      %229 = sbr.rel (%p227) target = $region36
    $region35: #{resnet_segmentation_forward.27} parent=5 // pred_region
      // Predicated region
      $region37: #{resnet_segmentation_forward.27} parent=35 // pred_check
        %p230 = pneg %p33
      $region38: #{resnet_segmentation_forward.27} parent=35 // pred_check_branch
        %232 = sbr.rel (%p230) target = $region40
      $region39: #{resnet_segmentation_forward.27} parent=35 // pred_region
        %s233 = smul.u32 64, %s13
        %p234 = scmp.lt.s32.totalorder %s233, 255
        %s235 = scalar_select %p234, %s233, 255
        %s236 = smul.addr %s235, 2
        %s237 = smul.addr %s236, 4
        %s238 = scalar_lea.vmem %s0, %s237
        %s239 = smul.u32 64, %s13
      $region40: #{resnet_segmentation_forward.27} parent=35 // pred_fallthru
        _
      // Predicated region
      $region41: #{resnet_segmentation_forward.27} parent=35 // pred_check
        %p240 = pneg %p80
      $region42: #{resnet_segmentation_forward.27} parent=35 // pred_check_branch
        %242 = sbr.rel (%p240) target = $region44
      $region43: #{resnet_segmentation_forward.27} parent=35 // pred_region
        %s243 = smul.u32 64, %s13
        %p244 = scmp.lt.s32.totalorder %s243, 255
        %s245 = scalar_select %p244, %s243, 255
        %s246 = smul.addr %s245, 4
        %s247 = scalar_lea.vmem %s2, %s246
        %s248 = smul.u32 64, %s13
      $region44: #{resnet_segmentation_forward.27} parent=35 // pred_fallthru
        _
    $region36: #{resnet_segmentation_forward.27} parent=5 // pred_fallthru
      _
    %p249 = scmp.le.s32.totalorder 1, %s13
    %p250 = scmp.lt.s32.totalorder %s13, 5
    %p251 = pnand %p249, %p250
    %p252 = pneg %p251
    // Predicated region
    $region45: #{resnet_segmentation_forward.27} parent=5 // pred_check
      _
    $region46: #{resnet_segmentation_forward.27} parent=5 // pred_check_branch
      %254 = sbr.rel (%p251) target = $region48
    $region47: #{resnet_segmentation_forward.27} parent=5 // pred_region
      %s255 = ssub.s32 %s13, 1
      %s256 = smul.u32 64, %s18
      %p257 = scmp.lt.s32.totalorder %s256, 255
      %s258 = scalar_select %p257, %s256, 255
      %s259 = smul.addr %s258, 2
      %s260 = smul.addr %s259, 4
      %s261 = scalar_lea.vmem %s0, %s260
      %p262 = pneg %p39
      %p263 = pneg %p36
      %p264 = pneg %p60
      %p265 = pneg %p57
      %s266 = smul.u32 64, %s18
      %p267 = scmp.lt.s32.totalorder %s266, 255
      %s268 = scalar_select %p267, %s266, 255
      %s269 = smul.addr %s268, 4
      %s270 = scalar_lea.vmem %s2, %s269
      %p271 = pneg %p86
      %p272 = pneg %p83
      %p273 = pneg %p107
      %p274 = pneg %p104
      %p275 = pneg %p128
      %p276 = pneg %p125
      %p277 = pneg %p149
      %p278 = pneg %p146
      %p279 = pneg %p170
      %p280 = pneg %p167
      %p281 = pneg %p196
      %p282 = pneg %p193
      %s283 = smul.u32 64, %s18
      %p284 = scmp.lt.s32.totalorder %s283, 255
      %s285 = scalar_select %p284, %s283, 255
      %s286 = smul.addr %s285, 8
      %s287 = scalar_lea.vmem %s7, %s286
      %s288 = smul.u32 64, %s18
      %p289 = scmp.lt.s32.totalorder %s288, 255
      %s290 = scalar_select %p289, %s288, 255
      %s291 = smul.addr %s290, 2
      %s292 = smul.addr %s291, 4
      %s293 = scalar_lea.vmem %s0, %s292
      %s294 = smul.u32 64, %s18
      %s295 = smul.u32 64, %s18
      %p296 = scmp.lt.s32.totalorder %s295, 255
      %s297 = scalar_select %p296, %s295, 255
      %s298 = smul.addr %s297, 4
      %s299 = scalar_lea.vmem %s2, %s298
      %s300 = smul.u32 64, %s18
      %s301 = smul.u32 64, %s18
      %p302 = scmp.lt.s32.totalorder %s301, 255
      %s303 = scalar_select %p302, %s301, 255
      %s304 = smul.addr %s303, 8
      %s305 = scalar_lea.vmem %s7, %s304
      %s306 = smul.u32 64, %s18
      %v307 = vld [vmem:[%s293] sm:$0xff]
      %v308 = vld [vmem:[%s293 + $0x8] sm:$0xff]
      %v309 = vld [vmem:[%s293 + $0x10] sm:$0xff]
      %v310 = vld [vmem:[%s293 + $0x18] sm:$0xff]
      %v311 = vld [vmem:[%s293 + $0x20] sm:$0xff]
      %v312 = vld [vmem:[%s293 + $0x28] sm:$0xff]
      %v313 = vld [vmem:[%s293 + $0x30] sm:$0xff]
      %v314 = vld [vmem:[%s293 + $0x38] sm:$0xff]
      %v315 = vld [vmem:[%s293 + $0x40] sm:$0xff]
      %v316 = vld [vmem:[%s293 + $0x48] sm:$0xff]
      %v317 = vld [vmem:[%s293 + $0x50] sm:$0xff]
      %v318 = vld [vmem:[%s293 + $0x58] sm:$0xff]
      %v319 = vld [vmem:[%s293 + $0x60] sm:$0xff]
      %v320 = vld [vmem:[%s293 + $0x68] sm:$0xff]
      %v321 = vld [vmem:[%s293 + $0x70] sm:$0xff]
      %v322 = vld [vmem:[%s293 + $0x78] sm:$0xff]
      %v323 = vld [vmem:[%s293 + $0x80] sm:$0xff]
      %v324 = vld [vmem:[%s293 + $0x88] sm:$0xff]
      %v325 = vld [vmem:[%s293 + $0x90] sm:$0xff]
      %v326 = vld [vmem:[%s293 + $0x98] sm:$0xff]
      %v327 = vld [vmem:[%s293 + $0xa0] sm:$0xff]
      %v328 = vld [vmem:[%s293 + $0xa8] sm:$0xff]
      %v329 = vld [vmem:[%s293 + $0xb0] sm:$0xff]
      %v330 = vld [vmem:[%s293 + $0xb8] sm:$0xff]
      %v331 = vld [vmem:[%s293 + $0xc0] sm:$0xff]
      %v332 = vld [vmem:[%s293 + $0xc8] sm:$0xff]
      %v333 = vld [vmem:[%s293 + $0xd0] sm:$0xff]
      %v334 = vld [vmem:[%s293 + $0xd8] sm:$0xff]
      %v335 = vld [vmem:[%s293 + $0xe0] sm:$0xff]
      %v336 = vld [vmem:[%s293 + $0xe8] sm:$0xff]
      %v337 = vld [vmem:[%s293 + $0xf0] sm:$0xff]
      %v338 = vld [vmem:[%s293 + $0xf8] sm:$0xff]
      %v339 = vld [vmem:[%s293 + $0x100] sm:$0xff]
      %v340 = vld [vmem:[%s293 + $0x108] sm:$0xff]
      %v341 = vld [vmem:[%s293 + $0x110] sm:$0xff]
      %v342 = vld [vmem:[%s293 + $0x118] sm:$0xff]
      %v343 = vld [vmem:[%s293 + $0x120] sm:$0xff]
      %v344 = vld [vmem:[%s293 + $0x128] sm:$0xff]
      %v345 = vld [vmem:[%s293 + $0x130] sm:$0xff]
      %v346 = vld [vmem:[%s293 + $0x138] sm:$0xff]
      %v347 = vld [vmem:[%s293 + $0x140] sm:$0xff]
      %v348 = vld [vmem:[%s293 + $0x148] sm:$0xff]
      %v349 = vld [vmem:[%s293 + $0x150] sm:$0xff]
      %v350 = vld [vmem:[%s293 + $0x158] sm:$0xff]
      %v351 = vld [vmem:[%s293 + $0x160] sm:$0xff]
      %v352 = vld [vmem:[%s293 + $0x168] sm:$0xff]
      %v353 = vld [vmem:[%s293 + $0x170] sm:$0xff]
      %v354 = vld [vmem:[%s293 + $0x178] sm:$0xff]
      %v355 = vld [vmem:[%s293 + $0x180] sm:$0xff]
      %v356 = vld [vmem:[%s293 + $0x188] sm:$0xff]
      %v357 = vld [vmem:[%s293 + $0x190] sm:$0xff]
      %v358 = vld [vmem:[%s293 + $0x198] sm:$0xff]
      %v359 = vld [vmem:[%s293 + $0x1a0] sm:$0xff]
      %v360 = vld [vmem:[%s293 + $0x1a8] sm:$0xff]
      %v361 = vld [vmem:[%s293 + $0x1b0] sm:$0xff]
      %v362 = vld [vmem:[%s293 + $0x1b8] sm:$0xff]
      %v363 = vld [vmem:[%s293 + $0x1c0] sm:$0xff]
      %v364 = vld [vmem:[%s293 + $0x1c8] sm:$0xff]
      %v365 = vld [vmem:[%s293 + $0x1d0] sm:$0xff]
      %v366 = vld [vmem:[%s293 + $0x1d8] sm:$0xff]
      %v367 = vld [vmem:[%s293 + $0x1e0] sm:$0xff]
      %v368 = vld [vmem:[%s293 + $0x1e8] sm:$0xff]
      %v369 = vld [vmem:[%s293 + $0x1f0] sm:$0xff]
      %v370 = vld [vmem:[%s293 + $0x1f8] sm:$0xff]
      %v371 = vld [vmem:[%s1] sm:$0xf]
      %v372 = vld [vmem:[%s1 + $0x4] sm:$0xf]
      %v373 = vld [vmem:[%s1 + $0x8] sm:$0xf]
      %v374 = vld [vmem:[%s1 + $0xc] sm:$0xf]
      %v375 = vld [vmem:[%s1 + $0x10] sm:$0xf]
      %v376 = vld [vmem:[%s1 + $0x14] sm:$0xf]
      %v377 = vld [vmem:[%s1 + $0x18] sm:$0xf]
      %v378 = vld [vmem:[%s1 + $0x1c] sm:$0xf]
      %v379 = vld [vmem:[%s1 + $0x20] sm:$0xf]
      %v380 = vld [vmem:[%s1 + $0x24] sm:$0xf]
      %v381 = vld [vmem:[%s1 + $0x28] sm:$0xf]
      %v382 = vld [vmem:[%s1 + $0x2c] sm:$0xf]
      %v383 = vld [vmem:[%s1 + $0x30] sm:$0xf]
      %v384 = vld [vmem:[%s1 + $0x34] sm:$0xf]
      %v385 = vld [vmem:[%s1 + $0x38] sm:$0xf]
      %v386 = vld [vmem:[%s1 + $0x3c] sm:$0xf]
      %v387 = vld [vmem:[%s1 + $0x40] sm:$0xf]
      %v388 = vld [vmem:[%s1 + $0x44] sm:$0xf]
      %v389 = vld [vmem:[%s1 + $0x48] sm:$0xf]
      %v390 = vld [vmem:[%s1 + $0x4c] sm:$0xf]
      %v391 = vld [vmem:[%s1 + $0x50] sm:$0xf]
      %v392 = vld [vmem:[%s1 + $0x54] sm:$0xf]
      %v393 = vld [vmem:[%s1 + $0x58] sm:$0xf]
      %v394 = vld [vmem:[%s1 + $0x5c] sm:$0xf]
      %v395 = vld [vmem:[%s1 + $0x60] sm:$0xf]
      %v396 = vld [vmem:[%s1 + $0x64] sm:$0xf]
      %v397 = vld [vmem:[%s1 + $0x68] sm:$0xf]
      %v398 = vld [vmem:[%s1 + $0x6c] sm:$0xf]
      %v399 = vld [vmem:[%s1 + $0x70] sm:$0xf]
      %v400 = vld [vmem:[%s1 + $0x74] sm:$0xf]
      %v401 = vld [vmem:[%s1 + $0x78] sm:$0xf]
      %v402 = vld [vmem:[%s1 + $0x7c] sm:$0xf]
      %v403 = vld [vmem:[%s299] sm:$0xf]
      %v404 = vld [vmem:[%s299 + $0x4] sm:$0xf]
      %v405 = vld [vmem:[%s299 + $0x8] sm:$0xf]
      %v406 = vld [vmem:[%s299 + $0xc] sm:$0xf]
      %v407 = vld [vmem:[%s299 + $0x10] sm:$0xf]
      %v408 = vld [vmem:[%s299 + $0x14] sm:$0xf]
      %v409 = vld [vmem:[%s299 + $0x18] sm:$0xf]
      %v410 = vld [vmem:[%s299 + $0x1c] sm:$0xf]
      %v411 = vld [vmem:[%s299 + $0x20] sm:$0xf]
      %v412 = vld [vmem:[%s299 + $0x24] sm:$0xf]
      %v413 = vld [vmem:[%s299 + $0x28] sm:$0xf]
      %v414 = vld [vmem:[%s299 + $0x2c] sm:$0xf]
      %v415 = vld [vmem:[%s299 + $0x30] sm:$0xf]
      %v416 = vld [vmem:[%s299 + $0x34] sm:$0xf]
      %v417 = vld [vmem:[%s299 + $0x38] sm:$0xf]
      %v418 = vld [vmem:[%s299 + $0x3c] sm:$0xf]
      %v419 = vld [vmem:[%s299 + $0x40] sm:$0xf]
      %v420 = vld [vmem:[%s299 + $0x44] sm:$0xf]
      %v421 = vld [vmem:[%s299 + $0x48] sm:$0xf]
      %v422 = vld [vmem:[%s299 + $0x4c] sm:$0xf]
      %v423 = vld [vmem:[%s299 + $0x50] sm:$0xf]
      %v424 = vld [vmem:[%s299 + $0x54] sm:$0xf]
      %v425 = vld [vmem:[%s299 + $0x58] sm:$0xf]
      %v426 = vld [vmem:[%s299 + $0x5c] sm:$0xf]
      %v427 = vld [vmem:[%s299 + $0x60] sm:$0xf]
      %v428 = vld [vmem:[%s299 + $0x64] sm:$0xf]
      %v429 = vld [vmem:[%s299 + $0x68] sm:$0xf]
      %v430 = vld [vmem:[%s299 + $0x6c] sm:$0xf]
      %v431 = vld [vmem:[%s299 + $0x70] sm:$0xf]
      %v432 = vld [vmem:[%s299 + $0x74] sm:$0xf]
      %v433 = vld [vmem:[%s299 + $0x78] sm:$0xf]
      %v434 = vld [vmem:[%s299 + $0x7c] sm:$0xf]
      %v435 = vld [vmem:[%s299 + $0x80] sm:$0xf]
      %v436 = vld [vmem:[%s299 + $0x84] sm:$0xf]
      %v437 = vld [vmem:[%s299 + $0x88] sm:$0xf]
      %v438 = vld [vmem:[%s299 + $0x8c] sm:$0xf]
      %v439 = vld [vmem:[%s299 + $0x90] sm:$0xf]
      %v440 = vld [vmem:[%s299 + $0x94] sm:$0xf]
      %v441 = vld [vmem:[%s299 + $0x98] sm:$0xf]
      %v442 = vld [vmem:[%s299 + $0x9c] sm:$0xf]
      %v443 = vld [vmem:[%s299 + $0xa0] sm:$0xf]
      %v444 = vld [vmem:[%s299 + $0xa4] sm:$0xf]
      %v445 = vld [vmem:[%s299 + $0xa8] sm:$0xf]
      %v446 = vld [vmem:[%s299 + $0xac] sm:$0xf]
      %v447 = vld [vmem:[%s299 + $0xb0] sm:$0xf]
      %v448 = vld [vmem:[%s299 + $0xb4] sm:$0xf]
      %v449 = vld [vmem:[%s299 + $0xb8] sm:$0xf]
      %v450 = vld [vmem:[%s299 + $0xbc] sm:$0xf]
      %v451 = vld [vmem:[%s299 + $0xc0] sm:$0xf]
      %v452 = vld [vmem:[%s299 + $0xc4] sm:$0xf]
      %v453 = vld [vmem:[%s299 + $0xc8] sm:$0xf]
      %v454 = vld [vmem:[%s299 + $0xcc] sm:$0xf]
      %v455 = vld [vmem:[%s299 + $0xd0] sm:$0xf]
      %v456 = vld [vmem:[%s299 + $0xd4] sm:$0xf]
      %v457 = vld [vmem:[%s299 + $0xd8] sm:$0xf]
      %v458 = vld [vmem:[%s299 + $0xdc] sm:$0xf]
      %v459 = vld [vmem:[%s299 + $0xe0] sm:$0xf]
      %v460 = vld [vmem:[%s299 + $0xe4] sm:$0xf]
      %v461 = vld [vmem:[%s299 + $0xe8] sm:$0xf]
      %v462 = vld [vmem:[%s299 + $0xec] sm:$0xf]
      %v463 = vld [vmem:[%s299 + $0xf0] sm:$0xf]
      %v464 = vld [vmem:[%s299 + $0xf4] sm:$0xf]
      %v465 = vld [vmem:[%s299 + $0xf8] sm:$0xf]
      %v466 = vld [vmem:[%s299 + $0xfc] sm:$0xf]
      %v467 = vld [vmem:[%s3] sm:$0xf]
      %v468 = vld [vmem:[%s3 + $0x4] sm:$0xf]
      %v469 = vld [vmem:[%s3 + $0x8] sm:$0xf]
      %v470 = vld [vmem:[%s3 + $0xc] sm:$0xf]
      %v471 = vld [vmem:[%s3 + $0x10] sm:$0xf]
      %v472 = vld [vmem:[%s3 + $0x14] sm:$0xf]
      %v473 = vld [vmem:[%s3 + $0x18] sm:$0xf]
      %v474 = vld [vmem:[%s3 + $0x1c] sm:$0xf]
      %v475 = vld [vmem:[%s3 + $0x20] sm:$0xf]
      %v476 = vld [vmem:[%s3 + $0x24] sm:$0xf]
      %v477 = vld [vmem:[%s3 + $0x28] sm:$0xf]
      %v478 = vld [vmem:[%s3 + $0x2c] sm:$0xf]
      %v479 = vld [vmem:[%s3 + $0x30] sm:$0xf]
      %v480 = vld [vmem:[%s3 + $0x34] sm:$0xf]
      %v481 = vld [vmem:[%s3 + $0x38] sm:$0xf]
      %v482 = vld [vmem:[%s3 + $0x3c] sm:$0xf]
      %v547 = vunpack.c.l.b16 %v403
      %v548 = vunpack.c.l.b16 %v404
      %v549 = vunpack.c.l.b16 %v405
      %v550 = vunpack.c.l.b16 %v406
      %v551 = vunpack.c.l.b16 %v407
      %v552 = vunpack.c.l.b16 %v408
      %v553 = vunpack.c.l.b16 %v409
      %v554 = vunpack.c.l.b16 %v410
      %v555 = vunpack.c.l.b16 %v411
      %v556 = vunpack.c.l.b16 %v412
      %v557 = vunpack.c.l.b16 %v413
      %v558 = vunpack.c.l.b16 %v414
      %v559 = vunpack.c.l.b16 %v415
      %v560 = vunpack.c.l.b16 %v416
      %v561 = vunpack.c.l.b16 %v417
      %v562 = vunpack.c.l.b16 %v418
      %v563 = vunpack.c.l.b16 %v419
      %v564 = vunpack.c.l.b16 %v420
      %v565 = vunpack.c.l.b16 %v421
      %v566 = vunpack.c.l.b16 %v422
      %v567 = vunpack.c.l.b16 %v423
      %v568 = vunpack.c.l.b16 %v424
      %v569 = vunpack.c.l.b16 %v425
      %v570 = vunpack.c.l.b16 %v426
      %v571 = vunpack.c.l.b16 %v427
      %v572 = vunpack.c.l.b16 %v428
      %v573 = vunpack.c.l.b16 %v429
      %v574 = vunpack.c.l.b16 %v430
      %v575 = vunpack.c.l.b16 %v431
      %v576 = vunpack.c.l.b16 %v432
      %v577 = vunpack.c.l.b16 %v433
      %v578 = vunpack.c.l.b16 %v434
      %v579 = vunpack.c.l.b16 %v435
      %v580 = vunpack.c.l.b16 %v436
      %v581 = vunpack.c.l.b16 %v437
      %v582 = vunpack.c.l.b16 %v438
      %v583 = vunpack.c.l.b16 %v439
      %v584 = vunpack.c.l.b16 %v440
      %v585 = vunpack.c.l.b16 %v441
      %v586 = vunpack.c.l.b16 %v442
      %v587 = vunpack.c.l.b16 %v443
      %v588 = vunpack.c.l.b16 %v444
      %v589 = vunpack.c.l.b16 %v445
      %v590 = vunpack.c.l.b16 %v446
      %v591 = vunpack.c.l.b16 %v447
      %v592 = vunpack.c.l.b16 %v448
      %v593 = vunpack.c.l.b16 %v449
      %v594 = vunpack.c.l.b16 %v450
      %v595 = vunpack.c.l.b16 %v451
      %v596 = vunpack.c.l.b16 %v452
      %v597 = vunpack.c.l.b16 %v453
      %v598 = vunpack.c.l.b16 %v454
      %v599 = vunpack.c.l.b16 %v455
      %v600 = vunpack.c.l.b16 %v456
      %v601 = vunpack.c.l.b16 %v457
      %v602 = vunpack.c.l.b16 %v458
      %v603 = vunpack.c.l.b16 %v459
      %v604 = vunpack.c.l.b16 %v460
      %v605 = vunpack.c.l.b16 %v461
      %v606 = vunpack.c.l.b16 %v462
      %v607 = vunpack.c.l.b16 %v463
      %v608 = vunpack.c.l.b16 %v464
      %v609 = vunpack.c.l.b16 %v465
      %v610 = vunpack.c.l.b16 %v466
      %v611 = vpack.c.b16 %v548, %v547
      %v612 = vpack.c.b16 %v550, %v549
      %v613 = vpack.c.b16 %v552, %v551
      %v614 = vpack.c.b16 %v554, %v553
      %v615 = vpack.c.b16 %v556, %v555
      %v616 = vpack.c.b16 %v558, %v557
      %v617 = vpack.c.b16 %v560, %v559
      %v618 = vpack.c.b16 %v562, %v561
      %v619 = vpack.c.b16 %v564, %v563
      %v620 = vpack.c.b16 %v566, %v565
      %v621 = vpack.c.b16 %v568, %v567
      %v622 = vpack.c.b16 %v570, %v569
      %v623 = vpack.c.b16 %v572, %v571
      %v624 = vpack.c.b16 %v574, %v573
      %v625 = vpack.c.b16 %v576, %v575
      %v626 = vpack.c.b16 %v578, %v577
      %v627 = vpack.c.b16 %v580, %v579
      %v628 = vpack.c.b16 %v582, %v581
      %v629 = vpack.c.b16 %v584, %v583
      %v630 = vpack.c.b16 %v586, %v585
      %v631 = vpack.c.b16 %v588, %v587
      %v632 = vpack.c.b16 %v590, %v589
      %v633 = vpack.c.b16 %v592, %v591
      %v634 = vpack.c.b16 %v594, %v593
      %v635 = vpack.c.b16 %v596, %v595
      %v636 = vpack.c.b16 %v598, %v597
      %v637 = vpack.c.b16 %v600, %v599
      %v638 = vpack.c.b16 %v602, %v601
      %v639 = vpack.c.b16 %v604, %v603
      %v640 = vpack.c.b16 %v606, %v605
      %v641 = vpack.c.b16 %v608, %v607
      %v642 = vpack.c.b16 %v610, %v609
      %v691 = vunpack.c.l.b16 %v467
      %v692 = vunpack.c.l.b16 %v468
      %v693 = vunpack.c.l.b16 %v469
      %v694 = vunpack.c.l.b16 %v470
      %v695 = vunpack.c.l.b16 %v471
      %v696 = vunpack.c.l.b16 %v472
      %v697 = vunpack.c.l.b16 %v473
      %v698 = vunpack.c.l.b16 %v474
      %v699 = vunpack.c.l.b16 %v475
      %v700 = vunpack.c.l.b16 %v476
      %v701 = vunpack.c.l.b16 %v477
      %v702 = vunpack.c.l.b16 %v478
      %v703 = vunpack.c.l.b16 %v479
      %v704 = vunpack.c.l.b16 %v480
      %v705 = vunpack.c.l.b16 %v481
      %v706 = vunpack.c.l.b16 %v482
      %v707 = vpack.c.b16 %v692, %v691
      %v708 = vpack.c.b16 %v694, %v693
      %v709 = vpack.c.b16 %v696, %v695
      %v710 = vpack.c.b16 %v698, %v697
      %v711 = vpack.c.b16 %v700, %v699
      %v712 = vpack.c.b16 %v702, %v701
      %v713 = vpack.c.b16 %v704, %v703
      %v714 = vpack.c.b16 %v706, %v705
      %723 = vmatpush.bf16.msra.mxu0 %v714
      %724 = vmatpush.bf16.msra.mxu0 %v713
      %725 = vmatpush.bf16.msra.mxu0 %v712
      %726 = vmatpush.bf16.msra.mxu0 %v711
      %727 = vmatpush.bf16.msra.mxu0 %v710
      %728 = vmatpush.bf16.msra.mxu0 %v709
      %729 = vmatpush.bf16.msra.mxu0 %v708
      %730 = vmatpush.bf16.msra.mxu0 %v707
      %731 = vmatmul.bf16.gmra.mxu0 %v611
      %v732 = vpop.f32.mrf.mxu0
      %v733 = vadd.f32 0.0, %v732
      %v734 = vpop.f32.mrf.mxu0
      %v735 = vadd.f32 0.0, %v734
      %736 = vmatmul.bf16.gmra.mxu0 %v612
      %v737 = vpop.f32.mrf.mxu0
      %v738 = vadd.f32 0.0, %v737
      %v739 = vpop.f32.mrf.mxu0
      %v740 = vadd.f32 0.0, %v739
      %741 = vmatmul.bf16.gmra.mxu0 %v613
      %v742 = vpop.f32.mrf.mxu0
      %v743 = vadd.f32 0.0, %v742
      %v744 = vpop.f32.mrf.mxu0
      %v745 = vadd.f32 0.0, %v744
      %746 = vmatmul.bf16.gmra.mxu0 %v614
      %v747 = vpop.f32.mrf.mxu0
      %v748 = vadd.f32 0.0, %v747
      %v749 = vpop.f32.mrf.mxu0
      %v750 = vadd.f32 0.0, %v749
      %751 = vmatmul.bf16.gmra.mxu0 %v615
      %v752 = vpop.f32.mrf.mxu0
      %v753 = vadd.f32 0.0, %v752
      %v754 = vpop.f32.mrf.mxu0
      %v755 = vadd.f32 0.0, %v754
      %756 = vmatmul.bf16.gmra.mxu0 %v616
      %v757 = vpop.f32.mrf.mxu0
      %v758 = vadd.f32 0.0, %v757
      %v759 = vpop.f32.mrf.mxu0
      %v760 = vadd.f32 0.0, %v759
      %761 = vmatmul.bf16.gmra.mxu0 %v617
      %v762 = vpop.f32.mrf.mxu0
      %v763 = vadd.f32 0.0, %v762
      %v764 = vpop.f32.mrf.mxu0
      %v765 = vadd.f32 0.0, %v764
      %766 = vmatmul.bf16.gmra.mxu0 %v618
      %v767 = vpop.f32.mrf.mxu0
      %v768 = vadd.f32 0.0, %v767
      %v769 = vpop.f32.mrf.mxu0
      %v770 = vadd.f32 0.0, %v769
      %771 = vmatmul.bf16.gmra.mxu0 %v619
      %v772 = vpop.f32.mrf.mxu0
      %v773 = vadd.f32 0.0, %v772
      %v774 = vpop.f32.mrf.mxu0
      %v775 = vadd.f32 0.0, %v774
      %776 = vmatmul.bf16.gmra.mxu0 %v620
      %v777 = vpop.f32.mrf.mxu0
      %v778 = vadd.f32 0.0, %v777
      %v779 = vpop.f32.mrf.mxu0
      %v780 = vadd.f32 0.0, %v779
      %781 = vmatmul.bf16.gmra.mxu0 %v621
      %v782 = vpop.f32.mrf.mxu0
      %v783 = vadd.f32 0.0, %v782
      %v784 = vpop.f32.mrf.mxu0
      %v785 = vadd.f32 0.0, %v784
      %786 = vmatmul.bf16.gmra.mxu0 %v622
      %v787 = vpop.f32.mrf.mxu0
      %v788 = vadd.f32 0.0, %v787
      %v789 = vpop.f32.mrf.mxu0
      %v790 = vadd.f32 0.0, %v789
      %791 = vmatmul.bf16.gmra.mxu0 %v623
      %v792 = vpop.f32.mrf.mxu0
      %v793 = vadd.f32 0.0, %v792
      %v794 = vpop.f32.mrf.mxu0
      %v795 = vadd.f32 0.0, %v794
      %796 = vmatmul.bf16.gmra.mxu0 %v624
      %v797 = vpop.f32.mrf.mxu0
      %v798 = vadd.f32 0.0, %v797
      %v799 = vpop.f32.mrf.mxu0
      %v800 = vadd.f32 0.0, %v799
      %801 = vmatmul.bf16.gmra.mxu0 %v625
      %v802 = vpop.f32.mrf.mxu0
      %v803 = vadd.f32 0.0, %v802
      %v804 = vpop.f32.mrf.mxu0
      %v805 = vadd.f32 0.0, %v804
      %806 = vmatmul.bf16.gmra.mxu0 %v626
      %v807 = vpop.f32.mrf.mxu0
      %v808 = vadd.f32 0.0, %v807
      %v809 = vpop.f32.mrf.mxu0
      %v810 = vadd.f32 0.0, %v809
      %811 = vmatmul.bf16.gmra.mxu0 %v627
      %v812 = vpop.f32.mrf.mxu0
      %v813 = vadd.f32 0.0, %v812
      %v814 = vpop.f32.mrf.mxu0
      %v815 = vadd.f32 0.0, %v814
      %816 = vmatmul.bf16.gmra.mxu0 %v628
      %v817 = vpop.f32.mrf.mxu0
      %v818 = vadd.f32 0.0, %v817
      %v819 = vpop.f32.mrf.mxu0
      %v820 = vadd.f32 0.0, %v819
      %821 = vmatmul.bf16.gmra.mxu0 %v629
      %v822 = vpop.f32.mrf.mxu0
      %v823 = vadd.f32 0.0, %v822
      %v824 = vpop.f32.mrf.mxu0
      %v825 = vadd.f32 0.0, %v824
      %826 = vmatmul.bf16.gmra.mxu0 %v630
      %v827 = vpop.f32.mrf.mxu0
      %v828 = vadd.f32 0.0, %v827
      %v829 = vpop.f32.mrf.mxu0
      %v830 = vadd.f32 0.0, %v829
      %831 = vmatmul.bf16.gmra.mxu0 %v631
      %v832 = vpop.f32.mrf.mxu0
      %v833 = vadd.f32 0.0, %v832
      %v834 = vpop.f32.mrf.mxu0
      %v835 = vadd.f32 0.0, %v834
      %836 = vmatmul.bf16.gmra.mxu0 %v632
      %v837 = vpop.f32.mrf.mxu0
      %v838 = vadd.f32 0.0, %v837
      %v839 = vpop.f32.mrf.mxu0
      %v840 = vadd.f32 0.0, %v839
      %841 = vmatmul.bf16.gmra.mxu0 %v633
      %v842 = vpop.f32.mrf.mxu0
      %v843 = vadd.f32 0.0, %v842
      %v844 = vpop.f32.mrf.mxu0
      %v845 = vadd.f32 0.0, %v844
      %846 = vmatmul.bf16.gmra.mxu0 %v634
      %v847 = vpop.f32.mrf.mxu0
      %v848 = vadd.f32 0.0, %v847
      %v849 = vpop.f32.mrf.mxu0
      %v850 = vadd.f32 0.0, %v849
      %851 = vmatmul.bf16.gmra.mxu0 %v635
      %v852 = vpop.f32.mrf.mxu0
      %v853 = vadd.f32 0.0, %v852
      %v854 = vpop.f32.mrf.mxu0
      %v855 = vadd.f32 0.0, %v854
      %856 = vmatmul.bf16.gmra.mxu0 %v636
      %v857 = vpop.f32.mrf.mxu0
      %v858 = vadd.f32 0.0, %v857
      %v859 = vpop.f32.mrf.mxu0
      %v860 = vadd.f32 0.0, %v859
      %861 = vmatmul.bf16.gmra.mxu0 %v637
      %v862 = vpop.f32.mrf.mxu0
      %v863 = vadd.f32 0.0, %v862
      %v864 = vpop.f32.mrf.mxu0
      %v865 = vadd.f32 0.0, %v864
      %866 = vmatmul.bf16.gmra.mxu0 %v638
      %v867 = vpop.f32.mrf.mxu0
      %v868 = vadd.f32 0.0, %v867
      %v869 = vpop.f32.mrf.mxu0
      %v870 = vadd.f32 0.0, %v869
      %871 = vmatmul.bf16.gmra.mxu0 %v639
      %v872 = vpop.f32.mrf.mxu0
      %v873 = vadd.f32 0.0, %v872
      %v874 = vpop.f32.mrf.mxu0
      %v875 = vadd.f32 0.0, %v874
      %876 = vmatmul.bf16.gmra.mxu0 %v640
      %v877 = vpop.f32.mrf.mxu0
      %v878 = vadd.f32 0.0, %v877
      %v879 = vpop.f32.mrf.mxu0
      %v880 = vadd.f32 0.0, %v879
      %881 = vmatmul.bf16.gmra.mxu0 %v641
      %v882 = vpop.f32.mrf.mxu0
      %v883 = vadd.f32 0.0, %v882
      %v884 = vpop.f32.mrf.mxu0
      %v885 = vadd.f32 0.0, %v884
      %886 = vmatmul.bf16.gmra.mxu0 %v642
      %v887 = vpop.f32.mrf.mxu0
      %v888 = vadd.f32 0.0, %v887
      %v889 = vpop.f32.mrf.mxu0
      %v890 = vadd.f32 0.0, %v889
      %891 = vdwg.mxu0
      %v956 = vunpack.c.l.b16 %v307
      %v957 = vunpack.c.h.b16 %v307
      %v958 = vunpack.c.l.b16 %v308
      %v959 = vunpack.c.h.b16 %v308
      %v960 = vunpack.c.l.b16 %v309
      %v961 = vunpack.c.h.b16 %v309
      %v962 = vunpack.c.l.b16 %v310
      %v963 = vunpack.c.h.b16 %v310
      %v964 = vunpack.c.l.b16 %v311
      %v965 = vunpack.c.h.b16 %v311
      %v966 = vunpack.c.l.b16 %v312
      %v967 = vunpack.c.h.b16 %v312
      %v968 = vunpack.c.l.b16 %v313
      %v969 = vunpack.c.h.b16 %v313
      %v970 = vunpack.c.l.b16 %v314
      %v971 = vunpack.c.h.b16 %v314
      %v972 = vunpack.c.l.b16 %v315
      %v973 = vunpack.c.h.b16 %v315
      %v974 = vunpack.c.l.b16 %v316
      %v975 = vunpack.c.h.b16 %v316
      %v976 = vunpack.c.l.b16 %v317
      %v977 = vunpack.c.h.b16 %v317
      %v978 = vunpack.c.l.b16 %v318
      %v979 = vunpack.c.h.b16 %v318
      %v980 = vunpack.c.l.b16 %v319
      %v981 = vunpack.c.h.b16 %v319
      %v982 = vunpack.c.l.b16 %v320
      %v983 = vunpack.c.h.b16 %v320
      %v984 = vunpack.c.l.b16 %v321
      %v985 = vunpack.c.h.b16 %v321
      %v986 = vunpack.c.l.b16 %v322
      %v987 = vunpack.c.h.b16 %v322
      %v988 = vunpack.c.l.b16 %v323
      %v989 = vunpack.c.h.b16 %v323
      %v990 = vunpack.c.l.b16 %v324
      %v991 = vunpack.c.h.b16 %v324
      %v992 = vunpack.c.l.b16 %v325
      %v993 = vunpack.c.h.b16 %v325
      %v994 = vunpack.c.l.b16 %v326
      %v995 = vunpack.c.h.b16 %v326
      %v996 = vunpack.c.l.b16 %v327
      %v997 = vunpack.c.h.b16 %v327
      %v998 = vunpack.c.l.b16 %v328
      %v999 = vunpack.c.h.b16 %v328
      %v1000 = vunpack.c.l.b16 %v329
      %v1001 = vunpack.c.h.b16 %v329
      %v1002 = vunpack.c.l.b16 %v330
      %v1003 = vunpack.c.h.b16 %v330
      %v1004 = vunpack.c.l.b16 %v331
      %v1005 = vunpack.c.h.b16 %v331
      %v1006 = vunpack.c.l.b16 %v332
      %v1007 = vunpack.c.h.b16 %v332
      %v1008 = vunpack.c.l.b16 %v333
      %v1009 = vunpack.c.h.b16 %v333
      %v1010 = vunpack.c.l.b16 %v334
      %v1011 = vunpack.c.h.b16 %v334
      %v1012 = vunpack.c.l.b16 %v335
      %v1013 = vunpack.c.h.b16 %v335
      %v1014 = vunpack.c.l.b16 %v336
      %v1015 = vunpack.c.h.b16 %v336
      %v1016 = vunpack.c.l.b16 %v337
      %v1017 = vunpack.c.h.b16 %v337
      %v1018 = vunpack.c.l.b16 %v338
      %v1019 = vunpack.c.h.b16 %v338
      %v1020 = vunpack.c.l.b16 %v339
      %v1021 = vunpack.c.h.b16 %v339
      %v1022 = vunpack.c.l.b16 %v340
      %v1023 = vunpack.c.h.b16 %v340
      %v1024 = vunpack.c.l.b16 %v341
      %v1025 = vunpack.c.h.b16 %v341
      %v1026 = vunpack.c.l.b16 %v342
      %v1027 = vunpack.c.h.b16 %v342
      %v1028 = vunpack.c.l.b16 %v343
      %v1029 = vunpack.c.h.b16 %v343
      %v1030 = vunpack.c.l.b16 %v344
      %v1031 = vunpack.c.h.b16 %v344
      %v1032 = vunpack.c.l.b16 %v345
      %v1033 = vunpack.c.h.b16 %v345
      %v1034 = vunpack.c.l.b16 %v346
      %v1035 = vunpack.c.h.b16 %v346
      %v1036 = vunpack.c.l.b16 %v347
      %v1037 = vunpack.c.h.b16 %v347
      %v1038 = vunpack.c.l.b16 %v348
      %v1039 = vunpack.c.h.b16 %v348
      %v1040 = vunpack.c.l.b16 %v349
      %v1041 = vunpack.c.h.b16 %v349
      %v1042 = vunpack.c.l.b16 %v350
      %v1043 = vunpack.c.h.b16 %v350
      %v1044 = vunpack.c.l.b16 %v351
      %v1045 = vunpack.c.h.b16 %v351
      %v1046 = vunpack.c.l.b16 %v352
      %v1047 = vunpack.c.h.b16 %v352
      %v1048 = vunpack.c.l.b16 %v353
      %v1049 = vunpack.c.h.b16 %v353
      %v1050 = vunpack.c.l.b16 %v354
      %v1051 = vunpack.c.h.b16 %v354
      %v1052 = vunpack.c.l.b16 %v355
      %v1053 = vunpack.c.h.b16 %v355
      %v1054 = vunpack.c.l.b16 %v356
      %v1055 = vunpack.c.h.b16 %v356
      %v1056 = vunpack.c.l.b16 %v357
      %v1057 = vunpack.c.h.b16 %v357
      %v1058 = vunpack.c.l.b16 %v358
      %v1059 = vunpack.c.h.b16 %v358
      %v1060 = vunpack.c.l.b16 %v359
      %v1061 = vunpack.c.h.b16 %v359
      %v1062 = vunpack.c.l.b16 %v360
      %v1063 = vunpack.c.h.b16 %v360
      %v1064 = vunpack.c.l.b16 %v361
      %v1065 = vunpack.c.h.b16 %v361
      %v1066 = vunpack.c.l.b16 %v362
      %v1067 = vunpack.c.h.b16 %v362
      %v1068 = vunpack.c.l.b16 %v363
      %v1069 = vunpack.c.h.b16 %v363
      %v1070 = vunpack.c.l.b16 %v364
      %v1071 = vunpack.c.h.b16 %v364
      %v1072 = vunpack.c.l.b16 %v365
      %v1073 = vunpack.c.h.b16 %v365
      %v1074 = vunpack.c.l.b16 %v366
      %v1075 = vunpack.c.h.b16 %v366
      %v1076 = vunpack.c.l.b16 %v367
      %v1077 = vunpack.c.h.b16 %v367
      %v1078 = vunpack.c.l.b16 %v368
      %v1079 = vunpack.c.h.b16 %v368
      %v1080 = vunpack.c.l.b16 %v369
      %v1081 = vunpack.c.h.b16 %v369
      %v1082 = vunpack.c.l.b16 %v370
      %v1083 = vunpack.c.h.b16 %v370
      %v1084 = vpack.c.b16 %v958, %v956
      %v1085 = vpack.c.b16 %v959, %v957
      %v1086 = vpack.c.b16 %v962, %v960
      %v1087 = vpack.c.b16 %v963, %v961
      %v1088 = vpack.c.b16 %v966, %v964
      %v1089 = vpack.c.b16 %v967, %v965
      %v1090 = vpack.c.b16 %v970, %v968
      %v1091 = vpack.c.b16 %v971, %v969
      %v1092 = vpack.c.b16 %v974, %v972
      %v1093 = vpack.c.b16 %v975, %v973
      %v1094 = vpack.c.b16 %v978, %v976
      %v1095 = vpack.c.b16 %v979, %v977
      %v1096 = vpack.c.b16 %v982, %v980
      %v1097 = vpack.c.b16 %v983, %v981
      %v1098 = vpack.c.b16 %v986, %v984
      %v1099 = vpack.c.b16 %v987, %v985
      %v1100 = vpack.c.b16 %v990, %v988
      %v1101 = vpack.c.b16 %v991, %v989
      %v1102 = vpack.c.b16 %v994, %v992
      %v1103 = vpack.c.b16 %v995, %v993
      %v1104 = vpack.c.b16 %v998, %v996
      %v1105 = vpack.c.b16 %v999, %v997
      %v1106 = vpack.c.b16 %v1002, %v1000
      %v1107 = vpack.c.b16 %v1003, %v1001
      %v1108 = vpack.c.b16 %v1006, %v1004
      %v1109 = vpack.c.b16 %v1007, %v1005
      %v1110 = vpack.c.b16 %v1010, %v1008
      %v1111 = vpack.c.b16 %v1011, %v1009
      %v1112 = vpack.c.b16 %v1014, %v1012
      %v1113 = vpack.c.b16 %v1015, %v1013
      %v1114 = vpack.c.b16 %v1018, %v1016
      %v1115 = vpack.c.b16 %v1019, %v1017
      %v1116 = vpack.c.b16 %v1022, %v1020
      %v1117 = vpack.c.b16 %v1023, %v1021
      %v1118 = vpack.c.b16 %v1026, %v1024
      %v1119 = vpack.c.b16 %v1027, %v1025
      %v1120 = vpack.c.b16 %v1030, %v1028
      %v1121 = vpack.c.b16 %v1031, %v1029
      %v1122 = vpack.c.b16 %v1034, %v1032
      %v1123 = vpack.c.b16 %v1035, %v1033
      %v1124 = vpack.c.b16 %v1038, %v1036
      %v1125 = vpack.c.b16 %v1039, %v1037
      %v1126 = vpack.c.b16 %v1042, %v1040
      %v1127 = vpack.c.b16 %v1043, %v1041
      %v1128 = vpack.c.b16 %v1046, %v1044
      %v1129 = vpack.c.b16 %v1047, %v1045
      %v1130 = vpack.c.b16 %v1050, %v1048
      %v1131 = vpack.c.b16 %v1051, %v1049
      %v1132 = vpack.c.b16 %v1054, %v1052
      %v1133 = vpack.c.b16 %v1055, %v1053
      %v1134 = vpack.c.b16 %v1058, %v1056
      %v1135 = vpack.c.b16 %v1059, %v1057
      %v1136 = vpack.c.b16 %v1062, %v1060
      %v1137 = vpack.c.b16 %v1063, %v1061
      %v1138 = vpack.c.b16 %v1066, %v1064
      %v1139 = vpack.c.b16 %v1067, %v1065
      %v1140 = vpack.c.b16 %v1070, %v1068
      %v1141 = vpack.c.b16 %v1071, %v1069
      %v1142 = vpack.c.b16 %v1074, %v1072
      %v1143 = vpack.c.b16 %v1075, %v1073
      %v1144 = vpack.c.b16 %v1078, %v1076
      %v1145 = vpack.c.b16 %v1079, %v1077
      %v1146 = vpack.c.b16 %v1082, %v1080
      %v1147 = vpack.c.b16 %v1083, %v1081
      %v1244 = vunpack.c.l.b16 %v371
      %v1245 = vunpack.c.l.b16 %v372
      %v1246 = vunpack.c.l.b16 %v373
      %v1247 = vunpack.c.l.b16 %v374
      %v1248 = vunpack.c.l.b16 %v375
      %v1249 = vunpack.c.l.b16 %v376
      %v1250 = vunpack.c.l.b16 %v377
      %v1251 = vunpack.c.l.b16 %v378
      %v1252 = vunpack.c.l.b16 %v379
      %v1253 = vunpack.c.l.b16 %v380
      %v1254 = vunpack.c.l.b16 %v381
      %v1255 = vunpack.c.l.b16 %v382
      %v1256 = vunpack.c.l.b16 %v383
      %v1257 = vunpack.c.l.b16 %v384
      %v1258 = vunpack.c.l.b16 %v385
      %v1259 = vunpack.c.l.b16 %v386
      %v1260 = vunpack.c.l.b16 %v387
      %v1261 = vunpack.c.l.b16 %v388
      %v1262 = vunpack.c.l.b16 %v389
      %v1263 = vunpack.c.l.b16 %v390
      %v1264 = vunpack.c.l.b16 %v391
      %v1265 = vunpack.c.l.b16 %v392
      %v1266 = vunpack.c.l.b16 %v393
      %v1267 = vunpack.c.l.b16 %v394
      %v1268 = vunpack.c.l.b16 %v395
      %v1269 = vunpack.c.l.b16 %v396
      %v1270 = vunpack.c.l.b16 %v397
      %v1271 = vunpack.c.l.b16 %v398
      %v1272 = vunpack.c.l.b16 %v399
      %v1273 = vunpack.c.l.b16 %v400
      %v1274 = vunpack.c.l.b16 %v401
      %v1275 = vunpack.c.l.b16 %v402
      %v1276 = vpack.c.b16 %v1245, %v1244
      %v1277 = vpack.c.b16 %v1247, %v1246
      %v1278 = vpack.c.b16 %v1249, %v1248
      %v1279 = vpack.c.b16 %v1251, %v1250
      %v1280 = vpack.c.b16 %v1253, %v1252
      %v1281 = vpack.c.b16 %v1255, %v1254
      %v1282 = vpack.c.b16 %v1257, %v1256
      %v1283 = vpack.c.b16 %v1259, %v1258
      %v1284 = vpack.c.b16 %v1261, %v1260
      %v1285 = vpack.c.b16 %v1263, %v1262
      %v1286 = vpack.c.b16 %v1265, %v1264
      %v1287 = vpack.c.b16 %v1267, %v1266
      %v1288 = vpack.c.b16 %v1269, %v1268
      %v1289 = vpack.c.b16 %v1271, %v1270
      %v1290 = vpack.c.b16 %v1273, %v1272
      %v1291 = vpack.c.b16 %v1275, %v1274
      %1308 = vmatpush.bf16.msra.mxu0 %v1283
      %1309 = vmatpush.bf16.msra.mxu0 %v1282
      %1310 = vmatpush.bf16.msra.mxu0 %v1281
      %1311 = vmatpush.bf16.msra.mxu0 %v1280
      %1312 = vmatpush.bf16.msra.mxu0 %v1279
      %1313 = vmatpush.bf16.msra.mxu0 %v1278
      %1314 = vmatpush.bf16.msra.mxu0 %v1277
      %1315 = vmatpush.bf16.msra.mxu0 %v1276
      %1316 = vmatmul.bf16.gmra.mxu0 %v1084
      %v1317 = vpop.f32.mrf.mxu0
      %v1318 = vadd.f32 %v733, %v1317
      %v1319 = vpop.f32.mrf.mxu0
      %v1320 = vadd.f32 %v735, %v1319
      %1321 = vmatmul.bf16.gmra.mxu0 %v1086
      %v1322 = vpop.f32.mrf.mxu0
      %v1323 = vadd.f32 %v738, %v1322
      %v1324 = vpop.f32.mrf.mxu0
      %v1325 = vadd.f32 %v740, %v1324
      %1326 = vmatmul.bf16.gmra.mxu0 %v1088
      %v1327 = vpop.f32.mrf.mxu0
      %v1328 = vadd.f32 %v743, %v1327
      %v1329 = vpop.f32.mrf.mxu0
      %v1330 = vadd.f32 %v745, %v1329
      %1331 = vmatmul.bf16.gmra.mxu0 %v1090
      %v1332 = vpop.f32.mrf.mxu0
      %v1333 = vadd.f32 %v748, %v1332
      %v1334 = vpop.f32.mrf.mxu0
      %v1335 = vadd.f32 %v750, %v1334
      %1336 = vmatmul.bf16.gmra.mxu0 %v1092
      %v1337 = vpop.f32.mrf.mxu0
      %v1338 = vadd.f32 %v753, %v1337
      %v1339 = vpop.f32.mrf.mxu0
      %v1340 = vadd.f32 %v755, %v1339
      %1341 = vmatmul.bf16.gmra.mxu0 %v1094
      %v1342 = vpop.f32.mrf.mxu0
      %v1343 = vadd.f32 %v758, %v1342
      %v1344 = vpop.f32.mrf.mxu0
      %v1345 = vadd.f32 %v760, %v1344
      %1346 = vmatmul.bf16.gmra.mxu0 %v1096
      %v1347 = vpop.f32.mrf.mxu0
      %v1348 = vadd.f32 %v763, %v1347
      %v1349 = vpop.f32.mrf.mxu0
      %v1350 = vadd.f32 %v765, %v1349
      %1351 = vmatmul.bf16.gmra.mxu0 %v1098
      %v1352 = vpop.f32.mrf.mxu0
      %v1353 = vadd.f32 %v768, %v1352
      %v1354 = vpop.f32.mrf.mxu0
      %v1355 = vadd.f32 %v770, %v1354
      %1356 = vmatmul.bf16.gmra.mxu0 %v1100
      %v1357 = vpop.f32.mrf.mxu0
      %v1358 = vadd.f32 %v773, %v1357
      %v1359 = vpop.f32.mrf.mxu0
      %v1360 = vadd.f32 %v775, %v1359
      %1361 = vmatmul.bf16.gmra.mxu0 %v1102
      %v1362 = vpop.f32.mrf.mxu0
      %v1363 = vadd.f32 %v778, %v1362
      %v1364 = vpop.f32.mrf.mxu0
      %v1365 = vadd.f32 %v780, %v1364
      %1366 = vmatmul.bf16.gmra.mxu0 %v1104
      %v1367 = vpop.f32.mrf.mxu0
      %v1368 = vadd.f32 %v783, %v1367
      %v1369 = vpop.f32.mrf.mxu0
      %v1370 = vadd.f32 %v785, %v1369
      %1371 = vmatmul.bf16.gmra.mxu0 %v1106
      %v1372 = vpop.f32.mrf.mxu0
      %v1373 = vadd.f32 %v788, %v1372
      %v1374 = vpop.f32.mrf.mxu0
      %v1375 = vadd.f32 %v790, %v1374
      %1376 = vmatmul.bf16.gmra.mxu0 %v1108
      %v1377 = vpop.f32.mrf.mxu0
      %v1378 = vadd.f32 %v793, %v1377
      %v1379 = vpop.f32.mrf.mxu0
      %v1380 = vadd.f32 %v795, %v1379
      %1381 = vmatmul.bf16.gmra.mxu0 %v1110
      %v1382 = vpop.f32.mrf.mxu0
      %v1383 = vadd.f32 %v798, %v1382
      %v1384 = vpop.f32.mrf.mxu0
      %v1385 = vadd.f32 %v800, %v1384
      %1386 = vmatmul.bf16.gmra.mxu0 %v1112
      %v1387 = vpop.f32.mrf.mxu0
      %v1388 = vadd.f32 %v803, %v1387
      %v1389 = vpop.f32.mrf.mxu0
      %v1390 = vadd.f32 %v805, %v1389
      %1391 = vmatmul.bf16.gmra.mxu0 %v1114
      %v1392 = vpop.f32.mrf.mxu0
      %v1393 = vadd.f32 %v808, %v1392
      %v1394 = vpop.f32.mrf.mxu0
      %v1395 = vadd.f32 %v810, %v1394
      %1396 = vmatmul.bf16.gmra.mxu0 %v1116
      %v1397 = vpop.f32.mrf.mxu0
      %v1398 = vadd.f32 %v813, %v1397
      %v1399 = vpop.f32.mrf.mxu0
      %v1400 = vadd.f32 %v815, %v1399
      %1401 = vmatmul.bf16.gmra.mxu0 %v1118
      %v1402 = vpop.f32.mrf.mxu0
      %v1403 = vadd.f32 %v818, %v1402
      %v1404 = vpop.f32.mrf.mxu0
      %v1405 = vadd.f32 %v820, %v1404
      %1406 = vmatmul.bf16.gmra.mxu0 %v1120
      %v1407 = vpop.f32.mrf.mxu0
      %v1408 = vadd.f32 %v823, %v1407
      %v1409 = vpop.f32.mrf.mxu0
      %v1410 = vadd.f32 %v825, %v1409
      %1411 = vmatmul.bf16.gmra.mxu0 %v1122
      %v1412 = vpop.f32.mrf.mxu0
      %v1413 = vadd.f32 %v828, %v1412
      %v1414 = vpop.f32.mrf.mxu0
      %v1415 = vadd.f32 %v830, %v1414
      %1416 = vmatmul.bf16.gmra.mxu0 %v1124
      %v1417 = vpop.f32.mrf.mxu0
      %v1418 = vadd.f32 %v833, %v1417
      %v1419 = vpop.f32.mrf.mxu0
      %v1420 = vadd.f32 %v835, %v1419
      %1421 = vmatmul.bf16.gmra.mxu0 %v1126
      %v1422 = vpop.f32.mrf.mxu0
      %v1423 = vadd.f32 %v838, %v1422
      %v1424 = vpop.f32.mrf.mxu0
      %v1425 = vadd.f32 %v840, %v1424
      %1426 = vmatmul.bf16.gmra.mxu0 %v1128
      %v1427 = vpop.f32.mrf.mxu0
      %v1428 = vadd.f32 %v843, %v1427
      %v1429 = vpop.f32.mrf.mxu0
      %v1430 = vadd.f32 %v845, %v1429
      %1431 = vmatmul.bf16.gmra.mxu0 %v1130
      %v1432 = vpop.f32.mrf.mxu0
      %v1433 = vadd.f32 %v848, %v1432
      %v1434 = vpop.f32.mrf.mxu0
      %v1435 = vadd.f32 %v850, %v1434
      %1436 = vmatmul.bf16.gmra.mxu0 %v1132
      %v1437 = vpop.f32.mrf.mxu0
      %v1438 = vadd.f32 %v853, %v1437
      %v1439 = vpop.f32.mrf.mxu0
      %v1440 = vadd.f32 %v855, %v1439
      %1441 = vmatmul.bf16.gmra.mxu0 %v1134
      %v1442 = vpop.f32.mrf.mxu0
      %v1443 = vadd.f32 %v858, %v1442
      %v1444 = vpop.f32.mrf.mxu0
      %v1445 = vadd.f32 %v860, %v1444
      %1446 = vmatmul.bf16.gmra.mxu0 %v1136
      %v1447 = vpop.f32.mrf.mxu0
      %v1448 = vadd.f32 %v863, %v1447
      %v1449 = vpop.f32.mrf.mxu0
      %v1450 = vadd.f32 %v865, %v1449
      %1451 = vmatmul.bf16.gmra.mxu0 %v1138
      %v1452 = vpop.f32.mrf.mxu0
      %v1453 = vadd.f32 %v868, %v1452
      %v1454 = vpop.f32.mrf.mxu0
      %v1455 = vadd.f32 %v870, %v1454
      %1456 = vmatmul.bf16.gmra.mxu0 %v1140
      %v1457 = vpop.f32.mrf.mxu0
      %v1458 = vadd.f32 %v873, %v1457
      %v1459 = vpop.f32.mrf.mxu0
      %v1460 = vadd.f32 %v875, %v1459
      %1461 = vmatmul.bf16.gmra.mxu0 %v1142
      %v1462 = vpop.f32.mrf.mxu0
      %v1463 = vadd.f32 %v878, %v1462
      %v1464 = vpop.f32.mrf.mxu0
      %v1465 = vadd.f32 %v880, %v1464
      %1466 = vmatmul.bf16.gmra.mxu0 %v1144
      %v1467 = vpop.f32.mrf.mxu0
      %v1468 = vadd.f32 %v883, %v1467
      %v1469 = vpop.f32.mrf.mxu0
      %v1470 = vadd.f32 %v885, %v1469
      %1471 = vmatmul.bf16.gmra.mxu0 %v1146
      %v1472 = vpop.f32.mrf.mxu0
      %v1473 = vadd.f32 %v888, %v1472
      %v1474 = vpop.f32.mrf.mxu0
      %v1475 = vadd.f32 %v890, %v1474
      %1476 = vdwg.mxu0
      %1477 = vmatpush.bf16.msra.mxu0 %v1291
      %1478 = vmatpush.bf16.msra.mxu0 %v1290
      %1479 = vmatpush.bf16.msra.mxu0 %v1289
      %1480 = vmatpush.bf16.msra.mxu0 %v1288
      %1481 = vmatpush.bf16.msra.mxu0 %v1287
      %1482 = vmatpush.bf16.msra.mxu0 %v1286
      %1483 = vmatpush.bf16.msra.mxu0 %v1285
      %1484 = vmatpush.bf16.msra.mxu0 %v1284
      %1485 = vmatmul.bf16.gmra.mxu0 %v1085
      %v1486 = vpop.f32.mrf.mxu0
      %v1487 = vadd.f32 %v1318, %v1486
      %v1488 = vpop.f32.mrf.mxu0
      %v1489 = vadd.f32 %v1320, %v1488
      %1490 = vmatmul.bf16.gmra.mxu0 %v1087
      %v1491 = vpop.f32.mrf.mxu0
      %v1492 = vadd.f32 %v1323, %v1491
      %v1493 = vpop.f32.mrf.mxu0
      %v1494 = vadd.f32 %v1325, %v1493
      %1495 = vmatmul.bf16.gmra.mxu0 %v1089
      %v1496 = vpop.f32.mrf.mxu0
      %v1497 = vadd.f32 %v1328, %v1496
      %v1498 = vpop.f32.mrf.mxu0
      %v1499 = vadd.f32 %v1330, %v1498
      %1500 = vmatmul.bf16.gmra.mxu0 %v1091
      %v1501 = vpop.f32.mrf.mxu0
      %v1502 = vadd.f32 %v1333, %v1501
      %v1503 = vpop.f32.mrf.mxu0
      %v1504 = vadd.f32 %v1335, %v1503
      %1505 = vmatmul.bf16.gmra.mxu0 %v1093
      %v1506 = vpop.f32.mrf.mxu0
      %v1507 = vadd.f32 %v1338, %v1506
      %v1508 = vpop.f32.mrf.mxu0
      %v1509 = vadd.f32 %v1340, %v1508
      %1510 = vmatmul.bf16.gmra.mxu0 %v1095
      %v1511 = vpop.f32.mrf.mxu0
      %v1512 = vadd.f32 %v1343, %v1511
      %v1513 = vpop.f32.mrf.mxu0
      %v1514 = vadd.f32 %v1345, %v1513
      %1515 = vmatmul.bf16.gmra.mxu0 %v1097
      %v1516 = vpop.f32.mrf.mxu0
      %v1517 = vadd.f32 %v1348, %v1516
      %v1518 = vpop.f32.mrf.mxu0
      %v1519 = vadd.f32 %v1350, %v1518
      %1520 = vmatmul.bf16.gmra.mxu0 %v1099
      %v1521 = vpop.f32.mrf.mxu0
      %v1522 = vadd.f32 %v1353, %v1521
      %v1523 = vpop.f32.mrf.mxu0
      %v1524 = vadd.f32 %v1355, %v1523
      %1525 = vmatmul.bf16.gmra.mxu0 %v1101
      %v1526 = vpop.f32.mrf.mxu0
      %v1527 = vadd.f32 %v1358, %v1526
      %v1528 = vpop.f32.mrf.mxu0
      %v1529 = vadd.f32 %v1360, %v1528
      %1530 = vmatmul.bf16.gmra.mxu0 %v1103
      %v1531 = vpop.f32.mrf.mxu0
      %v1532 = vadd.f32 %v1363, %v1531
      %v1533 = vpop.f32.mrf.mxu0
      %v1534 = vadd.f32 %v1365, %v1533
      %1535 = vmatmul.bf16.gmra.mxu0 %v1105
      %v1536 = vpop.f32.mrf.mxu0
      %v1537 = vadd.f32 %v1368, %v1536
      %v1538 = vpop.f32.mrf.mxu0
      %v1539 = vadd.f32 %v1370, %v1538
      %1540 = vmatmul.bf16.gmra.mxu0 %v1107
      %v1541 = vpop.f32.mrf.mxu0
      %v1542 = vadd.f32 %v1373, %v1541
      %v1543 = vpop.f32.mrf.mxu0
      %v1544 = vadd.f32 %v1375, %v1543
      %1545 = vmatmul.bf16.gmra.mxu0 %v1109
      %v1546 = vpop.f32.mrf.mxu0
      %v1547 = vadd.f32 %v1378, %v1546
      %v1548 = vpop.f32.mrf.mxu0
      %v1549 = vadd.f32 %v1380, %v1548
      %1550 = vmatmul.bf16.gmra.mxu0 %v1111
      %v1551 = vpop.f32.mrf.mxu0
      %v1552 = vadd.f32 %v1383, %v1551
      %v1553 = vpop.f32.mrf.mxu0
      %v1554 = vadd.f32 %v1385, %v1553
      %1555 = vmatmul.bf16.gmra.mxu0 %v1113
      %v1556 = vpop.f32.mrf.mxu0
      %v1557 = vadd.f32 %v1388, %v1556
      %v1558 = vpop.f32.mrf.mxu0
      %v1559 = vadd.f32 %v1390, %v1558
      %1560 = vmatmul.bf16.gmra.mxu0 %v1115
      %v1561 = vpop.f32.mrf.mxu0
      %v1562 = vadd.f32 %v1393, %v1561
      %v1563 = vpop.f32.mrf.mxu0
      %v1564 = vadd.f32 %v1395, %v1563
      %1565 = vmatmul.bf16.gmra.mxu0 %v1117
      %v1566 = vpop.f32.mrf.mxu0
      %v1567 = vadd.f32 %v1398, %v1566
      %v1568 = vpop.f32.mrf.mxu0
      %v1569 = vadd.f32 %v1400, %v1568
      %1570 = vmatmul.bf16.gmra.mxu0 %v1119
      %v1571 = vpop.f32.mrf.mxu0
      %v1572 = vadd.f32 %v1403, %v1571
      %v1573 = vpop.f32.mrf.mxu0
      %v1574 = vadd.f32 %v1405, %v1573
      %1575 = vmatmul.bf16.gmra.mxu0 %v1121
      %v1576 = vpop.f32.mrf.mxu0
      %v1577 = vadd.f32 %v1408, %v1576
      %v1578 = vpop.f32.mrf.mxu0
      %v1579 = vadd.f32 %v1410, %v1578
      %1580 = vmatmul.bf16.gmra.mxu0 %v1123
      %v1581 = vpop.f32.mrf.mxu0
      %v1582 = vadd.f32 %v1413, %v1581
      %v1583 = vpop.f32.mrf.mxu0
      %v1584 = vadd.f32 %v1415, %v1583
      %1585 = vmatmul.bf16.gmra.mxu0 %v1125
      %v1586 = vpop.f32.mrf.mxu0
      %v1587 = vadd.f32 %v1418, %v1586
      %v1588 = vpop.f32.mrf.mxu0
      %v1589 = vadd.f32 %v1420, %v1588
      %1590 = vmatmul.bf16.gmra.mxu0 %v1127
      %v1591 = vpop.f32.mrf.mxu0
      %v1592 = vadd.f32 %v1423, %v1591
      %v1593 = vpop.f32.mrf.mxu0
      %v1594 = vadd.f32 %v1425, %v1593
      %1595 = vmatmul.bf16.gmra.mxu0 %v1129
      %v1596 = vpop.f32.mrf.mxu0
      %v1597 = vadd.f32 %v1428, %v1596
      %v1598 = vpop.f32.mrf.mxu0
      %v1599 = vadd.f32 %v1430, %v1598
      %1600 = vmatmul.bf16.gmra.mxu0 %v1131
      %v1601 = vpop.f32.mrf.mxu0
      %v1602 = vadd.f32 %v1433, %v1601
      %v1603 = vpop.f32.mrf.mxu0
      %v1604 = vadd.f32 %v1435, %v1603
      %1605 = vmatmul.bf16.gmra.mxu0 %v1133
      %v1606 = vpop.f32.mrf.mxu0
      %v1607 = vadd.f32 %v1438, %v1606
      %v1608 = vpop.f32.mrf.mxu0
      %v1609 = vadd.f32 %v1440, %v1608
      %1610 = vmatmul.bf16.gmra.mxu0 %v1135
      %v1611 = vpop.f32.mrf.mxu0
      %v1612 = vadd.f32 %v1443, %v1611
      %v1613 = vpop.f32.mrf.mxu0
      %v1614 = vadd.f32 %v1445, %v1613
      %1615 = vmatmul.bf16.gmra.mxu0 %v1137
      %v1616 = vpop.f32.mrf.mxu0
      %v1617 = vadd.f32 %v1448, %v1616
      %v1618 = vpop.f32.mrf.mxu0
      %v1619 = vadd.f32 %v1450, %v1618
      %1620 = vmatmul.bf16.gmra.mxu0 %v1139
      %v1621 = vpop.f32.mrf.mxu0
      %v1622 = vadd.f32 %v1453, %v1621
      %v1623 = vpop.f32.mrf.mxu0
      %v1624 = vadd.f32 %v1455, %v1623
      %1625 = vmatmul.bf16.gmra.mxu0 %v1141
      %v1626 = vpop.f32.mrf.mxu0
      %v1627 = vadd.f32 %v1458, %v1626
      %v1628 = vpop.f32.mrf.mxu0
      %v1629 = vadd.f32 %v1460, %v1628
      %1630 = vmatmul.bf16.gmra.mxu0 %v1143
      %v1631 = vpop.f32.mrf.mxu0
      %v1632 = vadd.f32 %v1463, %v1631
      %v1633 = vpop.f32.mrf.mxu0
      %v1634 = vadd.f32 %v1465, %v1633
      %1635 = vmatmul.bf16.gmra.mxu0 %v1145
      %v1636 = vpop.f32.mrf.mxu0
      %v1637 = vadd.f32 %v1468, %v1636
      %v1638 = vpop.f32.mrf.mxu0
      %v1639 = vadd.f32 %v1470, %v1638
      %1640 = vmatmul.bf16.gmra.mxu0 %v1147
      %v1641 = vpop.f32.mrf.mxu0
      %v1642 = vadd.f32 %v1473, %v1641
      %v1643 = vpop.f32.mrf.mxu0
      %v1644 = vadd.f32 %v1475, %v1643
      %1645 = vdwg.mxu0
      %v1646 = vld [vmem:[%s4] sm:$0x1]
      %v1648 = vperm.slane %v1646, 0
      %v1650 = vadd.f32 %v1487, %v1648
      %v1651 = vadd.f32 %v1489, %v1648
      %v1652 = vadd.f32 %v1492, %v1648
      %v1653 = vadd.f32 %v1494, %v1648
      %v1654 = vadd.f32 %v1497, %v1648
      %v1655 = vadd.f32 %v1499, %v1648
      %v1656 = vadd.f32 %v1502, %v1648
      %v1657 = vadd.f32 %v1504, %v1648
      %v1658 = vadd.f32 %v1507, %v1648
      %v1659 = vadd.f32 %v1509, %v1648
      %v1660 = vadd.f32 %v1512, %v1648
      %v1661 = vadd.f32 %v1514, %v1648
      %v1662 = vadd.f32 %v1517, %v1648
      %v1663 = vadd.f32 %v1519, %v1648
      %v1664 = vadd.f32 %v1522, %v1648
      %v1665 = vadd.f32 %v1524, %v1648
      %v1666 = vadd.f32 %v1527, %v1648
      %v1667 = vadd.f32 %v1529, %v1648
      %v1668 = vadd.f32 %v1532, %v1648
      %v1669 = vadd.f32 %v1534, %v1648
      %v1670 = vadd.f32 %v1537, %v1648
      %v1671 = vadd.f32 %v1539, %v1648
      %v1672 = vadd.f32 %v1542, %v1648
      %v1673 = vadd.f32 %v1544, %v1648
      %v1674 = vadd.f32 %v1547, %v1648
      %v1675 = vadd.f32 %v1549, %v1648
      %v1676 = vadd.f32 %v1552, %v1648
      %v1677 = vadd.f32 %v1554, %v1648
      %v1678 = vadd.f32 %v1557, %v1648
      %v1679 = vadd.f32 %v1559, %v1648
      %v1680 = vadd.f32 %v1562, %v1648
      %v1681 = vadd.f32 %v1564, %v1648
      %v1682 = vadd.f32 %v1567, %v1648
      %v1683 = vadd.f32 %v1569, %v1648
      %v1684 = vadd.f32 %v1572, %v1648
      %v1685 = vadd.f32 %v1574, %v1648
      %v1686 = vadd.f32 %v1577, %v1648
      %v1687 = vadd.f32 %v1579, %v1648
      %v1688 = vadd.f32 %v1582, %v1648
      %v1689 = vadd.f32 %v1584, %v1648
      %v1690 = vadd.f32 %v1587, %v1648
      %v1691 = vadd.f32 %v1589, %v1648
      %v1692 = vadd.f32 %v1592, %v1648
      %v1693 = vadd.f32 %v1594, %v1648
      %v1694 = vadd.f32 %v1597, %v1648
      %v1695 = vadd.f32 %v1599, %v1648
      %v1696 = vadd.f32 %v1602, %v1648
      %v1697 = vadd.f32 %v1604, %v1648
      %v1698 = vadd.f32 %v1607, %v1648
      %v1699 = vadd.f32 %v1609, %v1648
      %v1700 = vadd.f32 %v1612, %v1648
      %v1701 = vadd.f32 %v1614, %v1648
      %v1702 = vadd.f32 %v1617, %v1648
      %v1703 = vadd.f32 %v1619, %v1648
      %v1704 = vadd.f32 %v1622, %v1648
      %v1705 = vadd.f32 %v1624, %v1648
      %v1706 = vadd.f32 %v1627, %v1648
      %v1707 = vadd.f32 %v1629, %v1648
      %v1708 = vadd.f32 %v1632, %v1648
      %v1709 = vadd.f32 %v1634, %v1648
      %v1710 = vadd.f32 %v1637, %v1648
      %v1711 = vadd.f32 %v1639, %v1648
      %v1712 = vadd.f32 %v1642, %v1648
      %v1713 = vadd.f32 %v1644, %v1648
      %v1714 = vmax.f32 %v1650, 0.0
      %v1715 = vmax.f32 %v1651, 0.0
      %v1716 = vmax.f32 %v1652, 0.0
      %v1717 = vmax.f32 %v1653, 0.0
      %v1718 = vmax.f32 %v1654, 0.0
      %v1719 = vmax.f32 %v1655, 0.0
      %v1720 = vmax.f32 %v1656, 0.0
      %v1721 = vmax.f32 %v1657, 0.0
      %v1722 = vmax.f32 %v1658, 0.0
      %v1723 = vmax.f32 %v1659, 0.0
      %v1724 = vmax.f32 %v1660, 0.0
      %v1725 = vmax.f32 %v1661, 0.0
      %v1726 = vmax.f32 %v1662, 0.0
      %v1727 = vmax.f32 %v1663, 0.0
      %v1728 = vmax.f32 %v1664, 0.0
      %v1729 = vmax.f32 %v1665, 0.0
      %v1730 = vmax.f32 %v1666, 0.0
      %v1731 = vmax.f32 %v1667, 0.0
      %v1732 = vmax.f32 %v1668, 0.0
      %v1733 = vmax.f32 %v1669, 0.0
      %v1734 = vmax.f32 %v1670, 0.0
      %v1735 = vmax.f32 %v1671, 0.0
      %v1736 = vmax.f32 %v1672, 0.0
      %v1737 = vmax.f32 %v1673, 0.0
      %v1738 = vmax.f32 %v1674, 0.0
      %v1739 = vmax.f32 %v1675, 0.0
      %v1740 = vmax.f32 %v1676, 0.0
      %v1741 = vmax.f32 %v1677, 0.0
      %v1742 = vmax.f32 %v1678, 0.0
      %v1743 = vmax.f32 %v1679, 0.0
      %v1744 = vmax.f32 %v1680, 0.0
      %v1745 = vmax.f32 %v1681, 0.0
      %v1746 = vmax.f32 %v1682, 0.0
      %v1747 = vmax.f32 %v1683, 0.0
      %v1748 = vmax.f32 %v1684, 0.0
      %v1749 = vmax.f32 %v1685, 0.0
      %v1750 = vmax.f32 %v1686, 0.0
      %v1751 = vmax.f32 %v1687, 0.0
      %v1752 = vmax.f32 %v1688, 0.0
      %v1753 = vmax.f32 %v1689, 0.0
      %v1754 = vmax.f32 %v1690, 0.0
      %v1755 = vmax.f32 %v1691, 0.0
      %v1756 = vmax.f32 %v1692, 0.0
      %v1757 = vmax.f32 %v1693, 0.0
      %v1758 = vmax.f32 %v1694, 0.0
      %v1759 = vmax.f32 %v1695, 0.0
      %v1760 = vmax.f32 %v1696, 0.0
      %v1761 = vmax.f32 %v1697, 0.0
      %v1762 = vmax.f32 %v1698, 0.0
      %v1763 = vmax.f32 %v1699, 0.0
      %v1764 = vmax.f32 %v1700, 0.0
      %v1765 = vmax.f32 %v1701, 0.0
      %v1766 = vmax.f32 %v1702, 0.0
      %v1767 = vmax.f32 %v1703, 0.0
      %v1768 = vmax.f32 %v1704, 0.0
      %v1769 = vmax.f32 %v1705, 0.0
      %v1770 = vmax.f32 %v1706, 0.0
      %v1771 = vmax.f32 %v1707, 0.0
      %v1772 = vmax.f32 %v1708, 0.0
      %v1773 = vmax.f32 %v1709, 0.0
      %v1774 = vmax.f32 %v1710, 0.0
      %v1775 = vmax.f32 %v1711, 0.0
      %v1776 = vmax.f32 %v1712, 0.0
      %v1777 = vmax.f32 %v1713, 0.0
      %v1778 = vld [vmem:[%s5] sm:$0xff]
      %v1779 = vld [vmem:[%s5 + $0x8] sm:$0xff]
      %v1780 = vld [vmem:[%s5 + $0x10] sm:$0xff]
      %v1781 = vld [vmem:[%s5 + $0x18] sm:$0xff]
      %v1782 = vld [vmem:[%s5 + $0x20] sm:$0xff]
      %v1783 = vld [vmem:[%s5 + $0x28] sm:$0xff]
      %v1784 = vld [vmem:[%s5 + $0x30] sm:$0xff]
      %v1785 = vld [vmem:[%s5 + $0x38] sm:$0xff]
      %v1786 = vld [vmem:[%s5 + $0x40] sm:$0xff]
      %v1787 = vld [vmem:[%s5 + $0x48] sm:$0xff]
      %v1788 = vld [vmem:[%s5 + $0x50] sm:$0xff]
      %v1789 = vld [vmem:[%s5 + $0x58] sm:$0xff]
      %v1790 = vld [vmem:[%s5 + $0x60] sm:$0xff]
      %v1791 = vld [vmem:[%s5 + $0x68] sm:$0xff]
      %v1792 = vld [vmem:[%s5 + $0x70] sm:$0xff]
      %v1793 = vld [vmem:[%s5 + $0x78] sm:$0xff]
      %v1794 = vld [vmem:[%s6] sm:$0x1]
      %v1796 = vperm.slane %v1794, 0
      %1798 = vmatpush.msra.mxu0 %v1793
      %1799 = vmatpush.msra.mxu0 %v1792
      %1800 = vmatpush.msra.mxu0 %v1791
      %1801 = vmatpush.msra.mxu0 %v1790
      %1802 = vmatpush.msra.mxu0 %v1789
      %1803 = vmatpush.msra.mxu0 %v1788
      %1804 = vmatpush.msra.mxu0 %v1787
      %1805 = vmatpush.msra.mxu0 %v1786
      %1806 = vmatpush.msra.mxu0 %v1785
      %1807 = vmatpush.msra.mxu0 %v1784
      %1808 = vmatpush.msra.mxu0 %v1783
      %1809 = vmatpush.msra.mxu0 %v1782
      %1810 = vmatpush.msra.mxu0 %v1781
      %1811 = vmatpush.msra.mxu0 %v1780
      %1812 = vmatpush.msra.mxu0 %v1779
      %1813 = vmatpush.msra.mxu0 %v1778
      %1814 = vmatmul.f32.gmra.mxu0 %v1714
      %v1815 = vpop.f32.mrf.mxu0
      %v1816 = vadd.f32 %v1796, %v1815
      %1817 = vmatmul.f32.gmra.mxu0 %v1715
      %v1818 = vpop.f32.mrf.mxu0
      %v1819 = vadd.f32 %v1796, %v1818
      %1820 = vmatmul.f32.gmra.mxu0 %v1716
      %v1821 = vpop.f32.mrf.mxu0
      %v1822 = vadd.f32 %v1796, %v1821
      %1823 = vmatmul.f32.gmra.mxu0 %v1717
      %v1824 = vpop.f32.mrf.mxu0
      %v1825 = vadd.f32 %v1796, %v1824
      %1826 = vmatmul.f32.gmra.mxu0 %v1718
      %v1827 = vpop.f32.mrf.mxu0
      %v1828 = vadd.f32 %v1796, %v1827
      %1829 = vmatmul.f32.gmra.mxu0 %v1719
      %v1830 = vpop.f32.mrf.mxu0
      %v1831 = vadd.f32 %v1796, %v1830
      %1832 = vmatmul.f32.gmra.mxu0 %v1720
      %v1833 = vpop.f32.mrf.mxu0
      %v1834 = vadd.f32 %v1796, %v1833
      %1835 = vmatmul.f32.gmra.mxu0 %v1721
      %v1836 = vpop.f32.mrf.mxu0
      %v1837 = vadd.f32 %v1796, %v1836
      %1838 = vmatmul.f32.gmra.mxu0 %v1722
      %v1839 = vpop.f32.mrf.mxu0
      %v1840 = vadd.f32 %v1796, %v1839
      %1841 = vmatmul.f32.gmra.mxu0 %v1723
      %v1842 = vpop.f32.mrf.mxu0
      %v1843 = vadd.f32 %v1796, %v1842
      %1844 = vmatmul.f32.gmra.mxu0 %v1724
      %v1845 = vpop.f32.mrf.mxu0
      %v1846 = vadd.f32 %v1796, %v1845
      %1847 = vmatmul.f32.gmra.mxu0 %v1725
      %v1848 = vpop.f32.mrf.mxu0
      %v1849 = vadd.f32 %v1796, %v1848
      %1850 = vmatmul.f32.gmra.mxu0 %v1726
      %v1851 = vpop.f32.mrf.mxu0
      %v1852 = vadd.f32 %v1796, %v1851
      %1853 = vmatmul.f32.gmra.mxu0 %v1727
      %v1854 = vpop.f32.mrf.mxu0
      %v1855 = vadd.f32 %v1796, %v1854
      %1856 = vmatmul.f32.gmra.mxu0 %v1728
      %v1857 = vpop.f32.mrf.mxu0
      %v1858 = vadd.f32 %v1796, %v1857
      %1859 = vmatmul.f32.gmra.mxu0 %v1729
      %v1860 = vpop.f32.mrf.mxu0
      %v1861 = vadd.f32 %v1796, %v1860
      %1862 = vmatmul.f32.gmra.mxu0 %v1730
      %v1863 = vpop.f32.mrf.mxu0
      %v1864 = vadd.f32 %v1796, %v1863
      %1865 = vmatmul.f32.gmra.mxu0 %v1731
      %v1866 = vpop.f32.mrf.mxu0
      %v1867 = vadd.f32 %v1796, %v1866
      %1868 = vmatmul.f32.gmra.mxu0 %v1732
      %v1869 = vpop.f32.mrf.mxu0
      %v1870 = vadd.f32 %v1796, %v1869
      %1871 = vmatmul.f32.gmra.mxu0 %v1733
      %v1872 = vpop.f32.mrf.mxu0
      %v1873 = vadd.f32 %v1796, %v1872
      %1874 = vmatmul.f32.gmra.mxu0 %v1734
      %v1875 = vpop.f32.mrf.mxu0
      %v1876 = vadd.f32 %v1796, %v1875
      %1877 = vmatmul.f32.gmra.mxu0 %v1735
      %v1878 = vpop.f32.mrf.mxu0
      %v1879 = vadd.f32 %v1796, %v1878
      %1880 = vmatmul.f32.gmra.mxu0 %v1736
      %v1881 = vpop.f32.mrf.mxu0
      %v1882 = vadd.f32 %v1796, %v1881
      %1883 = vmatmul.f32.gmra.mxu0 %v1737
      %v1884 = vpop.f32.mrf.mxu0
      %v1885 = vadd.f32 %v1796, %v1884
      %1886 = vmatmul.f32.gmra.mxu0 %v1738
      %v1887 = vpop.f32.mrf.mxu0
      %v1888 = vadd.f32 %v1796, %v1887
      %1889 = vmatmul.f32.gmra.mxu0 %v1739
      %v1890 = vpop.f32.mrf.mxu0
      %v1891 = vadd.f32 %v1796, %v1890
      %1892 = vmatmul.f32.gmra.mxu0 %v1740
      %v1893 = vpop.f32.mrf.mxu0
      %v1894 = vadd.f32 %v1796, %v1893
      %1895 = vmatmul.f32.gmra.mxu0 %v1741
      %v1896 = vpop.f32.mrf.mxu0
      %v1897 = vadd.f32 %v1796, %v1896
      %1898 = vmatmul.f32.gmra.mxu0 %v1742
      %v1899 = vpop.f32.mrf.mxu0
      %v1900 = vadd.f32 %v1796, %v1899
      %1901 = vmatmul.f32.gmra.mxu0 %v1743
      %v1902 = vpop.f32.mrf.mxu0
      %v1903 = vadd.f32 %v1796, %v1902
      %1904 = vmatmul.f32.gmra.mxu0 %v1744
      %v1905 = vpop.f32.mrf.mxu0
      %v1906 = vadd.f32 %v1796, %v1905
      %1907 = vmatmul.f32.gmra.mxu0 %v1745
      %v1908 = vpop.f32.mrf.mxu0
      %v1909 = vadd.f32 %v1796, %v1908
      %1910 = vmatmul.f32.gmra.mxu0 %v1746
      %v1911 = vpop.f32.mrf.mxu0
      %v1912 = vadd.f32 %v1796, %v1911
      %1913 = vmatmul.f32.gmra.mxu0 %v1747
      %v1914 = vpop.f32.mrf.mxu0
      %v1915 = vadd.f32 %v1796, %v1914
      %1916 = vmatmul.f32.gmra.mxu0 %v1748
      %v1917 = vpop.f32.mrf.mxu0
      %v1918 = vadd.f32 %v1796, %v1917
      %1919 = vmatmul.f32.gmra.mxu0 %v1749
      %v1920 = vpop.f32.mrf.mxu0
      %v1921 = vadd.f32 %v1796, %v1920
      %1922 = vmatmul.f32.gmra.mxu0 %v1750
      %v1923 = vpop.f32.mrf.mxu0
      %v1924 = vadd.f32 %v1796, %v1923
      %1925 = vmatmul.f32.gmra.mxu0 %v1751
      %v1926 = vpop.f32.mrf.mxu0
      %v1927 = vadd.f32 %v1796, %v1926
      %1928 = vmatmul.f32.gmra.mxu0 %v1752
      %v1929 = vpop.f32.mrf.mxu0
      %v1930 = vadd.f32 %v1796, %v1929
      %1931 = vmatmul.f32.gmra.mxu0 %v1753
      %v1932 = vpop.f32.mrf.mxu0
      %v1933 = vadd.f32 %v1796, %v1932
      %1934 = vmatmul.f32.gmra.mxu0 %v1754
      %v1935 = vpop.f32.mrf.mxu0
      %v1936 = vadd.f32 %v1796, %v1935
      %1937 = vmatmul.f32.gmra.mxu0 %v1755
      %v1938 = vpop.f32.mrf.mxu0
      %v1939 = vadd.f32 %v1796, %v1938
      %1940 = vmatmul.f32.gmra.mxu0 %v1756
      %v1941 = vpop.f32.mrf.mxu0
      %v1942 = vadd.f32 %v1796, %v1941
      %1943 = vmatmul.f32.gmra.mxu0 %v1757
      %v1944 = vpop.f32.mrf.mxu0
      %v1945 = vadd.f32 %v1796, %v1944
      %1946 = vmatmul.f32.gmra.mxu0 %v1758
      %v1947 = vpop.f32.mrf.mxu0
      %v1948 = vadd.f32 %v1796, %v1947
      %1949 = vmatmul.f32.gmra.mxu0 %v1759
      %v1950 = vpop.f32.mrf.mxu0
      %v1951 = vadd.f32 %v1796, %v1950
      %1952 = vmatmul.f32.gmra.mxu0 %v1760
      %v1953 = vpop.f32.mrf.mxu0
      %v1954 = vadd.f32 %v1796, %v1953
      %1955 = vmatmul.f32.gmra.mxu0 %v1761
      %v1956 = vpop.f32.mrf.mxu0
      %v1957 = vadd.f32 %v1796, %v1956
      %1958 = vmatmul.f32.gmra.mxu0 %v1762
      %v1959 = vpop.f32.mrf.mxu0
      %v1960 = vadd.f32 %v1796, %v1959
      %1961 = vmatmul.f32.gmra.mxu0 %v1763
      %v1962 = vpop.f32.mrf.mxu0
      %v1963 = vadd.f32 %v1796, %v1962
      %1964 = vmatmul.f32.gmra.mxu0 %v1764
      %v1965 = vpop.f32.mrf.mxu0
      %v1966 = vadd.f32 %v1796, %v1965
      %1967 = vmatmul.f32.gmra.mxu0 %v1765
      %v1968 = vpop.f32.mrf.mxu0
      %v1969 = vadd.f32 %v1796, %v1968
      %1970 = vmatmul.f32.gmra.mxu0 %v1766
      %v1971 = vpop.f32.mrf.mxu0
      %v1972 = vadd.f32 %v1796, %v1971
      %1973 = vmatmul.f32.gmra.mxu0 %v1767
      %v1974 = vpop.f32.mrf.mxu0
      %v1975 = vadd.f32 %v1796, %v1974
      %1976 = vmatmul.f32.gmra.mxu0 %v1768
      %v1977 = vpop.f32.mrf.mxu0
      %v1978 = vadd.f32 %v1796, %v1977
      %1979 = vmatmul.f32.gmra.mxu0 %v1769
      %v1980 = vpop.f32.mrf.mxu0
      %v1981 = vadd.f32 %v1796, %v1980
      %1982 = vmatmul.f32.gmra.mxu0 %v1770
      %v1983 = vpop.f32.mrf.mxu0
      %v1984 = vadd.f32 %v1796, %v1983
      %1985 = vmatmul.f32.gmra.mxu0 %v1771
      %v1986 = vpop.f32.mrf.mxu0
      %v1987 = vadd.f32 %v1796, %v1986
      %1988 = vmatmul.f32.gmra.mxu0 %v1772
      %v1989 = vpop.f32.mrf.mxu0
      %v1990 = vadd.f32 %v1796, %v1989
      %1991 = vmatmul.f32.gmra.mxu0 %v1773
      %v1992 = vpop.f32.mrf.mxu0
      %v1993 = vadd.f32 %v1796, %v1992
      %1994 = vmatmul.f32.gmra.mxu0 %v1774
      %v1995 = vpop.f32.mrf.mxu0
      %v1996 = vadd.f32 %v1796, %v1995
      %1997 = vmatmul.f32.gmra.mxu0 %v1775
      %v1998 = vpop.f32.mrf.mxu0
      %v1999 = vadd.f32 %v1796, %v1998
      %2000 = vmatmul.f32.gmra.mxu0 %v1776
      %v2001 = vpop.f32.mrf.mxu0
      %v2002 = vadd.f32 %v1796, %v2001
      %2003 = vmatmul.f32.gmra.mxu0 %v1777
      %v2004 = vpop.f32.mrf.mxu0
      %v2005 = vadd.f32 %v1796, %v2004
      %2006 = vdwg.mxu0
      %2007 = vst [vmem:[%s305] sm:$0xff] %v1816
      %2008 = vst [vmem:[%s305 + $0x8] sm:$0xff] %v1819
      %2009 = vst [vmem:[%s305 + $0x10] sm:$0xff] %v1822
      %2010 = vst [vmem:[%s305 + $0x18] sm:$0xff] %v1825
      %2011 = vst [vmem:[%s305 + $0x20] sm:$0xff] %v1828
      %2012 = vst [vmem:[%s305 + $0x28] sm:$0xff] %v1831
      %2013 = vst [vmem:[%s305 + $0x30] sm:$0xff] %v1834
      %2014 = vst [vmem:[%s305 + $0x38] sm:$0xff] %v1837
      %2015 = vst [vmem:[%s305 + $0x40] sm:$0xff] %v1840
      %2016 = vst [vmem:[%s305 + $0x48] sm:$0xff] %v1843
      %2017 = vst [vmem:[%s305 + $0x50] sm:$0xff] %v1846
      %2018 = vst [vmem:[%s305 + $0x58] sm:$0xff] %v1849
      %2019 = vst [vmem:[%s305 + $0x60] sm:$0xff] %v1852
      %2020 = vst [vmem:[%s305 + $0x68] sm:$0xff] %v1855
      %2021 = vst [vmem:[%s305 + $0x70] sm:$0xff] %v1858
      %2022 = vst [vmem:[%s305 + $0x78] sm:$0xff] %v1861
      %2023 = vst [vmem:[%s305 + $0x80] sm:$0xff] %v1864
      %2024 = vst [vmem:[%s305 + $0x88] sm:$0xff] %v1867
      %2025 = vst [vmem:[%s305 + $0x90] sm:$0xff] %v1870
      %2026 = vst [vmem:[%s305 + $0x98] sm:$0xff] %v1873
      %2027 = vst [vmem:[%s305 + $0xa0] sm:$0xff] %v1876
      %2028 = vst [vmem:[%s305 + $0xa8] sm:$0xff] %v1879
      %2029 = vst [vmem:[%s305 + $0xb0] sm:$0xff] %v1882
      %2030 = vst [vmem:[%s305 + $0xb8] sm:$0xff] %v1885
      %2031 = vst [vmem:[%s305 + $0xc0] sm:$0xff] %v1888
      %2032 = vst [vmem:[%s305 + $0xc8] sm:$0xff] %v1891
      %2033 = vst [vmem:[%s305 + $0xd0] sm:$0xff] %v1894
      %2034 = vst [vmem:[%s305 + $0xd8] sm:$0xff] %v1897
      %2035 = vst [vmem:[%s305 + $0xe0] sm:$0xff] %v1900
      %2036 = vst [vmem:[%s305 + $0xe8] sm:$0xff] %v1903
      %2037 = vst [vmem:[%s305 + $0xf0] sm:$0xff] %v1906
      %2038 = vst [vmem:[%s305 + $0xf8] sm:$0xff] %v1909
      %2039 = vst [vmem:[%s305 + $0x100] sm:$0xff] %v1912
      %2040 = vst [vmem:[%s305 + $0x108] sm:$0xff] %v1915
      %2041 = vst [vmem:[%s305 + $0x110] sm:$0xff] %v1918
      %2042 = vst [vmem:[%s305 + $0x118] sm:$0xff] %v1921
      %2043 = vst [vmem:[%s305 + $0x120] sm:$0xff] %v1924
      %2044 = vst [vmem:[%s305 + $0x128] sm:$0xff] %v1927
      %2045 = vst [vmem:[%s305 + $0x130] sm:$0xff] %v1930
      %2046 = vst [vmem:[%s305 + $0x138] sm:$0xff] %v1933
      %2047 = vst [vmem:[%s305 + $0x140] sm:$0xff] %v1936
      %2048 = vst [vmem:[%s305 + $0x148] sm:$0xff] %v1939
      %2049 = vst [vmem:[%s305 + $0x150] sm:$0xff] %v1942
      %2050 = vst [vmem:[%s305 + $0x158] sm:$0xff] %v1945
      %2051 = vst [vmem:[%s305 + $0x160] sm:$0xff] %v1948
      %2052 = vst [vmem:[%s305 + $0x168] sm:$0xff] %v1951
      %2053 = vst [vmem:[%s305 + $0x170] sm:$0xff] %v1954
      %2054 = vst [vmem:[%s305 + $0x178] sm:$0xff] %v1957
      %2055 = vst [vmem:[%s305 + $0x180] sm:$0xff] %v1960
      %2056 = vst [vmem:[%s305 + $0x188] sm:$0xff] %v1963
      %2057 = vst [vmem:[%s305 + $0x190] sm:$0xff] %v1966
      %2058 = vst [vmem:[%s305 + $0x198] sm:$0xff] %v1969
      %2059 = vst [vmem:[%s305 + $0x1a0] sm:$0xff] %v1972
      %2060 = vst [vmem:[%s305 + $0x1a8] sm:$0xff] %v1975
      %2061 = vst [vmem:[%s305 + $0x1b0] sm:$0xff] %v1978
      %2062 = vst [vmem:[%s305 + $0x1b8] sm:$0xff] %v1981
      %2063 = vst [vmem:[%s305 + $0x1c0] sm:$0xff] %v1984
      %2064 = vst [vmem:[%s305 + $0x1c8] sm:$0xff] %v1987
      %2065 = vst [vmem:[%s305 + $0x1d0] sm:$0xff] %v1990
      %2066 = vst [vmem:[%s305 + $0x1d8] sm:$0xff] %v1993
      %2067 = vst [vmem:[%s305 + $0x1e0] sm:$0xff] %v1996
      %2068 = vst [vmem:[%s305 + $0x1e8] sm:$0xff] %v1999
      %2069 = vst [vmem:[%s305 + $0x1f0] sm:$0xff] %v2002
      %2070 = vst [vmem:[%s305 + $0x1f8] sm:$0xff] %v2005
      %s2071 = smul.u32 64, %s18
      %p2072 = scmp.lt.s32.totalorder %s2071, 255
      %s2073 = scalar_select %p2072, %s2071, 255
      %s2074 = smul.addr %s2073, 8
      %s2075 = scalar_lea.vmem %s7, %s2074
      // Predicated region
      $region49: #{resnet_segmentation_forward.27} parent=47 // pred_check
        %p2076 = pneg %p193
      $region50: #{resnet_segmentation_forward.27} parent=47 // pred_check_branch
        %2078 = sbr.rel (%p2076) target = $region52
      $region51: #{resnet_segmentation_forward.27} parent=47 // pred_region
        %s2079 = smul.u32 64, %s18
      $region52: #{resnet_segmentation_forward.27} parent=47 // pred_fallthru
        _
    $region48: #{resnet_segmentation_forward.27} parent=5 // pred_fallthru
      _
    %p2080 = scmp.le.s32.totalorder 2, %s13
    // Predicated region
    $region53: #{resnet_segmentation_forward.27} parent=5 // pred_check
      %p2081 = pneg %p2080
    $region54: #{resnet_segmentation_forward.27} parent=5 // pred_check_branch
      %2083 = sbr.rel (%p2081) target = $region56
    $region55: #{resnet_segmentation_forward.27} parent=5 // pred_region
      %s2084 = ssub.s32 %s13, 2
      // Predicated region
      $region57: #{resnet_segmentation_forward.27} parent=55 // pred_check
        %p2085 = pneg %p199
      $region58: #{resnet_segmentation_forward.27} parent=55 // pred_check_branch
        %2087 = sbr.rel (%p2085) target = $region60
      $region59: #{resnet_segmentation_forward.27} parent=55 // pred_region
        %s2088 = smul.u32 64, %s19
        %p2089 = scmp.lt.s32.totalorder %s2088, 255
        %s2090 = scalar_select %p2089, %s2088, 255
        %s2091 = smul.addr %s2090, 8
        %s2092 = scalar_lea.vmem %s7, %s2091
      $region60: #{resnet_segmentation_forward.27} parent=55 // pred_fallthru
        _
    $region56: #{resnet_segmentation_forward.27} parent=5 // pred_fallthru
      _
  $region6: #{resnet_segmentation_forward.27} parent=0 // loop_footer
    %s17 = sadd.s32 1, %s13
  $region7: #{resnet_segmentation_forward.27} parent=0 // loop_footer_branch
    %12 = sbr.rel target = $region3
  $region8: #{resnet_segmentation_forward.27} parent=0 // loop_exit
    _

</llo_original>
